<compile_context>
chip_gen: v7x
topology: tpu7x:2x2x1
jax: 0.10.0
libtpu: 0.0.40
codegen_flags: <defaults>
</compile_context>

<pallas_src>
import functools
import math

import jax
import jax.numpy as jnp
from jax.experimental import pallas as pl
from jax.experimental.pallas import tpu as pltpu  # noqa: F401  (no scratch / compiler params needed at this size)

D_MODEL = 32
NHEAD = 4
HEAD_DIM = D_MODEL // NHEAD
DIM_FF = 64
LN_EPS = 1e-5


# ----------------------------- kernel helpers ------------------------------

def _layer_norm(x, w, b):
    mu = jnp.mean(x, axis=-1, keepdims=True)
    var = jnp.mean((x - mu) ** 2, axis=-1, keepdims=True)
    return (x - mu) * jax.lax.rsqrt(var + LN_EPS) * w + b


def _mha(q_in, k_in, v_in, wqkv, bqkv, wo, bo, *, B, Tq, Tk):
    """Multi-head attention on sublane-packed (B*T, D) activation slabs.

    wqkv: (3, H, D, Kh) pre-transposed per-head projection weights
    bqkv: (3, H, 1, Kh) per-head projection biases
    wo:   (H, Kh, D)    per-head slices of the (already transposed) out-proj
    bo:   (1, D)
    No weight transposes, no lane slices of activations, no head concat:
    per-head outputs are projected by wo[h] and accumulated.
    """
    scale = 1.0 / math.sqrt(HEAD_DIM)

    # Per-head projections on the full row-packed slabs (one dot per head).
    qs, ks, vs = [], [], []
    for h in range(NHEAD):  # static unroll, NHEAD = 4
        qs.append((jnp.dot(q_in, wqkv[0, h], preferred_element_type=jnp.float32)
                   + bqkv[0, h]) * scale)
        ks.append(jnp.dot(k_in, wqkv[1, h], preferred_element_type=jnp.float32)
                  + bqkv[1, h])
        vs.append(jnp.dot(v_in, wqkv[2, h], preferred_element_type=jnp.float32)
                  + bqkv[2, h])

    # Attention core: static loop over batch rows (tile-aligned sublane slices).
    outs = []
    for b in range(B):  # static unroll, B = 2
        rq = slice(b * Tq, (b + 1) * Tq)
        rk = slice(b * Tk, (b + 1) * Tk)
        acc = None
        for h in range(NHEAD):
            s = jnp.dot(qs[h][rq], ks[h][rk].T,
                        preferred_element_type=jnp.float32)        # (Tq, Tk)
            s = s - jnp.max(s, axis=-1, keepdims=True)
            p = jnp.exp(s)
            p = p * pl.reciprocal(jnp.sum(p, axis=-1, keepdims=True), approx=True)
            oh = jnp.dot(p, vs[h][rk],
                         preferred_element_type=jnp.float32)       # (Tq, Kh)
            contrib = jnp.dot(oh, wo[h],
                              preferred_element_type=jnp.float32)  # (Tq, D)
            acc = contrib if acc is None else acc + contrib
        outs.append(acc)
    return jnp.concatenate(outs, axis=0) + bo                      # (B*Tq, D)


# ------------------------------ Pallas kernel -------------------------------

def decoder_layer_kernel(
    tgt_ref, mem_ref, qpos_ref, pos_ref,
    sa_wqkv_ref, sa_bqkv_ref, sa_wo_ref,
    ca_wqkv_ref, ca_bqkv_ref, ca_wo_ref,
    ff_w1_ref, ff_b1_ref, ff_w2_ref,
    vecs_ref,
    out_ref,
    *, B, T, S,
):
    tgt = tgt_ref[...]      # (B*T, D)
    mem = mem_ref[...]      # (B*S, D)
    qpos = qpos_ref[...]    # (B*T, D)
    pos = pos_ref[...]      # (B*S, D)

    vecs = vecs_ref[...]    # (9, D) packed bias / LayerNorm vectors
    sa_bo, ca_bo, ff_b2 = vecs[0:1], vecs[1:2], vecs[2:3]
    ln1_w, ln1_b = vecs[3:4], vecs[4:5]
    ln2_w, ln2_b = vecs[5:6], vecs[6:7]
    ln3_w, ln3_b = vecs[7:8], vecs[8:9]

    # --- self attention (norm-first) ---
    t2 = _layer_norm(tgt, ln1_w, ln1_b)
    q_in = t2 + qpos
    sa = _mha(q_in, q_in, t2,
              sa_wqkv_ref[...], sa_bqkv_ref[...], sa_wo_ref[...], sa_bo,
              B=B, Tq=T, Tk=T)
    x = tgt + sa

    # --- cross attention ---
    t2 = _layer_norm(x, ln2_w, ln2_b)
    ca = _mha(t2 + qpos, mem + pos, mem,
              ca_wqkv_ref[...], ca_bqkv_ref[...], ca_wo_ref[...], ca_bo,
              B=B, Tq=T, Tk=S)
    x = x + ca

    # --- feed forward (relu) ---
    t2 = _layer_norm(x, ln3_w, ln3_b)
    h = jnp.maximum(
        jnp.dot(t2, ff_w1_ref[...], preferred_element_type=jnp.float32)
        + ff_b1_ref[...], 0.0)
    ff = jnp.dot(h, ff_w2_ref[...], preferred_element_type=jnp.float32) + ff_b2

    out_ref[...] = x + ff


# --------------------------------- wrapper -----------------------------------

def _full_spec(a):
    idx = (0,) * a.ndim
    return pl.BlockSpec(a.shape, lambda *_: idx)


def _cost_estimate(B, T, S):
    D, F, H = D_MODEL, DIM_FF, NHEAD
    flops = int(
        2 * B * T * D * D * 4          # self-attn q/k/v/out projections
        + 4 * B * T * T * D            # self-attn scores + weighted values
        + 2 * B * T * D * D * 2        # cross-attn q + out projections
        + 2 * B * S * D * D * 2        # cross-attn k/v projections
        + 4 * B * T * S * D            # cross-attn scores + weighted values
        + 4 * B * T * D * F            # FFN
    )
    transcendentals = int(B * H * T * (T + S) + 2 * B * H * T + 3 * B * T)
    bytes_accessed = int(4 * (3 * B * T * D + 2 * B * S * D
                              + 2 * (4 * D * D + 4 * D)
                              + 2 * D * F + F + D + 9 * D))
    return pl.CostEstimate(flops=flops, transcendentals=transcendentals,
                           bytes_accessed=bytes_accessed)


def transformer_decoder_layer(tgt, memory, packed_params, pos=None, query_pos=None):
    """Pallas forward for TransformerDecoderLayer (eval mode, no masks).

    Layout is batch-first (B, T, D); PyTorch's MultiheadAttention default is
    (T, B, D) but the layer never mixes batch elements, so this is equivalent.
    """
    B, T, D = tgt.shape
    S = memory.shape[1]
    if query_pos is None:
        query_pos = jnp.zeros_like(tgt)
    if pos is None:
        pos = jnp.zeros_like(memory)

    # Sublane-pack the batch: kernel sees (B*T, D) / (B*S, D) row slabs.
    args = (
        tgt.reshape(B * T, D), memory.reshape(B * S, D),
        query_pos.reshape(B * T, D), pos.reshape(B * S, D),
    ) + tuple(packed_params)

    kernel = functools.partial(decoder_layer_kernel, B=B, T=T, S=S)
    out = pl.pallas_call(
        kernel,
        out_shape=jax.ShapeDtypeStruct((B * T, D), jnp.float32),
        in_specs=[_full_spec(a) for a in args],
        out_specs=pl.BlockSpec((B * T, D), lambda *_: (0, 0)),
        cost_estimate=_cost_estimate(B, T, S),
    )(*args)
    return out.reshape(B, T, D)


# ------------------------- parameters (PyTorch layout) ------------------------

def init_layer_params(key):
    """Parameters in PyTorch layout: Linear weight is (out_features, in_features)."""
    ks = jax.random.split(key, 20)
    D, F = D_MODEL, DIM_FF

    def w(k, o, i):
        return jax.random.normal(k, (o, i), jnp.float32) * 0.05

    def b(k, o):
        return jax.random.normal(k, (o,), jnp.float32) * 0.05

    return dict(
        sa_wq=w(ks[0], D, D), sa_bq=b(ks[1], D),
        sa_wk=w(ks[2], D, D), sa_bk=b(ks[3], D),
        sa_wv=w(ks[4], D, D), sa_bv=b(ks[5], D),
        sa_wo=w(ks[6], D, D), sa_bo=b(ks[7], D),
        ca_wq=w(ks[8], D, D), ca_bq=b(ks[9], D),
        ca_wk=w(ks[10], D, D), ca_bk=b(ks[11], D),
        ca_wv=w(ks[12], D, D), ca_bv=b(ks[13], D),
        ca_wo=w(ks[14], D, D), ca_bo=b(ks[15], D),
        ff_w1=w(ks[16], F, D), ff_b1=b(ks[17], F),
        ff_w2=w(ks[18], D, F), ff_b2=b(ks[19], D),
        ln1_w=jnp.ones((D,), jnp.float32), ln1_b=jnp.zeros((D,), jnp.float32),
        ln2_w=jnp.ones((D,), jnp.float32), ln2_b=jnp.zeros((D,), jnp.float32),
        ln3_w=jnp.ones((D,), jnp.float32), ln3_b=jnp.zeros((D,), jnp.float32),
    )


def _split_heads_in(w, bias):
    """PyTorch (D, D) projection -> per-head right-multiply weight (H, D, Kh)."""
    wt = jnp.transpose(w.reshape(NHEAD, HEAD_DIM, D_MODEL), (0, 2, 1))
    return wt, bias.reshape(NHEAD, 1, HEAD_DIM)


def pack_params(p):
    """Host-side pre-transpose / pack into the kernel's layout (feedback items 2/3/7)."""
    sa_wq, sa_bq = _split_heads_in(p['sa_wq'], p['sa_bq'])
    sa_wk, sa_bk = _split_heads_in(p['sa_wk'], p['sa_bk'])
    sa_wv, sa_bv = _split_heads_in(p['sa_wv'], p['sa_bv'])
    ca_wq, ca_bq = _split_heads_in(p['ca_wq'], p['ca_bq'])
    ca_wk, ca_bk = _split_heads_in(p['ca_wk'], p['ca_bk'])
    ca_wv, ca_bv = _split_heads_in(p['ca_wv'], p['ca_bv'])

    sa_wqkv = jnp.stack([sa_wq, sa_wk, sa_wv])     # (3, H, D, Kh)
    sa_bqkv = jnp.stack([sa_bq, sa_bk, sa_bv])     # (3, H, 1, Kh)
    ca_wqkv = jnp.stack([ca_wq, ca_wk, ca_wv])
    ca_bqkv = jnp.stack([ca_bq, ca_bk, ca_bv])

    # out = sum_h o_h @ Wo[:, h*Kh:(h+1)*Kh].T  ->  stacked (H, Kh, D)
    sa_wo = p['sa_wo'].T.reshape(NHEAD, HEAD_DIM, D_MODEL)
    ca_wo = p['ca_wo'].T.reshape(NHEAD, HEAD_DIM, D_MODEL)

    ff_w1 = p['ff_w1'].T                           # (D, F)
    ff_b1 = p['ff_b1'].reshape(1, DIM_FF)
    ff_w2 = p['ff_w2'].T                           # (F, D)

    vecs = jnp.stack([p['sa_bo'], p['ca_bo'], p['ff_b2'],
                      p['ln1_w'], p['ln1_b'], p['ln2_w'], p['ln2_b'],
                      p['ln3_w'], p['ln3_b']])     # (9, D)

    return (sa_wqkv, sa_bqkv, sa_wo, ca_wqkv, ca_bqkv, ca_wo,
            ff_w1, ff_b1, ff_w2, vecs)


# ------------------------------ pure-JAX reference ----------------------------

def _ref_mha(q_in, k_in, v_in, wq, bq, wk, bk, wv, bv, wo, bo):
    q = q_in @ wq.T + bq
    k = k_in @ wk.T + bk
    v = v_in @ wv.T + bv
    B, T, _ = q.shape
    S = k.shape[1]
    qh = q.reshape(B, T, NHEAD, HEAD_DIM).transpose(0, 2, 1, 3) / math.sqrt(HEAD_DIM)
    kh = k.reshape(B, S, NHEAD, HEAD_DIM).transpose(0, 2, 1, 3)
    vh = v.reshape(B, S, NHEAD, HEAD_DIM).transpose(0, 2, 1, 3)
    s = jnp.einsum('bhtd,bhsd->bhts', qh, kh)
    p = jax.nn.softmax(s, axis=-1)
    o = jnp.einsum('bhts,bhsd->bhtd', p, vh).transpose(0, 2, 1, 3).reshape(B, T, D_MODEL)
    return o @ wo.T + bo


def _ref_layer_norm(x, w, b):
    mu = jnp.mean(x, axis=-1, keepdims=True)
    var = jnp.mean((x - mu) ** 2, axis=-1, keepdims=True)
    return (x - mu) * jax.lax.rsqrt(var + LN_EPS) * w + b


def _ref_decoder_layer(tgt, memory, p, pos, query_pos):
    t2 = _ref_layer_norm(tgt, p['ln1_w'], p['ln1_b'])
    q = t2 + query_pos
    sa = _ref_mha(q, q, t2, p['sa_wq'], p['sa_bq'], p['sa_wk'], p['sa_bk'],
                  p['sa_wv'], p['sa_bv'], p['sa_wo'], p['sa_bo'])
    x = tgt + sa
    t2 = _ref_layer_norm(x, p['ln2_w'], p['ln2_b'])
    ca = _ref_mha(t2 + query_pos, memory + pos, memory,
                  p['ca_wq'], p['ca_bq'], p['ca_wk'], p['ca_bk'],
                  p['ca_wv'], p['ca_bv'], p['ca_wo'], p['ca_bo'])
    x = x + ca
    t2 = _ref_layer_norm(x, p['ln3_w'], p['ln3_b'])
    h = jnp.maximum(t2 @ p['ff_w1'].T + p['ff_b1'], 0.0)
    return x + (h @ p['ff_w2'].T + p['ff_b2'])


# ---------------------------------- main --------------------------------------

if __name__ == "__main__":
    key = jax.random.PRNGKey(0)
    k_tgt, k_mem, k_pos, k_qpos, k_params = jax.random.split(key, 5)

    B, T, S = 2, 8, 16  # batch, num queries, memory length
    tgt = jax.random.normal(k_tgt, (B, T, D_MODEL), jnp.float32)
    memory = jax.random.normal(k_mem, (B, S, D_MODEL), jnp.float32)
    pos = jax.random.normal(k_pos, (B, S, D_MODEL), jnp.float32)
    query_pos = jax.random.normal(k_qpos, (B, T, D_MODEL), jnp.float32)

    params = init_layer_params(k_params)
    packed = pack_params(params)

    out = transformer_decoder_layer(tgt, memory, packed, pos=pos, query_pos=query_pos)
    out = jax.block_until_ready(out)

    ref = _ref_decoder_layer(tgt, memory, params, pos, query_pos)
    assert out.shape == (B, T, D_MODEL)
    err = float(jnp.max(jnp.abs(out - ref)))
    # The 5e-3 slack is solely for the EUP approximate-reciprocal softmax
    # normalisation (performance feedback); with exact division the kernel
    # agrees with the f32 reference to ~1e-5.
    assert err < 5e-3, f"mismatch vs pure-JAX reference: {err}"

    print("KERNEL_OK")
</pallas_src>

<mosaic_0001>
module attributes {stable_mosaic.version = 11 : i64} {
  func.func @decoder_layer_kernel(%arg0: memref<16x32xf32, #tpu.memory_space<vmem>>, %arg1: memref<32x32xf32, #tpu.memory_space<vmem>>, %arg2: memref<16x32xf32, #tpu.memory_space<vmem>>, %arg3: memref<32x32xf32, #tpu.memory_space<vmem>>, %arg4: memref<3x4x32x8xf32, #tpu.memory_space<vmem>>, %arg5: memref<3x4x1x8xf32, #tpu.memory_space<vmem>>, %arg6: memref<4x8x32xf32, #tpu.memory_space<vmem>>, %arg7: memref<3x4x32x8xf32, #tpu.memory_space<vmem>>, %arg8: memref<3x4x1x8xf32, #tpu.memory_space<vmem>>, %arg9: memref<4x8x32xf32, #tpu.memory_space<vmem>>, %arg10: memref<32x64xf32, #tpu.memory_space<vmem>>, %arg11: memref<1x64xf32, #tpu.memory_space<vmem>>, %arg12: memref<64x32xf32, #tpu.memory_space<vmem>>, %arg13: memref<9x32xf32, #tpu.memory_space<vmem>>, %arg14: memref<16x32xf32, #tpu.memory_space<vmem>>) attributes {dimension_semantics = [], scalar_prefetch = 0 : i64, scratch_operands = 0 : i64, tpu.core_type = #tpu.core_type<tc>} {
    %c0 = arith.constant 0 : index
    %c0_0 = arith.constant 0 : index
    %0 = vector.load %arg0[%c0, %c0_0] : memref<16x32xf32, #tpu.memory_space<vmem>>, vector<16x32xf32>
    %c0_1 = arith.constant 0 : index
    %c0_2 = arith.constant 0 : index
    %1 = vector.load %arg1[%c0_1, %c0_2] : memref<32x32xf32, #tpu.memory_space<vmem>>, vector<32x32xf32>
    %c0_3 = arith.constant 0 : index
    %c0_4 = arith.constant 0 : index
    %2 = vector.load %arg2[%c0_3, %c0_4] : memref<16x32xf32, #tpu.memory_space<vmem>>, vector<16x32xf32>
    %c0_5 = arith.constant 0 : index
    %c0_6 = arith.constant 0 : index
    %3 = vector.load %arg3[%c0_5, %c0_6] : memref<32x32xf32, #tpu.memory_space<vmem>>, vector<32x32xf32>
    %c0_7 = arith.constant 0 : index
    %c0_8 = arith.constant 0 : index
    %4 = vector.load %arg13[%c0_7, %c0_8] : memref<9x32xf32, #tpu.memory_space<vmem>>, vector<9x32xf32>
    %5 = vector.extract_strided_slice %4 {offsets = [0, 0], sizes = [1, 32], strides = [1, 1]} : vector<9x32xf32> to vector<1x32xf32>
    %6 = vector.extract_strided_slice %4 {offsets = [1, 0], sizes = [1, 32], strides = [1, 1]} : vector<9x32xf32> to vector<1x32xf32>
    %7 = vector.extract_strided_slice %4 {offsets = [2, 0], sizes = [1, 32], strides = [1, 1]} : vector<9x32xf32> to vector<1x32xf32>
    %8 = vector.extract_strided_slice %4 {offsets = [3, 0], sizes = [1, 32], strides = [1, 1]} : vector<9x32xf32> to vector<1x32xf32>
    %9 = vector.extract_strided_slice %4 {offsets = [4, 0], sizes = [1, 32], strides = [1, 1]} : vector<9x32xf32> to vector<1x32xf32>
    %10 = vector.extract_strided_slice %4 {offsets = [5, 0], sizes = [1, 32], strides = [1, 1]} : vector<9x32xf32> to vector<1x32xf32>
    %11 = vector.extract_strided_slice %4 {offsets = [6, 0], sizes = [1, 32], strides = [1, 1]} : vector<9x32xf32> to vector<1x32xf32>
    %12 = vector.extract_strided_slice %4 {offsets = [7, 0], sizes = [1, 32], strides = [1, 1]} : vector<9x32xf32> to vector<1x32xf32>
    %13 = vector.extract_strided_slice %4 {offsets = [8, 0], sizes = [1, 32], strides = [1, 1]} : vector<9x32xf32> to vector<1x32xf32>
    %cst = arith.constant dense<0.000000e+00> : vector<16xf32>
    %14 = vector.multi_reduction <add>, %0, %cst [1] : vector<16x32xf32> to vector<16xf32>
    %15 = vector.shape_cast %14 : vector<16xf32> to vector<16x1xf32>
    %cst_9 = arith.constant 3.200000e+01 : f32
    %16 = vector.broadcast %cst_9 : f32 to vector<16x1xf32>
    %17 = arith.divf %15, %16 : vector<16x1xf32>
    %18 = vector.broadcast %17 : vector<16x1xf32> to vector<16x32xf32>
    %19 = arith.subf %0, %18 : vector<16x32xf32>
    %20 = arith.mulf %19, %19 : vector<16x32xf32>
    %cst_10 = arith.constant dense<0.000000e+00> : vector<16xf32>
    %21 = vector.multi_reduction <add>, %20, %cst_10 [1] : vector<16x32xf32> to vector<16xf32>
    %22 = vector.shape_cast %21 : vector<16xf32> to vector<16x1xf32>
    %cst_11 = arith.constant 3.200000e+01 : f32
    %23 = vector.broadcast %cst_11 : f32 to vector<16x1xf32>
    %24 = arith.divf %22, %23 : vector<16x1xf32>
    %25 = vector.broadcast %17 : vector<16x1xf32> to vector<16x32xf32>
    %26 = arith.subf %0, %25 : vector<16x32xf32>
    %cst_12 = arith.constant 9.99999974E-6 : f32
    %27 = vector.broadcast %cst_12 : f32 to vector<16x1xf32>
    %28 = arith.addf %24, %27 : vector<16x1xf32>
    %29 = math.rsqrt %28 : vector<16x1xf32>
    %30 = vector.broadcast %29 : vector<16x1xf32> to vector<16x32xf32>
    %31 = arith.mulf %26, %30 : vector<16x32xf32>
    %32 = vector.broadcast %8 : vector<1x32xf32> to vector<16x32xf32>
    %33 = arith.mulf %31, %32 : vector<16x32xf32>
    %34 = vector.broadcast %9 : vector<1x32xf32> to vector<16x32xf32>
    %35 = arith.addf %33, %34 : vector<16x32xf32>
    %36 = arith.addf %35, %2 : vector<16x32xf32>
    %c0_13 = arith.constant 0 : index
    %c0_14 = arith.constant 0 : index
    %c0_15 = arith.constant 0 : index
    %c0_16 = arith.constant 0 : index
    %37 = vector.load %arg4[%c0_13, %c0_14, %c0_15, %c0_16] : memref<3x4x32x8xf32, #tpu.memory_space<vmem>>, vector<3x4x32x8xf32>
    %c0_17 = arith.constant 0 : index
    %c0_18 = arith.constant 0 : index
    %c0_19 = arith.constant 0 : index
    %c0_20 = arith.constant 0 : index
    %38 = vector.load %arg5[%c0_17, %c0_18, %c0_19, %c0_20] : memref<3x4x1x8xf32, #tpu.memory_space<vmem>>, vector<3x4x1x8xf32>
    %c0_21 = arith.constant 0 : index
    %c0_22 = arith.constant 0 : index
    %c0_23 = arith.constant 0 : index
    %39 = vector.load %arg6[%c0_21, %c0_22, %c0_23] : memref<4x8x32xf32, #tpu.memory_space<vmem>>, vector<4x8x32xf32>
    %40 = vector.extract_strided_slice %37 {offsets = [0, 0, 0, 0], sizes = [1, 1, 32, 8], strides = [1, 1, 1, 1]} : vector<3x4x32x8xf32> to vector<1x1x32x8xf32>
    %41 = vector.shape_cast %40 : vector<1x1x32x8xf32> to vector<32x8xf32>
    %cst_24 = arith.constant dense<0.000000e+00> : vector<16x8xf32>
    %42 = tpu.matmul %36, %41, %cst_24 {dimension_numbers = #tpu.dot_dimension_numbers<[1], [0], [0], [1], [0, 0, 1, 1], [], []>} : vector<16x32xf32>, vector<32x8xf32>, vector<16x8xf32> -> vector<16x8xf32>
    %43 = vector.extract_strided_slice %38 {offsets = [0, 0, 0, 0], sizes = [1, 1, 1, 8], strides = [1, 1, 1, 1]} : vector<3x4x1x8xf32> to vector<1x1x1x8xf32>
    %44 = vector.shape_cast %43 : vector<1x1x1x8xf32> to vector<1x8xf32>
    %45 = vector.broadcast %44 : vector<1x8xf32> to vector<16x8xf32>
    %46 = arith.addf %42, %45 : vector<16x8xf32>
    %cst_25 = arith.constant 0.353553385 : f32
    %47 = vector.broadcast %cst_25 : f32 to vector<16x8xf32>
    %48 = arith.mulf %46, %47 : vector<16x8xf32>
    %49 = vector.extract_strided_slice %37 {offsets = [1, 0, 0, 0], sizes = [1, 1, 32, 8], strides = [1, 1, 1, 1]} : vector<3x4x32x8xf32> to vector<1x1x32x8xf32>
    %50 = vector.shape_cast %49 : vector<1x1x32x8xf32> to vector<32x8xf32>
    %cst_26 = arith.constant dense<0.000000e+00> : vector<16x8xf32>
    %51 = tpu.matmul %36, %50, %cst_26 {dimension_numbers = #tpu.dot_dimension_numbers<[1], [0], [0], [1], [0, 0, 1, 1], [], []>} : vector<16x32xf32>, vector<32x8xf32>, vector<16x8xf32> -> vector<16x8xf32>
    %52 = vector.extract_strided_slice %38 {offsets = [1, 0, 0, 0], sizes = [1, 1, 1, 8], strides = [1, 1, 1, 1]} : vector<3x4x1x8xf32> to vector<1x1x1x8xf32>
    %53 = vector.shape_cast %52 : vector<1x1x1x8xf32> to vector<1x8xf32>
    %54 = vector.broadcast %53 : vector<1x8xf32> to vector<16x8xf32>
    %55 = arith.addf %51, %54 : vector<16x8xf32>
    %56 = vector.extract_strided_slice %37 {offsets = [2, 0, 0, 0], sizes = [1, 1, 32, 8], strides = [1, 1, 1, 1]} : vector<3x4x32x8xf32> to vector<1x1x32x8xf32>
    %57 = vector.shape_cast %56 : vector<1x1x32x8xf32> to vector<32x8xf32>
    %cst_27 = arith.constant dense<0.000000e+00> : vector<16x8xf32>
    %58 = tpu.matmul %35, %57, %cst_27 {dimension_numbers = #tpu.dot_dimension_numbers<[1], [0], [0], [1], [0, 0, 1, 1], [], []>} : vector<16x32xf32>, vector<32x8xf32>, vector<16x8xf32> -> vector<16x8xf32>
    %59 = vector.extract_strided_slice %38 {offsets = [2, 0, 0, 0], sizes = [1, 1, 1, 8], strides = [1, 1, 1, 1]} : vector<3x4x1x8xf32> to vector<1x1x1x8xf32>
    %60 = vector.shape_cast %59 : vector<1x1x1x8xf32> to vector<1x8xf32>
    %61 = vector.broadcast %60 : vector<1x8xf32> to vector<16x8xf32>
    %62 = arith.addf %58, %61 : vector<16x8xf32>
    %63 = vector.extract_strided_slice %37 {offsets = [0, 1, 0, 0], sizes = [1, 1, 32, 8], strides = [1, 1, 1, 1]} : vector<3x4x32x8xf32> to vector<1x1x32x8xf32>
    %64 = vector.shape_cast %63 : vector<1x1x32x8xf32> to vector<32x8xf32>
    %cst_28 = arith.constant dense<0.000000e+00> : vector<16x8xf32>
    %65 = tpu.matmul %36, %64, %cst_28 {dimension_numbers = #tpu.dot_dimension_numbers<[1], [0], [0], [1], [0, 0, 1, 1], [], []>} : vector<16x32xf32>, vector<32x8xf32>, vector<16x8xf32> -> vector<16x8xf32>
    %66 = vector.extract_strided_slice %38 {offsets = [0, 1, 0, 0], sizes = [1, 1, 1, 8], strides = [1, 1, 1, 1]} : vector<3x4x1x8xf32> to vector<1x1x1x8xf32>
    %67 = vector.shape_cast %66 : vector<1x1x1x8xf32> to vector<1x8xf32>
    %68 = vector.broadcast %67 : vector<1x8xf32> to vector<16x8xf32>
    %69 = arith.addf %65, %68 : vector<16x8xf32>
    %cst_29 = arith.constant 0.353553385 : f32
    %70 = vector.broadcast %cst_29 : f32 to vector<16x8xf32>
    %71 = arith.mulf %69, %70 : vector<16x8xf32>
    %72 = vector.extract_strided_slice %37 {offsets = [1, 1, 0, 0], sizes = [1, 1, 32, 8], strides = [1, 1, 1, 1]} : vector<3x4x32x8xf32> to vector<1x1x32x8xf32>
    %73 = vector.shape_cast %72 : vector<1x1x32x8xf32> to vector<32x8xf32>
    %cst_30 = arith.constant dense<0.000000e+00> : vector<16x8xf32>
    %74 = tpu.matmul %36, %73, %cst_30 {dimension_numbers = #tpu.dot_dimension_numbers<[1], [0], [0], [1], [0, 0, 1, 1], [], []>} : vector<16x32xf32>, vector<32x8xf32>, vector<16x8xf32> -> vector<16x8xf32>
    %75 = vector.extract_strided_slice %38 {offsets = [1, 1, 0, 0], sizes = [1, 1, 1, 8], strides = [1, 1, 1, 1]} : vector<3x4x1x8xf32> to vector<1x1x1x8xf32>
    %76 = vector.shape_cast %75 : vector<1x1x1x8xf32> to vector<1x8xf32>
    %77 = vector.broadcast %76 : vector<1x8xf32> to vector<16x8xf32>
    %78 = arith.addf %74, %77 : vector<16x8xf32>
    %79 = vector.extract_strided_slice %37 {offsets = [2, 1, 0, 0], sizes = [1, 1, 32, 8], strides = [1, 1, 1, 1]} : vector<3x4x32x8xf32> to vector<1x1x32x8xf32>
    %80 = vector.shape_cast %79 : vector<1x1x32x8xf32> to vector<32x8xf32>
    %cst_31 = arith.constant dense<0.000000e+00> : vector<16x8xf32>
    %81 = tpu.matmul %35, %80, %cst_31 {dimension_numbers = #tpu.dot_dimension_numbers<[1], [0], [0], [1], [0, 0, 1, 1], [], []>} : vector<16x32xf32>, vector<32x8xf32>, vector<16x8xf32> -> vector<16x8xf32>
    %82 = vector.extract_strided_slice %38 {offsets = [2, 1, 0, 0], sizes = [1, 1, 1, 8], strides = [1, 1, 1, 1]} : vector<3x4x1x8xf32> to vector<1x1x1x8xf32>
    %83 = vector.shape_cast %82 : vector<1x1x1x8xf32> to vector<1x8xf32>
    %84 = vector.broadcast %83 : vector<1x8xf32> to vector<16x8xf32>
    %85 = arith.addf %81, %84 : vector<16x8xf32>
    %86 = vector.extract_strided_slice %37 {offsets = [0, 2, 0, 0], sizes = [1, 1, 32, 8], strides = [1, 1, 1, 1]} : vector<3x4x32x8xf32> to vector<1x1x32x8xf32>
    %87 = vector.shape_cast %86 : vector<1x1x32x8xf32> to vector<32x8xf32>
    %cst_32 = arith.constant dense<0.000000e+00> : vector<16x8xf32>
    %88 = tpu.matmul %36, %87, %cst_32 {dimension_numbers = #tpu.dot_dimension_numbers<[1], [0], [0], [1], [0, 0, 1, 1], [], []>} : vector<16x32xf32>, vector<32x8xf32>, vector<16x8xf32> -> vector<16x8xf32>
    %89 = vector.extract_strided_slice %38 {offsets = [0, 2, 0, 0], sizes = [1, 1, 1, 8], strides = [1, 1, 1, 1]} : vector<3x4x1x8xf32> to vector<1x1x1x8xf32>
    %90 = vector.shape_cast %89 : vector<1x1x1x8xf32> to vector<1x8xf32>
    %91 = vector.broadcast %90 : vector<1x8xf32> to vector<16x8xf32>
    %92 = arith.addf %88, %91 : vector<16x8xf32>
    %cst_33 = arith.constant 0.353553385 : f32
    %93 = vector.broadcast %cst_33 : f32 to vector<16x8xf32>
    %94 = arith.mulf %92, %93 : vector<16x8xf32>
    %95 = vector.extract_strided_slice %37 {offsets = [1, 2, 0, 0], sizes = [1, 1, 32, 8], strides = [1, 1, 1, 1]} : vector<3x4x32x8xf32> to vector<1x1x32x8xf32>
    %96 = vector.shape_cast %95 : vector<1x1x32x8xf32> to vector<32x8xf32>
    %cst_34 = arith.constant dense<0.000000e+00> : vector<16x8xf32>
    %97 = tpu.matmul %36, %96, %cst_34 {dimension_numbers = #tpu.dot_dimension_numbers<[1], [0], [0], [1], [0, 0, 1, 1], [], []>} : vector<16x32xf32>, vector<32x8xf32>, vector<16x8xf32> -> vector<16x8xf32>
    %98 = vector.extract_strided_slice %38 {offsets = [1, 2, 0, 0], sizes = [1, 1, 1, 8], strides = [1, 1, 1, 1]} : vector<3x4x1x8xf32> to vector<1x1x1x8xf32>
    %99 = vector.shape_cast %98 : vector<1x1x1x8xf32> to vector<1x8xf32>
    %100 = vector.broadcast %99 : vector<1x8xf32> to vector<16x8xf32>
    %101 = arith.addf %97, %100 : vector<16x8xf32>
    %102 = vector.extract_strided_slice %37 {offsets = [2, 2, 0, 0], sizes = [1, 1, 32, 8], strides = [1, 1, 1, 1]} : vector<3x4x32x8xf32> to vector<1x1x32x8xf32>
    %103 = vector.shape_cast %102 : vector<1x1x32x8xf32> to vector<32x8xf32>
    %cst_35 = arith.constant dense<0.000000e+00> : vector<16x8xf32>
    %104 = tpu.matmul %35, %103, %cst_35 {dimension_numbers = #tpu.dot_dimension_numbers<[1], [0], [0], [1], [0, 0, 1, 1], [], []>} : vector<16x32xf32>, vector<32x8xf32>, vector<16x8xf32> -> vector<16x8xf32>
    %105 = vector.extract_strided_slice %38 {offsets = [2, 2, 0, 0], sizes = [1, 1, 1, 8], strides = [1, 1, 1, 1]} : vector<3x4x1x8xf32> to vector<1x1x1x8xf32>
    %106 = vector.shape_cast %105 : vector<1x1x1x8xf32> to vector<1x8xf32>
    %107 = vector.broadcast %106 : vector<1x8xf32> to vector<16x8xf32>
    %108 = arith.addf %104, %107 : vector<16x8xf32>
    %109 = vector.extract_strided_slice %37 {offsets = [0, 3, 0, 0], sizes = [1, 1, 32, 8], strides = [1, 1, 1, 1]} : vector<3x4x32x8xf32> to vector<1x1x32x8xf32>
    %110 = vector.shape_cast %109 : vector<1x1x32x8xf32> to vector<32x8xf32>
    %cst_36 = arith.constant dense<0.000000e+00> : vector<16x8xf32>
    %111 = tpu.matmul %36, %110, %cst_36 {dimension_numbers = #tpu.dot_dimension_numbers<[1], [0], [0], [1], [0, 0, 1, 1], [], []>} : vector<16x32xf32>, vector<32x8xf32>, vector<16x8xf32> -> vector<16x8xf32>
    %112 = vector.extract_strided_slice %38 {offsets = [0, 3, 0, 0], sizes = [1, 1, 1, 8], strides = [1, 1, 1, 1]} : vector<3x4x1x8xf32> to vector<1x1x1x8xf32>
    %113 = vector.shape_cast %112 : vector<1x1x1x8xf32> to vector<1x8xf32>
    %114 = vector.broadcast %113 : vector<1x8xf32> to vector<16x8xf32>
    %115 = arith.addf %111, %114 : vector<16x8xf32>
    %cst_37 = arith.constant 0.353553385 : f32
    %116 = vector.broadcast %cst_37 : f32 to vector<16x8xf32>
    %117 = arith.mulf %115, %116 : vector<16x8xf32>
    %118 = vector.extract_strided_slice %37 {offsets = [1, 3, 0, 0], sizes = [1, 1, 32, 8], strides = [1, 1, 1, 1]} : vector<3x4x32x8xf32> to vector<1x1x32x8xf32>
    %119 = vector.shape_cast %118 : vector<1x1x32x8xf32> to vector<32x8xf32>
    %cst_38 = arith.constant dense<0.000000e+00> : vector<16x8xf32>
    %120 = tpu.matmul %36, %119, %cst_38 {dimension_numbers = #tpu.dot_dimension_numbers<[1], [0], [0], [1], [0, 0, 1, 1], [], []>} : vector<16x32xf32>, vector<32x8xf32>, vector<16x8xf32> -> vector<16x8xf32>
    %121 = vector.extract_strided_slice %38 {offsets = [1, 3, 0, 0], sizes = [1, 1, 1, 8], strides = [1, 1, 1, 1]} : vector<3x4x1x8xf32> to vector<1x1x1x8xf32>
    %122 = vector.shape_cast %121 : vector<1x1x1x8xf32> to vector<1x8xf32>
    %123 = vector.broadcast %122 : vector<1x8xf32> to vector<16x8xf32>
    %124 = arith.addf %120, %123 : vector<16x8xf32>
    %125 = vector.extract_strided_slice %37 {offsets = [2, 3, 0, 0], sizes = [1, 1, 32, 8], strides = [1, 1, 1, 1]} : vector<3x4x32x8xf32> to vector<1x1x32x8xf32>
    %126 = vector.shape_cast %125 : vector<1x1x32x8xf32> to vector<32x8xf32>
    %cst_39 = arith.constant dense<0.000000e+00> : vector<16x8xf32>
    %127 = tpu.matmul %35, %126, %cst_39 {dimension_numbers = #tpu.dot_dimension_numbers<[1], [0], [0], [1], [0, 0, 1, 1], [], []>} : vector<16x32xf32>, vector<32x8xf32>, vector<16x8xf32> -> vector<16x8xf32>
    %128 = vector.extract_strided_slice %38 {offsets = [2, 3, 0, 0], sizes = [1, 1, 1, 8], strides = [1, 1, 1, 1]} : vector<3x4x1x8xf32> to vector<1x1x1x8xf32>
    %129 = vector.shape_cast %128 : vector<1x1x1x8xf32> to vector<1x8xf32>
    %130 = vector.broadcast %129 : vector<1x8xf32> to vector<16x8xf32>
    %131 = arith.addf %127, %130 : vector<16x8xf32>
    %132 = vector.extract_strided_slice %48 {offsets = [0, 0], sizes = [8, 8], strides = [1, 1]} : vector<16x8xf32> to vector<8x8xf32>
    %133 = vector.extract_strided_slice %55 {offsets = [0, 0], sizes = [8, 8], strides = [1, 1]} : vector<16x8xf32> to vector<8x8xf32>
    %134 = tpu.transpose %133, [1, 0] : vector<8x8xf32> -> vector<8x8xf32>
    %cst_40 = arith.constant dense<0.000000e+00> : vector<8x8xf32>
    %135 = tpu.matmul %132, %134, %cst_40 {dimension_numbers = #tpu.dot_dimension_numbers<[1], [0], [0], [1], [0, 0, 1, 1], [], []>} : vector<8x8xf32>, vector<8x8xf32>, vector<8x8xf32> -> vector<8x8xf32>
    %cst_41 = arith.constant dense<0xFF800000> : vector<8xf32>
    %136 = vector.multi_reduction <maximumf>, %135, %cst_41 [1] : vector<8x8xf32> to vector<8xf32>
    %137 = vector.shape_cast %136 : vector<8xf32> to vector<8x1xf32>
    %138 = vector.broadcast %137 : vector<8x1xf32> to vector<8x8xf32>
    %139 = arith.subf %135, %138 : vector<8x8xf32>
    %140 = math.exp %139 : vector<8x8xf32>
    %cst_42 = arith.constant dense<0.000000e+00> : vector<8xf32>
    %141 = vector.multi_reduction <add>, %140, %cst_42 [1] : vector<8x8xf32> to vector<8xf32>
    %142 = vector.shape_cast %141 : vector<8xf32> to vector<8x1xf32>
    %143 = tpu.reciprocal %142 {approx = true} : vector<8x1xf32> -> vector<8x1xf32>
    %144 = vector.broadcast %143 : vector<8x1xf32> to vector<8x8xf32>
    %145 = arith.mulf %140, %144 : vector<8x8xf32>
    %146 = vector.extract_strided_slice %62 {offsets = [0, 0], sizes = [8, 8], strides = [1, 1]} : vector<16x8xf32> to vector<8x8xf32>
    %cst_43 = arith.constant dense<0.000000e+00> : vector<8x8xf32>
    %147 = tpu.matmul %145, %146, %cst_43 {dimension_numbers = #tpu.dot_dimension_numbers<[1], [0], [0], [1], [0, 0, 1, 1], [], []>} : vector<8x8xf32>, vector<8x8xf32>, vector<8x8xf32> -> vector<8x8xf32>
    %148 = vector.extract_strided_slice %39 {offsets = [0, 0, 0], sizes = [1, 8, 32], strides = [1, 1, 1]} : vector<4x8x32xf32> to vector<1x8x32xf32>
    %149 = vector.shape_cast %148 : vector<1x8x32xf32> to vector<8x32xf32>
    %cst_44 = arith.constant dense<0.000000e+00> : vector<8x32xf32>
    %150 = tpu.matmul %147, %149, %cst_44 {dimension_numbers = #tpu.dot_dimension_numbers<[1], [0], [0], [1], [0, 0, 1, 1], [], []>} : vector<8x8xf32>, vector<8x32xf32>, vector<8x32xf32> -> vector<8x32xf32>
    %151 = vector.extract_strided_slice %71 {offsets = [0, 0], sizes = [8, 8], strides = [1, 1]} : vector<16x8xf32> to vector<8x8xf32>
    %152 = vector.extract_strided_slice %78 {offsets = [0, 0], sizes = [8, 8], strides = [1, 1]} : vector<16x8xf32> to vector<8x8xf32>
    %153 = tpu.transpose %152, [1, 0] : vector<8x8xf32> -> vector<8x8xf32>
    %cst_45 = arith.constant dense<0.000000e+00> : vector<8x8xf32>
    %154 = tpu.matmul %151, %153, %cst_45 {dimension_numbers = #tpu.dot_dimension_numbers<[1], [0], [0], [1], [0, 0, 1, 1], [], []>} : vector<8x8xf32>, vector<8x8xf32>, vector<8x8xf32> -> vector<8x8xf32>
    %cst_46 = arith.constant dense<0xFF800000> : vector<8xf32>
    %155 = vector.multi_reduction <maximumf>, %154, %cst_46 [1] : vector<8x8xf32> to vector<8xf32>
    %156 = vector.shape_cast %155 : vector<8xf32> to vector<8x1xf32>
    %157 = vector.broadcast %156 : vector<8x1xf32> to vector<8x8xf32>
    %158 = arith.subf %154, %157 : vector<8x8xf32>
    %159 = math.exp %158 : vector<8x8xf32>
    %cst_47 = arith.constant dense<0.000000e+00> : vector<8xf32>
    %160 = vector.multi_reduction <add>, %159, %cst_47 [1] : vector<8x8xf32> to vector<8xf32>
    %161 = vector.shape_cast %160 : vector<8xf32> to vector<8x1xf32>
    %162 = tpu.reciprocal %161 {approx = true} : vector<8x1xf32> -> vector<8x1xf32>
    %163 = vector.broadcast %162 : vector<8x1xf32> to vector<8x8xf32>
    %164 = arith.mulf %159, %163 : vector<8x8xf32>
    %165 = vector.extract_strided_slice %85 {offsets = [0, 0], sizes = [8, 8], strides = [1, 1]} : vector<16x8xf32> to vector<8x8xf32>
    %cst_48 = arith.constant dense<0.000000e+00> : vector<8x8xf32>
    %166 = tpu.matmul %164, %165, %cst_48 {dimension_numbers = #tpu.dot_dimension_numbers<[1], [0], [0], [1], [0, 0, 1, 1], [], []>} : vector<8x8xf32>, vector<8x8xf32>, vector<8x8xf32> -> vector<8x8xf32>
    %167 = vector.extract_strided_slice %39 {offsets = [1, 0, 0], sizes = [1, 8, 32], strides = [1, 1, 1]} : vector<4x8x32xf32> to vector<1x8x32xf32>
    %168 = vector.shape_cast %167 : vector<1x8x32xf32> to vector<8x32xf32>
    %cst_49 = arith.constant dense<0.000000e+00> : vector<8x32xf32>
    %169 = tpu.matmul %166, %168, %cst_49 {dimension_numbers = #tpu.dot_dimension_numbers<[1], [0], [0], [1], [0, 0, 1, 1], [], []>} : vector<8x8xf32>, vector<8x32xf32>, vector<8x32xf32> -> vector<8x32xf32>
    %170 = arith.addf %150, %169 : vector<8x32xf32>
    %171 = vector.extract_strided_slice %94 {offsets = [0, 0], sizes = [8, 8], strides = [1, 1]} : vector<16x8xf32> to vector<8x8xf32>
    %172 = vector.extract_strided_slice %101 {offsets = [0, 0], sizes = [8, 8], strides = [1, 1]} : vector<16x8xf32> to vector<8x8xf32>
    %173 = tpu.transpose %172, [1, 0] : vector<8x8xf32> -> vector<8x8xf32>
    %cst_50 = arith.constant dense<0.000000e+00> : vector<8x8xf32>
    %174 = tpu.matmul %171, %173, %cst_50 {dimension_numbers = #tpu.dot_dimension_numbers<[1], [0], [0], [1], [0, 0, 1, 1], [], []>} : vector<8x8xf32>, vector<8x8xf32>, vector<8x8xf32> -> vector<8x8xf32>
    %cst_51 = arith.constant dense<0xFF800000> : vector<8xf32>
    %175 = vector.multi_reduction <maximumf>, %174, %cst_51 [1] : vector<8x8xf32> to vector<8xf32>
    %176 = vector.shape_cast %175 : vector<8xf32> to vector<8x1xf32>
    %177 = vector.broadcast %176 : vector<8x1xf32> to vector<8x8xf32>
    %178 = arith.subf %174, %177 : vector<8x8xf32>
    %179 = math.exp %178 : vector<8x8xf32>
    %cst_52 = arith.constant dense<0.000000e+00> : vector<8xf32>
    %180 = vector.multi_reduction <add>, %179, %cst_52 [1] : vector<8x8xf32> to vector<8xf32>
    %181 = vector.shape_cast %180 : vector<8xf32> to vector<8x1xf32>
    %182 = tpu.reciprocal %181 {approx = true} : vector<8x1xf32> -> vector<8x1xf32>
    %183 = vector.broadcast %182 : vector<8x1xf32> to vector<8x8xf32>
    %184 = arith.mulf %179, %183 : vector<8x8xf32>
    %185 = vector.extract_strided_slice %108 {offsets = [0, 0], sizes = [8, 8], strides = [1, 1]} : vector<16x8xf32> to vector<8x8xf32>
    %cst_53 = arith.constant dense<0.000000e+00> : vector<8x8xf32>
    %186 = tpu.matmul %184, %185, %cst_53 {dimension_numbers = #tpu.dot_dimension_numbers<[1], [0], [0], [1], [0, 0, 1, 1], [], []>} : vector<8x8xf32>, vector<8x8xf32>, vector<8x8xf32> -> vector<8x8xf32>
    %187 = vector.extract_strided_slice %39 {offsets = [2, 0, 0], sizes = [1, 8, 32], strides = [1, 1, 1]} : vector<4x8x32xf32> to vector<1x8x32xf32>
    %188 = vector.shape_cast %187 : vector<1x8x32xf32> to vector<8x32xf32>
    %cst_54 = arith.constant dense<0.000000e+00> : vector<8x32xf32>
    %189 = tpu.matmul %186, %188, %cst_54 {dimension_numbers = #tpu.dot_dimension_numbers<[1], [0], [0], [1], [0, 0, 1, 1], [], []>} : vector<8x8xf32>, vector<8x32xf32>, vector<8x32xf32> -> vector<8x32xf32>
    %190 = arith.addf %170, %189 : vector<8x32xf32>
    %191 = vector.extract_strided_slice %117 {offsets = [0, 0], sizes = [8, 8], strides = [1, 1]} : vector<16x8xf32> to vector<8x8xf32>
    %192 = vector.extract_strided_slice %124 {offsets = [0, 0], sizes = [8, 8], strides = [1, 1]} : vector<16x8xf32> to vector<8x8xf32>
    %193 = tpu.transpose %192, [1, 0] : vector<8x8xf32> -> vector<8x8xf32>
    %cst_55 = arith.constant dense<0.000000e+00> : vector<8x8xf32>
    %194 = tpu.matmul %191, %193, %cst_55 {dimension_numbers = #tpu.dot_dimension_numbers<[1], [0], [0], [1], [0, 0, 1, 1], [], []>} : vector<8x8xf32>, vector<8x8xf32>, vector<8x8xf32> -> vector<8x8xf32>
    %cst_56 = arith.constant dense<0xFF800000> : vector<8xf32>
    %195 = vector.multi_reduction <maximumf>, %194, %cst_56 [1] : vector<8x8xf32> to vector<8xf32>
    %196 = vector.shape_cast %195 : vector<8xf32> to vector<8x1xf32>
    %197 = vector.broadcast %196 : vector<8x1xf32> to vector<8x8xf32>
    %198 = arith.subf %194, %197 : vector<8x8xf32>
    %199 = math.exp %198 : vector<8x8xf32>
    %cst_57 = arith.constant dense<0.000000e+00> : vector<8xf32>
    %200 = vector.multi_reduction <add>, %199, %cst_57 [1] : vector<8x8xf32> to vector<8xf32>
    %201 = vector.shape_cast %200 : vector<8xf32> to vector<8x1xf32>
    %202 = tpu.reciprocal %201 {approx = true} : vector<8x1xf32> -> vector<8x1xf32>
    %203 = vector.broadcast %202 : vector<8x1xf32> to vector<8x8xf32>
    %204 = arith.mulf %199, %203 : vector<8x8xf32>
    %205 = vector.extract_strided_slice %131 {offsets = [0, 0], sizes = [8, 8], strides = [1, 1]} : vector<16x8xf32> to vector<8x8xf32>
    %cst_58 = arith.constant dense<0.000000e+00> : vector<8x8xf32>
    %206 = tpu.matmul %204, %205, %cst_58 {dimension_numbers = #tpu.dot_dimension_numbers<[1], [0], [0], [1], [0, 0, 1, 1], [], []>} : vector<8x8xf32>, vector<8x8xf32>, vector<8x8xf32> -> vector<8x8xf32>
    %207 = vector.extract_strided_slice %39 {offsets = [3, 0, 0], sizes = [1, 8, 32], strides = [1, 1, 1]} : vector<4x8x32xf32> to vector<1x8x32xf32>
    %208 = vector.shape_cast %207 : vector<1x8x32xf32> to vector<8x32xf32>
    %cst_59 = arith.constant dense<0.000000e+00> : vector<8x32xf32>
    %209 = tpu.matmul %206, %208, %cst_59 {dimension_numbers = #tpu.dot_dimension_numbers<[1], [0], [0], [1], [0, 0, 1, 1], [], []>} : vector<8x8xf32>, vector<8x32xf32>, vector<8x32xf32> -> vector<8x32xf32>
    %210 = arith.addf %190, %209 : vector<8x32xf32>
    %211 = vector.extract_strided_slice %48 {offsets = [8, 0], sizes = [8, 8], strides = [1, 1]} : vector<16x8xf32> to vector<8x8xf32>
    %212 = vector.extract_strided_slice %55 {offsets = [8, 0], sizes = [8, 8], strides = [1, 1]} : vector<16x8xf32> to vector<8x8xf32>
    %213 = tpu.transpose %212, [1, 0] : vector<8x8xf32> -> vector<8x8xf32>
    %cst_60 = arith.constant dense<0.000000e+00> : vector<8x8xf32>
    %214 = tpu.matmul %211, %213, %cst_60 {dimension_numbers = #tpu.dot_dimension_numbers<[1], [0], [0], [1], [0, 0, 1, 1], [], []>} : vector<8x8xf32>, vector<8x8xf32>, vector<8x8xf32> -> vector<8x8xf32>
    %cst_61 = arith.constant dense<0xFF800000> : vector<8xf32>
    %215 = vector.multi_reduction <maximumf>, %214, %cst_61 [1] : vector<8x8xf32> to vector<8xf32>
    %216 = vector.shape_cast %215 : vector<8xf32> to vector<8x1xf32>
    %217 = vector.broadcast %216 : vector<8x1xf32> to vector<8x8xf32>
    %218 = arith.subf %214, %217 : vector<8x8xf32>
    %219 = math.exp %218 : vector<8x8xf32>
    %cst_62 = arith.constant dense<0.000000e+00> : vector<8xf32>
    %220 = vector.multi_reduction <add>, %219, %cst_62 [1] : vector<8x8xf32> to vector<8xf32>
    %221 = vector.shape_cast %220 : vector<8xf32> to vector<8x1xf32>
    %222 = tpu.reciprocal %221 {approx = true} : vector<8x1xf32> -> vector<8x1xf32>
    %223 = vector.broadcast %222 : vector<8x1xf32> to vector<8x8xf32>
    %224 = arith.mulf %219, %223 : vector<8x8xf32>
    %225 = vector.extract_strided_slice %62 {offsets = [8, 0], sizes = [8, 8], strides = [1, 1]} : vector<16x8xf32> to vector<8x8xf32>
    %cst_63 = arith.constant dense<0.000000e+00> : vector<8x8xf32>
    %226 = tpu.matmul %224, %225, %cst_63 {dimension_numbers = #tpu.dot_dimension_numbers<[1], [0], [0], [1], [0, 0, 1, 1], [], []>} : vector<8x8xf32>, vector<8x8xf32>, vector<8x8xf32> -> vector<8x8xf32>
    %227 = vector.extract_strided_slice %39 {offsets = [0, 0, 0], sizes = [1, 8, 32], strides = [1, 1, 1]} : vector<4x8x32xf32> to vector<1x8x32xf32>
    %228 = vector.shape_cast %227 : vector<1x8x32xf32> to vector<8x32xf32>
    %cst_64 = arith.constant dense<0.000000e+00> : vector<8x32xf32>
    %229 = tpu.matmul %226, %228, %cst_64 {dimension_numbers = #tpu.dot_dimension_numbers<[1], [0], [0], [1], [0, 0, 1, 1], [], []>} : vector<8x8xf32>, vector<8x32xf32>, vector<8x32xf32> -> vector<8x32xf32>
    %230 = vector.extract_strided_slice %71 {offsets = [8, 0], sizes = [8, 8], strides = [1, 1]} : vector<16x8xf32> to vector<8x8xf32>
    %231 = vector.extract_strided_slice %78 {offsets = [8, 0], sizes = [8, 8], strides = [1, 1]} : vector<16x8xf32> to vector<8x8xf32>
    %232 = tpu.transpose %231, [1, 0] : vector<8x8xf32> -> vector<8x8xf32>
    %cst_65 = arith.constant dense<0.000000e+00> : vector<8x8xf32>
    %233 = tpu.matmul %230, %232, %cst_65 {dimension_numbers = #tpu.dot_dimension_numbers<[1], [0], [0], [1], [0, 0, 1, 1], [], []>} : vector<8x8xf32>, vector<8x8xf32>, vector<8x8xf32> -> vector<8x8xf32>
    %cst_66 = arith.constant dense<0xFF800000> : vector<8xf32>
    %234 = vector.multi_reduction <maximumf>, %233, %cst_66 [1] : vector<8x8xf32> to vector<8xf32>
    %235 = vector.shape_cast %234 : vector<8xf32> to vector<8x1xf32>
    %236 = vector.broadcast %235 : vector<8x1xf32> to vector<8x8xf32>
    %237 = arith.subf %233, %236 : vector<8x8xf32>
    %238 = math.exp %237 : vector<8x8xf32>
    %cst_67 = arith.constant dense<0.000000e+00> : vector<8xf32>
    %239 = vector.multi_reduction <add>, %238, %cst_67 [1] : vector<8x8xf32> to vector<8xf32>
    %240 = vector.shape_cast %239 : vector<8xf32> to vector<8x1xf32>
    %241 = tpu.reciprocal %240 {approx = true} : vector<8x1xf32> -> vector<8x1xf32>
    %242 = vector.broadcast %241 : vector<8x1xf32> to vector<8x8xf32>
    %243 = arith.mulf %238, %242 : vector<8x8xf32>
    %244 = vector.extract_strided_slice %85 {offsets = [8, 0], sizes = [8, 8], strides = [1, 1]} : vector<16x8xf32> to vector<8x8xf32>
    %cst_68 = arith.constant dense<0.000000e+00> : vector<8x8xf32>
    %245 = tpu.matmul %243, %244, %cst_68 {dimension_numbers = #tpu.dot_dimension_numbers<[1], [0], [0], [1], [0, 0, 1, 1], [], []>} : vector<8x8xf32>, vector<8x8xf32>, vector<8x8xf32> -> vector<8x8xf32>
    %246 = vector.extract_strided_slice %39 {offsets = [1, 0, 0], sizes = [1, 8, 32], strides = [1, 1, 1]} : vector<4x8x32xf32> to vector<1x8x32xf32>
    %247 = vector.shape_cast %246 : vector<1x8x32xf32> to vector<8x32xf32>
    %cst_69 = arith.constant dense<0.000000e+00> : vector<8x32xf32>
    %248 = tpu.matmul %245, %247, %cst_69 {dimension_numbers = #tpu.dot_dimension_numbers<[1], [0], [0], [1], [0, 0, 1, 1], [], []>} : vector<8x8xf32>, vector<8x32xf32>, vector<8x32xf32> -> vector<8x32xf32>
    %249 = arith.addf %229, %248 : vector<8x32xf32>
    %250 = vector.extract_strided_slice %94 {offsets = [8, 0], sizes = [8, 8], strides = [1, 1]} : vector<16x8xf32> to vector<8x8xf32>
    %251 = vector.extract_strided_slice %101 {offsets = [8, 0], sizes = [8, 8], strides = [1, 1]} : vector<16x8xf32> to vector<8x8xf32>
    %252 = tpu.transpose %251, [1, 0] : vector<8x8xf32> -> vector<8x8xf32>
    %cst_70 = arith.constant dense<0.000000e+00> : vector<8x8xf32>
    %253 = tpu.matmul %250, %252, %cst_70 {dimension_numbers = #tpu.dot_dimension_numbers<[1], [0], [0], [1], [0, 0, 1, 1], [], []>} : vector<8x8xf32>, vector<8x8xf32>, vector<8x8xf32> -> vector<8x8xf32>
    %cst_71 = arith.constant dense<0xFF800000> : vector<8xf32>
    %254 = vector.multi_reduction <maximumf>, %253, %cst_71 [1] : vector<8x8xf32> to vector<8xf32>
    %255 = vector.shape_cast %254 : vector<8xf32> to vector<8x1xf32>
    %256 = vector.broadcast %255 : vector<8x1xf32> to vector<8x8xf32>
    %257 = arith.subf %253, %256 : vector<8x8xf32>
    %258 = math.exp %257 : vector<8x8xf32>
    %cst_72 = arith.constant dense<0.000000e+00> : vector<8xf32>
    %259 = vector.multi_reduction <add>, %258, %cst_72 [1] : vector<8x8xf32> to vector<8xf32>
    %260 = vector.shape_cast %259 : vector<8xf32> to vector<8x1xf32>
    %261 = tpu.reciprocal %260 {approx = true} : vector<8x1xf32> -> vector<8x1xf32>
    %262 = vector.broadcast %261 : vector<8x1xf32> to vector<8x8xf32>
    %263 = arith.mulf %258, %262 : vector<8x8xf32>
    %264 = vector.extract_strided_slice %108 {offsets = [8, 0], sizes = [8, 8], strides = [1, 1]} : vector<16x8xf32> to vector<8x8xf32>
    %cst_73 = arith.constant dense<0.000000e+00> : vector<8x8xf32>
    %265 = tpu.matmul %263, %264, %cst_73 {dimension_numbers = #tpu.dot_dimension_numbers<[1], [0], [0], [1], [0, 0, 1, 1], [], []>} : vector<8x8xf32>, vector<8x8xf32>, vector<8x8xf32> -> vector<8x8xf32>
    %266 = vector.extract_strided_slice %39 {offsets = [2, 0, 0], sizes = [1, 8, 32], strides = [1, 1, 1]} : vector<4x8x32xf32> to vector<1x8x32xf32>
    %267 = vector.shape_cast %266 : vector<1x8x32xf32> to vector<8x32xf32>
    %cst_74 = arith.constant dense<0.000000e+00> : vector<8x32xf32>
    %268 = tpu.matmul %265, %267, %cst_74 {dimension_numbers = #tpu.dot_dimension_numbers<[1], [0], [0], [1], [0, 0, 1, 1], [], []>} : vector<8x8xf32>, vector<8x32xf32>, vector<8x32xf32> -> vector<8x32xf32>
    %269 = arith.addf %249, %268 : vector<8x32xf32>
    %270 = vector.extract_strided_slice %117 {offsets = [8, 0], sizes = [8, 8], strides = [1, 1]} : vector<16x8xf32> to vector<8x8xf32>
    %271 = vector.extract_strided_slice %124 {offsets = [8, 0], sizes = [8, 8], strides = [1, 1]} : vector<16x8xf32> to vector<8x8xf32>
    %272 = tpu.transpose %271, [1, 0] : vector<8x8xf32> -> vector<8x8xf32>
    %cst_75 = arith.constant dense<0.000000e+00> : vector<8x8xf32>
    %273 = tpu.matmul %270, %272, %cst_75 {dimension_numbers = #tpu.dot_dimension_numbers<[1], [0], [0], [1], [0, 0, 1, 1], [], []>} : vector<8x8xf32>, vector<8x8xf32>, vector<8x8xf32> -> vector<8x8xf32>
    %cst_76 = arith.constant dense<0xFF800000> : vector<8xf32>
    %274 = vector.multi_reduction <maximumf>, %273, %cst_76 [1] : vector<8x8xf32> to vector<8xf32>
    %275 = vector.shape_cast %274 : vector<8xf32> to vector<8x1xf32>
    %276 = vector.broadcast %275 : vector<8x1xf32> to vector<8x8xf32>
    %277 = arith.subf %273, %276 : vector<8x8xf32>
    %278 = math.exp %277 : vector<8x8xf32>
    %cst_77 = arith.constant dense<0.000000e+00> : vector<8xf32>
    %279 = vector.multi_reduction <add>, %278, %cst_77 [1] : vector<8x8xf32> to vector<8xf32>
    %280 = vector.shape_cast %279 : vector<8xf32> to vector<8x1xf32>
    %281 = tpu.reciprocal %280 {approx = true} : vector<8x1xf32> -> vector<8x1xf32>
    %282 = vector.broadcast %281 : vector<8x1xf32> to vector<8x8xf32>
    %283 = arith.mulf %278, %282 : vector<8x8xf32>
    %284 = vector.extract_strided_slice %131 {offsets = [8, 0], sizes = [8, 8], strides = [1, 1]} : vector<16x8xf32> to vector<8x8xf32>
    %cst_78 = arith.constant dense<0.000000e+00> : vector<8x8xf32>
    %285 = tpu.matmul %283, %284, %cst_78 {dimension_numbers = #tpu.dot_dimension_numbers<[1], [0], [0], [1], [0, 0, 1, 1], [], []>} : vector<8x8xf32>, vector<8x8xf32>, vector<8x8xf32> -> vector<8x8xf32>
    %286 = vector.extract_strided_slice %39 {offsets = [3, 0, 0], sizes = [1, 8, 32], strides = [1, 1, 1]} : vector<4x8x32xf32> to vector<1x8x32xf32>
    %287 = vector.shape_cast %286 : vector<1x8x32xf32> to vector<8x32xf32>
    %cst_79 = arith.constant dense<0.000000e+00> : vector<8x32xf32>
    %288 = tpu.matmul %285, %287, %cst_79 {dimension_numbers = #tpu.dot_dimension_numbers<[1], [0], [0], [1], [0, 0, 1, 1], [], []>} : vector<8x8xf32>, vector<8x32xf32>, vector<8x32xf32> -> vector<8x32xf32>
    %289 = arith.addf %269, %288 : vector<8x32xf32>
    %290 = tpu.concatenate %210, %289 in 0 : vector<8x32xf32>, vector<8x32xf32> -> vector<16x32xf32>
    %291 = vector.broadcast %5 : vector<1x32xf32> to vector<16x32xf32>
    %292 = arith.addf %290, %291 : vector<16x32xf32>
    %293 = arith.addf %0, %292 : vector<16x32xf32>
    %cst_80 = arith.constant dense<0.000000e+00> : vector<16xf32>
    %294 = vector.multi_reduction <add>, %293, %cst_80 [1] : vector<16x32xf32> to vector<16xf32>
    %295 = vector.shape_cast %294 : vector<16xf32> to vector<16x1xf32>
    %cst_81 = arith.constant 3.200000e+01 : f32
    %296 = vector.broadcast %cst_81 : f32 to vector<16x1xf32>
    %297 = arith.divf %295, %296 : vector<16x1xf32>
    %298 = vector.broadcast %297 : vector<16x1xf32> to vector<16x32xf32>
    %299 = arith.subf %293, %298 : vector<16x32xf32>
    %300 = arith.mulf %299, %299 : vector<16x32xf32>
    %cst_82 = arith.constant dense<0.000000e+00> : vector<16xf32>
    %301 = vector.multi_reduction <add>, %300, %cst_82 [1] : vector<16x32xf32> to vector<16xf32>
    %302 = vector.shape_cast %301 : vector<16xf32> to vector<16x1xf32>
    %cst_83 = arith.constant 3.200000e+01 : f32
    %303 = vector.broadcast %cst_83 : f32 to vector<16x1xf32>
    %304 = arith.divf %302, %303 : vector<16x1xf32>
    %305 = vector.broadcast %297 : vector<16x1xf32> to vector<16x32xf32>
    %306 = arith.subf %293, %305 : vector<16x32xf32>
    %cst_84 = arith.constant 9.99999974E-6 : f32
    %307 = vector.broadcast %cst_84 : f32 to vector<16x1xf32>
    %308 = arith.addf %304, %307 : vector<16x1xf32>
    %309 = math.rsqrt %308 : vector<16x1xf32>
    %310 = vector.broadcast %309 : vector<16x1xf32> to vector<16x32xf32>
    %311 = arith.mulf %306, %310 : vector<16x32xf32>
    %312 = vector.broadcast %10 : vector<1x32xf32> to vector<16x32xf32>
    %313 = arith.mulf %311, %312 : vector<16x32xf32>
    %314 = vector.broadcast %11 : vector<1x32xf32> to vector<16x32xf32>
    %315 = arith.addf %313, %314 : vector<16x32xf32>
    %316 = arith.addf %315, %2 : vector<16x32xf32>
    %317 = arith.addf %1, %3 : vector<32x32xf32>
    %c0_85 = arith.constant 0 : index
    %c0_86 = arith.constant 0 : index
    %c0_87 = arith.constant 0 : index
    %c0_88 = arith.constant 0 : index
    %318 = vector.load %arg7[%c0_85, %c0_86, %c0_87, %c0_88] : memref<3x4x32x8xf32, #tpu.memory_space<vmem>>, vector<3x4x32x8xf32>
    %c0_89 = arith.constant 0 : index
    %c0_90 = arith.constant 0 : index
    %c0_91 = arith.constant 0 : index
    %c0_92 = arith.constant 0 : index
    %319 = vector.load %arg8[%c0_89, %c0_90, %c0_91, %c0_92] : memref<3x4x1x8xf32, #tpu.memory_space<vmem>>, vector<3x4x1x8xf32>
    %c0_93 = arith.constant 0 : index
    %c0_94 = arith.constant 0 : index
    %c0_95 = arith.constant 0 : index
    %320 = vector.load %arg9[%c0_93, %c0_94, %c0_95] : memref<4x8x32xf32, #tpu.memory_space<vmem>>, vector<4x8x32xf32>
    %321 = vector.extract_strided_slice %318 {offsets = [0, 0, 0, 0], sizes = [1, 1, 32, 8], strides = [1, 1, 1, 1]} : vector<3x4x32x8xf32> to vector<1x1x32x8xf32>
    %322 = vector.shape_cast %321 : vector<1x1x32x8xf32> to vector<32x8xf32>
    %cst_96 = arith.constant dense<0.000000e+00> : vector<16x8xf32>
    %323 = tpu.matmul %316, %322, %cst_96 {dimension_numbers = #tpu.dot_dimension_numbers<[1], [0], [0], [1], [0, 0, 1, 1], [], []>} : vector<16x32xf32>, vector<32x8xf32>, vector<16x8xf32> -> vector<16x8xf32>
    %324 = vector.extract_strided_slice %319 {offsets = [0, 0, 0, 0], sizes = [1, 1, 1, 8], strides = [1, 1, 1, 1]} : vector<3x4x1x8xf32> to vector<1x1x1x8xf32>
    %325 = vector.shape_cast %324 : vector<1x1x1x8xf32> to vector<1x8xf32>
    %326 = vector.broadcast %325 : vector<1x8xf32> to vector<16x8xf32>
    %327 = arith.addf %323, %326 : vector<16x8xf32>
    %cst_97 = arith.constant 0.353553385 : f32
    %328 = vector.broadcast %cst_97 : f32 to vector<16x8xf32>
    %329 = arith.mulf %327, %328 : vector<16x8xf32>
    %330 = vector.extract_strided_slice %318 {offsets = [1, 0, 0, 0], sizes = [1, 1, 32, 8], strides = [1, 1, 1, 1]} : vector<3x4x32x8xf32> to vector<1x1x32x8xf32>
    %331 = vector.shape_cast %330 : vector<1x1x32x8xf32> to vector<32x8xf32>
    %cst_98 = arith.constant dense<0.000000e+00> : vector<32x8xf32>
    %332 = tpu.matmul %317, %331, %cst_98 {dimension_numbers = #tpu.dot_dimension_numbers<[1], [0], [0], [1], [0, 0, 1, 1], [], []>} : vector<32x32xf32>, vector<32x8xf32>, vector<32x8xf32> -> vector<32x8xf32>
    %333 = vector.extract_strided_slice %319 {offsets = [1, 0, 0, 0], sizes = [1, 1, 1, 8], strides = [1, 1, 1, 1]} : vector<3x4x1x8xf32> to vector<1x1x1x8xf32>
    %334 = vector.shape_cast %333 : vector<1x1x1x8xf32> to vector<1x8xf32>
    %335 = vector.broadcast %334 : vector<1x8xf32> to vector<32x8xf32>
    %336 = arith.addf %332, %335 : vector<32x8xf32>
    %337 = vector.extract_strided_slice %318 {offsets = [2, 0, 0, 0], sizes = [1, 1, 32, 8], strides = [1, 1, 1, 1]} : vector<3x4x32x8xf32> to vector<1x1x32x8xf32>
    %338 = vector.shape_cast %337 : vector<1x1x32x8xf32> to vector<32x8xf32>
    %cst_99 = arith.constant dense<0.000000e+00> : vector<32x8xf32>
    %339 = tpu.matmul %1, %338, %cst_99 {dimension_numbers = #tpu.dot_dimension_numbers<[1], [0], [0], [1], [0, 0, 1, 1], [], []>} : vector<32x32xf32>, vector<32x8xf32>, vector<32x8xf32> -> vector<32x8xf32>
    %340 = vector.extract_strided_slice %319 {offsets = [2, 0, 0, 0], sizes = [1, 1, 1, 8], strides = [1, 1, 1, 1]} : vector<3x4x1x8xf32> to vector<1x1x1x8xf32>
    %341 = vector.shape_cast %340 : vector<1x1x1x8xf32> to vector<1x8xf32>
    %342 = vector.broadcast %341 : vector<1x8xf32> to vector<32x8xf32>
    %343 = arith.addf %339, %342 : vector<32x8xf32>
    %344 = vector.extract_strided_slice %318 {offsets = [0, 1, 0, 0], sizes = [1, 1, 32, 8], strides = [1, 1, 1, 1]} : vector<3x4x32x8xf32> to vector<1x1x32x8xf32>
    %345 = vector.shape_cast %344 : vector<1x1x32x8xf32> to vector<32x8xf32>
    %cst_100 = arith.constant dense<0.000000e+00> : vector<16x8xf32>
    %346 = tpu.matmul %316, %345, %cst_100 {dimension_numbers = #tpu.dot_dimension_numbers<[1], [0], [0], [1], [0, 0, 1, 1], [], []>} : vector<16x32xf32>, vector<32x8xf32>, vector<16x8xf32> -> vector<16x8xf32>
    %347 = vector.extract_strided_slice %319 {offsets = [0, 1, 0, 0], sizes = [1, 1, 1, 8], strides = [1, 1, 1, 1]} : vector<3x4x1x8xf32> to vector<1x1x1x8xf32>
    %348 = vector.shape_cast %347 : vector<1x1x1x8xf32> to vector<1x8xf32>
    %349 = vector.broadcast %348 : vector<1x8xf32> to vector<16x8xf32>
    %350 = arith.addf %346, %349 : vector<16x8xf32>
    %cst_101 = arith.constant 0.353553385 : f32
    %351 = vector.broadcast %cst_101 : f32 to vector<16x8xf32>
    %352 = arith.mulf %350, %351 : vector<16x8xf32>
    %353 = vector.extract_strided_slice %318 {offsets = [1, 1, 0, 0], sizes = [1, 1, 32, 8], strides = [1, 1, 1, 1]} : vector<3x4x32x8xf32> to vector<1x1x32x8xf32>
    %354 = vector.shape_cast %353 : vector<1x1x32x8xf32> to vector<32x8xf32>
    %cst_102 = arith.constant dense<0.000000e+00> : vector<32x8xf32>
    %355 = tpu.matmul %317, %354, %cst_102 {dimension_numbers = #tpu.dot_dimension_numbers<[1], [0], [0], [1], [0, 0, 1, 1], [], []>} : vector<32x32xf32>, vector<32x8xf32>, vector<32x8xf32> -> vector<32x8xf32>
    %356 = vector.extract_strided_slice %319 {offsets = [1, 1, 0, 0], sizes = [1, 1, 1, 8], strides = [1, 1, 1, 1]} : vector<3x4x1x8xf32> to vector<1x1x1x8xf32>
    %357 = vector.shape_cast %356 : vector<1x1x1x8xf32> to vector<1x8xf32>
    %358 = vector.broadcast %357 : vector<1x8xf32> to vector<32x8xf32>
    %359 = arith.addf %355, %358 : vector<32x8xf32>
    %360 = vector.extract_strided_slice %318 {offsets = [2, 1, 0, 0], sizes = [1, 1, 32, 8], strides = [1, 1, 1, 1]} : vector<3x4x32x8xf32> to vector<1x1x32x8xf32>
    %361 = vector.shape_cast %360 : vector<1x1x32x8xf32> to vector<32x8xf32>
    %cst_103 = arith.constant dense<0.000000e+00> : vector<32x8xf32>
    %362 = tpu.matmul %1, %361, %cst_103 {dimension_numbers = #tpu.dot_dimension_numbers<[1], [0], [0], [1], [0, 0, 1, 1], [], []>} : vector<32x32xf32>, vector<32x8xf32>, vector<32x8xf32> -> vector<32x8xf32>
    %363 = vector.extract_strided_slice %319 {offsets = [2, 1, 0, 0], sizes = [1, 1, 1, 8], strides = [1, 1, 1, 1]} : vector<3x4x1x8xf32> to vector<1x1x1x8xf32>
    %364 = vector.shape_cast %363 : vector<1x1x1x8xf32> to vector<1x8xf32>
    %365 = vector.broadcast %364 : vector<1x8xf32> to vector<32x8xf32>
    %366 = arith.addf %362, %365 : vector<32x8xf32>
    %367 = vector.extract_strided_slice %318 {offsets = [0, 2, 0, 0], sizes = [1, 1, 32, 8], strides = [1, 1, 1, 1]} : vector<3x4x32x8xf32> to vector<1x1x32x8xf32>
    %368 = vector.shape_cast %367 : vector<1x1x32x8xf32> to vector<32x8xf32>
    %cst_104 = arith.constant dense<0.000000e+00> : vector<16x8xf32>
    %369 = tpu.matmul %316, %368, %cst_104 {dimension_numbers = #tpu.dot_dimension_numbers<[1], [0], [0], [1], [0, 0, 1, 1], [], []>} : vector<16x32xf32>, vector<32x8xf32>, vector<16x8xf32> -> vector<16x8xf32>
    %370 = vector.extract_strided_slice %319 {offsets = [0, 2, 0, 0], sizes = [1, 1, 1, 8], strides = [1, 1, 1, 1]} : vector<3x4x1x8xf32> to vector<1x1x1x8xf32>
    %371 = vector.shape_cast %370 : vector<1x1x1x8xf32> to vector<1x8xf32>
    %372 = vector.broadcast %371 : vector<1x8xf32> to vector<16x8xf32>
    %373 = arith.addf %369, %372 : vector<16x8xf32>
    %cst_105 = arith.constant 0.353553385 : f32
    %374 = vector.broadcast %cst_105 : f32 to vector<16x8xf32>
    %375 = arith.mulf %373, %374 : vector<16x8xf32>
    %376 = vector.extract_strided_slice %318 {offsets = [1, 2, 0, 0], sizes = [1, 1, 32, 8], strides = [1, 1, 1, 1]} : vector<3x4x32x8xf32> to vector<1x1x32x8xf32>
    %377 = vector.shape_cast %376 : vector<1x1x32x8xf32> to vector<32x8xf32>
    %cst_106 = arith.constant dense<0.000000e+00> : vector<32x8xf32>
    %378 = tpu.matmul %317, %377, %cst_106 {dimension_numbers = #tpu.dot_dimension_numbers<[1], [0], [0], [1], [0, 0, 1, 1], [], []>} : vector<32x32xf32>, vector<32x8xf32>, vector<32x8xf32> -> vector<32x8xf32>
    %379 = vector.extract_strided_slice %319 {offsets = [1, 2, 0, 0], sizes = [1, 1, 1, 8], strides = [1, 1, 1, 1]} : vector<3x4x1x8xf32> to vector<1x1x1x8xf32>
    %380 = vector.shape_cast %379 : vector<1x1x1x8xf32> to vector<1x8xf32>
    %381 = vector.broadcast %380 : vector<1x8xf32> to vector<32x8xf32>
    %382 = arith.addf %378, %381 : vector<32x8xf32>
    %383 = vector.extract_strided_slice %318 {offsets = [2, 2, 0, 0], sizes = [1, 1, 32, 8], strides = [1, 1, 1, 1]} : vector<3x4x32x8xf32> to vector<1x1x32x8xf32>
    %384 = vector.shape_cast %383 : vector<1x1x32x8xf32> to vector<32x8xf32>
    %cst_107 = arith.constant dense<0.000000e+00> : vector<32x8xf32>
    %385 = tpu.matmul %1, %384, %cst_107 {dimension_numbers = #tpu.dot_dimension_numbers<[1], [0], [0], [1], [0, 0, 1, 1], [], []>} : vector<32x32xf32>, vector<32x8xf32>, vector<32x8xf32> -> vector<32x8xf32>
    %386 = vector.extract_strided_slice %319 {offsets = [2, 2, 0, 0], sizes = [1, 1, 1, 8], strides = [1, 1, 1, 1]} : vector<3x4x1x8xf32> to vector<1x1x1x8xf32>
    %387 = vector.shape_cast %386 : vector<1x1x1x8xf32> to vector<1x8xf32>
    %388 = vector.broadcast %387 : vector<1x8xf32> to vector<32x8xf32>
    %389 = arith.addf %385, %388 : vector<32x8xf32>
    %390 = vector.extract_strided_slice %318 {offsets = [0, 3, 0, 0], sizes = [1, 1, 32, 8], strides = [1, 1, 1, 1]} : vector<3x4x32x8xf32> to vector<1x1x32x8xf32>
    %391 = vector.shape_cast %390 : vector<1x1x32x8xf32> to vector<32x8xf32>
    %cst_108 = arith.constant dense<0.000000e+00> : vector<16x8xf32>
    %392 = tpu.matmul %316, %391, %cst_108 {dimension_numbers = #tpu.dot_dimension_numbers<[1], [0], [0], [1], [0, 0, 1, 1], [], []>} : vector<16x32xf32>, vector<32x8xf32>, vector<16x8xf32> -> vector<16x8xf32>
    %393 = vector.extract_strided_slice %319 {offsets = [0, 3, 0, 0], sizes = [1, 1, 1, 8], strides = [1, 1, 1, 1]} : vector<3x4x1x8xf32> to vector<1x1x1x8xf32>
    %394 = vector.shape_cast %393 : vector<1x1x1x8xf32> to vector<1x8xf32>
    %395 = vector.broadcast %394 : vector<1x8xf32> to vector<16x8xf32>
    %396 = arith.addf %392, %395 : vector<16x8xf32>
    %cst_109 = arith.constant 0.353553385 : f32
    %397 = vector.broadcast %cst_109 : f32 to vector<16x8xf32>
    %398 = arith.mulf %396, %397 : vector<16x8xf32>
    %399 = vector.extract_strided_slice %318 {offsets = [1, 3, 0, 0], sizes = [1, 1, 32, 8], strides = [1, 1, 1, 1]} : vector<3x4x32x8xf32> to vector<1x1x32x8xf32>
    %400 = vector.shape_cast %399 : vector<1x1x32x8xf32> to vector<32x8xf32>
    %cst_110 = arith.constant dense<0.000000e+00> : vector<32x8xf32>
    %401 = tpu.matmul %317, %400, %cst_110 {dimension_numbers = #tpu.dot_dimension_numbers<[1], [0], [0], [1], [0, 0, 1, 1], [], []>} : vector<32x32xf32>, vector<32x8xf32>, vector<32x8xf32> -> vector<32x8xf32>
    %402 = vector.extract_strided_slice %319 {offsets = [1, 3, 0, 0], sizes = [1, 1, 1, 8], strides = [1, 1, 1, 1]} : vector<3x4x1x8xf32> to vector<1x1x1x8xf32>
    %403 = vector.shape_cast %402 : vector<1x1x1x8xf32> to vector<1x8xf32>
    %404 = vector.broadcast %403 : vector<1x8xf32> to vector<32x8xf32>
    %405 = arith.addf %401, %404 : vector<32x8xf32>
    %406 = vector.extract_strided_slice %318 {offsets = [2, 3, 0, 0], sizes = [1, 1, 32, 8], strides = [1, 1, 1, 1]} : vector<3x4x32x8xf32> to vector<1x1x32x8xf32>
    %407 = vector.shape_cast %406 : vector<1x1x32x8xf32> to vector<32x8xf32>
    %cst_111 = arith.constant dense<0.000000e+00> : vector<32x8xf32>
    %408 = tpu.matmul %1, %407, %cst_111 {dimension_numbers = #tpu.dot_dimension_numbers<[1], [0], [0], [1], [0, 0, 1, 1], [], []>} : vector<32x32xf32>, vector<32x8xf32>, vector<32x8xf32> -> vector<32x8xf32>
    %409 = vector.extract_strided_slice %319 {offsets = [2, 3, 0, 0], sizes = [1, 1, 1, 8], strides = [1, 1, 1, 1]} : vector<3x4x1x8xf32> to vector<1x1x1x8xf32>
    %410 = vector.shape_cast %409 : vector<1x1x1x8xf32> to vector<1x8xf32>
    %411 = vector.broadcast %410 : vector<1x8xf32> to vector<32x8xf32>
    %412 = arith.addf %408, %411 : vector<32x8xf32>
    %413 = vector.extract_strided_slice %329 {offsets = [0, 0], sizes = [8, 8], strides = [1, 1]} : vector<16x8xf32> to vector<8x8xf32>
    %414 = vector.extract_strided_slice %336 {offsets = [0, 0], sizes = [16, 8], strides = [1, 1]} : vector<32x8xf32> to vector<16x8xf32>
    %415 = tpu.transpose %414, [1, 0] : vector<16x8xf32> -> vector<8x16xf32>
    %cst_112 = arith.constant dense<0.000000e+00> : vector<8x16xf32>
    %416 = tpu.matmul %413, %415, %cst_112 {dimension_numbers = #tpu.dot_dimension_numbers<[1], [0], [0], [1], [0, 0, 1, 1], [], []>} : vector<8x8xf32>, vector<8x16xf32>, vector<8x16xf32> -> vector<8x16xf32>
    %cst_113 = arith.constant dense<0xFF800000> : vector<8xf32>
    %417 = vector.multi_reduction <maximumf>, %416, %cst_113 [1] : vector<8x16xf32> to vector<8xf32>
    %418 = vector.shape_cast %417 : vector<8xf32> to vector<8x1xf32>
    %419 = vector.broadcast %418 : vector<8x1xf32> to vector<8x16xf32>
    %420 = arith.subf %416, %419 : vector<8x16xf32>
    %421 = math.exp %420 : vector<8x16xf32>
    %cst_114 = arith.constant dense<0.000000e+00> : vector<8xf32>
    %422 = vector.multi_reduction <add>, %421, %cst_114 [1] : vector<8x16xf32> to vector<8xf32>
    %423 = vector.shape_cast %422 : vector<8xf32> to vector<8x1xf32>
    %424 = tpu.reciprocal %423 {approx = true} : vector<8x1xf32> -> vector<8x1xf32>
    %425 = vector.broadcast %424 : vector<8x1xf32> to vector<8x16xf32>
    %426 = arith.mulf %421, %425 : vector<8x16xf32>
    %427 = vector.extract_strided_slice %343 {offsets = [0, 0], sizes = [16, 8], strides = [1, 1]} : vector<32x8xf32> to vector<16x8xf32>
    %cst_115 = arith.constant dense<0.000000e+00> : vector<8x8xf32>
    %428 = tpu.matmul %426, %427, %cst_115 {dimension_numbers = #tpu.dot_dimension_numbers<[1], [0], [0], [1], [0, 0, 1, 1], [], []>} : vector<8x16xf32>, vector<16x8xf32>, vector<8x8xf32> -> vector<8x8xf32>
    %429 = vector.extract_strided_slice %320 {offsets = [0, 0, 0], sizes = [1, 8, 32], strides = [1, 1, 1]} : vector<4x8x32xf32> to vector<1x8x32xf32>
    %430 = vector.shape_cast %429 : vector<1x8x32xf32> to vector<8x32xf32>
    %cst_116 = arith.constant dense<0.000000e+00> : vector<8x32xf32>
    %431 = tpu.matmul %428, %430, %cst_116 {dimension_numbers = #tpu.dot_dimension_numbers<[1], [0], [0], [1], [0, 0, 1, 1], [], []>} : vector<8x8xf32>, vector<8x32xf32>, vector<8x32xf32> -> vector<8x32xf32>
    %432 = vector.extract_strided_slice %352 {offsets = [0, 0], sizes = [8, 8], strides = [1, 1]} : vector<16x8xf32> to vector<8x8xf32>
    %433 = vector.extract_strided_slice %359 {offsets = [0, 0], sizes = [16, 8], strides = [1, 1]} : vector<32x8xf32> to vector<16x8xf32>
    %434 = tpu.transpose %433, [1, 0] : vector<16x8xf32> -> vector<8x16xf32>
    %cst_117 = arith.constant dense<0.000000e+00> : vector<8x16xf32>
    %435 = tpu.matmul %432, %434, %cst_117 {dimension_numbers = #tpu.dot_dimension_numbers<[1], [0], [0], [1], [0, 0, 1, 1], [], []>} : vector<8x8xf32>, vector<8x16xf32>, vector<8x16xf32> -> vector<8x16xf32>
    %cst_118 = arith.constant dense<0xFF800000> : vector<8xf32>
    %436 = vector.multi_reduction <maximumf>, %435, %cst_118 [1] : vector<8x16xf32> to vector<8xf32>
    %437 = vector.shape_cast %436 : vector<8xf32> to vector<8x1xf32>
    %438 = vector.broadcast %437 : vector<8x1xf32> to vector<8x16xf32>
    %439 = arith.subf %435, %438 : vector<8x16xf32>
    %440 = math.exp %439 : vector<8x16xf32>
    %cst_119 = arith.constant dense<0.000000e+00> : vector<8xf32>
    %441 = vector.multi_reduction <add>, %440, %cst_119 [1] : vector<8x16xf32> to vector<8xf32>
    %442 = vector.shape_cast %441 : vector<8xf32> to vector<8x1xf32>
    %443 = tpu.reciprocal %442 {approx = true} : vector<8x1xf32> -> vector<8x1xf32>
    %444 = vector.broadcast %443 : vector<8x1xf32> to vector<8x16xf32>
    %445 = arith.mulf %440, %444 : vector<8x16xf32>
    %446 = vector.extract_strided_slice %366 {offsets = [0, 0], sizes = [16, 8], strides = [1, 1]} : vector<32x8xf32> to vector<16x8xf32>
    %cst_120 = arith.constant dense<0.000000e+00> : vector<8x8xf32>
    %447 = tpu.matmul %445, %446, %cst_120 {dimension_numbers = #tpu.dot_dimension_numbers<[1], [0], [0], [1], [0, 0, 1, 1], [], []>} : vector<8x16xf32>, vector<16x8xf32>, vector<8x8xf32> -> vector<8x8xf32>
    %448 = vector.extract_strided_slice %320 {offsets = [1, 0, 0], sizes = [1, 8, 32], strides = [1, 1, 1]} : vector<4x8x32xf32> to vector<1x8x32xf32>
    %449 = vector.shape_cast %448 : vector<1x8x32xf32> to vector<8x32xf32>
    %cst_121 = arith.constant dense<0.000000e+00> : vector<8x32xf32>
    %450 = tpu.matmul %447, %449, %cst_121 {dimension_numbers = #tpu.dot_dimension_numbers<[1], [0], [0], [1], [0, 0, 1, 1], [], []>} : vector<8x8xf32>, vector<8x32xf32>, vector<8x32xf32> -> vector<8x32xf32>
    %451 = arith.addf %431, %450 : vector<8x32xf32>
    %452 = vector.extract_strided_slice %375 {offsets = [0, 0], sizes = [8, 8], strides = [1, 1]} : vector<16x8xf32> to vector<8x8xf32>
    %453 = vector.extract_strided_slice %382 {offsets = [0, 0], sizes = [16, 8], strides = [1, 1]} : vector<32x8xf32> to vector<16x8xf32>
    %454 = tpu.transpose %453, [1, 0] : vector<16x8xf32> -> vector<8x16xf32>
    %cst_122 = arith.constant dense<0.000000e+00> : vector<8x16xf32>
    %455 = tpu.matmul %452, %454, %cst_122 {dimension_numbers = #tpu.dot_dimension_numbers<[1], [0], [0], [1], [0, 0, 1, 1], [], []>} : vector<8x8xf32>, vector<8x16xf32>, vector<8x16xf32> -> vector<8x16xf32>
    %cst_123 = arith.constant dense<0xFF800000> : vector<8xf32>
    %456 = vector.multi_reduction <maximumf>, %455, %cst_123 [1] : vector<8x16xf32> to vector<8xf32>
    %457 = vector.shape_cast %456 : vector<8xf32> to vector<8x1xf32>
    %458 = vector.broadcast %457 : vector<8x1xf32> to vector<8x16xf32>
    %459 = arith.subf %455, %458 : vector<8x16xf32>
    %460 = math.exp %459 : vector<8x16xf32>
    %cst_124 = arith.constant dense<0.000000e+00> : vector<8xf32>
    %461 = vector.multi_reduction <add>, %460, %cst_124 [1] : vector<8x16xf32> to vector<8xf32>
    %462 = vector.shape_cast %461 : vector<8xf32> to vector<8x1xf32>
    %463 = tpu.reciprocal %462 {approx = true} : vector<8x1xf32> -> vector<8x1xf32>
    %464 = vector.broadcast %463 : vector<8x1xf32> to vector<8x16xf32>
    %465 = arith.mulf %460, %464 : vector<8x16xf32>
    %466 = vector.extract_strided_slice %389 {offsets = [0, 0], sizes = [16, 8], strides = [1, 1]} : vector<32x8xf32> to vector<16x8xf32>
    %cst_125 = arith.constant dense<0.000000e+00> : vector<8x8xf32>
    %467 = tpu.matmul %465, %466, %cst_125 {dimension_numbers = #tpu.dot_dimension_numbers<[1], [0], [0], [1], [0, 0, 1, 1], [], []>} : vector<8x16xf32>, vector<16x8xf32>, vector<8x8xf32> -> vector<8x8xf32>
    %468 = vector.extract_strided_slice %320 {offsets = [2, 0, 0], sizes = [1, 8, 32], strides = [1, 1, 1]} : vector<4x8x32xf32> to vector<1x8x32xf32>
    %469 = vector.shape_cast %468 : vector<1x8x32xf32> to vector<8x32xf32>
    %cst_126 = arith.constant dense<0.000000e+00> : vector<8x32xf32>
    %470 = tpu.matmul %467, %469, %cst_126 {dimension_numbers = #tpu.dot_dimension_numbers<[1], [0], [0], [1], [0, 0, 1, 1], [], []>} : vector<8x8xf32>, vector<8x32xf32>, vector<8x32xf32> -> vector<8x32xf32>
    %471 = arith.addf %451, %470 : vector<8x32xf32>
    %472 = vector.extract_strided_slice %398 {offsets = [0, 0], sizes = [8, 8], strides = [1, 1]} : vector<16x8xf32> to vector<8x8xf32>
    %473 = vector.extract_strided_slice %405 {offsets = [0, 0], sizes = [16, 8], strides = [1, 1]} : vector<32x8xf32> to vector<16x8xf32>
    %474 = tpu.transpose %473, [1, 0] : vector<16x8xf32> -> vector<8x16xf32>
    %cst_127 = arith.constant dense<0.000000e+00> : vector<8x16xf32>
    %475 = tpu.matmul %472, %474, %cst_127 {dimension_numbers = #tpu.dot_dimension_numbers<[1], [0], [0], [1], [0, 0, 1, 1], [], []>} : vector<8x8xf32>, vector<8x16xf32>, vector<8x16xf32> -> vector<8x16xf32>
    %cst_128 = arith.constant dense<0xFF800000> : vector<8xf32>
    %476 = vector.multi_reduction <maximumf>, %475, %cst_128 [1] : vector<8x16xf32> to vector<8xf32>
    %477 = vector.shape_cast %476 : vector<8xf32> to vector<8x1xf32>
    %478 = vector.broadcast %477 : vector<8x1xf32> to vector<8x16xf32>
    %479 = arith.subf %475, %478 : vector<8x16xf32>
    %480 = math.exp %479 : vector<8x16xf32>
    %cst_129 = arith.constant dense<0.000000e+00> : vector<8xf32>
    %481 = vector.multi_reduction <add>, %480, %cst_129 [1] : vector<8x16xf32> to vector<8xf32>
    %482 = vector.shape_cast %481 : vector<8xf32> to vector<8x1xf32>
    %483 = tpu.reciprocal %482 {approx = true} : vector<8x1xf32> -> vector<8x1xf32>
    %484 = vector.broadcast %483 : vector<8x1xf32> to vector<8x16xf32>
    %485 = arith.mulf %480, %484 : vector<8x16xf32>
    %486 = vector.extract_strided_slice %412 {offsets = [0, 0], sizes = [16, 8], strides = [1, 1]} : vector<32x8xf32> to vector<16x8xf32>
    %cst_130 = arith.constant dense<0.000000e+00> : vector<8x8xf32>
    %487 = tpu.matmul %485, %486, %cst_130 {dimension_numbers = #tpu.dot_dimension_numbers<[1], [0], [0], [1], [0, 0, 1, 1], [], []>} : vector<8x16xf32>, vector<16x8xf32>, vector<8x8xf32> -> vector<8x8xf32>
    %488 = vector.extract_strided_slice %320 {offsets = [3, 0, 0], sizes = [1, 8, 32], strides = [1, 1, 1]} : vector<4x8x32xf32> to vector<1x8x32xf32>
    %489 = vector.shape_cast %488 : vector<1x8x32xf32> to vector<8x32xf32>
    %cst_131 = arith.constant dense<0.000000e+00> : vector<8x32xf32>
    %490 = tpu.matmul %487, %489, %cst_131 {dimension_numbers = #tpu.dot_dimension_numbers<[1], [0], [0], [1], [0, 0, 1, 1], [], []>} : vector<8x8xf32>, vector<8x32xf32>, vector<8x32xf32> -> vector<8x32xf32>
    %491 = arith.addf %471, %490 : vector<8x32xf32>
    %492 = vector.extract_strided_slice %329 {offsets = [8, 0], sizes = [8, 8], strides = [1, 1]} : vector<16x8xf32> to vector<8x8xf32>
    %493 = vector.extract_strided_slice %336 {offsets = [16, 0], sizes = [16, 8], strides = [1, 1]} : vector<32x8xf32> to vector<16x8xf32>
    %494 = tpu.transpose %493, [1, 0] : vector<16x8xf32> -> vector<8x16xf32>
    %cst_132 = arith.constant dense<0.000000e+00> : vector<8x16xf32>
    %495 = tpu.matmul %492, %494, %cst_132 {dimension_numbers = #tpu.dot_dimension_numbers<[1], [0], [0], [1], [0, 0, 1, 1], [], []>} : vector<8x8xf32>, vector<8x16xf32>, vector<8x16xf32> -> vector<8x16xf32>
    %cst_133 = arith.constant dense<0xFF800000> : vector<8xf32>
    %496 = vector.multi_reduction <maximumf>, %495, %cst_133 [1] : vector<8x16xf32> to vector<8xf32>
    %497 = vector.shape_cast %496 : vector<8xf32> to vector<8x1xf32>
    %498 = vector.broadcast %497 : vector<8x1xf32> to vector<8x16xf32>
    %499 = arith.subf %495, %498 : vector<8x16xf32>
    %500 = math.exp %499 : vector<8x16xf32>
    %cst_134 = arith.constant dense<0.000000e+00> : vector<8xf32>
    %501 = vector.multi_reduction <add>, %500, %cst_134 [1] : vector<8x16xf32> to vector<8xf32>
    %502 = vector.shape_cast %501 : vector<8xf32> to vector<8x1xf32>
    %503 = tpu.reciprocal %502 {approx = true} : vector<8x1xf32> -> vector<8x1xf32>
    %504 = vector.broadcast %503 : vector<8x1xf32> to vector<8x16xf32>
    %505 = arith.mulf %500, %504 : vector<8x16xf32>
    %506 = vector.extract_strided_slice %343 {offsets = [16, 0], sizes = [16, 8], strides = [1, 1]} : vector<32x8xf32> to vector<16x8xf32>
    %cst_135 = arith.constant dense<0.000000e+00> : vector<8x8xf32>
    %507 = tpu.matmul %505, %506, %cst_135 {dimension_numbers = #tpu.dot_dimension_numbers<[1], [0], [0], [1], [0, 0, 1, 1], [], []>} : vector<8x16xf32>, vector<16x8xf32>, vector<8x8xf32> -> vector<8x8xf32>
    %508 = vector.extract_strided_slice %320 {offsets = [0, 0, 0], sizes = [1, 8, 32], strides = [1, 1, 1]} : vector<4x8x32xf32> to vector<1x8x32xf32>
    %509 = vector.shape_cast %508 : vector<1x8x32xf32> to vector<8x32xf32>
    %cst_136 = arith.constant dense<0.000000e+00> : vector<8x32xf32>
    %510 = tpu.matmul %507, %509, %cst_136 {dimension_numbers = #tpu.dot_dimension_numbers<[1], [0], [0], [1], [0, 0, 1, 1], [], []>} : vector<8x8xf32>, vector<8x32xf32>, vector<8x32xf32> -> vector<8x32xf32>
    %511 = vector.extract_strided_slice %352 {offsets = [8, 0], sizes = [8, 8], strides = [1, 1]} : vector<16x8xf32> to vector<8x8xf32>
    %512 = vector.extract_strided_slice %359 {offsets = [16, 0], sizes = [16, 8], strides = [1, 1]} : vector<32x8xf32> to vector<16x8xf32>
    %513 = tpu.transpose %512, [1, 0] : vector<16x8xf32> -> vector<8x16xf32>
    %cst_137 = arith.constant dense<0.000000e+00> : vector<8x16xf32>
    %514 = tpu.matmul %511, %513, %cst_137 {dimension_numbers = #tpu.dot_dimension_numbers<[1], [0], [0], [1], [0, 0, 1, 1], [], []>} : vector<8x8xf32>, vector<8x16xf32>, vector<8x16xf32> -> vector<8x16xf32>
    %cst_138 = arith.constant dense<0xFF800000> : vector<8xf32>
    %515 = vector.multi_reduction <maximumf>, %514, %cst_138 [1] : vector<8x16xf32> to vector<8xf32>
    %516 = vector.shape_cast %515 : vector<8xf32> to vector<8x1xf32>
    %517 = vector.broadcast %516 : vector<8x1xf32> to vector<8x16xf32>
    %518 = arith.subf %514, %517 : vector<8x16xf32>
    %519 = math.exp %518 : vector<8x16xf32>
    %cst_139 = arith.constant dense<0.000000e+00> : vector<8xf32>
    %520 = vector.multi_reduction <add>, %519, %cst_139 [1] : vector<8x16xf32> to vector<8xf32>
    %521 = vector.shape_cast %520 : vector<8xf32> to vector<8x1xf32>
    %522 = tpu.reciprocal %521 {approx = true} : vector<8x1xf32> -> vector<8x1xf32>
    %523 = vector.broadcast %522 : vector<8x1xf32> to vector<8x16xf32>
    %524 = arith.mulf %519, %523 : vector<8x16xf32>
    %525 = vector.extract_strided_slice %366 {offsets = [16, 0], sizes = [16, 8], strides = [1, 1]} : vector<32x8xf32> to vector<16x8xf32>
    %cst_140 = arith.constant dense<0.000000e+00> : vector<8x8xf32>
    %526 = tpu.matmul %524, %525, %cst_140 {dimension_numbers = #tpu.dot_dimension_numbers<[1], [0], [0], [1], [0, 0, 1, 1], [], []>} : vector<8x16xf32>, vector<16x8xf32>, vector<8x8xf32> -> vector<8x8xf32>
    %527 = vector.extract_strided_slice %320 {offsets = [1, 0, 0], sizes = [1, 8, 32], strides = [1, 1, 1]} : vector<4x8x32xf32> to vector<1x8x32xf32>
    %528 = vector.shape_cast %527 : vector<1x8x32xf32> to vector<8x32xf32>
    %cst_141 = arith.constant dense<0.000000e+00> : vector<8x32xf32>
    %529 = tpu.matmul %526, %528, %cst_141 {dimension_numbers = #tpu.dot_dimension_numbers<[1], [0], [0], [1], [0, 0, 1, 1], [], []>} : vector<8x8xf32>, vector<8x32xf32>, vector<8x32xf32> -> vector<8x32xf32>
    %530 = arith.addf %510, %529 : vector<8x32xf32>
    %531 = vector.extract_strided_slice %375 {offsets = [8, 0], sizes = [8, 8], strides = [1, 1]} : vector<16x8xf32> to vector<8x8xf32>
    %532 = vector.extract_strided_slice %382 {offsets = [16, 0], sizes = [16, 8], strides = [1, 1]} : vector<32x8xf32> to vector<16x8xf32>
    %533 = tpu.transpose %532, [1, 0] : vector<16x8xf32> -> vector<8x16xf32>
    %cst_142 = arith.constant dense<0.000000e+00> : vector<8x16xf32>
    %534 = tpu.matmul %531, %533, %cst_142 {dimension_numbers = #tpu.dot_dimension_numbers<[1], [0], [0], [1], [0, 0, 1, 1], [], []>} : vector<8x8xf32>, vector<8x16xf32>, vector<8x16xf32> -> vector<8x16xf32>
    %cst_143 = arith.constant dense<0xFF800000> : vector<8xf32>
    %535 = vector.multi_reduction <maximumf>, %534, %cst_143 [1] : vector<8x16xf32> to vector<8xf32>
    %536 = vector.shape_cast %535 : vector<8xf32> to vector<8x1xf32>
    %537 = vector.broadcast %536 : vector<8x1xf32> to vector<8x16xf32>
    %538 = arith.subf %534, %537 : vector<8x16xf32>
    %539 = math.exp %538 : vector<8x16xf32>
    %cst_144 = arith.constant dense<0.000000e+00> : vector<8xf32>
    %540 = vector.multi_reduction <add>, %539, %cst_144 [1] : vector<8x16xf32> to vector<8xf32>
    %541 = vector.shape_cast %540 : vector<8xf32> to vector<8x1xf32>
    %542 = tpu.reciprocal %541 {approx = true} : vector<8x1xf32> -> vector<8x1xf32>
    %543 = vector.broadcast %542 : vector<8x1xf32> to vector<8x16xf32>
    %544 = arith.mulf %539, %543 : vector<8x16xf32>
    %545 = vector.extract_strided_slice %389 {offsets = [16, 0], sizes = [16, 8], strides = [1, 1]} : vector<32x8xf32> to vector<16x8xf32>
    %cst_145 = arith.constant dense<0.000000e+00> : vector<8x8xf32>
    %546 = tpu.matmul %544, %545, %cst_145 {dimension_numbers = #tpu.dot_dimension_numbers<[1], [0], [0], [1], [0, 0, 1, 1], [], []>} : vector<8x16xf32>, vector<16x8xf32>, vector<8x8xf32> -> vector<8x8xf32>
    %547 = vector.extract_strided_slice %320 {offsets = [2, 0, 0], sizes = [1, 8, 32], strides = [1, 1, 1]} : vector<4x8x32xf32> to vector<1x8x32xf32>
    %548 = vector.shape_cast %547 : vector<1x8x32xf32> to vector<8x32xf32>
    %cst_146 = arith.constant dense<0.000000e+00> : vector<8x32xf32>
    %549 = tpu.matmul %546, %548, %cst_146 {dimension_numbers = #tpu.dot_dimension_numbers<[1], [0], [0], [1], [0, 0, 1, 1], [], []>} : vector<8x8xf32>, vector<8x32xf32>, vector<8x32xf32> -> vector<8x32xf32>
    %550 = arith.addf %530, %549 : vector<8x32xf32>
    %551 = vector.extract_strided_slice %398 {offsets = [8, 0], sizes = [8, 8], strides = [1, 1]} : vector<16x8xf32> to vector<8x8xf32>
    %552 = vector.extract_strided_slice %405 {offsets = [16, 0], sizes = [16, 8], strides = [1, 1]} : vector<32x8xf32> to vector<16x8xf32>
    %553 = tpu.transpose %552, [1, 0] : vector<16x8xf32> -> vector<8x16xf32>
    %cst_147 = arith.constant dense<0.000000e+00> : vector<8x16xf32>
    %554 = tpu.matmul %551, %553, %cst_147 {dimension_numbers = #tpu.dot_dimension_numbers<[1], [0], [0], [1], [0, 0, 1, 1], [], []>} : vector<8x8xf32>, vector<8x16xf32>, vector<8x16xf32> -> vector<8x16xf32>
    %cst_148 = arith.constant dense<0xFF800000> : vector<8xf32>
    %555 = vector.multi_reduction <maximumf>, %554, %cst_148 [1] : vector<8x16xf32> to vector<8xf32>
    %556 = vector.shape_cast %555 : vector<8xf32> to vector<8x1xf32>
    %557 = vector.broadcast %556 : vector<8x1xf32> to vector<8x16xf32>
    %558 = arith.subf %554, %557 : vector<8x16xf32>
    %559 = math.exp %558 : vector<8x16xf32>
    %cst_149 = arith.constant dense<0.000000e+00> : vector<8xf32>
    %560 = vector.multi_reduction <add>, %559, %cst_149 [1] : vector<8x16xf32> to vector<8xf32>
    %561 = vector.shape_cast %560 : vector<8xf32> to vector<8x1xf32>
    %562 = tpu.reciprocal %561 {approx = true} : vector<8x1xf32> -> vector<8x1xf32>
    %563 = vector.broadcast %562 : vector<8x1xf32> to vector<8x16xf32>
    %564 = arith.mulf %559, %563 : vector<8x16xf32>
    %565 = vector.extract_strided_slice %412 {offsets = [16, 0], sizes = [16, 8], strides = [1, 1]} : vector<32x8xf32> to vector<16x8xf32>
    %cst_150 = arith.constant dense<0.000000e+00> : vector<8x8xf32>
    %566 = tpu.matmul %564, %565, %cst_150 {dimension_numbers = #tpu.dot_dimension_numbers<[1], [0], [0], [1], [0, 0, 1, 1], [], []>} : vector<8x16xf32>, vector<16x8xf32>, vector<8x8xf32> -> vector<8x8xf32>
    %567 = vector.extract_strided_slice %320 {offsets = [3, 0, 0], sizes = [1, 8, 32], strides = [1, 1, 1]} : vector<4x8x32xf32> to vector<1x8x32xf32>
    %568 = vector.shape_cast %567 : vector<1x8x32xf32> to vector<8x32xf32>
    %cst_151 = arith.constant dense<0.000000e+00> : vector<8x32xf32>
    %569 = tpu.matmul %566, %568, %cst_151 {dimension_numbers = #tpu.dot_dimension_numbers<[1], [0], [0], [1], [0, 0, 1, 1], [], []>} : vector<8x8xf32>, vector<8x32xf32>, vector<8x32xf32> -> vector<8x32xf32>
    %570 = arith.addf %550, %569 : vector<8x32xf32>
    %571 = tpu.concatenate %491, %570 in 0 : vector<8x32xf32>, vector<8x32xf32> -> vector<16x32xf32>
    %572 = vector.broadcast %6 : vector<1x32xf32> to vector<16x32xf32>
    %573 = arith.addf %571, %572 : vector<16x32xf32>
    %574 = arith.addf %293, %573 : vector<16x32xf32>
    %cst_152 = arith.constant dense<0.000000e+00> : vector<16xf32>
    %575 = vector.multi_reduction <add>, %574, %cst_152 [1] : vector<16x32xf32> to vector<16xf32>
    %576 = vector.shape_cast %575 : vector<16xf32> to vector<16x1xf32>
    %cst_153 = arith.constant 3.200000e+01 : f32
    %577 = vector.broadcast %cst_153 : f32 to vector<16x1xf32>
    %578 = arith.divf %576, %577 : vector<16x1xf32>
    %579 = vector.broadcast %578 : vector<16x1xf32> to vector<16x32xf32>
    %580 = arith.subf %574, %579 : vector<16x32xf32>
    %581 = arith.mulf %580, %580 : vector<16x32xf32>
    %cst_154 = arith.constant dense<0.000000e+00> : vector<16xf32>
    %582 = vector.multi_reduction <add>, %581, %cst_154 [1] : vector<16x32xf32> to vector<16xf32>
    %583 = vector.shape_cast %582 : vector<16xf32> to vector<16x1xf32>
    %cst_155 = arith.constant 3.200000e+01 : f32
    %584 = vector.broadcast %cst_155 : f32 to vector<16x1xf32>
    %585 = arith.divf %583, %584 : vector<16x1xf32>
    %586 = vector.broadcast %578 : vector<16x1xf32> to vector<16x32xf32>
    %587 = arith.subf %574, %586 : vector<16x32xf32>
    %cst_156 = arith.constant 9.99999974E-6 : f32
    %588 = vector.broadcast %cst_156 : f32 to vector<16x1xf32>
    %589 = arith.addf %585, %588 : vector<16x1xf32>
    %590 = math.rsqrt %589 : vector<16x1xf32>
    %591 = vector.broadcast %590 : vector<16x1xf32> to vector<16x32xf32>
    %592 = arith.mulf %587, %591 : vector<16x32xf32>
    %593 = vector.broadcast %12 : vector<1x32xf32> to vector<16x32xf32>
    %594 = arith.mulf %592, %593 : vector<16x32xf32>
    %595 = vector.broadcast %13 : vector<1x32xf32> to vector<16x32xf32>
    %596 = arith.addf %594, %595 : vector<16x32xf32>
    %c0_157 = arith.constant 0 : index
    %c0_158 = arith.constant 0 : index
    %597 = vector.load %arg10[%c0_157, %c0_158] : memref<32x64xf32, #tpu.memory_space<vmem>>, vector<32x64xf32>
    %cst_159 = arith.constant dense<0.000000e+00> : vector<16x64xf32>
    %598 = tpu.matmul %596, %597, %cst_159 {dimension_numbers = #tpu.dot_dimension_numbers<[1], [0], [0], [1], [0, 0, 1, 1], [], []>} : vector<16x32xf32>, vector<32x64xf32>, vector<16x64xf32> -> vector<16x64xf32>
    %c0_160 = arith.constant 0 : index
    %c0_161 = arith.constant 0 : index
    %599 = vector.load %arg11[%c0_160, %c0_161] : memref<1x64xf32, #tpu.memory_space<vmem>>, vector<1x64xf32>
    %600 = vector.broadcast %599 : vector<1x64xf32> to vector<16x64xf32>
    %601 = arith.addf %598, %600 : vector<16x64xf32>
    %cst_162 = arith.constant 0.000000e+00 : f32
    %602 = vector.broadcast %cst_162 : f32 to vector<16x64xf32>
    %603 = arith.maximumf %601, %602 : vector<16x64xf32>
    %c0_163 = arith.constant 0 : index
    %c0_164 = arith.constant 0 : index
    %604 = vector.load %arg12[%c0_163, %c0_164] : memref<64x32xf32, #tpu.memory_space<vmem>>, vector<64x32xf32>
    %cst_165 = arith.constant dense<0.000000e+00> : vector<16x32xf32>
    %605 = tpu.matmul %603, %604, %cst_165 {dimension_numbers = #tpu.dot_dimension_numbers<[1], [0], [0], [1], [0, 0, 1, 1], [], []>} : vector<16x64xf32>, vector<64x32xf32>, vector<16x32xf32> -> vector<16x32xf32>
    %606 = vector.broadcast %7 : vector<1x32xf32> to vector<16x32xf32>
    %607 = arith.addf %605, %606 : vector<16x32xf32>
    %608 = arith.addf %574, %607 : vector<16x32xf32>
    %c0_166 = arith.constant 0 : index
    %c0_167 = arith.constant 0 : index
    %609 = vector.load %arg14[%c0_166, %c0_167] : memref<16x32xf32, #tpu.memory_space<vmem>>, vector<16x32xf32>
    tpu.vector_store %arg14[%c0_166, %c0_167], %608 {strides = array<i32>} : memref<16x32xf32, #tpu.memory_space<vmem>>, vector<16x32xf32>,
    return
  }
}

</mosaic_0001>

<llo_original>
// kernel: tpu_custom_call.1
$region0: #{tpu_custom_call.1}
  #allocation0 [shape = 'u32[]', space=smem, size = 0x4, offset = 0x4, fixed_abs, tag = 'smem constant byte address 0x4 - core index']
  #allocation1 [shape = 'u32[144,128]{1,0:T(1,128)}', space=vmem, size = 0x12000, scoped, tag = 'internal scratch']
  %s0 = inlined_call_operand.vmem [shape: f32[16,32], index: 0, kind: input, shape index: {}]
  %s1 = inlined_call_operand.vmem [shape: f32[32,32], index: 1, kind: input, shape index: {}]
  %s2 = inlined_call_operand.vmem [shape: f32[16,32], index: 2, kind: input, shape index: {}]
  %s3 = inlined_call_operand.vmem [shape: f32[32,32], index: 3, kind: input, shape index: {}]
  %s4 = inlined_call_operand.vmem [shape: f32[3,4,32,8], index: 4, kind: input, shape index: {}]
  %s5 = inlined_call_operand.vmem [shape: f32[3,4,1,8], index: 5, kind: input, shape index: {}]
  %s6 = inlined_call_operand.vmem [shape: f32[4,8,32], index: 6, kind: input, shape index: {}]
  %s7 = inlined_call_operand.vmem [shape: f32[3,4,32,8], index: 7, kind: input, shape index: {}]
  %s8 = inlined_call_operand.vmem [shape: f32[3,4,1,8], index: 8, kind: input, shape index: {}]
  %s9 = inlined_call_operand.vmem [shape: f32[4,8,32], index: 9, kind: input, shape index: {}]
  %s10 = inlined_call_operand.vmem [shape: f32[32,64], index: 10, kind: input, shape index: {}]
  %s11 = inlined_call_operand.vmem [shape: f32[1,64], index: 11, kind: input, shape index: {}]
  %s12 = inlined_call_operand.vmem [shape: f32[64,32], index: 12, kind: input, shape index: {}]
  %s13 = inlined_call_operand.vmem [shape: f32[9,32], index: 13, kind: input, shape index: {}]
  %s14 = inlined_call_operand.hbm [shape: f32[16,32], index: 14, kind: output, shape index: {}]
  %s15 = sld [smem:[#allocation0]]
  $region66: #{tpu_custom_call.1} parent=0
    _
  %s17 = ssub.s32 1, %s15
  %s18 = scalar_select 0, %s17, %s15
  $region1: #{tpu_custom_call.1} parent=0
    #allocation2 [shape = 'u8[8192]{0}', space=vmem, size = 0x2000, scoped, tag = 'output window, operand 0, single buffered']
    #allocation3 [shape = 's32[1]{0}', space=sflag, size = 0x4, scoped, tag = 'scoped memory for tpu_custom_call.1']
    %19 = vsyncpa [#allocation3], 0
    // Predicated region
    $region2: #{tpu_custom_call.1} parent=1 // pred_check
      _
    $region3: #{tpu_custom_call.1} parent=1 // pred_check_branch
      %21 = sbr.rel (0) target = $region5
    $region4: #{tpu_custom_call.1} parent=1 // pred_region
      _
    $region5: #{tpu_custom_call.1} parent=1 // pred_fallthru
      _
    // Predicated region
    $region6: #{tpu_custom_call.1} parent=1 // pred_check
      _
    $region7: #{tpu_custom_call.1} parent=1 // pred_check_branch
      %23 = sbr.rel (0) target = $region9
    $region8: #{tpu_custom_call.1} parent=1 // pred_region
      _
    $region9: #{tpu_custom_call.1} parent=1 // pred_fallthru
      _
    // Predicated region
    $region10: #{tpu_custom_call.1} parent=1 // pred_check
      _
    $region11: #{tpu_custom_call.1} parent=1 // pred_check_branch
      %25 = sbr.rel (0) target = $region13
    $region12: #{tpu_custom_call.1} parent=1 // pred_region
      _
    $region13: #{tpu_custom_call.1} parent=1 // pred_fallthru
      _
    // Predicated region
    $region14: #{tpu_custom_call.1} parent=1 // pred_check
      _
    $region15: #{tpu_custom_call.1} parent=1 // pred_check_branch
      %27 = sbr.rel (0) target = $region17
    $region16: #{tpu_custom_call.1} parent=1 // pred_region
      _
    $region17: #{tpu_custom_call.1} parent=1 // pred_fallthru
      _
    // Predicated region
    $region18: #{tpu_custom_call.1} parent=1 // pred_check
      _
    $region19: #{tpu_custom_call.1} parent=1 // pred_check_branch
      %29 = sbr.rel (0) target = $region21
    $region20: #{tpu_custom_call.1} parent=1 // pred_region
      _
    $region21: #{tpu_custom_call.1} parent=1 // pred_fallthru
      _
    // Predicated region
    $region22: #{tpu_custom_call.1} parent=1 // pred_check
      _
    $region23: #{tpu_custom_call.1} parent=1 // pred_check_branch
      %31 = sbr.rel (0) target = $region25
    $region24: #{tpu_custom_call.1} parent=1 // pred_region
      _
    $region25: #{tpu_custom_call.1} parent=1 // pred_fallthru
      _
    // Predicated region
    $region26: #{tpu_custom_call.1} parent=1 // pred_check
      _
    $region27: #{tpu_custom_call.1} parent=1 // pred_check_branch
      %33 = sbr.rel (0) target = $region29
    $region28: #{tpu_custom_call.1} parent=1 // pred_region
      _
    $region29: #{tpu_custom_call.1} parent=1 // pred_fallthru
      _
    // Predicated region
    $region30: #{tpu_custom_call.1} parent=1 // pred_check
      _
    $region31: #{tpu_custom_call.1} parent=1 // pred_check_branch
      %35 = sbr.rel (0) target = $region33
    $region32: #{tpu_custom_call.1} parent=1 // pred_region
      _
    $region33: #{tpu_custom_call.1} parent=1 // pred_fallthru
      _
    // Predicated region
    $region34: #{tpu_custom_call.1} parent=1 // pred_check
      _
    $region35: #{tpu_custom_call.1} parent=1 // pred_check_branch
      %37 = sbr.rel (0) target = $region37
    $region36: #{tpu_custom_call.1} parent=1 // pred_region
      _
    $region37: #{tpu_custom_call.1} parent=1 // pred_fallthru
      _
    // Predicated region
    $region38: #{tpu_custom_call.1} parent=1 // pred_check
      _
    $region39: #{tpu_custom_call.1} parent=1 // pred_check_branch
      %39 = sbr.rel (0) target = $region41
    $region40: #{tpu_custom_call.1} parent=1 // pred_region
      _
    $region41: #{tpu_custom_call.1} parent=1 // pred_fallthru
      _
    // Predicated region
    $region42: #{tpu_custom_call.1} parent=1 // pred_check
      _
    $region43: #{tpu_custom_call.1} parent=1 // pred_check_branch
      %41 = sbr.rel (0) target = $region45
    $region44: #{tpu_custom_call.1} parent=1 // pred_region
      _
    $region45: #{tpu_custom_call.1} parent=1 // pred_fallthru
      _
    // Predicated region
    $region46: #{tpu_custom_call.1} parent=1 // pred_check
      _
    $region47: #{tpu_custom_call.1} parent=1 // pred_check_branch
      %43 = sbr.rel (0) target = $region49
    $region48: #{tpu_custom_call.1} parent=1 // pred_region
      _
    $region49: #{tpu_custom_call.1} parent=1 // pred_fallthru
      _
    // Predicated region
    $region50: #{tpu_custom_call.1} parent=1 // pred_check
      _
    $region51: #{tpu_custom_call.1} parent=1 // pred_check_branch
      %45 = sbr.rel (0) target = $region53
    $region52: #{tpu_custom_call.1} parent=1 // pred_region
      _
    $region53: #{tpu_custom_call.1} parent=1 // pred_fallthru
      _
    // Predicated region
    $region54: #{tpu_custom_call.1} parent=1 // pred_check
      _
    $region55: #{tpu_custom_call.1} parent=1 // pred_check_branch
      %47 = sbr.rel (0) target = $region57
    $region56: #{tpu_custom_call.1} parent=1 // pred_region
      _
    $region57: #{tpu_custom_call.1} parent=1 // pred_fallthru
      _
    %v48 = vld [vmem:[%s0] sm:$0xff]
    %v49 = vld [vmem:[%s0 + $0x8] sm:$0xff]
    %v50 = vld [vmem:[%s1] sm:$0xff]
    %v51 = vld [vmem:[%s1 + $0x8] sm:$0xff]
    %v52 = vld [vmem:[%s1 + $0x10] sm:$0xff]
    %v53 = vld [vmem:[%s1 + $0x18] sm:$0xff]
    %v54 = vld [vmem:[%s2] sm:$0xff]
    %v55 = vld [vmem:[%s2 + $0x8] sm:$0xff]
    %v56 = vld [vmem:[%s3] sm:$0xff]
    %v57 = vld [vmem:[%s3 + $0x8] sm:$0xff]
    %v58 = vld [vmem:[%s3 + $0x10] sm:$0xff]
    %v59 = vld [vmem:[%s3 + $0x18] sm:$0xff]
    %v60 = vld [vmem:[%s13] sm:$0xff]
    %v61 = vld [vmem:[%s13 + $0x8] sm:$0x1]
    %vm62 = vcmask 261120
    %v63 = vsel %vm62, %v48, 0.0
    %64 = vadd.xlane.f32.xlu0 %v63
    %v65 = vpop.xlane.xlu0 %64
    %v66 = vsel %vm62, %v49, 0.0
    %67 = vadd.xlane.f32.xlu0 %v66
    %v68 = vpop.xlane.xlu0 %67
    %v69 = vrcp.pop 32.0
    %v70 = vmul.f32 %v65, %v69
    %v71 = vmul.f32 %v68, %v69
    %v72 = vsub.f32 %v48, %v70
    %v73 = vsub.f32 %v49, %v71
    %v74 = vmul.f32 %v72, %v72
    %v75 = vmul.f32 %v73, %v73
    %v76 = vsel %vm62, %v74, 0.0
    %77 = vadd.xlane.f32.xlu0 %v76
    %v78 = vpop.xlane.xlu0 %77
    %v79 = vsel %vm62, %v75, 0.0
    %80 = vadd.xlane.f32.xlu0 %v79
    %v81 = vpop.xlane.xlu0 %80
    %v82 = vmul.f32 %v78, %v69
    %v83 = vmul.f32 %v81, %v69
    %v84 = vadd.f32 %v82, 1e-05
    %v85 = vadd.f32 %v83, 1e-05
    %v86 = vrsqrt.pop %v84
    %v87 = vrsqrt.pop %v85
    %v88 = vmul.f32 %v72, %v86
    %v89 = vmul.f32 %v73, %v87
    %v90 = vlaneseq
    %v91 = vshrl.u32 %v90, 7
    %v92 = vsub.s32 3, %v91
    %v93 = vrot.slane %v60, %v92
    %v94 = vmul.f32 %v88, %v93
    %v95 = vmul.f32 %v89, %v93
    %v96 = vlaneseq
    %v97 = vshrl.u32 %v96, 7
    %v98 = vsub.s32 4, %v97
    %v99 = vrot.slane %v60, %v98
    %v100 = vadd.f32 %v94, %v99
    %v101 = vadd.f32 %v95, %v99
    %v102 = vadd.f32 %v100, %v54
    %v103 = vadd.f32 %v101, %v55
    %v104 = vld [vmem:[%s4] sm:$0xff]
    %v105 = vld [vmem:[%s4 + $0x8] sm:$0xff]
    %v106 = vld [vmem:[%s4 + $0x10] sm:$0xff]
    %v107 = vld [vmem:[%s4 + $0x18] sm:$0xff]
    %v108 = vld [vmem:[%s4 + $0x20] sm:$0xff]
    %v109 = vld [vmem:[%s4 + $0x28] sm:$0xff]
    %v110 = vld [vmem:[%s4 + $0x30] sm:$0xff]
    %v111 = vld [vmem:[%s4 + $0x38] sm:$0xff]
    %v112 = vld [vmem:[%s4 + $0x40] sm:$0xff]
    %v113 = vld [vmem:[%s4 + $0x48] sm:$0xff]
    %v114 = vld [vmem:[%s4 + $0x50] sm:$0xff]
    %v115 = vld [vmem:[%s4 + $0x58] sm:$0xff]
    %v116 = vld [vmem:[%s4 + $0x60] sm:$0xff]
    %v117 = vld [vmem:[%s4 + $0x68] sm:$0xff]
    %v118 = vld [vmem:[%s4 + $0x70] sm:$0xff]
    %v119 = vld [vmem:[%s4 + $0x78] sm:$0xff]
    %v120 = vld [vmem:[%s4 + $0x80] sm:$0xff]
    %v121 = vld [vmem:[%s4 + $0x88] sm:$0xff]
    %v122 = vld [vmem:[%s4 + $0x90] sm:$0xff]
    %v123 = vld [vmem:[%s4 + $0x98] sm:$0xff]
    %v124 = vld [vmem:[%s4 + $0xa0] sm:$0xff]
    %v125 = vld [vmem:[%s4 + $0xa8] sm:$0xff]
    %v126 = vld [vmem:[%s4 + $0xb0] sm:$0xff]
    %v127 = vld [vmem:[%s4 + $0xb8] sm:$0xff]
    %v128 = vld [vmem:[%s4 + $0xc0] sm:$0xff]
    %v129 = vld [vmem:[%s4 + $0xc8] sm:$0xff]
    %v130 = vld [vmem:[%s4 + $0xd0] sm:$0xff]
    %v131 = vld [vmem:[%s4 + $0xd8] sm:$0xff]
    %v132 = vld [vmem:[%s4 + $0xe0] sm:$0xff]
    %v133 = vld [vmem:[%s4 + $0xe8] sm:$0xff]
    %v134 = vld [vmem:[%s4 + $0xf0] sm:$0xff]
    %v135 = vld [vmem:[%s4 + $0xf8] sm:$0xff]
    %v136 = vld [vmem:[%s4 + $0x100] sm:$0xff]
    %v137 = vld [vmem:[%s4 + $0x108] sm:$0xff]
    %v138 = vld [vmem:[%s4 + $0x110] sm:$0xff]
    %v139 = vld [vmem:[%s4 + $0x118] sm:$0xff]
    %v140 = vld [vmem:[%s4 + $0x120] sm:$0xff]
    %v141 = vld [vmem:[%s4 + $0x128] sm:$0xff]
    %v142 = vld [vmem:[%s4 + $0x130] sm:$0xff]
    %v143 = vld [vmem:[%s4 + $0x138] sm:$0xff]
    %v144 = vld [vmem:[%s4 + $0x140] sm:$0xff]
    %v145 = vld [vmem:[%s4 + $0x148] sm:$0xff]
    %v146 = vld [vmem:[%s4 + $0x150] sm:$0xff]
    %v147 = vld [vmem:[%s4 + $0x158] sm:$0xff]
    %v148 = vld [vmem:[%s4 + $0x160] sm:$0xff]
    %v149 = vld [vmem:[%s4 + $0x168] sm:$0xff]
    %v150 = vld [vmem:[%s4 + $0x170] sm:$0xff]
    %v151 = vld [vmem:[%s4 + $0x178] sm:$0xff]
    %v152 = vld [vmem:[%s5] sm:$0x1]
    %v153 = vld [vmem:[%s5 + $0x1] sm:$0x1]
    %v154 = vld [vmem:[%s5 + $0x2] sm:$0x1]
    %v155 = vld [vmem:[%s5 + $0x3] sm:$0x1]
    %v156 = vld [vmem:[%s5 + $0x4] sm:$0x1]
    %v157 = vld [vmem:[%s5 + $0x5] sm:$0x1]
    %v158 = vld [vmem:[%s5 + $0x6] sm:$0x1]
    %v159 = vld [vmem:[%s5 + $0x7] sm:$0x1]
    %v160 = vld [vmem:[%s5 + $0x8] sm:$0x1]
    %v161 = vld [vmem:[%s5 + $0x9] sm:$0x1]
    %v162 = vld [vmem:[%s5 + $0xa] sm:$0x1]
    %v163 = vld [vmem:[%s5 + $0xb] sm:$0x1]
    %v164 = vld [vmem:[%s6] sm:$0xff]
    %v165 = vld [vmem:[%s6 + $0x8] sm:$0xff]
    %v166 = vld [vmem:[%s6 + $0x10] sm:$0xff]
    %v167 = vld [vmem:[%s6 + $0x18] sm:$0xff]
    %v169 = vlaneseq
    %v170 = vshrl.u32 %v169, 7
    %v171 = vsub.s32 0, %v170
    %v172 = vrot.slane %v152, %v171
    %v175 = vsel %vm62, %v102, 0
    %v178 = vsel %vm62, %v103, 0
    %180 = vmatprep.subr.mxu0 0.0
    %181 = vmatpush1.msra.mxu0 %v104
    %182 = vmatprep.subr.mxu0 0.0
    %183 = vmatpush1.msra.mxu0 %v105
    %184 = vmatprep.subr.mxu0 0.0
    %185 = vmatpush1.msra.mxu0 %v106
    %186 = vmatprep.subr.mxu0 0.0
    %187 = vmatpush1.msra.mxu0 %v107
    %188 = vmatprep.subr.mxu0 0.0
    %189 = vmatpush1.msra.mxu0 0.0
    %190 = vmatprep.subr.mxu0 0.0
    %191 = vmatpush1.msra.mxu0 0.0
    %192 = vmatprep.subr.mxu0 0.0
    %193 = vmatpush1.msra.mxu0 0.0
    %194 = vmatprep.subr.mxu0 0.0
    %195 = vmatpush1.msra.mxu0 0.0
    %196 = vmatprep.subr.mxu0 0.0
    %197 = vmatpush1.msra.mxu0 0.0
    %198 = vmatprep.subr.mxu0 0.0
    %199 = vmatpush1.msra.mxu0 0.0
    %200 = vmatprep.subr.mxu0 0.0
    %201 = vmatpush1.msra.mxu0 0.0
    %202 = vmatprep.subr.mxu0 0.0
    %203 = vmatpush1.msra.mxu0 0.0
    %204 = vmatprep.subr.mxu0 0.0
    %205 = vmatpush1.msra.mxu0 0.0
    %206 = vmatprep.subr.mxu0 0.0
    %207 = vmatpush1.msra.mxu0 0.0
    %208 = vmatprep.subr.mxu0 0.0
    %209 = vmatpush1.msra.mxu0 0.0
    %210 = vmatprep.subr.mxu0 0.0
    %211 = vmatpush1.msra.mxu0 0.0
    %212 = vmatprep.subr.mxu0 0.0
    %213 = vmatpush1.msra.mxu0 0.0
    %214 = vmatprep.subr.mxu0 0.0
    %215 = vmatpush1.msra.mxu0 0.0
    %216 = vmatprep.subr.mxu0 0.0
    %217 = vmatpush1.msra.mxu0 0.0
    %218 = vmatprep.subr.mxu0 0.0
    %219 = vmatpush1.msra.mxu0 0.0
    %220 = vmatprep.subr.mxu0 0.0
    %221 = vmatpush1.msra.mxu0 0.0
    %222 = vmatprep.subr.mxu0 0.0
    %223 = vmatpush1.msra.mxu0 0.0
    %224 = vmatprep.subr.mxu0 0.0
    %225 = vmatpush1.msra.mxu0 0.0
    %226 = vmatprep.subr.mxu0 0.0
    %227 = vmatpush1.msra.mxu0 0.0
    %228 = vmatprep.subr.mxu0 0.0
    %229 = vmatpush1.msra.mxu0 0.0
    %230 = vmatprep.subr.mxu0 0.0
    %231 = vmatpush1.msra.mxu0 0.0
    %232 = vmatprep.subr.mxu0 0.0
    %233 = vmatpush1.msra.mxu0 0.0
    %234 = vmatprep.subr.mxu0 0.0
    %235 = vmatpush1.msra.mxu0 0.0
    %236 = vmatprep.subr.mxu0 0.0
    %237 = vmatpush1.msra.mxu0 0.0
    %238 = vmatprep.subr.mxu0 0.0
    %239 = vmatpush1.msra.mxu0 0.0
    %240 = vmatprep.subr.mxu0 0.0
    %241 = vmatpush1.msra.mxu0 0.0
    %242 = vmatprep.subr.mxu0 0.0
    %243 = vmatpush1.msra.mxu0 0.0
    %244 = vmatprep.mubr.f32.mxu0 0.0
    %245 = vmatmul.mubr.f32.gmra.mrb[0].mxu0 %v175
    %v246 = vpop.f32.mrb[0].mxu0
    %v247 = vadd.f32 %v172, %v246
    %v248 = vpop.f32.mrb[0].mxu0
    %249 = vmatprep.mubr.f32.mxu0 0.0
    %250 = vmatmul.mubr.f32.gmra.mrb[0].mxu0 %v178
    %v251 = vpop.f32.mrb[0].mxu0
    %v252 = vadd.f32 %v172, %v251
    %v253 = vpop.f32.mrb[0].mxu0
    %254 = vdwg.mxu0
    %v255 = vmul.f32 %v247, 0.35355338
    %v256 = vmul.f32 %v252, 0.35355338
    %v258 = vlaneseq
    %v259 = vshrl.u32 %v258, 7
    %v260 = vsub.s32 0, %v259
    %v261 = vrot.slane %v156, %v260
    %263 = vmatprep.subr.mxu0 0.0
    %264 = vmatpush1.msra.mxu0 %v120
    %265 = vmatprep.subr.mxu0 0.0
    %266 = vmatpush1.msra.mxu0 %v121
    %267 = vmatprep.subr.mxu0 0.0
    %268 = vmatpush1.msra.mxu0 %v122
    %269 = vmatprep.subr.mxu0 0.0
    %270 = vmatpush1.msra.mxu0 %v123
    %271 = vmatprep.subr.mxu0 0.0
    %272 = vmatpush1.msra.mxu0 0.0
    %273 = vmatprep.subr.mxu0 0.0
    %274 = vmatpush1.msra.mxu0 0.0
    %275 = vmatprep.subr.mxu0 0.0
    %276 = vmatpush1.msra.mxu0 0.0
    %277 = vmatprep.subr.mxu0 0.0
    %278 = vmatpush1.msra.mxu0 0.0
    %279 = vmatprep.subr.mxu0 0.0
    %280 = vmatpush1.msra.mxu0 0.0
    %281 = vmatprep.subr.mxu0 0.0
    %282 = vmatpush1.msra.mxu0 0.0
    %283 = vmatprep.subr.mxu0 0.0
    %284 = vmatpush1.msra.mxu0 0.0
    %285 = vmatprep.subr.mxu0 0.0
    %286 = vmatpush1.msra.mxu0 0.0
    %287 = vmatprep.subr.mxu0 0.0
    %288 = vmatpush1.msra.mxu0 0.0
    %289 = vmatprep.subr.mxu0 0.0
    %290 = vmatpush1.msra.mxu0 0.0
    %291 = vmatprep.subr.mxu0 0.0
    %292 = vmatpush1.msra.mxu0 0.0
    %293 = vmatprep.subr.mxu0 0.0
    %294 = vmatpush1.msra.mxu0 0.0
    %295 = vmatprep.subr.mxu0 0.0
    %296 = vmatpush1.msra.mxu0 0.0
    %297 = vmatprep.subr.mxu0 0.0
    %298 = vmatpush1.msra.mxu0 0.0
    %299 = vmatprep.subr.mxu0 0.0
    %300 = vmatpush1.msra.mxu0 0.0
    %301 = vmatprep.subr.mxu0 0.0
    %302 = vmatpush1.msra.mxu0 0.0
    %303 = vmatprep.subr.mxu0 0.0
    %304 = vmatpush1.msra.mxu0 0.0
    %305 = vmatprep.subr.mxu0 0.0
    %306 = vmatpush1.msra.mxu0 0.0
    %307 = vmatprep.subr.mxu0 0.0
    %308 = vmatpush1.msra.mxu0 0.0
    %309 = vmatprep.subr.mxu0 0.0
    %310 = vmatpush1.msra.mxu0 0.0
    %311 = vmatprep.subr.mxu0 0.0
    %312 = vmatpush1.msra.mxu0 0.0
    %313 = vmatprep.subr.mxu0 0.0
    %314 = vmatpush1.msra.mxu0 0.0
    %315 = vmatprep.subr.mxu0 0.0
    %316 = vmatpush1.msra.mxu0 0.0
    %317 = vmatprep.subr.mxu0 0.0
    %318 = vmatpush1.msra.mxu0 0.0
    %319 = vmatprep.subr.mxu0 0.0
    %320 = vmatpush1.msra.mxu0 0.0
    %321 = vmatprep.subr.mxu0 0.0
    %322 = vmatpush1.msra.mxu0 0.0
    %323 = vmatprep.subr.mxu0 0.0
    %324 = vmatpush1.msra.mxu0 0.0
    %325 = vmatprep.subr.mxu0 0.0
    %326 = vmatpush1.msra.mxu0 0.0
    %327 = vmatprep.mubr.f32.mxu0 0.0
    %328 = vmatmul.mubr.f32.gmra.mrb[0].mxu0 %v175
    %v329 = vpop.f32.mrb[0].mxu0
    %v330 = vadd.f32 %v261, %v329
    %v331 = vpop.f32.mrb[0].mxu0
    %332 = vmatprep.mubr.f32.mxu0 0.0
    %333 = vmatmul.mubr.f32.gmra.mrb[0].mxu0 %v178
    %v334 = vpop.f32.mrb[0].mxu0
    %v335 = vadd.f32 %v261, %v334
    %v336 = vpop.f32.mrb[0].mxu0
    %337 = vdwg.mxu0
    %v339 = vlaneseq
    %v340 = vshrl.u32 %v339, 7
    %v341 = vsub.s32 0, %v340
    %v342 = vrot.slane %v160, %v341
    %v345 = vsel %vm62, %v100, 0
    %v348 = vsel %vm62, %v101, 0
    %350 = vmatprep.subr.mxu0 0.0
    %351 = vmatpush1.msra.mxu0 %v136
    %352 = vmatprep.subr.mxu0 0.0
    %353 = vmatpush1.msra.mxu0 %v137
    %354 = vmatprep.subr.mxu0 0.0
    %355 = vmatpush1.msra.mxu0 %v138
    %356 = vmatprep.subr.mxu0 0.0
    %357 = vmatpush1.msra.mxu0 %v139
    %358 = vmatprep.subr.mxu0 0.0
    %359 = vmatpush1.msra.mxu0 0.0
    %360 = vmatprep.subr.mxu0 0.0
    %361 = vmatpush1.msra.mxu0 0.0
    %362 = vmatprep.subr.mxu0 0.0
    %363 = vmatpush1.msra.mxu0 0.0
    %364 = vmatprep.subr.mxu0 0.0
    %365 = vmatpush1.msra.mxu0 0.0
    %366 = vmatprep.subr.mxu0 0.0
    %367 = vmatpush1.msra.mxu0 0.0
    %368 = vmatprep.subr.mxu0 0.0
    %369 = vmatpush1.msra.mxu0 0.0
    %370 = vmatprep.subr.mxu0 0.0
    %371 = vmatpush1.msra.mxu0 0.0
    %372 = vmatprep.subr.mxu0 0.0
    %373 = vmatpush1.msra.mxu0 0.0
    %374 = vmatprep.subr.mxu0 0.0
    %375 = vmatpush1.msra.mxu0 0.0
    %376 = vmatprep.subr.mxu0 0.0
    %377 = vmatpush1.msra.mxu0 0.0
    %378 = vmatprep.subr.mxu0 0.0
    %379 = vmatpush1.msra.mxu0 0.0
    %380 = vmatprep.subr.mxu0 0.0
    %381 = vmatpush1.msra.mxu0 0.0
    %382 = vmatprep.subr.mxu0 0.0
    %383 = vmatpush1.msra.mxu0 0.0
    %384 = vmatprep.subr.mxu0 0.0
    %385 = vmatpush1.msra.mxu0 0.0
    %386 = vmatprep.subr.mxu0 0.0
    %387 = vmatpush1.msra.mxu0 0.0
    %388 = vmatprep.subr.mxu0 0.0
    %389 = vmatpush1.msra.mxu0 0.0
    %390 = vmatprep.subr.mxu0 0.0
    %391 = vmatpush1.msra.mxu0 0.0
    %392 = vmatprep.subr.mxu0 0.0
    %393 = vmatpush1.msra.mxu0 0.0
    %394 = vmatprep.subr.mxu0 0.0
    %395 = vmatpush1.msra.mxu0 0.0
    %396 = vmatprep.subr.mxu0 0.0
    %397 = vmatpush1.msra.mxu0 0.0
    %398 = vmatprep.subr.mxu0 0.0
    %399 = vmatpush1.msra.mxu0 0.0
    %400 = vmatprep.subr.mxu0 0.0
    %401 = vmatpush1.msra.mxu0 0.0
    %402 = vmatprep.subr.mxu0 0.0
    %403 = vmatpush1.msra.mxu0 0.0
    %404 = vmatprep.subr.mxu0 0.0
    %405 = vmatpush1.msra.mxu0 0.0
    %406 = vmatprep.subr.mxu0 0.0
    %407 = vmatpush1.msra.mxu0 0.0
    %408 = vmatprep.subr.mxu0 0.0
    %409 = vmatpush1.msra.mxu0 0.0
    %410 = vmatprep.subr.mxu0 0.0
    %411 = vmatpush1.msra.mxu0 0.0
    %412 = vmatprep.subr.mxu0 0.0
    %413 = vmatpush1.msra.mxu0 0.0
    %414 = vmatprep.mubr.f32.mxu0 0.0
    %415 = vmatmul.mubr.f32.gmra.mrb[0].mxu0 %v345
    %v416 = vpop.f32.mrb[0].mxu0
    %v417 = vadd.f32 %v342, %v416
    %v418 = vpop.f32.mrb[0].mxu0
    %419 = vmatprep.mubr.f32.mxu0 0.0
    %420 = vmatmul.mubr.f32.gmra.mrb[0].mxu0 %v348
    %v421 = vpop.f32.mrb[0].mxu0
    %v422 = vadd.f32 %v342, %v421
    %v423 = vpop.f32.mrb[0].mxu0
    %424 = vdwg.mxu0
    %v426 = vlaneseq
    %v427 = vshrl.u32 %v426, 7
    %v428 = vsub.s32 0, %v427
    %v429 = vrot.slane %v153, %v428
    %431 = vmatprep.subr.mxu0 0.0
    %432 = vmatpush1.msra.mxu0 %v108
    %433 = vmatprep.subr.mxu0 0.0
    %434 = vmatpush1.msra.mxu0 %v109
    %435 = vmatprep.subr.mxu0 0.0
    %436 = vmatpush1.msra.mxu0 %v110
    %437 = vmatprep.subr.mxu0 0.0
    %438 = vmatpush1.msra.mxu0 %v111
    %439 = vmatprep.subr.mxu0 0.0
    %440 = vmatpush1.msra.mxu0 0.0
    %441 = vmatprep.subr.mxu0 0.0
    %442 = vmatpush1.msra.mxu0 0.0
    %443 = vmatprep.subr.mxu0 0.0
    %444 = vmatpush1.msra.mxu0 0.0
    %445 = vmatprep.subr.mxu0 0.0
    %446 = vmatpush1.msra.mxu0 0.0
    %447 = vmatprep.subr.mxu0 0.0
    %448 = vmatpush1.msra.mxu0 0.0
    %449 = vmatprep.subr.mxu0 0.0
    %450 = vmatpush1.msra.mxu0 0.0
    %451 = vmatprep.subr.mxu0 0.0
    %452 = vmatpush1.msra.mxu0 0.0
    %453 = vmatprep.subr.mxu0 0.0
    %454 = vmatpush1.msra.mxu0 0.0
    %455 = vmatprep.subr.mxu0 0.0
    %456 = vmatpush1.msra.mxu0 0.0
    %457 = vmatprep.subr.mxu0 0.0
    %458 = vmatpush1.msra.mxu0 0.0
    %459 = vmatprep.subr.mxu0 0.0
    %460 = vmatpush1.msra.mxu0 0.0
    %461 = vmatprep.subr.mxu0 0.0
    %462 = vmatpush1.msra.mxu0 0.0
    %463 = vmatprep.subr.mxu0 0.0
    %464 = vmatpush1.msra.mxu0 0.0
    %465 = vmatprep.subr.mxu0 0.0
    %466 = vmatpush1.msra.mxu0 0.0
    %467 = vmatprep.subr.mxu0 0.0
    %468 = vmatpush1.msra.mxu0 0.0
    %469 = vmatprep.subr.mxu0 0.0
    %470 = vmatpush1.msra.mxu0 0.0
    %471 = vmatprep.subr.mxu0 0.0
    %472 = vmatpush1.msra.mxu0 0.0
    %473 = vmatprep.subr.mxu0 0.0
    %474 = vmatpush1.msra.mxu0 0.0
    %475 = vmatprep.subr.mxu0 0.0
    %476 = vmatpush1.msra.mxu0 0.0
    %477 = vmatprep.subr.mxu0 0.0
    %478 = vmatpush1.msra.mxu0 0.0
    %479 = vmatprep.subr.mxu0 0.0
    %480 = vmatpush1.msra.mxu0 0.0
    %481 = vmatprep.subr.mxu0 0.0
    %482 = vmatpush1.msra.mxu0 0.0
    %483 = vmatprep.subr.mxu0 0.0
    %484 = vmatpush1.msra.mxu0 0.0
    %485 = vmatprep.subr.mxu0 0.0
    %486 = vmatpush1.msra.mxu0 0.0
    %487 = vmatprep.subr.mxu0 0.0
    %488 = vmatpush1.msra.mxu0 0.0
    %489 = vmatprep.subr.mxu0 0.0
    %490 = vmatpush1.msra.mxu0 0.0
    %491 = vmatprep.subr.mxu0 0.0
    %492 = vmatpush1.msra.mxu0 0.0
    %493 = vmatprep.subr.mxu0 0.0
    %494 = vmatpush1.msra.mxu0 0.0
    %495 = vmatprep.mubr.f32.mxu0 0.0
    %496 = vmatmul.mubr.f32.gmra.mrb[0].mxu0 %v175
    %v497 = vpop.f32.mrb[0].mxu0
    %v498 = vadd.f32 %v429, %v497
    %v499 = vpop.f32.mrb[0].mxu0
    %500 = vmatprep.mubr.f32.mxu0 0.0
    %501 = vmatmul.mubr.f32.gmra.mrb[0].mxu0 %v178
    %v502 = vpop.f32.mrb[0].mxu0
    %v503 = vadd.f32 %v429, %v502
    %v504 = vpop.f32.mrb[0].mxu0
    %505 = vdwg.mxu0
    %v506 = vmul.f32 %v498, 0.35355338
    %v507 = vmul.f32 %v503, 0.35355338
    %v509 = vlaneseq
    %v510 = vshrl.u32 %v509, 7
    %v511 = vsub.s32 0, %v510
    %v512 = vrot.slane %v157, %v511
    %514 = vmatprep.subr.mxu0 0.0
    %515 = vmatpush1.msra.mxu0 %v124
    %516 = vmatprep.subr.mxu0 0.0
    %517 = vmatpush1.msra.mxu0 %v125
    %518 = vmatprep.subr.mxu0 0.0
    %519 = vmatpush1.msra.mxu0 %v126
    %520 = vmatprep.subr.mxu0 0.0
    %521 = vmatpush1.msra.mxu0 %v127
    %522 = vmatprep.subr.mxu0 0.0
    %523 = vmatpush1.msra.mxu0 0.0
    %524 = vmatprep.subr.mxu0 0.0
    %525 = vmatpush1.msra.mxu0 0.0
    %526 = vmatprep.subr.mxu0 0.0
    %527 = vmatpush1.msra.mxu0 0.0
    %528 = vmatprep.subr.mxu0 0.0
    %529 = vmatpush1.msra.mxu0 0.0
    %530 = vmatprep.subr.mxu0 0.0
    %531 = vmatpush1.msra.mxu0 0.0
    %532 = vmatprep.subr.mxu0 0.0
    %533 = vmatpush1.msra.mxu0 0.0
    %534 = vmatprep.subr.mxu0 0.0
    %535 = vmatpush1.msra.mxu0 0.0
    %536 = vmatprep.subr.mxu0 0.0
    %537 = vmatpush1.msra.mxu0 0.0
    %538 = vmatprep.subr.mxu0 0.0
    %539 = vmatpush1.msra.mxu0 0.0
    %540 = vmatprep.subr.mxu0 0.0
    %541 = vmatpush1.msra.mxu0 0.0
    %542 = vmatprep.subr.mxu0 0.0
    %543 = vmatpush1.msra.mxu0 0.0
    %544 = vmatprep.subr.mxu0 0.0
    %545 = vmatpush1.msra.mxu0 0.0
    %546 = vmatprep.subr.mxu0 0.0
    %547 = vmatpush1.msra.mxu0 0.0
    %548 = vmatprep.subr.mxu0 0.0
    %549 = vmatpush1.msra.mxu0 0.0
    %550 = vmatprep.subr.mxu0 0.0
    %551 = vmatpush1.msra.mxu0 0.0
    %552 = vmatprep.subr.mxu0 0.0
    %553 = vmatpush1.msra.mxu0 0.0
    %554 = vmatprep.subr.mxu0 0.0
    %555 = vmatpush1.msra.mxu0 0.0
    %556 = vmatprep.subr.mxu0 0.0
    %557 = vmatpush1.msra.mxu0 0.0
    %558 = vmatprep.subr.mxu0 0.0
    %559 = vmatpush1.msra.mxu0 0.0
    %560 = vmatprep.subr.mxu0 0.0
    %561 = vmatpush1.msra.mxu0 0.0
    %562 = vmatprep.subr.mxu0 0.0
    %563 = vmatpush1.msra.mxu0 0.0
    %564 = vmatprep.subr.mxu0 0.0
    %565 = vmatpush1.msra.mxu0 0.0
    %566 = vmatprep.subr.mxu0 0.0
    %567 = vmatpush1.msra.mxu0 0.0
    %568 = vmatprep.subr.mxu0 0.0
    %569 = vmatpush1.msra.mxu0 0.0
    %570 = vmatprep.subr.mxu0 0.0
    %571 = vmatpush1.msra.mxu0 0.0
    %572 = vmatprep.subr.mxu0 0.0
    %573 = vmatpush1.msra.mxu0 0.0
    %574 = vmatprep.subr.mxu0 0.0
    %575 = vmatpush1.msra.mxu0 0.0
    %576 = vmatprep.subr.mxu0 0.0
    %577 = vmatpush1.msra.mxu0 0.0
    %578 = vmatprep.mubr.f32.mxu0 0.0
    %579 = vmatmul.mubr.f32.gmra.mrb[0].mxu0 %v175
    %v580 = vpop.f32.mrb[0].mxu0
    %v581 = vadd.f32 %v512, %v580
    %v582 = vpop.f32.mrb[0].mxu0
    %583 = vmatprep.mubr.f32.mxu0 0.0
    %584 = vmatmul.mubr.f32.gmra.mrb[0].mxu0 %v178
    %v585 = vpop.f32.mrb[0].mxu0
    %v586 = vadd.f32 %v512, %v585
    %v587 = vpop.f32.mrb[0].mxu0
    %588 = vdwg.mxu0
    %v590 = vlaneseq
    %v591 = vshrl.u32 %v590, 7
    %v592 = vsub.s32 0, %v591
    %v593 = vrot.slane %v161, %v592
    %595 = vmatprep.subr.mxu0 0.0
    %596 = vmatpush1.msra.mxu0 %v140
    %597 = vmatprep.subr.mxu0 0.0
    %598 = vmatpush1.msra.mxu0 %v141
    %599 = vmatprep.subr.mxu0 0.0
    %600 = vmatpush1.msra.mxu0 %v142
    %601 = vmatprep.subr.mxu0 0.0
    %602 = vmatpush1.msra.mxu0 %v143
    %603 = vmatprep.subr.mxu0 0.0
    %604 = vmatpush1.msra.mxu0 0.0
    %605 = vmatprep.subr.mxu0 0.0
    %606 = vmatpush1.msra.mxu0 0.0
    %607 = vmatprep.subr.mxu0 0.0
    %608 = vmatpush1.msra.mxu0 0.0
    %609 = vmatprep.subr.mxu0 0.0
    %610 = vmatpush1.msra.mxu0 0.0
    %611 = vmatprep.subr.mxu0 0.0
    %612 = vmatpush1.msra.mxu0 0.0
    %613 = vmatprep.subr.mxu0 0.0
    %614 = vmatpush1.msra.mxu0 0.0
    %615 = vmatprep.subr.mxu0 0.0
    %616 = vmatpush1.msra.mxu0 0.0
    %617 = vmatprep.subr.mxu0 0.0
    %618 = vmatpush1.msra.mxu0 0.0
    %619 = vmatprep.subr.mxu0 0.0
    %620 = vmatpush1.msra.mxu0 0.0
    %621 = vmatprep.subr.mxu0 0.0
    %622 = vmatpush1.msra.mxu0 0.0
    %623 = vmatprep.subr.mxu0 0.0
    %624 = vmatpush1.msra.mxu0 0.0
    %625 = vmatprep.subr.mxu0 0.0
    %626 = vmatpush1.msra.mxu0 0.0
    %627 = vmatprep.subr.mxu0 0.0
    %628 = vmatpush1.msra.mxu0 0.0
    %629 = vmatprep.subr.mxu0 0.0
    %630 = vmatpush1.msra.mxu0 0.0
    %631 = vmatprep.subr.mxu0 0.0
    %632 = vmatpush1.msra.mxu0 0.0
    %633 = vmatprep.subr.mxu0 0.0
    %634 = vmatpush1.msra.mxu0 0.0
    %635 = vmatprep.subr.mxu0 0.0
    %636 = vmatpush1.msra.mxu0 0.0
    %637 = vmatprep.subr.mxu0 0.0
    %638 = vmatpush1.msra.mxu0 0.0
    %639 = vmatprep.subr.mxu0 0.0
    %640 = vmatpush1.msra.mxu0 0.0
    %641 = vmatprep.subr.mxu0 0.0
    %642 = vmatpush1.msra.mxu0 0.0
    %643 = vmatprep.subr.mxu0 0.0
    %644 = vmatpush1.msra.mxu0 0.0
    %645 = vmatprep.subr.mxu0 0.0
    %646 = vmatpush1.msra.mxu0 0.0
    %647 = vmatprep.subr.mxu0 0.0
    %648 = vmatpush1.msra.mxu0 0.0
    %649 = vmatprep.subr.mxu0 0.0
    %650 = vmatpush1.msra.mxu0 0.0
    %651 = vmatprep.subr.mxu0 0.0
    %652 = vmatpush1.msra.mxu0 0.0
    %653 = vmatprep.subr.mxu0 0.0
    %654 = vmatpush1.msra.mxu0 0.0
    %655 = vmatprep.subr.mxu0 0.0
    %656 = vmatpush1.msra.mxu0 0.0
    %657 = vmatprep.subr.mxu0 0.0
    %658 = vmatpush1.msra.mxu0 0.0
    %659 = vmatprep.mubr.f32.mxu0 0.0
    %660 = vmatmul.mubr.f32.gmra.mrb[0].mxu0 %v345
    %v661 = vpop.f32.mrb[0].mxu0
    %v662 = vadd.f32 %v593, %v661
    %v663 = vpop.f32.mrb[0].mxu0
    %664 = vmatprep.mubr.f32.mxu0 0.0
    %665 = vmatmul.mubr.f32.gmra.mrb[0].mxu0 %v348
    %v666 = vpop.f32.mrb[0].mxu0
    %v667 = vadd.f32 %v593, %v666
    %v668 = vpop.f32.mrb[0].mxu0
    %669 = vdwg.mxu0
    %v671 = vlaneseq
    %v672 = vshrl.u32 %v671, 7
    %v673 = vsub.s32 0, %v672
    %v674 = vrot.slane %v154, %v673
    %676 = vmatprep.subr.mxu0 0.0
    %677 = vmatpush1.msra.mxu0 %v112
    %678 = vmatprep.subr.mxu0 0.0
    %679 = vmatpush1.msra.mxu0 %v113
    %680 = vmatprep.subr.mxu0 0.0
    %681 = vmatpush1.msra.mxu0 %v114
    %682 = vmatprep.subr.mxu0 0.0
    %683 = vmatpush1.msra.mxu0 %v115
    %684 = vmatprep.subr.mxu0 0.0
    %685 = vmatpush1.msra.mxu0 0.0
    %686 = vmatprep.subr.mxu0 0.0
    %687 = vmatpush1.msra.mxu0 0.0
    %688 = vmatprep.subr.mxu0 0.0
    %689 = vmatpush1.msra.mxu0 0.0
    %690 = vmatprep.subr.mxu0 0.0
    %691 = vmatpush1.msra.mxu0 0.0
    %692 = vmatprep.subr.mxu0 0.0
    %693 = vmatpush1.msra.mxu0 0.0
    %694 = vmatprep.subr.mxu0 0.0
    %695 = vmatpush1.msra.mxu0 0.0
    %696 = vmatprep.subr.mxu0 0.0
    %697 = vmatpush1.msra.mxu0 0.0
    %698 = vmatprep.subr.mxu0 0.0
    %699 = vmatpush1.msra.mxu0 0.0
    %700 = vmatprep.subr.mxu0 0.0
    %701 = vmatpush1.msra.mxu0 0.0
    %702 = vmatprep.subr.mxu0 0.0
    %703 = vmatpush1.msra.mxu0 0.0
    %704 = vmatprep.subr.mxu0 0.0
    %705 = vmatpush1.msra.mxu0 0.0
    %706 = vmatprep.subr.mxu0 0.0
    %707 = vmatpush1.msra.mxu0 0.0
    %708 = vmatprep.subr.mxu0 0.0
    %709 = vmatpush1.msra.mxu0 0.0
    %710 = vmatprep.subr.mxu0 0.0
    %711 = vmatpush1.msra.mxu0 0.0
    %712 = vmatprep.subr.mxu0 0.0
    %713 = vmatpush1.msra.mxu0 0.0
    %714 = vmatprep.subr.mxu0 0.0
    %715 = vmatpush1.msra.mxu0 0.0
    %716 = vmatprep.subr.mxu0 0.0
    %717 = vmatpush1.msra.mxu0 0.0
    %718 = vmatprep.subr.mxu0 0.0
    %719 = vmatpush1.msra.mxu0 0.0
    %720 = vmatprep.subr.mxu0 0.0
    %721 = vmatpush1.msra.mxu0 0.0
    %722 = vmatprep.subr.mxu0 0.0
    %723 = vmatpush1.msra.mxu0 0.0
    %724 = vmatprep.subr.mxu0 0.0
    %725 = vmatpush1.msra.mxu0 0.0
    %726 = vmatprep.subr.mxu0 0.0
    %727 = vmatpush1.msra.mxu0 0.0
    %728 = vmatprep.subr.mxu0 0.0
    %729 = vmatpush1.msra.mxu0 0.0
    %730 = vmatprep.subr.mxu0 0.0
    %731 = vmatpush1.msra.mxu0 0.0
    %732 = vmatprep.subr.mxu0 0.0
    %733 = vmatpush1.msra.mxu0 0.0
    %734 = vmatprep.subr.mxu0 0.0
    %735 = vmatpush1.msra.mxu0 0.0
    %736 = vmatprep.subr.mxu0 0.0
    %737 = vmatpush1.msra.mxu0 0.0
    %738 = vmatprep.subr.mxu0 0.0
    %739 = vmatpush1.msra.mxu0 0.0
    %740 = vmatprep.mubr.f32.mxu0 0.0
    %741 = vmatmul.mubr.f32.gmra.mrb[0].mxu0 %v175
    %v742 = vpop.f32.mrb[0].mxu0
    %v743 = vadd.f32 %v674, %v742
    %v744 = vpop.f32.mrb[0].mxu0
    %745 = vmatprep.mubr.f32.mxu0 0.0
    %746 = vmatmul.mubr.f32.gmra.mrb[0].mxu0 %v178
    %v747 = vpop.f32.mrb[0].mxu0
    %v748 = vadd.f32 %v674, %v747
    %v749 = vpop.f32.mrb[0].mxu0
    %750 = vdwg.mxu0
    %v751 = vmul.f32 %v743, 0.35355338
    %v752 = vmul.f32 %v748, 0.35355338
    %v754 = vlaneseq
    %v755 = vshrl.u32 %v754, 7
    %v756 = vsub.s32 0, %v755
    %v757 = vrot.slane %v158, %v756
    %759 = vmatprep.subr.mxu0 0.0
    %760 = vmatpush1.msra.mxu0 %v128
    %761 = vmatprep.subr.mxu0 0.0
    %762 = vmatpush1.msra.mxu0 %v129
    %763 = vmatprep.subr.mxu0 0.0
    %764 = vmatpush1.msra.mxu0 %v130
    %765 = vmatprep.subr.mxu0 0.0
    %766 = vmatpush1.msra.mxu0 %v131
    %767 = vmatprep.subr.mxu0 0.0
    %768 = vmatpush1.msra.mxu0 0.0
    %769 = vmatprep.subr.mxu0 0.0
    %770 = vmatpush1.msra.mxu0 0.0
    %771 = vmatprep.subr.mxu0 0.0
    %772 = vmatpush1.msra.mxu0 0.0
    %773 = vmatprep.subr.mxu0 0.0
    %774 = vmatpush1.msra.mxu0 0.0
    %775 = vmatprep.subr.mxu0 0.0
    %776 = vmatpush1.msra.mxu0 0.0
    %777 = vmatprep.subr.mxu0 0.0
    %778 = vmatpush1.msra.mxu0 0.0
    %779 = vmatprep.subr.mxu0 0.0
    %780 = vmatpush1.msra.mxu0 0.0
    %781 = vmatprep.subr.mxu0 0.0
    %782 = vmatpush1.msra.mxu0 0.0
    %783 = vmatprep.subr.mxu0 0.0
    %784 = vmatpush1.msra.mxu0 0.0
    %785 = vmatprep.subr.mxu0 0.0
    %786 = vmatpush1.msra.mxu0 0.0
    %787 = vmatprep.subr.mxu0 0.0
    %788 = vmatpush1.msra.mxu0 0.0
    %789 = vmatprep.subr.mxu0 0.0
    %790 = vmatpush1.msra.mxu0 0.0
    %791 = vmatprep.subr.mxu0 0.0
    %792 = vmatpush1.msra.mxu0 0.0
    %793 = vmatprep.subr.mxu0 0.0
    %794 = vmatpush1.msra.mxu0 0.0
    %795 = vmatprep.subr.mxu0 0.0
    %796 = vmatpush1.msra.mxu0 0.0
    %797 = vmatprep.subr.mxu0 0.0
    %798 = vmatpush1.msra.mxu0 0.0
    %799 = vmatprep.subr.mxu0 0.0
    %800 = vmatpush1.msra.mxu0 0.0
    %801 = vmatprep.subr.mxu0 0.0
    %802 = vmatpush1.msra.mxu0 0.0
    %803 = vmatprep.subr.mxu0 0.0
    %804 = vmatpush1.msra.mxu0 0.0
    %805 = vmatprep.subr.mxu0 0.0
    %806 = vmatpush1.msra.mxu0 0.0
    %807 = vmatprep.subr.mxu0 0.0
    %808 = vmatpush1.msra.mxu0 0.0
    %809 = vmatprep.subr.mxu0 0.0
    %810 = vmatpush1.msra.mxu0 0.0
    %811 = vmatprep.subr.mxu0 0.0
    %812 = vmatpush1.msra.mxu0 0.0
    %813 = vmatprep.subr.mxu0 0.0
    %814 = vmatpush1.msra.mxu0 0.0
    %815 = vmatprep.subr.mxu0 0.0
    %816 = vmatpush1.msra.mxu0 0.0
    %817 = vmatprep.subr.mxu0 0.0
    %818 = vmatpush1.msra.mxu0 0.0
    %819 = vmatprep.subr.mxu0 0.0
    %820 = vmatpush1.msra.mxu0 0.0
    %821 = vmatprep.subr.mxu0 0.0
    %822 = vmatpush1.msra.mxu0 0.0
    %823 = vmatprep.mubr.f32.mxu0 0.0
    %824 = vmatmul.mubr.f32.gmra.mrb[0].mxu0 %v175
    %v825 = vpop.f32.mrb[0].mxu0
    %v826 = vadd.f32 %v757, %v825
    %v827 = vpop.f32.mrb[0].mxu0
    %828 = vmatprep.mubr.f32.mxu0 0.0
    %829 = vmatmul.mubr.f32.gmra.mrb[0].mxu0 %v178
    %v830 = vpop.f32.mrb[0].mxu0
    %v831 = vadd.f32 %v757, %v830
    %v832 = vpop.f32.mrb[0].mxu0
    %833 = vdwg.mxu0
    %v835 = vlaneseq
    %v836 = vshrl.u32 %v835, 7
    %v837 = vsub.s32 0, %v836
    %v838 = vrot.slane %v162, %v837
    %840 = vmatprep.subr.mxu0 0.0
    %841 = vmatpush1.msra.mxu0 %v144
    %842 = vmatprep.subr.mxu0 0.0
    %843 = vmatpush1.msra.mxu0 %v145
    %844 = vmatprep.subr.mxu0 0.0
    %845 = vmatpush1.msra.mxu0 %v146
    %846 = vmatprep.subr.mxu0 0.0
    %847 = vmatpush1.msra.mxu0 %v147
    %848 = vmatprep.subr.mxu0 0.0
    %849 = vmatpush1.msra.mxu0 0.0
    %850 = vmatprep.subr.mxu0 0.0
    %851 = vmatpush1.msra.mxu0 0.0
    %852 = vmatprep.subr.mxu0 0.0
    %853 = vmatpush1.msra.mxu0 0.0
    %854 = vmatprep.subr.mxu0 0.0
    %855 = vmatpush1.msra.mxu0 0.0
    %856 = vmatprep.subr.mxu0 0.0
    %857 = vmatpush1.msra.mxu0 0.0
    %858 = vmatprep.subr.mxu0 0.0
    %859 = vmatpush1.msra.mxu0 0.0
    %860 = vmatprep.subr.mxu0 0.0
    %861 = vmatpush1.msra.mxu0 0.0
    %862 = vmatprep.subr.mxu0 0.0
    %863 = vmatpush1.msra.mxu0 0.0
    %864 = vmatprep.subr.mxu0 0.0
    %865 = vmatpush1.msra.mxu0 0.0
    %866 = vmatprep.subr.mxu0 0.0
    %867 = vmatpush1.msra.mxu0 0.0
    %868 = vmatprep.subr.mxu0 0.0
    %869 = vmatpush1.msra.mxu0 0.0
    %870 = vmatprep.subr.mxu0 0.0
    %871 = vmatpush1.msra.mxu0 0.0
    %872 = vmatprep.subr.mxu0 0.0
    %873 = vmatpush1.msra.mxu0 0.0
    %874 = vmatprep.subr.mxu0 0.0
    %875 = vmatpush1.msra.mxu0 0.0
    %876 = vmatprep.subr.mxu0 0.0
    %877 = vmatpush1.msra.mxu0 0.0
    %878 = vmatprep.subr.mxu0 0.0
    %879 = vmatpush1.msra.mxu0 0.0
    %880 = vmatprep.subr.mxu0 0.0
    %881 = vmatpush1.msra.mxu0 0.0
    %882 = vmatprep.subr.mxu0 0.0
    %883 = vmatpush1.msra.mxu0 0.0
    %884 = vmatprep.subr.mxu0 0.0
    %885 = vmatpush1.msra.mxu0 0.0
    %886 = vmatprep.subr.mxu0 0.0
    %887 = vmatpush1.msra.mxu0 0.0
    %888 = vmatprep.subr.mxu0 0.0
    %889 = vmatpush1.msra.mxu0 0.0
    %890 = vmatprep.subr.mxu0 0.0
    %891 = vmatpush1.msra.mxu0 0.0
    %892 = vmatprep.subr.mxu0 0.0
    %893 = vmatpush1.msra.mxu0 0.0
    %894 = vmatprep.subr.mxu0 0.0
    %895 = vmatpush1.msra.mxu0 0.0
    %896 = vmatprep.subr.mxu0 0.0
    %897 = vmatpush1.msra.mxu0 0.0
    %898 = vmatprep.subr.mxu0 0.0
    %899 = vmatpush1.msra.mxu0 0.0
    %900 = vmatprep.subr.mxu0 0.0
    %901 = vmatpush1.msra.mxu0 0.0
    %902 = vmatprep.subr.mxu0 0.0
    %903 = vmatpush1.msra.mxu0 0.0
    %904 = vmatprep.mubr.f32.mxu0 0.0
    %905 = vmatmul.mubr.f32.gmra.mrb[0].mxu0 %v345
    %v906 = vpop.f32.mrb[0].mxu0
    %v907 = vadd.f32 %v838, %v906
    %v908 = vpop.f32.mrb[0].mxu0
    %909 = vmatprep.mubr.f32.mxu0 0.0
    %910 = vmatmul.mubr.f32.gmra.mrb[0].mxu0 %v348
    %v911 = vpop.f32.mrb[0].mxu0
    %v912 = vadd.f32 %v838, %v911
    %v913 = vpop.f32.mrb[0].mxu0
    %914 = vdwg.mxu0
    %v916 = vlaneseq
    %v917 = vshrl.u32 %v916, 7
    %v918 = vsub.s32 0, %v917
    %v919 = vrot.slane %v155, %v918
    %921 = vmatprep.subr.mxu0 0.0
    %922 = vmatpush1.msra.mxu0 %v116
    %923 = vmatprep.subr.mxu0 0.0
    %924 = vmatpush1.msra.mxu0 %v117
    %925 = vmatprep.subr.mxu0 0.0
    %926 = vmatpush1.msra.mxu0 %v118
    %927 = vmatprep.subr.mxu0 0.0
    %928 = vmatpush1.msra.mxu0 %v119
    %929 = vmatprep.subr.mxu0 0.0
    %930 = vmatpush1.msra.mxu0 0.0
    %931 = vmatprep.subr.mxu0 0.0
    %932 = vmatpush1.msra.mxu0 0.0
    %933 = vmatprep.subr.mxu0 0.0
    %934 = vmatpush1.msra.mxu0 0.0
    %935 = vmatprep.subr.mxu0 0.0
    %936 = vmatpush1.msra.mxu0 0.0
    %937 = vmatprep.subr.mxu0 0.0
    %938 = vmatpush1.msra.mxu0 0.0
    %939 = vmatprep.subr.mxu0 0.0
    %940 = vmatpush1.msra.mxu0 0.0
    %941 = vmatprep.subr.mxu0 0.0
    %942 = vmatpush1.msra.mxu0 0.0
    %943 = vmatprep.subr.mxu0 0.0
    %944 = vmatpush1.msra.mxu0 0.0
    %945 = vmatprep.subr.mxu0 0.0
    %946 = vmatpush1.msra.mxu0 0.0
    %947 = vmatprep.subr.mxu0 0.0
    %948 = vmatpush1.msra.mxu0 0.0
    %949 = vmatprep.subr.mxu0 0.0
    %950 = vmatpush1.msra.mxu0 0.0
    %951 = vmatprep.subr.mxu0 0.0
    %952 = vmatpush1.msra.mxu0 0.0
    %953 = vmatprep.subr.mxu0 0.0
    %954 = vmatpush1.msra.mxu0 0.0
    %955 = vmatprep.subr.mxu0 0.0
    %956 = vmatpush1.msra.mxu0 0.0
    %957 = vmatprep.subr.mxu0 0.0
    %958 = vmatpush1.msra.mxu0 0.0
    %959 = vmatprep.subr.mxu0 0.0
    %960 = vmatpush1.msra.mxu0 0.0
    %961 = vmatprep.subr.mxu0 0.0
    %962 = vmatpush1.msra.mxu0 0.0
    %963 = vmatprep.subr.mxu0 0.0
    %964 = vmatpush1.msra.mxu0 0.0
    %965 = vmatprep.subr.mxu0 0.0
    %966 = vmatpush1.msra.mxu0 0.0
    %967 = vmatprep.subr.mxu0 0.0
    %968 = vmatpush1.msra.mxu0 0.0
    %969 = vmatprep.subr.mxu0 0.0
    %970 = vmatpush1.msra.mxu0 0.0
    %971 = vmatprep.subr.mxu0 0.0
    %972 = vmatpush1.msra.mxu0 0.0
    %973 = vmatprep.subr.mxu0 0.0
    %974 = vmatpush1.msra.mxu0 0.0
    %975 = vmatprep.subr.mxu0 0.0
    %976 = vmatpush1.msra.mxu0 0.0
    %977 = vmatprep.subr.mxu0 0.0
    %978 = vmatpush1.msra.mxu0 0.0
    %979 = vmatprep.subr.mxu0 0.0
    %980 = vmatpush1.msra.mxu0 0.0
    %981 = vmatprep.subr.mxu0 0.0
    %982 = vmatpush1.msra.mxu0 0.0
    %983 = vmatprep.subr.mxu0 0.0
    %984 = vmatpush1.msra.mxu0 0.0
    %985 = vmatprep.mubr.f32.mxu0 0.0
    %986 = vmatmul.mubr.f32.gmra.mrb[0].mxu0 %v175
    %v987 = vpop.f32.mrb[0].mxu0
    %v988 = vadd.f32 %v919, %v987
    %v989 = vpop.f32.mrb[0].mxu0
    %990 = vmatprep.mubr.f32.mxu0 0.0
    %991 = vmatmul.mubr.f32.gmra.mrb[0].mxu0 %v178
    %v992 = vpop.f32.mrb[0].mxu0
    %v993 = vadd.f32 %v919, %v992
    %v994 = vpop.f32.mrb[0].mxu0
    %995 = vdwg.mxu0
    %v996 = vmul.f32 %v988, 0.35355338
    %v997 = vmul.f32 %v993, 0.35355338
    %v999 = vlaneseq
    %v1000 = vshrl.u32 %v999, 7
    %v1001 = vsub.s32 0, %v1000
    %v1002 = vrot.slane %v159, %v1001
    %1004 = vmatprep.subr.mxu0 0.0
    %1005 = vmatpush1.msra.mxu0 %v132
    %1006 = vmatprep.subr.mxu0 0.0
    %1007 = vmatpush1.msra.mxu0 %v133
    %1008 = vmatprep.subr.mxu0 0.0
    %1009 = vmatpush1.msra.mxu0 %v134
    %1010 = vmatprep.subr.mxu0 0.0
    %1011 = vmatpush1.msra.mxu0 %v135
    %1012 = vmatprep.subr.mxu0 0.0
    %1013 = vmatpush1.msra.mxu0 0.0
    %1014 = vmatprep.subr.mxu0 0.0
    %1015 = vmatpush1.msra.mxu0 0.0
    %1016 = vmatprep.subr.mxu0 0.0
    %1017 = vmatpush1.msra.mxu0 0.0
    %1018 = vmatprep.subr.mxu0 0.0
    %1019 = vmatpush1.msra.mxu0 0.0
    %1020 = vmatprep.subr.mxu0 0.0
    %1021 = vmatpush1.msra.mxu0 0.0
    %1022 = vmatprep.subr.mxu0 0.0
    %1023 = vmatpush1.msra.mxu0 0.0
    %1024 = vmatprep.subr.mxu0 0.0
    %1025 = vmatpush1.msra.mxu0 0.0
    %1026 = vmatprep.subr.mxu0 0.0
    %1027 = vmatpush1.msra.mxu0 0.0
    %1028 = vmatprep.subr.mxu0 0.0
    %1029 = vmatpush1.msra.mxu0 0.0
    %1030 = vmatprep.subr.mxu0 0.0
    %1031 = vmatpush1.msra.mxu0 0.0
    %1032 = vmatprep.subr.mxu0 0.0
    %1033 = vmatpush1.msra.mxu0 0.0
    %1034 = vmatprep.subr.mxu0 0.0
    %1035 = vmatpush1.msra.mxu0 0.0
    %1036 = vmatprep.subr.mxu0 0.0
    %1037 = vmatpush1.msra.mxu0 0.0
    %1038 = vmatprep.subr.mxu0 0.0
    %1039 = vmatpush1.msra.mxu0 0.0
    %1040 = vmatprep.subr.mxu0 0.0
    %1041 = vmatpush1.msra.mxu0 0.0
    %1042 = vmatprep.subr.mxu0 0.0
    %1043 = vmatpush1.msra.mxu0 0.0
    %1044 = vmatprep.subr.mxu0 0.0
    %1045 = vmatpush1.msra.mxu0 0.0
    %1046 = vmatprep.subr.mxu0 0.0
    %1047 = vmatpush1.msra.mxu0 0.0
    %1048 = vmatprep.subr.mxu0 0.0
    %1049 = vmatpush1.msra.mxu0 0.0
    %1050 = vmatprep.subr.mxu0 0.0
    %1051 = vmatpush1.msra.mxu0 0.0
    %1052 = vmatprep.subr.mxu0 0.0
    %1053 = vmatpush1.msra.mxu0 0.0
    %1054 = vmatprep.subr.mxu0 0.0
    %1055 = vmatpush1.msra.mxu0 0.0
    %1056 = vmatprep.subr.mxu0 0.0
    %1057 = vmatpush1.msra.mxu0 0.0
    %1058 = vmatprep.subr.mxu0 0.0
    %1059 = vmatpush1.msra.mxu0 0.0
    %1060 = vmatprep.subr.mxu0 0.0
    %1061 = vmatpush1.msra.mxu0 0.0
    %1062 = vmatprep.subr.mxu0 0.0
    %1063 = vmatpush1.msra.mxu0 0.0
    %1064 = vmatprep.subr.mxu0 0.0
    %1065 = vmatpush1.msra.mxu0 0.0
    %1066 = vmatprep.subr.mxu0 0.0
    %1067 = vmatpush1.msra.mxu0 0.0
    %1068 = vmatprep.mubr.f32.mxu0 0.0
    %1069 = vmatmul.mubr.f32.gmra.mrb[0].mxu0 %v175
    %v1070 = vpop.f32.mrb[0].mxu0
    %v1071 = vadd.f32 %v1002, %v1070
    %v1072 = vpop.f32.mrb[0].mxu0
    %1073 = vmatprep.mubr.f32.mxu0 0.0
    %1074 = vmatmul.mubr.f32.gmra.mrb[0].mxu0 %v178
    %v1075 = vpop.f32.mrb[0].mxu0
    %v1076 = vadd.f32 %v1002, %v1075
    %v1077 = vpop.f32.mrb[0].mxu0
    %1078 = vdwg.mxu0
    %v1080 = vlaneseq
    %v1081 = vshrl.u32 %v1080, 7
    %v1082 = vsub.s32 0, %v1081
    %v1083 = vrot.slane %v163, %v1082
    %1085 = vmatprep.subr.mxu0 0.0
    %1086 = vmatpush1.msra.mxu0 %v148
    %1087 = vmatprep.subr.mxu0 0.0
    %1088 = vmatpush1.msra.mxu0 %v149
    %1089 = vmatprep.subr.mxu0 0.0
    %1090 = vmatpush1.msra.mxu0 %v150
    %1091 = vmatprep.subr.mxu0 0.0
    %1092 = vmatpush1.msra.mxu0 %v151
    %1093 = vmatprep.subr.mxu0 0.0
    %1094 = vmatpush1.msra.mxu0 0.0
    %1095 = vmatprep.subr.mxu0 0.0
    %1096 = vmatpush1.msra.mxu0 0.0
    %1097 = vmatprep.subr.mxu0 0.0
    %1098 = vmatpush1.msra.mxu0 0.0
    %1099 = vmatprep.subr.mxu0 0.0
    %1100 = vmatpush1.msra.mxu0 0.0
    %1101 = vmatprep.subr.mxu0 0.0
    %1102 = vmatpush1.msra.mxu0 0.0
    %1103 = vmatprep.subr.mxu0 0.0
    %1104 = vmatpush1.msra.mxu0 0.0
    %1105 = vmatprep.subr.mxu0 0.0
    %1106 = vmatpush1.msra.mxu0 0.0
    %1107 = vmatprep.subr.mxu0 0.0
    %1108 = vmatpush1.msra.mxu0 0.0
    %1109 = vmatprep.subr.mxu0 0.0
    %1110 = vmatpush1.msra.mxu0 0.0
    %1111 = vmatprep.subr.mxu0 0.0
    %1112 = vmatpush1.msra.mxu0 0.0
    %1113 = vmatprep.subr.mxu0 0.0
    %1114 = vmatpush1.msra.mxu0 0.0
    %1115 = vmatprep.subr.mxu0 0.0
    %1116 = vmatpush1.msra.mxu0 0.0
    %1117 = vmatprep.subr.mxu0 0.0
    %1118 = vmatpush1.msra.mxu0 0.0
    %1119 = vmatprep.subr.mxu0 0.0
    %1120 = vmatpush1.msra.mxu0 0.0
    %1121 = vmatprep.subr.mxu0 0.0
    %1122 = vmatpush1.msra.mxu0 0.0
    %1123 = vmatprep.subr.mxu0 0.0
    %1124 = vmatpush1.msra.mxu0 0.0
    %1125 = vmatprep.subr.mxu0 0.0
    %1126 = vmatpush1.msra.mxu0 0.0
    %1127 = vmatprep.subr.mxu0 0.0
    %1128 = vmatpush1.msra.mxu0 0.0
    %1129 = vmatprep.subr.mxu0 0.0
    %1130 = vmatpush1.msra.mxu0 0.0
    %1131 = vmatprep.subr.mxu0 0.0
    %1132 = vmatpush1.msra.mxu0 0.0
    %1133 = vmatprep.subr.mxu0 0.0
    %1134 = vmatpush1.msra.mxu0 0.0
    %1135 = vmatprep.subr.mxu0 0.0
    %1136 = vmatpush1.msra.mxu0 0.0
    %1137 = vmatprep.subr.mxu0 0.0
    %1138 = vmatpush1.msra.mxu0 0.0
    %1139 = vmatprep.subr.mxu0 0.0
    %1140 = vmatpush1.msra.mxu0 0.0
    %1141 = vmatprep.subr.mxu0 0.0
    %1142 = vmatpush1.msra.mxu0 0.0
    %1143 = vmatprep.subr.mxu0 0.0
    %1144 = vmatpush1.msra.mxu0 0.0
    %1145 = vmatprep.subr.mxu0 0.0
    %1146 = vmatpush1.msra.mxu0 0.0
    %1147 = vmatprep.subr.mxu0 0.0
    %1148 = vmatpush1.msra.mxu0 0.0
    %1149 = vmatprep.mubr.f32.mxu0 0.0
    %1150 = vmatmul.mubr.f32.gmra.mrb[0].mxu0 %v345
    %v1151 = vpop.f32.mrb[0].mxu0
    %v1152 = vadd.f32 %v1083, %v1151
    %v1153 = vpop.f32.mrb[0].mxu0
    %1154 = vmatprep.mubr.f32.mxu0 0.0
    %1155 = vmatmul.mubr.f32.gmra.mrb[0].mxu0 %v348
    %v1156 = vpop.f32.mrb[0].mxu0
    %v1157 = vadd.f32 %v1083, %v1156
    %v1158 = vpop.f32.mrb[0].mxu0
    %1159 = vdwg.mxu0
    %vm1160 = vcmask 64512
    %v1162 = vsel %vm1160, %v255, 0
    %v1165 = vsel %vm1160, %v330, 0
    %1167 = vmatprep.subr.mxu0 0.0
    %1168 = vmatpush1.xpose.msra.mxu0 %v1165
    %1169 = vmatprep.subr.mxu0 0.0
    %1170 = vmatpush1.xpose.msra.mxu0 0.0
    %1171 = vmatprep.subr.mxu0 0.0
    %1172 = vmatpush1.xpose.msra.mxu0 0.0
    %1173 = vmatprep.subr.mxu0 0.0
    %1174 = vmatpush1.xpose.msra.mxu0 0.0
    %1175 = vmatprep.subr.mxu0 0.0
    %1176 = vmatpush1.xpose.msra.mxu0 0.0
    %1177 = vmatprep.subr.mxu0 0.0
    %1178 = vmatpush1.xpose.msra.mxu0 0.0
    %1179 = vmatprep.subr.mxu0 0.0
    %1180 = vmatpush1.xpose.msra.mxu0 0.0
    %1181 = vmatprep.subr.mxu0 0.0
    %1182 = vmatpush1.xpose.msra.mxu0 0.0
    %1183 = vmatprep.subr.mxu0 0.0
    %1184 = vmatpush1.xpose.msra.mxu0 0.0
    %1185 = vmatprep.subr.mxu0 0.0
    %1186 = vmatpush1.xpose.msra.mxu0 0.0
    %1187 = vmatprep.subr.mxu0 0.0
    %1188 = vmatpush1.xpose.msra.mxu0 0.0
    %1189 = vmatprep.subr.mxu0 0.0
    %1190 = vmatpush1.xpose.msra.mxu0 0.0
    %1191 = vmatprep.subr.mxu0 0.0
    %1192 = vmatpush1.xpose.msra.mxu0 0.0
    %1193 = vmatprep.subr.mxu0 0.0
    %1194 = vmatpush1.xpose.msra.mxu0 0.0
    %1195 = vmatprep.subr.mxu0 0.0
    %1196 = vmatpush1.xpose.msra.mxu0 0.0
    %1197 = vmatprep.subr.mxu0 0.0
    %1198 = vmatpush1.xpose.msra.mxu0 0.0
    %1199 = vmatprep.subr.mxu0 0.0
    %1200 = vmatpush1.xpose.msra.mxu0 0.0
    %1201 = vmatprep.subr.mxu0 0.0
    %1202 = vmatpush1.xpose.msra.mxu0 0.0
    %1203 = vmatprep.subr.mxu0 0.0
    %1204 = vmatpush1.xpose.msra.mxu0 0.0
    %1205 = vmatprep.subr.mxu0 0.0
    %1206 = vmatpush1.xpose.msra.mxu0 0.0
    %1207 = vmatprep.subr.mxu0 0.0
    %1208 = vmatpush1.xpose.msra.mxu0 0.0
    %1209 = vmatprep.subr.mxu0 0.0
    %1210 = vmatpush1.xpose.msra.mxu0 0.0
    %1211 = vmatprep.subr.mxu0 0.0
    %1212 = vmatpush1.xpose.msra.mxu0 0.0
    %1213 = vmatprep.subr.mxu0 0.0
    %1214 = vmatpush1.xpose.msra.mxu0 0.0
    %1215 = vmatprep.subr.mxu0 0.0
    %1216 = vmatpush1.xpose.msra.mxu0 0.0
    %1217 = vmatprep.subr.mxu0 0.0
    %1218 = vmatpush1.xpose.msra.mxu0 0.0
    %1219 = vmatprep.subr.mxu0 0.0
    %1220 = vmatpush1.xpose.msra.mxu0 0.0
    %1221 = vmatprep.subr.mxu0 0.0
    %1222 = vmatpush1.xpose.msra.mxu0 0.0
    %1223 = vmatprep.subr.mxu0 0.0
    %1224 = vmatpush1.xpose.msra.mxu0 0.0
    %1225 = vmatprep.subr.mxu0 0.0
    %1226 = vmatpush1.xpose.msra.mxu0 0.0
    %1227 = vmatprep.subr.mxu0 0.0
    %1228 = vmatpush1.xpose.msra.mxu0 0.0
    %1229 = vmatprep.subr.mxu0 0.0
    %1230 = vmatpush1.xpose.msra.mxu0 0.0
    %1231 = vmatprep.mubr.f32.mxu0 0.0
    %1232 = vmatmul.mubr.f32.gmra.mrb[0].mxu0 %v1162
    %v1233 = vpop.f32.mrb[0].mxu0
    %v1234 = vadd.f32 0.0, %v1233
    %v1235 = vpop.f32.mrb[0].mxu0
    %1236 = vdwg.mxu0
    %v1237 = vsel %vm1160, %v1234, -inf
    %1238 = vmax.xlane.f32.xlu0 %v1237
    %v1239 = vpop.xlane.xlu0 %1238
    %v1240 = vsub.f32 %v1234, %v1239
    %v1241 = vmul.f32 %v1240, 1.442695
    %v1242 = vpow.pop %v1241
    %v1243 = vsel %vm1160, %v1242, 0.0
    %1244 = vadd.xlane.f32.xlu0 %v1243
    %v1245 = vpop.xlane.xlu0 %1244
    %v1246 = vrcp.pop %v1245
    %v1247 = vmul.f32 %v1242, %v1246
    %v1249 = vsel %vm1160, %v1247, 0
    %1251 = vmatprep.subr.mxu0 0.0
    %1252 = vmatpush1.msra.mxu0 %v417
    %1253 = vmatprep.subr.mxu0 0.0
    %1254 = vmatpush1.msra.mxu0 0.0
    %1255 = vmatprep.subr.mxu0 0.0
    %1256 = vmatpush1.msra.mxu0 0.0
    %1257 = vmatprep.subr.mxu0 0.0
    %1258 = vmatpush1.msra.mxu0 0.0
    %1259 = vmatprep.subr.mxu0 0.0
    %1260 = vmatpush1.msra.mxu0 0.0
    %1261 = vmatprep.subr.mxu0 0.0
    %1262 = vmatpush1.msra.mxu0 0.0
    %1263 = vmatprep.subr.mxu0 0.0
    %1264 = vmatpush1.msra.mxu0 0.0
    %1265 = vmatprep.subr.mxu0 0.0
    %1266 = vmatpush1.msra.mxu0 0.0
    %1267 = vmatprep.subr.mxu0 0.0
    %1268 = vmatpush1.msra.mxu0 0.0
    %1269 = vmatprep.subr.mxu0 0.0
    %1270 = vmatpush1.msra.mxu0 0.0
    %1271 = vmatprep.subr.mxu0 0.0
    %1272 = vmatpush1.msra.mxu0 0.0
    %1273 = vmatprep.subr.mxu0 0.0
    %1274 = vmatpush1.msra.mxu0 0.0
    %1275 = vmatprep.subr.mxu0 0.0
    %1276 = vmatpush1.msra.mxu0 0.0
    %1277 = vmatprep.subr.mxu0 0.0
    %1278 = vmatpush1.msra.mxu0 0.0
    %1279 = vmatprep.subr.mxu0 0.0
    %1280 = vmatpush1.msra.mxu0 0.0
    %1281 = vmatprep.subr.mxu0 0.0
    %1282 = vmatpush1.msra.mxu0 0.0
    %1283 = vmatprep.subr.mxu0 0.0
    %1284 = vmatpush1.msra.mxu0 0.0
    %1285 = vmatprep.subr.mxu0 0.0
    %1286 = vmatpush1.msra.mxu0 0.0
    %1287 = vmatprep.subr.mxu0 0.0
    %1288 = vmatpush1.msra.mxu0 0.0
    %1289 = vmatprep.subr.mxu0 0.0
    %1290 = vmatpush1.msra.mxu0 0.0
    %1291 = vmatprep.subr.mxu0 0.0
    %1292 = vmatpush1.msra.mxu0 0.0
    %1293 = vmatprep.subr.mxu0 0.0
    %1294 = vmatpush1.msra.mxu0 0.0
    %1295 = vmatprep.subr.mxu0 0.0
    %1296 = vmatpush1.msra.mxu0 0.0
    %1297 = vmatprep.subr.mxu0 0.0
    %1298 = vmatpush1.msra.mxu0 0.0
    %1299 = vmatprep.subr.mxu0 0.0
    %1300 = vmatpush1.msra.mxu0 0.0
    %1301 = vmatprep.subr.mxu0 0.0
    %1302 = vmatpush1.msra.mxu0 0.0
    %1303 = vmatprep.subr.mxu0 0.0
    %1304 = vmatpush1.msra.mxu0 0.0
    %1305 = vmatprep.subr.mxu0 0.0
    %1306 = vmatpush1.msra.mxu0 0.0
    %1307 = vmatprep.subr.mxu0 0.0
    %1308 = vmatpush1.msra.mxu0 0.0
    %1309 = vmatprep.subr.mxu0 0.0
    %1310 = vmatpush1.msra.mxu0 0.0
    %1311 = vmatprep.subr.mxu0 0.0
    %1312 = vmatpush1.msra.mxu0 0.0
    %1313 = vmatprep.subr.mxu0 0.0
    %1314 = vmatpush1.msra.mxu0 0.0
    %1315 = vmatprep.mubr.f32.mxu0 0.0
    %1316 = vmatmul.mubr.f32.gmra.mrb[0].mxu0 %v1249
    %v1317 = vpop.f32.mrb[0].mxu0
    %v1318 = vadd.f32 0.0, %v1317
    %v1319 = vpop.f32.mrb[0].mxu0
    %1320 = vdwg.mxu0
    %v1322 = vsel %vm1160, %v506, 0
    %v1325 = vsel %vm1160, %v581, 0
    %1327 = vmatprep.subr.mxu0 0.0
    %1328 = vmatpush1.xpose.msra.mxu0 %v1325
    %1329 = vmatprep.subr.mxu0 0.0
    %1330 = vmatpush1.xpose.msra.mxu0 0.0
    %1331 = vmatprep.subr.mxu0 0.0
    %1332 = vmatpush1.xpose.msra.mxu0 0.0
    %1333 = vmatprep.subr.mxu0 0.0
    %1334 = vmatpush1.xpose.msra.mxu0 0.0
    %1335 = vmatprep.subr.mxu0 0.0
    %1336 = vmatpush1.xpose.msra.mxu0 0.0
    %1337 = vmatprep.subr.mxu0 0.0
    %1338 = vmatpush1.xpose.msra.mxu0 0.0
    %1339 = vmatprep.subr.mxu0 0.0
    %1340 = vmatpush1.xpose.msra.mxu0 0.0
    %1341 = vmatprep.subr.mxu0 0.0
    %1342 = vmatpush1.xpose.msra.mxu0 0.0
    %1343 = vmatprep.subr.mxu0 0.0
    %1344 = vmatpush1.xpose.msra.mxu0 0.0
    %1345 = vmatprep.subr.mxu0 0.0
    %1346 = vmatpush1.xpose.msra.mxu0 0.0
    %1347 = vmatprep.subr.mxu0 0.0
    %1348 = vmatpush1.xpose.msra.mxu0 0.0
    %1349 = vmatprep.subr.mxu0 0.0
    %1350 = vmatpush1.xpose.msra.mxu0 0.0
    %1351 = vmatprep.subr.mxu0 0.0
    %1352 = vmatpush1.xpose.msra.mxu0 0.0
    %1353 = vmatprep.subr.mxu0 0.0
    %1354 = vmatpush1.xpose.msra.mxu0 0.0
    %1355 = vmatprep.subr.mxu0 0.0
    %1356 = vmatpush1.xpose.msra.mxu0 0.0
    %1357 = vmatprep.subr.mxu0 0.0
    %1358 = vmatpush1.xpose.msra.mxu0 0.0
    %1359 = vmatprep.subr.mxu0 0.0
    %1360 = vmatpush1.xpose.msra.mxu0 0.0
    %1361 = vmatprep.subr.mxu0 0.0
    %1362 = vmatpush1.xpose.msra.mxu0 0.0
    %1363 = vmatprep.subr.mxu0 0.0
    %1364 = vmatpush1.xpose.msra.mxu0 0.0
    %1365 = vmatprep.subr.mxu0 0.0
    %1366 = vmatpush1.xpose.msra.mxu0 0.0
    %1367 = vmatprep.subr.mxu0 0.0
    %1368 = vmatpush1.xpose.msra.mxu0 0.0
    %1369 = vmatprep.subr.mxu0 0.0
    %1370 = vmatpush1.xpose.msra.mxu0 0.0
    %1371 = vmatprep.subr.mxu0 0.0
    %1372 = vmatpush1.xpose.msra.mxu0 0.0
    %1373 = vmatprep.subr.mxu0 0.0
    %1374 = vmatpush1.xpose.msra.mxu0 0.0
    %1375 = vmatprep.subr.mxu0 0.0
    %1376 = vmatpush1.xpose.msra.mxu0 0.0
    %1377 = vmatprep.subr.mxu0 0.0
    %1378 = vmatpush1.xpose.msra.mxu0 0.0
    %1379 = vmatprep.subr.mxu0 0.0
    %1380 = vmatpush1.xpose.msra.mxu0 0.0
    %1381 = vmatprep.subr.mxu0 0.0
    %1382 = vmatpush1.xpose.msra.mxu0 0.0
    %1383 = vmatprep.subr.mxu0 0.0
    %1384 = vmatpush1.xpose.msra.mxu0 0.0
    %1385 = vmatprep.subr.mxu0 0.0
    %1386 = vmatpush1.xpose.msra.mxu0 0.0
    %1387 = vmatprep.subr.mxu0 0.0
    %1388 = vmatpush1.xpose.msra.mxu0 0.0
    %1389 = vmatprep.subr.mxu0 0.0
    %1390 = vmatpush1.xpose.msra.mxu0 0.0
    %1391 = vmatprep.mubr.f32.mxu0 0.0
    %1392 = vmatmul.mubr.f32.gmra.mrb[0].mxu0 %v1322
    %v1393 = vpop.f32.mrb[0].mxu0
    %v1394 = vadd.f32 0.0, %v1393
    %v1395 = vpop.f32.mrb[0].mxu0
    %1396 = vdwg.mxu0
    %v1397 = vsel %vm1160, %v1394, -inf
    %1398 = vmax.xlane.f32.xlu0 %v1397
    %v1399 = vpop.xlane.xlu0 %1398
    %v1400 = vsub.f32 %v1394, %v1399
    %v1401 = vmul.f32 %v1400, 1.442695
    %v1402 = vpow.pop %v1401
    %v1403 = vsel %vm1160, %v1402, 0.0
    %1404 = vadd.xlane.f32.xlu0 %v1403
    %v1405 = vpop.xlane.xlu0 %1404
    %v1406 = vrcp.pop %v1405
    %v1407 = vmul.f32 %v1402, %v1406
    %v1409 = vsel %vm1160, %v1407, 0
    %1411 = vmatprep.subr.mxu0 0.0
    %1412 = vmatpush1.msra.mxu0 %v662
    %1413 = vmatprep.subr.mxu0 0.0
    %1414 = vmatpush1.msra.mxu0 0.0
    %1415 = vmatprep.subr.mxu0 0.0
    %1416 = vmatpush1.msra.mxu0 0.0
    %1417 = vmatprep.subr.mxu0 0.0
    %1418 = vmatpush1.msra.mxu0 0.0
    %1419 = vmatprep.subr.mxu0 0.0
    %1420 = vmatpush1.msra.mxu0 0.0
    %1421 = vmatprep.subr.mxu0 0.0
    %1422 = vmatpush1.msra.mxu0 0.0
    %1423 = vmatprep.subr.mxu0 0.0
    %1424 = vmatpush1.msra.mxu0 0.0
    %1425 = vmatprep.subr.mxu0 0.0
    %1426 = vmatpush1.msra.mxu0 0.0
    %1427 = vmatprep.subr.mxu0 0.0
    %1428 = vmatpush1.msra.mxu0 0.0
    %1429 = vmatprep.subr.mxu0 0.0
    %1430 = vmatpush1.msra.mxu0 0.0
    %1431 = vmatprep.subr.mxu0 0.0
    %1432 = vmatpush1.msra.mxu0 0.0
    %1433 = vmatprep.subr.mxu0 0.0
    %1434 = vmatpush1.msra.mxu0 0.0
    %1435 = vmatprep.subr.mxu0 0.0
    %1436 = vmatpush1.msra.mxu0 0.0
    %1437 = vmatprep.subr.mxu0 0.0
    %1438 = vmatpush1.msra.mxu0 0.0
    %1439 = vmatprep.subr.mxu0 0.0
    %1440 = vmatpush1.msra.mxu0 0.0
    %1441 = vmatprep.subr.mxu0 0.0
    %1442 = vmatpush1.msra.mxu0 0.0
    %1443 = vmatprep.subr.mxu0 0.0
    %1444 = vmatpush1.msra.mxu0 0.0
    %1445 = vmatprep.subr.mxu0 0.0
    %1446 = vmatpush1.msra.mxu0 0.0
    %1447 = vmatprep.subr.mxu0 0.0
    %1448 = vmatpush1.msra.mxu0 0.0
    %1449 = vmatprep.subr.mxu0 0.0
    %1450 = vmatpush1.msra.mxu0 0.0
    %1451 = vmatprep.subr.mxu0 0.0
    %1452 = vmatpush1.msra.mxu0 0.0
    %1453 = vmatprep.subr.mxu0 0.0
    %1454 = vmatpush1.msra.mxu0 0.0
    %1455 = vmatprep.subr.mxu0 0.0
    %1456 = vmatpush1.msra.mxu0 0.0
    %1457 = vmatprep.subr.mxu0 0.0
    %1458 = vmatpush1.msra.mxu0 0.0
    %1459 = vmatprep.subr.mxu0 0.0
    %1460 = vmatpush1.msra.mxu0 0.0
    %1461 = vmatprep.subr.mxu0 0.0
    %1462 = vmatpush1.msra.mxu0 0.0
    %1463 = vmatprep.subr.mxu0 0.0
    %1464 = vmatpush1.msra.mxu0 0.0
    %1465 = vmatprep.subr.mxu0 0.0
    %1466 = vmatpush1.msra.mxu0 0.0
    %1467 = vmatprep.subr.mxu0 0.0
    %1468 = vmatpush1.msra.mxu0 0.0
    %1469 = vmatprep.subr.mxu0 0.0
    %1470 = vmatpush1.msra.mxu0 0.0
    %1471 = vmatprep.subr.mxu0 0.0
    %1472 = vmatpush1.msra.mxu0 0.0
    %1473 = vmatprep.subr.mxu0 0.0
    %1474 = vmatpush1.msra.mxu0 0.0
    %1475 = vmatprep.mubr.f32.mxu0 0.0
    %1476 = vmatmul.mubr.f32.gmra.mrb[0].mxu0 %v1409
    %v1477 = vpop.f32.mrb[0].mxu0
    %v1478 = vadd.f32 0.0, %v1477
    %v1479 = vpop.f32.mrb[0].mxu0
    %1480 = vdwg.mxu0
    %v1482 = vsel %vm1160, %v1478, 0
    %1484 = vmatprep.subr.mxu0 0.0
    %1485 = vmatpush1.msra.mxu0 %v165
    %1486 = vmatprep.subr.mxu0 0.0
    %1487 = vmatpush1.msra.mxu0 0.0
    %1488 = vmatprep.subr.mxu0 0.0
    %1489 = vmatpush1.msra.mxu0 0.0
    %1490 = vmatprep.subr.mxu0 0.0
    %1491 = vmatpush1.msra.mxu0 0.0
    %1492 = vmatprep.subr.mxu0 0.0
    %1493 = vmatpush1.msra.mxu0 0.0
    %1494 = vmatprep.subr.mxu0 0.0
    %1495 = vmatpush1.msra.mxu0 0.0
    %1496 = vmatprep.subr.mxu0 0.0
    %1497 = vmatpush1.msra.mxu0 0.0
    %1498 = vmatprep.subr.mxu0 0.0
    %1499 = vmatpush1.msra.mxu0 0.0
    %1500 = vmatprep.subr.mxu0 0.0
    %1501 = vmatpush1.msra.mxu0 0.0
    %1502 = vmatprep.subr.mxu0 0.0
    %1503 = vmatpush1.msra.mxu0 0.0
    %1504 = vmatprep.subr.mxu0 0.0
    %1505 = vmatpush1.msra.mxu0 0.0
    %1506 = vmatprep.subr.mxu0 0.0
    %1507 = vmatpush1.msra.mxu0 0.0
    %1508 = vmatprep.subr.mxu0 0.0
    %1509 = vmatpush1.msra.mxu0 0.0
    %1510 = vmatprep.subr.mxu0 0.0
    %1511 = vmatpush1.msra.mxu0 0.0
    %1512 = vmatprep.subr.mxu0 0.0
    %1513 = vmatpush1.msra.mxu0 0.0
    %1514 = vmatprep.subr.mxu0 0.0
    %1515 = vmatpush1.msra.mxu0 0.0
    %1516 = vmatprep.subr.mxu0 0.0
    %1517 = vmatpush1.msra.mxu0 0.0
    %1518 = vmatprep.subr.mxu0 0.0
    %1519 = vmatpush1.msra.mxu0 0.0
    %1520 = vmatprep.subr.mxu0 0.0
    %1521 = vmatpush1.msra.mxu0 0.0
    %1522 = vmatprep.subr.mxu0 0.0
    %1523 = vmatpush1.msra.mxu0 0.0
    %1524 = vmatprep.subr.mxu0 0.0
    %1525 = vmatpush1.msra.mxu0 0.0
    %1526 = vmatprep.subr.mxu0 0.0
    %1527 = vmatpush1.msra.mxu0 0.0
    %1528 = vmatprep.subr.mxu0 0.0
    %1529 = vmatpush1.msra.mxu0 0.0
    %1530 = vmatprep.subr.mxu0 0.0
    %1531 = vmatpush1.msra.mxu0 0.0
    %1532 = vmatprep.subr.mxu0 0.0
    %1533 = vmatpush1.msra.mxu0 0.0
    %1534 = vmatprep.subr.mxu0 0.0
    %1535 = vmatpush1.msra.mxu0 0.0
    %1536 = vmatprep.subr.mxu0 0.0
    %1537 = vmatpush1.msra.mxu0 0.0
    %1538 = vmatprep.subr.mxu0 0.0
    %1539 = vmatpush1.msra.mxu0 0.0
    %1540 = vmatprep.subr.mxu0 0.0
    %1541 = vmatpush1.msra.mxu0 0.0
    %1542 = vmatprep.subr.mxu0 0.0
    %1543 = vmatpush1.msra.mxu0 0.0
    %1544 = vmatprep.subr.mxu0 0.0
    %1545 = vmatpush1.msra.mxu0 0.0
    %1546 = vmatprep.subr.mxu0 0.0
    %1547 = vmatpush1.msra.mxu0 0.0
    %1548 = vmatprep.mubr.f32.mxu0 0.0
    %1549 = vmatmul.mubr.f32.gmra.mrb[0].mxu0 %v1482
    %v1550 = vpop.f32.mrb[0].mxu0
    %v1551 = vadd.f32 0.0, %v1550
    %v1552 = vpop.f32.mrb[0].mxu0
    %1553 = vdwg.mxu0
    %v1555 = vsel %vm1160, %v1318, 0
    %1557 = vmatprep.subr.mxu0 0.0
    %1558 = vmatpush1.msra.mxu0 %v164
    %1559 = vmatprep.subr.mxu0 0.0
    %1560 = vmatpush1.msra.mxu0 0.0
    %1561 = vmatprep.subr.mxu0 0.0
    %1562 = vmatpush1.msra.mxu0 0.0
    %1563 = vmatprep.subr.mxu0 0.0
    %1564 = vmatpush1.msra.mxu0 0.0
    %1565 = vmatprep.subr.mxu0 0.0
    %1566 = vmatpush1.msra.mxu0 0.0
    %1567 = vmatprep.subr.mxu0 0.0
    %1568 = vmatpush1.msra.mxu0 0.0
    %1569 = vmatprep.subr.mxu0 0.0
    %1570 = vmatpush1.msra.mxu0 0.0
    %1571 = vmatprep.subr.mxu0 0.0
    %1572 = vmatpush1.msra.mxu0 0.0
    %1573 = vmatprep.subr.mxu0 0.0
    %1574 = vmatpush1.msra.mxu0 0.0
    %1575 = vmatprep.subr.mxu0 0.0
    %1576 = vmatpush1.msra.mxu0 0.0
    %1577 = vmatprep.subr.mxu0 0.0
    %1578 = vmatpush1.msra.mxu0 0.0
    %1579 = vmatprep.subr.mxu0 0.0
    %1580 = vmatpush1.msra.mxu0 0.0
    %1581 = vmatprep.subr.mxu0 0.0
    %1582 = vmatpush1.msra.mxu0 0.0
    %1583 = vmatprep.subr.mxu0 0.0
    %1584 = vmatpush1.msra.mxu0 0.0
    %1585 = vmatprep.subr.mxu0 0.0
    %1586 = vmatpush1.msra.mxu0 0.0
    %1587 = vmatprep.subr.mxu0 0.0
    %1588 = vmatpush1.msra.mxu0 0.0
    %1589 = vmatprep.subr.mxu0 0.0
    %1590 = vmatpush1.msra.mxu0 0.0
    %1591 = vmatprep.subr.mxu0 0.0
    %1592 = vmatpush1.msra.mxu0 0.0
    %1593 = vmatprep.subr.mxu0 0.0
    %1594 = vmatpush1.msra.mxu0 0.0
    %1595 = vmatprep.subr.mxu0 0.0
    %1596 = vmatpush1.msra.mxu0 0.0
    %1597 = vmatprep.subr.mxu0 0.0
    %1598 = vmatpush1.msra.mxu0 0.0
    %1599 = vmatprep.subr.mxu0 0.0
    %1600 = vmatpush1.msra.mxu0 0.0
    %1601 = vmatprep.subr.mxu0 0.0
    %1602 = vmatpush1.msra.mxu0 0.0
    %1603 = vmatprep.subr.mxu0 0.0
    %1604 = vmatpush1.msra.mxu0 0.0
    %1605 = vmatprep.subr.mxu0 0.0
    %1606 = vmatpush1.msra.mxu0 0.0
    %1607 = vmatprep.subr.mxu0 0.0
    %1608 = vmatpush1.msra.mxu0 0.0
    %1609 = vmatprep.subr.mxu0 0.0
    %1610 = vmatpush1.msra.mxu0 0.0
    %1611 = vmatprep.subr.mxu0 0.0
    %1612 = vmatpush1.msra.mxu0 0.0
    %1613 = vmatprep.subr.mxu0 0.0
    %1614 = vmatpush1.msra.mxu0 0.0
    %1615 = vmatprep.subr.mxu0 0.0
    %1616 = vmatpush1.msra.mxu0 0.0
    %1617 = vmatprep.subr.mxu0 0.0
    %1618 = vmatpush1.msra.mxu0 0.0
    %1619 = vmatprep.subr.mxu0 0.0
    %1620 = vmatpush1.msra.mxu0 0.0
    %1621 = vmatprep.mubr.f32.mxu0 0.0
    %1622 = vmatmul.mubr.f32.gmra.mrb[0].mxu0 %v1555
    %v1623 = vpop.f32.mrb[0].mxu0
    %v1624 = vadd.f32 %v1551, %v1623
    %v1625 = vpop.f32.mrb[0].mxu0
    %1626 = vdwg.mxu0
    %v1628 = vsel %vm1160, %v751, 0
    %v1631 = vsel %vm1160, %v826, 0
    %1633 = vmatprep.subr.mxu0 0.0
    %1634 = vmatpush1.xpose.msra.mxu0 %v1631
    %1635 = vmatprep.subr.mxu0 0.0
    %1636 = vmatpush1.xpose.msra.mxu0 0.0
    %1637 = vmatprep.subr.mxu0 0.0
    %1638 = vmatpush1.xpose.msra.mxu0 0.0
    %1639 = vmatprep.subr.mxu0 0.0
    %1640 = vmatpush1.xpose.msra.mxu0 0.0
    %1641 = vmatprep.subr.mxu0 0.0
    %1642 = vmatpush1.xpose.msra.mxu0 0.0
    %1643 = vmatprep.subr.mxu0 0.0
    %1644 = vmatpush1.xpose.msra.mxu0 0.0
    %1645 = vmatprep.subr.mxu0 0.0
    %1646 = vmatpush1.xpose.msra.mxu0 0.0
    %1647 = vmatprep.subr.mxu0 0.0
    %1648 = vmatpush1.xpose.msra.mxu0 0.0
    %1649 = vmatprep.subr.mxu0 0.0
    %1650 = vmatpush1.xpose.msra.mxu0 0.0
    %1651 = vmatprep.subr.mxu0 0.0
    %1652 = vmatpush1.xpose.msra.mxu0 0.0
    %1653 = vmatprep.subr.mxu0 0.0
    %1654 = vmatpush1.xpose.msra.mxu0 0.0
    %1655 = vmatprep.subr.mxu0 0.0
    %1656 = vmatpush1.xpose.msra.mxu0 0.0
    %1657 = vmatprep.subr.mxu0 0.0
    %1658 = vmatpush1.xpose.msra.mxu0 0.0
    %1659 = vmatprep.subr.mxu0 0.0
    %1660 = vmatpush1.xpose.msra.mxu0 0.0
    %1661 = vmatprep.subr.mxu0 0.0
    %1662 = vmatpush1.xpose.msra.mxu0 0.0
    %1663 = vmatprep.subr.mxu0 0.0
    %1664 = vmatpush1.xpose.msra.mxu0 0.0
    %1665 = vmatprep.subr.mxu0 0.0
    %1666 = vmatpush1.xpose.msra.mxu0 0.0
    %1667 = vmatprep.subr.mxu0 0.0
    %1668 = vmatpush1.xpose.msra.mxu0 0.0
    %1669 = vmatprep.subr.mxu0 0.0
    %1670 = vmatpush1.xpose.msra.mxu0 0.0
    %1671 = vmatprep.subr.mxu0 0.0
    %1672 = vmatpush1.xpose.msra.mxu0 0.0
    %1673 = vmatprep.subr.mxu0 0.0
    %1674 = vmatpush1.xpose.msra.mxu0 0.0
    %1675 = vmatprep.subr.mxu0 0.0
    %1676 = vmatpush1.xpose.msra.mxu0 0.0
    %1677 = vmatprep.subr.mxu0 0.0
    %1678 = vmatpush1.xpose.msra.mxu0 0.0
    %1679 = vmatprep.subr.mxu0 0.0
    %1680 = vmatpush1.xpose.msra.mxu0 0.0
    %1681 = vmatprep.subr.mxu0 0.0
    %1682 = vmatpush1.xpose.msra.mxu0 0.0
    %1683 = vmatprep.subr.mxu0 0.0
    %1684 = vmatpush1.xpose.msra.mxu0 0.0
    %1685 = vmatprep.subr.mxu0 0.0
    %1686 = vmatpush1.xpose.msra.mxu0 0.0
    %1687 = vmatprep.subr.mxu0 0.0
    %1688 = vmatpush1.xpose.msra.mxu0 0.0
    %1689 = vmatprep.subr.mxu0 0.0
    %1690 = vmatpush1.xpose.msra.mxu0 0.0
    %1691 = vmatprep.subr.mxu0 0.0
    %1692 = vmatpush1.xpose.msra.mxu0 0.0
    %1693 = vmatprep.subr.mxu0 0.0
    %1694 = vmatpush1.xpose.msra.mxu0 0.0
    %1695 = vmatprep.subr.mxu0 0.0
    %1696 = vmatpush1.xpose.msra.mxu0 0.0
    %1697 = vmatprep.mubr.f32.mxu0 0.0
    %1698 = vmatmul.mubr.f32.gmra.mrb[0].mxu0 %v1628
    %v1699 = vpop.f32.mrb[0].mxu0
    %v1700 = vadd.f32 0.0, %v1699
    %v1701 = vpop.f32.mrb[0].mxu0
    %1702 = vdwg.mxu0
    %v1703 = vsel %vm1160, %v1700, -inf
    %1704 = vmax.xlane.f32.xlu0 %v1703
    %v1705 = vpop.xlane.xlu0 %1704
    %v1706 = vsub.f32 %v1700, %v1705
    %v1707 = vmul.f32 %v1706, 1.442695
    %v1708 = vpow.pop %v1707
    %v1709 = vsel %vm1160, %v1708, 0.0
    %1710 = vadd.xlane.f32.xlu0 %v1709
    %v1711 = vpop.xlane.xlu0 %1710
    %v1712 = vrcp.pop %v1711
    %v1713 = vmul.f32 %v1708, %v1712
    %v1715 = vsel %vm1160, %v1713, 0
    %1717 = vmatprep.subr.mxu0 0.0
    %1718 = vmatpush1.msra.mxu0 %v907
    %1719 = vmatprep.subr.mxu0 0.0
    %1720 = vmatpush1.msra.mxu0 0.0
    %1721 = vmatprep.subr.mxu0 0.0
    %1722 = vmatpush1.msra.mxu0 0.0
    %1723 = vmatprep.subr.mxu0 0.0
    %1724 = vmatpush1.msra.mxu0 0.0
    %1725 = vmatprep.subr.mxu0 0.0
    %1726 = vmatpush1.msra.mxu0 0.0
    %1727 = vmatprep.subr.mxu0 0.0
    %1728 = vmatpush1.msra.mxu0 0.0
    %1729 = vmatprep.subr.mxu0 0.0
    %1730 = vmatpush1.msra.mxu0 0.0
    %1731 = vmatprep.subr.mxu0 0.0
    %1732 = vmatpush1.msra.mxu0 0.0
    %1733 = vmatprep.subr.mxu0 0.0
    %1734 = vmatpush1.msra.mxu0 0.0
    %1735 = vmatprep.subr.mxu0 0.0
    %1736 = vmatpush1.msra.mxu0 0.0
    %1737 = vmatprep.subr.mxu0 0.0
    %1738 = vmatpush1.msra.mxu0 0.0
    %1739 = vmatprep.subr.mxu0 0.0
    %1740 = vmatpush1.msra.mxu0 0.0
    %1741 = vmatprep.subr.mxu0 0.0
    %1742 = vmatpush1.msra.mxu0 0.0
    %1743 = vmatprep.subr.mxu0 0.0
    %1744 = vmatpush1.msra.mxu0 0.0
    %1745 = vmatprep.subr.mxu0 0.0
    %1746 = vmatpush1.msra.mxu0 0.0
    %1747 = vmatprep.subr.mxu0 0.0
    %1748 = vmatpush1.msra.mxu0 0.0
    %1749 = vmatprep.subr.mxu0 0.0
    %1750 = vmatpush1.msra.mxu0 0.0
    %1751 = vmatprep.subr.mxu0 0.0
    %1752 = vmatpush1.msra.mxu0 0.0
    %1753 = vmatprep.subr.mxu0 0.0
    %1754 = vmatpush1.msra.mxu0 0.0
    %1755 = vmatprep.subr.mxu0 0.0
    %1756 = vmatpush1.msra.mxu0 0.0
    %1757 = vmatprep.subr.mxu0 0.0
    %1758 = vmatpush1.msra.mxu0 0.0
    %1759 = vmatprep.subr.mxu0 0.0
    %1760 = vmatpush1.msra.mxu0 0.0
    %1761 = vmatprep.subr.mxu0 0.0
    %1762 = vmatpush1.msra.mxu0 0.0
    %1763 = vmatprep.subr.mxu0 0.0
    %1764 = vmatpush1.msra.mxu0 0.0
    %1765 = vmatprep.subr.mxu0 0.0
    %1766 = vmatpush1.msra.mxu0 0.0
    %1767 = vmatprep.subr.mxu0 0.0
    %1768 = vmatpush1.msra.mxu0 0.0
    %1769 = vmatprep.subr.mxu0 0.0
    %1770 = vmatpush1.msra.mxu0 0.0
    %1771 = vmatprep.subr.mxu0 0.0
    %1772 = vmatpush1.msra.mxu0 0.0
    %1773 = vmatprep.subr.mxu0 0.0
    %1774 = vmatpush1.msra.mxu0 0.0
    %1775 = vmatprep.subr.mxu0 0.0
    %1776 = vmatpush1.msra.mxu0 0.0
    %1777 = vmatprep.subr.mxu0 0.0
    %1778 = vmatpush1.msra.mxu0 0.0
    %1779 = vmatprep.subr.mxu0 0.0
    %1780 = vmatpush1.msra.mxu0 0.0
    %1781 = vmatprep.mubr.f32.mxu0 0.0
    %1782 = vmatmul.mubr.f32.gmra.mrb[0].mxu0 %v1715
    %v1783 = vpop.f32.mrb[0].mxu0
    %v1784 = vadd.f32 0.0, %v1783
    %v1785 = vpop.f32.mrb[0].mxu0
    %1786 = vdwg.mxu0
    %v1788 = vsel %vm1160, %v1784, 0
    %1790 = vmatprep.subr.mxu0 0.0
    %1791 = vmatpush1.msra.mxu0 %v166
    %1792 = vmatprep.subr.mxu0 0.0
    %1793 = vmatpush1.msra.mxu0 0.0
    %1794 = vmatprep.subr.mxu0 0.0
    %1795 = vmatpush1.msra.mxu0 0.0
    %1796 = vmatprep.subr.mxu0 0.0
    %1797 = vmatpush1.msra.mxu0 0.0
    %1798 = vmatprep.subr.mxu0 0.0
    %1799 = vmatpush1.msra.mxu0 0.0
    %1800 = vmatprep.subr.mxu0 0.0
    %1801 = vmatpush1.msra.mxu0 0.0
    %1802 = vmatprep.subr.mxu0 0.0
    %1803 = vmatpush1.msra.mxu0 0.0
    %1804 = vmatprep.subr.mxu0 0.0
    %1805 = vmatpush1.msra.mxu0 0.0
    %1806 = vmatprep.subr.mxu0 0.0
    %1807 = vmatpush1.msra.mxu0 0.0
    %1808 = vmatprep.subr.mxu0 0.0
    %1809 = vmatpush1.msra.mxu0 0.0
    %1810 = vmatprep.subr.mxu0 0.0
    %1811 = vmatpush1.msra.mxu0 0.0
    %1812 = vmatprep.subr.mxu0 0.0
    %1813 = vmatpush1.msra.mxu0 0.0
    %1814 = vmatprep.subr.mxu0 0.0
    %1815 = vmatpush1.msra.mxu0 0.0
    %1816 = vmatprep.subr.mxu0 0.0
    %1817 = vmatpush1.msra.mxu0 0.0
    %1818 = vmatprep.subr.mxu0 0.0
    %1819 = vmatpush1.msra.mxu0 0.0
    %1820 = vmatprep.subr.mxu0 0.0
    %1821 = vmatpush1.msra.mxu0 0.0
    %1822 = vmatprep.subr.mxu0 0.0
    %1823 = vmatpush1.msra.mxu0 0.0
    %1824 = vmatprep.subr.mxu0 0.0
    %1825 = vmatpush1.msra.mxu0 0.0
    %1826 = vmatprep.subr.mxu0 0.0
    %1827 = vmatpush1.msra.mxu0 0.0
    %1828 = vmatprep.subr.mxu0 0.0
    %1829 = vmatpush1.msra.mxu0 0.0
    %1830 = vmatprep.subr.mxu0 0.0
    %1831 = vmatpush1.msra.mxu0 0.0
    %1832 = vmatprep.subr.mxu0 0.0
    %1833 = vmatpush1.msra.mxu0 0.0
    %1834 = vmatprep.subr.mxu0 0.0
    %1835 = vmatpush1.msra.mxu0 0.0
    %1836 = vmatprep.subr.mxu0 0.0
    %1837 = vmatpush1.msra.mxu0 0.0
    %1838 = vmatprep.subr.mxu0 0.0
    %1839 = vmatpush1.msra.mxu0 0.0
    %1840 = vmatprep.subr.mxu0 0.0
    %1841 = vmatpush1.msra.mxu0 0.0
    %1842 = vmatprep.subr.mxu0 0.0
    %1843 = vmatpush1.msra.mxu0 0.0
    %1844 = vmatprep.subr.mxu0 0.0
    %1845 = vmatpush1.msra.mxu0 0.0
    %1846 = vmatprep.subr.mxu0 0.0
    %1847 = vmatpush1.msra.mxu0 0.0
    %1848 = vmatprep.subr.mxu0 0.0
    %1849 = vmatpush1.msra.mxu0 0.0
    %1850 = vmatprep.subr.mxu0 0.0
    %1851 = vmatpush1.msra.mxu0 0.0
    %1852 = vmatprep.subr.mxu0 0.0
    %1853 = vmatpush1.msra.mxu0 0.0
    %1854 = vmatprep.mubr.f32.mxu0 0.0
    %1855 = vmatmul.mubr.f32.gmra.mrb[0].mxu0 %v1788
    %v1856 = vpop.f32.mrb[0].mxu0
    %v1857 = vadd.f32 0.0, %v1856
    %v1858 = vpop.f32.mrb[0].mxu0
    %1859 = vdwg.mxu0
    %v1860 = vadd.f32 %v1624, %v1857
    %v1862 = vsel %vm1160, %v996, 0
    %v1865 = vsel %vm1160, %v1071, 0
    %1867 = vmatprep.subr.mxu0 0.0
    %1868 = vmatpush1.xpose.msra.mxu0 %v1865
    %1869 = vmatprep.subr.mxu0 0.0
    %1870 = vmatpush1.xpose.msra.mxu0 0.0
    %1871 = vmatprep.subr.mxu0 0.0
    %1872 = vmatpush1.xpose.msra.mxu0 0.0
    %1873 = vmatprep.subr.mxu0 0.0
    %1874 = vmatpush1.xpose.msra.mxu0 0.0
    %1875 = vmatprep.subr.mxu0 0.0
    %1876 = vmatpush1.xpose.msra.mxu0 0.0
    %1877 = vmatprep.subr.mxu0 0.0
    %1878 = vmatpush1.xpose.msra.mxu0 0.0
    %1879 = vmatprep.subr.mxu0 0.0
    %1880 = vmatpush1.xpose.msra.mxu0 0.0
    %1881 = vmatprep.subr.mxu0 0.0
    %1882 = vmatpush1.xpose.msra.mxu0 0.0
    %1883 = vmatprep.subr.mxu0 0.0
    %1884 = vmatpush1.xpose.msra.mxu0 0.0
    %1885 = vmatprep.subr.mxu0 0.0
    %1886 = vmatpush1.xpose.msra.mxu0 0.0
    %1887 = vmatprep.subr.mxu0 0.0
    %1888 = vmatpush1.xpose.msra.mxu0 0.0
    %1889 = vmatprep.subr.mxu0 0.0
    %1890 = vmatpush1.xpose.msra.mxu0 0.0
    %1891 = vmatprep.subr.mxu0 0.0
    %1892 = vmatpush1.xpose.msra.mxu0 0.0
    %1893 = vmatprep.subr.mxu0 0.0
    %1894 = vmatpush1.xpose.msra.mxu0 0.0
    %1895 = vmatprep.subr.mxu0 0.0
    %1896 = vmatpush1.xpose.msra.mxu0 0.0
    %1897 = vmatprep.subr.mxu0 0.0
    %1898 = vmatpush1.xpose.msra.mxu0 0.0
    %1899 = vmatprep.subr.mxu0 0.0
    %1900 = vmatpush1.xpose.msra.mxu0 0.0
    %1901 = vmatprep.subr.mxu0 0.0
    %1902 = vmatpush1.xpose.msra.mxu0 0.0
    %1903 = vmatprep.subr.mxu0 0.0
    %1904 = vmatpush1.xpose.msra.mxu0 0.0
    %1905 = vmatprep.subr.mxu0 0.0
    %1906 = vmatpush1.xpose.msra.mxu0 0.0
    %1907 = vmatprep.subr.mxu0 0.0
    %1908 = vmatpush1.xpose.msra.mxu0 0.0
    %1909 = vmatprep.subr.mxu0 0.0
    %1910 = vmatpush1.xpose.msra.mxu0 0.0
    %1911 = vmatprep.subr.mxu0 0.0
    %1912 = vmatpush1.xpose.msra.mxu0 0.0
    %1913 = vmatprep.subr.mxu0 0.0
    %1914 = vmatpush1.xpose.msra.mxu0 0.0
    %1915 = vmatprep.subr.mxu0 0.0
    %1916 = vmatpush1.xpose.msra.mxu0 0.0
    %1917 = vmatprep.subr.mxu0 0.0
    %1918 = vmatpush1.xpose.msra.mxu0 0.0
    %1919 = vmatprep.subr.mxu0 0.0
    %1920 = vmatpush1.xpose.msra.mxu0 0.0
    %1921 = vmatprep.subr.mxu0 0.0
    %1922 = vmatpush1.xpose.msra.mxu0 0.0
    %1923 = vmatprep.subr.mxu0 0.0
    %1924 = vmatpush1.xpose.msra.mxu0 0.0
    %1925 = vmatprep.subr.mxu0 0.0
    %1926 = vmatpush1.xpose.msra.mxu0 0.0
    %1927 = vmatprep.subr.mxu0 0.0
    %1928 = vmatpush1.xpose.msra.mxu0 0.0
    %1929 = vmatprep.subr.mxu0 0.0
    %1930 = vmatpush1.xpose.msra.mxu0 0.0
    %1931 = vmatprep.mubr.f32.mxu0 0.0
    %1932 = vmatmul.mubr.f32.gmra.mrb[0].mxu0 %v1862
    %v1933 = vpop.f32.mrb[0].mxu0
    %v1934 = vadd.f32 0.0, %v1933
    %v1935 = vpop.f32.mrb[0].mxu0
    %1936 = vdwg.mxu0
    %v1937 = vsel %vm1160, %v1934, -inf
    %1938 = vmax.xlane.f32.xlu0 %v1937
    %v1939 = vpop.xlane.xlu0 %1938
    %v1940 = vsub.f32 %v1934, %v1939
    %v1941 = vmul.f32 %v1940, 1.442695
    %v1942 = vpow.pop %v1941
    %v1943 = vsel %vm1160, %v1942, 0.0
    %1944 = vadd.xlane.f32.xlu0 %v1943
    %v1945 = vpop.xlane.xlu0 %1944
    %v1946 = vrcp.pop %v1945
    %v1947 = vmul.f32 %v1942, %v1946
    %v1949 = vsel %vm1160, %v1947, 0
    %1951 = vmatprep.subr.mxu0 0.0
    %1952 = vmatpush1.msra.mxu0 %v1152
    %1953 = vmatprep.subr.mxu0 0.0
    %1954 = vmatpush1.msra.mxu0 0.0
    %1955 = vmatprep.subr.mxu0 0.0
    %1956 = vmatpush1.msra.mxu0 0.0
    %1957 = vmatprep.subr.mxu0 0.0
    %1958 = vmatpush1.msra.mxu0 0.0
    %1959 = vmatprep.subr.mxu0 0.0
    %1960 = vmatpush1.msra.mxu0 0.0
    %1961 = vmatprep.subr.mxu0 0.0
    %1962 = vmatpush1.msra.mxu0 0.0
    %1963 = vmatprep.subr.mxu0 0.0
    %1964 = vmatpush1.msra.mxu0 0.0
    %1965 = vmatprep.subr.mxu0 0.0
    %1966 = vmatpush1.msra.mxu0 0.0
    %1967 = vmatprep.subr.mxu0 0.0
    %1968 = vmatpush1.msra.mxu0 0.0
    %1969 = vmatprep.subr.mxu0 0.0
    %1970 = vmatpush1.msra.mxu0 0.0
    %1971 = vmatprep.subr.mxu0 0.0
    %1972 = vmatpush1.msra.mxu0 0.0
    %1973 = vmatprep.subr.mxu0 0.0
    %1974 = vmatpush1.msra.mxu0 0.0
    %1975 = vmatprep.subr.mxu0 0.0
    %1976 = vmatpush1.msra.mxu0 0.0
    %1977 = vmatprep.subr.mxu0 0.0
    %1978 = vmatpush1.msra.mxu0 0.0
    %1979 = vmatprep.subr.mxu0 0.0
    %1980 = vmatpush1.msra.mxu0 0.0
    %1981 = vmatprep.subr.mxu0 0.0
    %1982 = vmatpush1.msra.mxu0 0.0
    %1983 = vmatprep.subr.mxu0 0.0
    %1984 = vmatpush1.msra.mxu0 0.0
    %1985 = vmatprep.subr.mxu0 0.0
    %1986 = vmatpush1.msra.mxu0 0.0
    %1987 = vmatprep.subr.mxu0 0.0
    %1988 = vmatpush1.msra.mxu0 0.0
    %1989 = vmatprep.subr.mxu0 0.0
    %1990 = vmatpush1.msra.mxu0 0.0
    %1991 = vmatprep.subr.mxu0 0.0
    %1992 = vmatpush1.msra.mxu0 0.0
    %1993 = vmatprep.subr.mxu0 0.0
    %1994 = vmatpush1.msra.mxu0 0.0
    %1995 = vmatprep.subr.mxu0 0.0
    %1996 = vmatpush1.msra.mxu0 0.0
    %1997 = vmatprep.subr.mxu0 0.0
    %1998 = vmatpush1.msra.mxu0 0.0
    %1999 = vmatprep.subr.mxu0 0.0
    %2000 = vmatpush1.msra.mxu0 0.0
    %2001 = vmatprep.subr.mxu0 0.0
    %2002 = vmatpush1.msra.mxu0 0.0
    %2003 = vmatprep.subr.mxu0 0.0
    %2004 = vmatpush1.msra.mxu0 0.0
    %2005 = vmatprep.subr.mxu0 0.0
    %2006 = vmatpush1.msra.mxu0 0.0
    %2007 = vmatprep.subr.mxu0 0.0
    %2008 = vmatpush1.msra.mxu0 0.0
    %2009 = vmatprep.subr.mxu0 0.0
    %2010 = vmatpush1.msra.mxu0 0.0
    %2011 = vmatprep.subr.mxu0 0.0
    %2012 = vmatpush1.msra.mxu0 0.0
    %2013 = vmatprep.subr.mxu0 0.0
    %2014 = vmatpush1.msra.mxu0 0.0
    %2015 = vmatprep.mubr.f32.mxu0 0.0
    %2016 = vmatmul.mubr.f32.gmra.mrb[0].mxu0 %v1949
    %v2017 = vpop.f32.mrb[0].mxu0
    %v2018 = vadd.f32 0.0, %v2017
    %v2019 = vpop.f32.mrb[0].mxu0
    %2020 = vdwg.mxu0
    %v2022 = vsel %vm1160, %v2018, 0
    %2024 = vmatprep.subr.mxu0 0.0
    %2025 = vmatpush1.msra.mxu0 %v167
    %2026 = vmatprep.subr.mxu0 0.0
    %2027 = vmatpush1.msra.mxu0 0.0
    %2028 = vmatprep.subr.mxu0 0.0
    %2029 = vmatpush1.msra.mxu0 0.0
    %2030 = vmatprep.subr.mxu0 0.0
    %2031 = vmatpush1.msra.mxu0 0.0
    %2032 = vmatprep.subr.mxu0 0.0
    %2033 = vmatpush1.msra.mxu0 0.0
    %2034 = vmatprep.subr.mxu0 0.0
    %2035 = vmatpush1.msra.mxu0 0.0
    %2036 = vmatprep.subr.mxu0 0.0
    %2037 = vmatpush1.msra.mxu0 0.0
    %2038 = vmatprep.subr.mxu0 0.0
    %2039 = vmatpush1.msra.mxu0 0.0
    %2040 = vmatprep.subr.mxu0 0.0
    %2041 = vmatpush1.msra.mxu0 0.0
    %2042 = vmatprep.subr.mxu0 0.0
    %2043 = vmatpush1.msra.mxu0 0.0
    %2044 = vmatprep.subr.mxu0 0.0
    %2045 = vmatpush1.msra.mxu0 0.0
    %2046 = vmatprep.subr.mxu0 0.0
    %2047 = vmatpush1.msra.mxu0 0.0
    %2048 = vmatprep.subr.mxu0 0.0
    %2049 = vmatpush1.msra.mxu0 0.0
    %2050 = vmatprep.subr.mxu0 0.0
    %2051 = vmatpush1.msra.mxu0 0.0
    %2052 = vmatprep.subr.mxu0 0.0
    %2053 = vmatpush1.msra.mxu0 0.0
    %2054 = vmatprep.subr.mxu0 0.0
    %2055 = vmatpush1.msra.mxu0 0.0
    %2056 = vmatprep.subr.mxu0 0.0
    %2057 = vmatpush1.msra.mxu0 0.0
    %2058 = vmatprep.subr.mxu0 0.0
    %2059 = vmatpush1.msra.mxu0 0.0
    %2060 = vmatprep.subr.mxu0 0.0
    %2061 = vmatpush1.msra.mxu0 0.0
    %2062 = vmatprep.subr.mxu0 0.0
    %2063 = vmatpush1.msra.mxu0 0.0
    %2064 = vmatprep.subr.mxu0 0.0
    %2065 = vmatpush1.msra.mxu0 0.0
    %2066 = vmatprep.subr.mxu0 0.0
    %2067 = vmatpush1.msra.mxu0 0.0
    %2068 = vmatprep.subr.mxu0 0.0
    %2069 = vmatpush1.msra.mxu0 0.0
    %2070 = vmatprep.subr.mxu0 0.0
    %2071 = vmatpush1.msra.mxu0 0.0
    %2072 = vmatprep.subr.mxu0 0.0
    %2073 = vmatpush1.msra.mxu0 0.0
    %2074 = vmatprep.subr.mxu0 0.0
    %2075 = vmatpush1.msra.mxu0 0.0
    %2076 = vmatprep.subr.mxu0 0.0
    %2077 = vmatpush1.msra.mxu0 0.0
    %2078 = vmatprep.subr.mxu0 0.0
    %2079 = vmatpush1.msra.mxu0 0.0
    %2080 = vmatprep.subr.mxu0 0.0
    %2081 = vmatpush1.msra.mxu0 0.0
    %2082 = vmatprep.subr.mxu0 0.0
    %2083 = vmatpush1.msra.mxu0 0.0
    %2084 = vmatprep.subr.mxu0 0.0
    %2085 = vmatpush1.msra.mxu0 0.0
    %2086 = vmatprep.subr.mxu0 0.0
    %2087 = vmatpush1.msra.mxu0 0.0
    %2088 = vmatprep.mubr.f32.mxu0 0.0
    %2089 = vmatmul.mubr.f32.gmra.mrb[0].mxu0 %v2022
    %v2090 = vpop.f32.mrb[0].mxu0
    %v2091 = vadd.f32 0.0, %v2090
    %v2092 = vpop.f32.mrb[0].mxu0
    %2093 = vdwg.mxu0
    %v2094 = vadd.f32 %v1860, %v2091
    %v2096 = vsel %vm1160, %v256, 0
    %v2099 = vsel %vm1160, %v335, 0
    %2101 = vmatprep.subr.mxu0 0.0
    %2102 = vmatpush1.xpose.msra.mxu0 %v2099
    %2103 = vmatprep.subr.mxu0 0.0
    %2104 = vmatpush1.xpose.msra.mxu0 0.0
    %2105 = vmatprep.subr.mxu0 0.0
    %2106 = vmatpush1.xpose.msra.mxu0 0.0
    %2107 = vmatprep.subr.mxu0 0.0
    %2108 = vmatpush1.xpose.msra.mxu0 0.0
    %2109 = vmatprep.subr.mxu0 0.0
    %2110 = vmatpush1.xpose.msra.mxu0 0.0
    %2111 = vmatprep.subr.mxu0 0.0
    %2112 = vmatpush1.xpose.msra.mxu0 0.0
    %2113 = vmatprep.subr.mxu0 0.0
    %2114 = vmatpush1.xpose.msra.mxu0 0.0
    %2115 = vmatprep.subr.mxu0 0.0
    %2116 = vmatpush1.xpose.msra.mxu0 0.0
    %2117 = vmatprep.subr.mxu0 0.0
    %2118 = vmatpush1.xpose.msra.mxu0 0.0
    %2119 = vmatprep.subr.mxu0 0.0
    %2120 = vmatpush1.xpose.msra.mxu0 0.0
    %2121 = vmatprep.subr.mxu0 0.0
    %2122 = vmatpush1.xpose.msra.mxu0 0.0
    %2123 = vmatprep.subr.mxu0 0.0
    %2124 = vmatpush1.xpose.msra.mxu0 0.0
    %2125 = vmatprep.subr.mxu0 0.0
    %2126 = vmatpush1.xpose.msra.mxu0 0.0
    %2127 = vmatprep.subr.mxu0 0.0
    %2128 = vmatpush1.xpose.msra.mxu0 0.0
    %2129 = vmatprep.subr.mxu0 0.0
    %2130 = vmatpush1.xpose.msra.mxu0 0.0
    %2131 = vmatprep.subr.mxu0 0.0
    %2132 = vmatpush1.xpose.msra.mxu0 0.0
    %2133 = vmatprep.subr.mxu0 0.0
    %2134 = vmatpush1.xpose.msra.mxu0 0.0
    %2135 = vmatprep.subr.mxu0 0.0
    %2136 = vmatpush1.xpose.msra.mxu0 0.0
    %2137 = vmatprep.subr.mxu0 0.0
    %2138 = vmatpush1.xpose.msra.mxu0 0.0
    %2139 = vmatprep.subr.mxu0 0.0
    %2140 = vmatpush1.xpose.msra.mxu0 0.0
    %2141 = vmatprep.subr.mxu0 0.0
    %2142 = vmatpush1.xpose.msra.mxu0 0.0
    %2143 = vmatprep.subr.mxu0 0.0
    %2144 = vmatpush1.xpose.msra.mxu0 0.0
    %2145 = vmatprep.subr.mxu0 0.0
    %2146 = vmatpush1.xpose.msra.mxu0 0.0
    %2147 = vmatprep.subr.mxu0 0.0
    %2148 = vmatpush1.xpose.msra.mxu0 0.0
    %2149 = vmatprep.subr.mxu0 0.0
    %2150 = vmatpush1.xpose.msra.mxu0 0.0
    %2151 = vmatprep.subr.mxu0 0.0
    %2152 = vmatpush1.xpose.msra.mxu0 0.0
    %2153 = vmatprep.subr.mxu0 0.0
    %2154 = vmatpush1.xpose.msra.mxu0 0.0
    %2155 = vmatprep.subr.mxu0 0.0
    %2156 = vmatpush1.xpose.msra.mxu0 0.0
    %2157 = vmatprep.subr.mxu0 0.0
    %2158 = vmatpush1.xpose.msra.mxu0 0.0
    %2159 = vmatprep.subr.mxu0 0.0
    %2160 = vmatpush1.xpose.msra.mxu0 0.0
    %2161 = vmatprep.subr.mxu0 0.0
    %2162 = vmatpush1.xpose.msra.mxu0 0.0
    %2163 = vmatprep.subr.mxu0 0.0
    %2164 = vmatpush1.xpose.msra.mxu0 0.0
    %2165 = vmatprep.mubr.f32.mxu0 0.0
    %2166 = vmatmul.mubr.f32.gmra.mrb[0].mxu0 %v2096
    %v2167 = vpop.f32.mrb[0].mxu0
    %v2168 = vadd.f32 0.0, %v2167
    %v2169 = vpop.f32.mrb[0].mxu0
    %2170 = vdwg.mxu0
    %v2171 = vsel %vm1160, %v2168, -inf
    %2172 = vmax.xlane.f32.xlu0 %v2171
    %v2173 = vpop.xlane.xlu0 %2172
    %v2174 = vsub.f32 %v2168, %v2173
    %v2175 = vmul.f32 %v2174, 1.442695
    %v2176 = vpow.pop %v2175
    %v2177 = vsel %vm1160, %v2176, 0.0
    %2178 = vadd.xlane.f32.xlu0 %v2177
    %v2179 = vpop.xlane.xlu0 %2178
    %v2180 = vrcp.pop %v2179
    %v2181 = vmul.f32 %v2176, %v2180
    %v2183 = vsel %vm1160, %v2181, 0
    %2185 = vmatprep.subr.mxu0 0.0
    %2186 = vmatpush1.msra.mxu0 %v422
    %2187 = vmatprep.subr.mxu0 0.0
    %2188 = vmatpush1.msra.mxu0 0.0
    %2189 = vmatprep.subr.mxu0 0.0
    %2190 = vmatpush1.msra.mxu0 0.0
    %2191 = vmatprep.subr.mxu0 0.0
    %2192 = vmatpush1.msra.mxu0 0.0
    %2193 = vmatprep.subr.mxu0 0.0
    %2194 = vmatpush1.msra.mxu0 0.0
    %2195 = vmatprep.subr.mxu0 0.0
    %2196 = vmatpush1.msra.mxu0 0.0
    %2197 = vmatprep.subr.mxu0 0.0
    %2198 = vmatpush1.msra.mxu0 0.0
    %2199 = vmatprep.subr.mxu0 0.0
    %2200 = vmatpush1.msra.mxu0 0.0
    %2201 = vmatprep.subr.mxu0 0.0
    %2202 = vmatpush1.msra.mxu0 0.0
    %2203 = vmatprep.subr.mxu0 0.0
    %2204 = vmatpush1.msra.mxu0 0.0
    %2205 = vmatprep.subr.mxu0 0.0
    %2206 = vmatpush1.msra.mxu0 0.0
    %2207 = vmatprep.subr.mxu0 0.0
    %2208 = vmatpush1.msra.mxu0 0.0
    %2209 = vmatprep.subr.mxu0 0.0
    %2210 = vmatpush1.msra.mxu0 0.0
    %2211 = vmatprep.subr.mxu0 0.0
    %2212 = vmatpush1.msra.mxu0 0.0
    %2213 = vmatprep.subr.mxu0 0.0
    %2214 = vmatpush1.msra.mxu0 0.0
    %2215 = vmatprep.subr.mxu0 0.0
    %2216 = vmatpush1.msra.mxu0 0.0
    %2217 = vmatprep.subr.mxu0 0.0
    %2218 = vmatpush1.msra.mxu0 0.0
    %2219 = vmatprep.subr.mxu0 0.0
    %2220 = vmatpush1.msra.mxu0 0.0
    %2221 = vmatprep.subr.mxu0 0.0
    %2222 = vmatpush1.msra.mxu0 0.0
    %2223 = vmatprep.subr.mxu0 0.0
    %2224 = vmatpush1.msra.mxu0 0.0
    %2225 = vmatprep.subr.mxu0 0.0
    %2226 = vmatpush1.msra.mxu0 0.0
    %2227 = vmatprep.subr.mxu0 0.0
    %2228 = vmatpush1.msra.mxu0 0.0
    %2229 = vmatprep.subr.mxu0 0.0
    %2230 = vmatpush1.msra.mxu0 0.0
    %2231 = vmatprep.subr.mxu0 0.0
    %2232 = vmatpush1.msra.mxu0 0.0
    %2233 = vmatprep.subr.mxu0 0.0
    %2234 = vmatpush1.msra.mxu0 0.0
    %2235 = vmatprep.subr.mxu0 0.0
    %2236 = vmatpush1.msra.mxu0 0.0
    %2237 = vmatprep.subr.mxu0 0.0
    %2238 = vmatpush1.msra.mxu0 0.0
    %2239 = vmatprep.subr.mxu0 0.0
    %2240 = vmatpush1.msra.mxu0 0.0
    %2241 = vmatprep.subr.mxu0 0.0
    %2242 = vmatpush1.msra.mxu0 0.0
    %2243 = vmatprep.subr.mxu0 0.0
    %2244 = vmatpush1.msra.mxu0 0.0
    %2245 = vmatprep.subr.mxu0 0.0
    %2246 = vmatpush1.msra.mxu0 0.0
    %2247 = vmatprep.subr.mxu0 0.0
    %2248 = vmatpush1.msra.mxu0 0.0
    %2249 = vmatprep.mubr.f32.mxu0 0.0
    %2250 = vmatmul.mubr.f32.gmra.mrb[0].mxu0 %v2183
    %v2251 = vpop.f32.mrb[0].mxu0
    %v2252 = vadd.f32 0.0, %v2251
    %v2253 = vpop.f32.mrb[0].mxu0
    %2254 = vdwg.mxu0
    %v2256 = vsel %vm1160, %v507, 0
    %v2259 = vsel %vm1160, %v586, 0
    %2261 = vmatprep.subr.mxu0 0.0
    %2262 = vmatpush1.xpose.msra.mxu0 %v2259
    %2263 = vmatprep.subr.mxu0 0.0
    %2264 = vmatpush1.xpose.msra.mxu0 0.0
    %2265 = vmatprep.subr.mxu0 0.0
    %2266 = vmatpush1.xpose.msra.mxu0 0.0
    %2267 = vmatprep.subr.mxu0 0.0
    %2268 = vmatpush1.xpose.msra.mxu0 0.0
    %2269 = vmatprep.subr.mxu0 0.0
    %2270 = vmatpush1.xpose.msra.mxu0 0.0
    %2271 = vmatprep.subr.mxu0 0.0
    %2272 = vmatpush1.xpose.msra.mxu0 0.0
    %2273 = vmatprep.subr.mxu0 0.0
    %2274 = vmatpush1.xpose.msra.mxu0 0.0
    %2275 = vmatprep.subr.mxu0 0.0
    %2276 = vmatpush1.xpose.msra.mxu0 0.0
    %2277 = vmatprep.subr.mxu0 0.0
    %2278 = vmatpush1.xpose.msra.mxu0 0.0
    %2279 = vmatprep.subr.mxu0 0.0
    %2280 = vmatpush1.xpose.msra.mxu0 0.0
    %2281 = vmatprep.subr.mxu0 0.0
    %2282 = vmatpush1.xpose.msra.mxu0 0.0
    %2283 = vmatprep.subr.mxu0 0.0
    %2284 = vmatpush1.xpose.msra.mxu0 0.0
    %2285 = vmatprep.subr.mxu0 0.0
    %2286 = vmatpush1.xpose.msra.mxu0 0.0
    %2287 = vmatprep.subr.mxu0 0.0
    %2288 = vmatpush1.xpose.msra.mxu0 0.0
    %2289 = vmatprep.subr.mxu0 0.0
    %2290 = vmatpush1.xpose.msra.mxu0 0.0
    %2291 = vmatprep.subr.mxu0 0.0
    %2292 = vmatpush1.xpose.msra.mxu0 0.0
    %2293 = vmatprep.subr.mxu0 0.0
    %2294 = vmatpush1.xpose.msra.mxu0 0.0
    %2295 = vmatprep.subr.mxu0 0.0
    %2296 = vmatpush1.xpose.msra.mxu0 0.0
    %2297 = vmatprep.subr.mxu0 0.0
    %2298 = vmatpush1.xpose.msra.mxu0 0.0
    %2299 = vmatprep.subr.mxu0 0.0
    %2300 = vmatpush1.xpose.msra.mxu0 0.0
    %2301 = vmatprep.subr.mxu0 0.0
    %2302 = vmatpush1.xpose.msra.mxu0 0.0
    %2303 = vmatprep.subr.mxu0 0.0
    %2304 = vmatpush1.xpose.msra.mxu0 0.0
    %2305 = vmatprep.subr.mxu0 0.0
    %2306 = vmatpush1.xpose.msra.mxu0 0.0
    %2307 = vmatprep.subr.mxu0 0.0
    %2308 = vmatpush1.xpose.msra.mxu0 0.0
    %2309 = vmatprep.subr.mxu0 0.0
    %2310 = vmatpush1.xpose.msra.mxu0 0.0
    %2311 = vmatprep.subr.mxu0 0.0
    %2312 = vmatpush1.xpose.msra.mxu0 0.0
    %2313 = vmatprep.subr.mxu0 0.0
    %2314 = vmatpush1.xpose.msra.mxu0 0.0
    %2315 = vmatprep.subr.mxu0 0.0
    %2316 = vmatpush1.xpose.msra.mxu0 0.0
    %2317 = vmatprep.subr.mxu0 0.0
    %2318 = vmatpush1.xpose.msra.mxu0 0.0
    %2319 = vmatprep.subr.mxu0 0.0
    %2320 = vmatpush1.xpose.msra.mxu0 0.0
    %2321 = vmatprep.subr.mxu0 0.0
    %2322 = vmatpush1.xpose.msra.mxu0 0.0
    %2323 = vmatprep.subr.mxu0 0.0
    %2324 = vmatpush1.xpose.msra.mxu0 0.0
    %2325 = vmatprep.mubr.f32.mxu0 0.0
    %2326 = vmatmul.mubr.f32.gmra.mrb[0].mxu0 %v2256
    %v2327 = vpop.f32.mrb[0].mxu0
    %v2328 = vadd.f32 0.0, %v2327
    %v2329 = vpop.f32.mrb[0].mxu0
    %2330 = vdwg.mxu0
    %v2331 = vsel %vm1160, %v2328, -inf
    %2332 = vmax.xlane.f32.xlu0 %v2331
    %v2333 = vpop.xlane.xlu0 %2332
    %v2334 = vsub.f32 %v2328, %v2333
    %v2335 = vmul.f32 %v2334, 1.442695
    %v2336 = vpow.pop %v2335
    %v2337 = vsel %vm1160, %v2336, 0.0
    %2338 = vadd.xlane.f32.xlu0 %v2337
    %v2339 = vpop.xlane.xlu0 %2338
    %v2340 = vrcp.pop %v2339
    %v2341 = vmul.f32 %v2336, %v2340
    %v2343 = vsel %vm1160, %v2341, 0
    %2345 = vmatprep.subr.mxu0 0.0
    %2346 = vmatpush1.msra.mxu0 %v667
    %2347 = vmatprep.subr.mxu0 0.0
    %2348 = vmatpush1.msra.mxu0 0.0
    %2349 = vmatprep.subr.mxu0 0.0
    %2350 = vmatpush1.msra.mxu0 0.0
    %2351 = vmatprep.subr.mxu0 0.0
    %2352 = vmatpush1.msra.mxu0 0.0
    %2353 = vmatprep.subr.mxu0 0.0
    %2354 = vmatpush1.msra.mxu0 0.0
    %2355 = vmatprep.subr.mxu0 0.0
    %2356 = vmatpush1.msra.mxu0 0.0
    %2357 = vmatprep.subr.mxu0 0.0
    %2358 = vmatpush1.msra.mxu0 0.0
    %2359 = vmatprep.subr.mxu0 0.0
    %2360 = vmatpush1.msra.mxu0 0.0
    %2361 = vmatprep.subr.mxu0 0.0
    %2362 = vmatpush1.msra.mxu0 0.0
    %2363 = vmatprep.subr.mxu0 0.0
    %2364 = vmatpush1.msra.mxu0 0.0
    %2365 = vmatprep.subr.mxu0 0.0
    %2366 = vmatpush1.msra.mxu0 0.0
    %2367 = vmatprep.subr.mxu0 0.0
    %2368 = vmatpush1.msra.mxu0 0.0
    %2369 = vmatprep.subr.mxu0 0.0
    %2370 = vmatpush1.msra.mxu0 0.0
    %2371 = vmatprep.subr.mxu0 0.0
    %2372 = vmatpush1.msra.mxu0 0.0
    %2373 = vmatprep.subr.mxu0 0.0
    %2374 = vmatpush1.msra.mxu0 0.0
    %2375 = vmatprep.subr.mxu0 0.0
    %2376 = vmatpush1.msra.mxu0 0.0
    %2377 = vmatprep.subr.mxu0 0.0
    %2378 = vmatpush1.msra.mxu0 0.0
    %2379 = vmatprep.subr.mxu0 0.0
    %2380 = vmatpush1.msra.mxu0 0.0
    %2381 = vmatprep.subr.mxu0 0.0
    %2382 = vmatpush1.msra.mxu0 0.0
    %2383 = vmatprep.subr.mxu0 0.0
    %2384 = vmatpush1.msra.mxu0 0.0
    %2385 = vmatprep.subr.mxu0 0.0
    %2386 = vmatpush1.msra.mxu0 0.0
    %2387 = vmatprep.subr.mxu0 0.0
    %2388 = vmatpush1.msra.mxu0 0.0
    %2389 = vmatprep.subr.mxu0 0.0
    %2390 = vmatpush1.msra.mxu0 0.0
    %2391 = vmatprep.subr.mxu0 0.0
    %2392 = vmatpush1.msra.mxu0 0.0
    %2393 = vmatprep.subr.mxu0 0.0
    %2394 = vmatpush1.msra.mxu0 0.0
    %2395 = vmatprep.subr.mxu0 0.0
    %2396 = vmatpush1.msra.mxu0 0.0
    %2397 = vmatprep.subr.mxu0 0.0
    %2398 = vmatpush1.msra.mxu0 0.0
    %2399 = vmatprep.subr.mxu0 0.0
    %2400 = vmatpush1.msra.mxu0 0.0
    %2401 = vmatprep.subr.mxu0 0.0
    %2402 = vmatpush1.msra.mxu0 0.0
    %2403 = vmatprep.subr.mxu0 0.0
    %2404 = vmatpush1.msra.mxu0 0.0
    %2405 = vmatprep.subr.mxu0 0.0
    %2406 = vmatpush1.msra.mxu0 0.0
    %2407 = vmatprep.subr.mxu0 0.0
    %2408 = vmatpush1.msra.mxu0 0.0
    %2409 = vmatprep.mubr.f32.mxu0 0.0
    %2410 = vmatmul.mubr.f32.gmra.mrb[0].mxu0 %v2343
    %v2411 = vpop.f32.mrb[0].mxu0
    %v2412 = vadd.f32 0.0, %v2411
    %v2413 = vpop.f32.mrb[0].mxu0
    %2414 = vdwg.mxu0
    %v2416 = vsel %vm1160, %v2412, 0
    %2418 = vmatprep.subr.mxu0 0.0
    %2419 = vmatpush1.msra.mxu0 %v165
    %2420 = vmatprep.subr.mxu0 0.0
    %2421 = vmatpush1.msra.mxu0 0.0
    %2422 = vmatprep.subr.mxu0 0.0
    %2423 = vmatpush1.msra.mxu0 0.0
    %2424 = vmatprep.subr.mxu0 0.0
    %2425 = vmatpush1.msra.mxu0 0.0
    %2426 = vmatprep.subr.mxu0 0.0
    %2427 = vmatpush1.msra.mxu0 0.0
    %2428 = vmatprep.subr.mxu0 0.0
    %2429 = vmatpush1.msra.mxu0 0.0
    %2430 = vmatprep.subr.mxu0 0.0
    %2431 = vmatpush1.msra.mxu0 0.0
    %2432 = vmatprep.subr.mxu0 0.0
    %2433 = vmatpush1.msra.mxu0 0.0
    %2434 = vmatprep.subr.mxu0 0.0
    %2435 = vmatpush1.msra.mxu0 0.0
    %2436 = vmatprep.subr.mxu0 0.0
    %2437 = vmatpush1.msra.mxu0 0.0
    %2438 = vmatprep.subr.mxu0 0.0
    %2439 = vmatpush1.msra.mxu0 0.0
    %2440 = vmatprep.subr.mxu0 0.0
    %2441 = vmatpush1.msra.mxu0 0.0
    %2442 = vmatprep.subr.mxu0 0.0
    %2443 = vmatpush1.msra.mxu0 0.0
    %2444 = vmatprep.subr.mxu0 0.0
    %2445 = vmatpush1.msra.mxu0 0.0
    %2446 = vmatprep.subr.mxu0 0.0
    %2447 = vmatpush1.msra.mxu0 0.0
    %2448 = vmatprep.subr.mxu0 0.0
    %2449 = vmatpush1.msra.mxu0 0.0
    %2450 = vmatprep.subr.mxu0 0.0
    %2451 = vmatpush1.msra.mxu0 0.0
    %2452 = vmatprep.subr.mxu0 0.0
    %2453 = vmatpush1.msra.mxu0 0.0
    %2454 = vmatprep.subr.mxu0 0.0
    %2455 = vmatpush1.msra.mxu0 0.0
    %2456 = vmatprep.subr.mxu0 0.0
    %2457 = vmatpush1.msra.mxu0 0.0
    %2458 = vmatprep.subr.mxu0 0.0
    %2459 = vmatpush1.msra.mxu0 0.0
    %2460 = vmatprep.subr.mxu0 0.0
    %2461 = vmatpush1.msra.mxu0 0.0
    %2462 = vmatprep.subr.mxu0 0.0
    %2463 = vmatpush1.msra.mxu0 0.0
    %2464 = vmatprep.subr.mxu0 0.0
    %2465 = vmatpush1.msra.mxu0 0.0
    %2466 = vmatprep.subr.mxu0 0.0
    %2467 = vmatpush1.msra.mxu0 0.0
    %2468 = vmatprep.subr.mxu0 0.0
    %2469 = vmatpush1.msra.mxu0 0.0
    %2470 = vmatprep.subr.mxu0 0.0
    %2471 = vmatpush1.msra.mxu0 0.0
    %2472 = vmatprep.subr.mxu0 0.0
    %2473 = vmatpush1.msra.mxu0 0.0
    %2474 = vmatprep.subr.mxu0 0.0
    %2475 = vmatpush1.msra.mxu0 0.0
    %2476 = vmatprep.subr.mxu0 0.0
    %2477 = vmatpush1.msra.mxu0 0.0
    %2478 = vmatprep.subr.mxu0 0.0
    %2479 = vmatpush1.msra.mxu0 0.0
    %2480 = vmatprep.subr.mxu0 0.0
    %2481 = vmatpush1.msra.mxu0 0.0
    %2482 = vmatprep.mubr.f32.mxu0 0.0
    %2483 = vmatmul.mubr.f32.gmra.mrb[0].mxu0 %v2416
    %v2484 = vpop.f32.mrb[0].mxu0
    %v2485 = vadd.f32 0.0, %v2484
    %v2486 = vpop.f32.mrb[0].mxu0
    %2487 = vdwg.mxu0
    %v2489 = vsel %vm1160, %v2252, 0
    %2491 = vmatprep.subr.mxu0 0.0
    %2492 = vmatpush1.msra.mxu0 %v164
    %2493 = vmatprep.subr.mxu0 0.0
    %2494 = vmatpush1.msra.mxu0 0.0
    %2495 = vmatprep.subr.mxu0 0.0
    %2496 = vmatpush1.msra.mxu0 0.0
    %2497 = vmatprep.subr.mxu0 0.0
    %2498 = vmatpush1.msra.mxu0 0.0
    %2499 = vmatprep.subr.mxu0 0.0
    %2500 = vmatpush1.msra.mxu0 0.0
    %2501 = vmatprep.subr.mxu0 0.0
    %2502 = vmatpush1.msra.mxu0 0.0
    %2503 = vmatprep.subr.mxu0 0.0
    %2504 = vmatpush1.msra.mxu0 0.0
    %2505 = vmatprep.subr.mxu0 0.0
    %2506 = vmatpush1.msra.mxu0 0.0
    %2507 = vmatprep.subr.mxu0 0.0
    %2508 = vmatpush1.msra.mxu0 0.0
    %2509 = vmatprep.subr.mxu0 0.0
    %2510 = vmatpush1.msra.mxu0 0.0
    %2511 = vmatprep.subr.mxu0 0.0
    %2512 = vmatpush1.msra.mxu0 0.0
    %2513 = vmatprep.subr.mxu0 0.0
    %2514 = vmatpush1.msra.mxu0 0.0
    %2515 = vmatprep.subr.mxu0 0.0
    %2516 = vmatpush1.msra.mxu0 0.0
    %2517 = vmatprep.subr.mxu0 0.0
    %2518 = vmatpush1.msra.mxu0 0.0
    %2519 = vmatprep.subr.mxu0 0.0
    %2520 = vmatpush1.msra.mxu0 0.0
    %2521 = vmatprep.subr.mxu0 0.0
    %2522 = vmatpush1.msra.mxu0 0.0
    %2523 = vmatprep.subr.mxu0 0.0
    %2524 = vmatpush1.msra.mxu0 0.0
    %2525 = vmatprep.subr.mxu0 0.0
    %2526 = vmatpush1.msra.mxu0 0.0
    %2527 = vmatprep.subr.mxu0 0.0
    %2528 = vmatpush1.msra.mxu0 0.0
    %2529 = vmatprep.subr.mxu0 0.0
    %2530 = vmatpush1.msra.mxu0 0.0
    %2531 = vmatprep.subr.mxu0 0.0
    %2532 = vmatpush1.msra.mxu0 0.0
    %2533 = vmatprep.subr.mxu0 0.0
    %2534 = vmatpush1.msra.mxu0 0.0
    %2535 = vmatprep.subr.mxu0 0.0
    %2536 = vmatpush1.msra.mxu0 0.0
    %2537 = vmatprep.subr.mxu0 0.0
    %2538 = vmatpush1.msra.mxu0 0.0
    %2539 = vmatprep.subr.mxu0 0.0
    %2540 = vmatpush1.msra.mxu0 0.0
    %2541 = vmatprep.subr.mxu0 0.0
    %2542 = vmatpush1.msra.mxu0 0.0
    %2543 = vmatprep.subr.mxu0 0.0
    %2544 = vmatpush1.msra.mxu0 0.0
    %2545 = vmatprep.subr.mxu0 0.0
    %2546 = vmatpush1.msra.mxu0 0.0
    %2547 = vmatprep.subr.mxu0 0.0
    %2548 = vmatpush1.msra.mxu0 0.0
    %2549 = vmatprep.subr.mxu0 0.0
    %2550 = vmatpush1.msra.mxu0 0.0
    %2551 = vmatprep.subr.mxu0 0.0
    %2552 = vmatpush1.msra.mxu0 0.0
    %2553 = vmatprep.subr.mxu0 0.0
    %2554 = vmatpush1.msra.mxu0 0.0
    %2555 = vmatprep.mubr.f32.mxu0 0.0
    %2556 = vmatmul.mubr.f32.gmra.mrb[0].mxu0 %v2489
    %v2557 = vpop.f32.mrb[0].mxu0
    %v2558 = vadd.f32 %v2485, %v2557
    %v2559 = vpop.f32.mrb[0].mxu0
    %2560 = vdwg.mxu0
    %v2562 = vsel %vm1160, %v752, 0
    %v2565 = vsel %vm1160, %v831, 0
    %2567 = vmatprep.subr.mxu0 0.0
    %2568 = vmatpush1.xpose.msra.mxu0 %v2565
    %2569 = vmatprep.subr.mxu0 0.0
    %2570 = vmatpush1.xpose.msra.mxu0 0.0
    %2571 = vmatprep.subr.mxu0 0.0
    %2572 = vmatpush1.xpose.msra.mxu0 0.0
    %2573 = vmatprep.subr.mxu0 0.0
    %2574 = vmatpush1.xpose.msra.mxu0 0.0
    %2575 = vmatprep.subr.mxu0 0.0
    %2576 = vmatpush1.xpose.msra.mxu0 0.0
    %2577 = vmatprep.subr.mxu0 0.0
    %2578 = vmatpush1.xpose.msra.mxu0 0.0
    %2579 = vmatprep.subr.mxu0 0.0
    %2580 = vmatpush1.xpose.msra.mxu0 0.0
    %2581 = vmatprep.subr.mxu0 0.0
    %2582 = vmatpush1.xpose.msra.mxu0 0.0
    %2583 = vmatprep.subr.mxu0 0.0
    %2584 = vmatpush1.xpose.msra.mxu0 0.0
    %2585 = vmatprep.subr.mxu0 0.0
    %2586 = vmatpush1.xpose.msra.mxu0 0.0
    %2587 = vmatprep.subr.mxu0 0.0
    %2588 = vmatpush1.xpose.msra.mxu0 0.0
    %2589 = vmatprep.subr.mxu0 0.0
    %2590 = vmatpush1.xpose.msra.mxu0 0.0
    %2591 = vmatprep.subr.mxu0 0.0
    %2592 = vmatpush1.xpose.msra.mxu0 0.0
    %2593 = vmatprep.subr.mxu0 0.0
    %2594 = vmatpush1.xpose.msra.mxu0 0.0
    %2595 = vmatprep.subr.mxu0 0.0
    %2596 = vmatpush1.xpose.msra.mxu0 0.0
    %2597 = vmatprep.subr.mxu0 0.0
    %2598 = vmatpush1.xpose.msra.mxu0 0.0
    %2599 = vmatprep.subr.mxu0 0.0
    %2600 = vmatpush1.xpose.msra.mxu0 0.0
    %2601 = vmatprep.subr.mxu0 0.0
    %2602 = vmatpush1.xpose.msra.mxu0 0.0
    %2603 = vmatprep.subr.mxu0 0.0
    %2604 = vmatpush1.xpose.msra.mxu0 0.0
    %2605 = vmatprep.subr.mxu0 0.0
    %2606 = vmatpush1.xpose.msra.mxu0 0.0
    %2607 = vmatprep.subr.mxu0 0.0
    %2608 = vmatpush1.xpose.msra.mxu0 0.0
    %2609 = vmatprep.subr.mxu0 0.0
    %2610 = vmatpush1.xpose.msra.mxu0 0.0
    %2611 = vmatprep.subr.mxu0 0.0
    %2612 = vmatpush1.xpose.msra.mxu0 0.0
    %2613 = vmatprep.subr.mxu0 0.0
    %2614 = vmatpush1.xpose.msra.mxu0 0.0
    %2615 = vmatprep.subr.mxu0 0.0
    %2616 = vmatpush1.xpose.msra.mxu0 0.0
    %2617 = vmatprep.subr.mxu0 0.0
    %2618 = vmatpush1.xpose.msra.mxu0 0.0
    %2619 = vmatprep.subr.mxu0 0.0
    %2620 = vmatpush1.xpose.msra.mxu0 0.0
    %2621 = vmatprep.subr.mxu0 0.0
    %2622 = vmatpush1.xpose.msra.mxu0 0.0
    %2623 = vmatprep.subr.mxu0 0.0
    %2624 = vmatpush1.xpose.msra.mxu0 0.0
    %2625 = vmatprep.subr.mxu0 0.0
    %2626 = vmatpush1.xpose.msra.mxu0 0.0
    %2627 = vmatprep.subr.mxu0 0.0
    %2628 = vmatpush1.xpose.msra.mxu0 0.0
    %2629 = vmatprep.subr.mxu0 0.0
    %2630 = vmatpush1.xpose.msra.mxu0 0.0
    %2631 = vmatprep.mubr.f32.mxu0 0.0
    %2632 = vmatmul.mubr.f32.gmra.mrb[0].mxu0 %v2562
    %v2633 = vpop.f32.mrb[0].mxu0
    %v2634 = vadd.f32 0.0, %v2633
    %v2635 = vpop.f32.mrb[0].mxu0
    %2636 = vdwg.mxu0
    %v2637 = vsel %vm1160, %v2634, -inf
    %2638 = vmax.xlane.f32.xlu0 %v2637
    %v2639 = vpop.xlane.xlu0 %2638
    %v2640 = vsub.f32 %v2634, %v2639
    %v2641 = vmul.f32 %v2640, 1.442695
    %v2642 = vpow.pop %v2641
    %v2643 = vsel %vm1160, %v2642, 0.0
    %2644 = vadd.xlane.f32.xlu0 %v2643
    %v2645 = vpop.xlane.xlu0 %2644
    %v2646 = vrcp.pop %v2645
    %v2647 = vmul.f32 %v2642, %v2646
    %v2649 = vsel %vm1160, %v2647, 0
    %2651 = vmatprep.subr.mxu0 0.0
    %2652 = vmatpush1.msra.mxu0 %v912
    %2653 = vmatprep.subr.mxu0 0.0
    %2654 = vmatpush1.msra.mxu0 0.0
    %2655 = vmatprep.subr.mxu0 0.0
    %2656 = vmatpush1.msra.mxu0 0.0
    %2657 = vmatprep.subr.mxu0 0.0
    %2658 = vmatpush1.msra.mxu0 0.0
    %2659 = vmatprep.subr.mxu0 0.0
    %2660 = vmatpush1.msra.mxu0 0.0
    %2661 = vmatprep.subr.mxu0 0.0
    %2662 = vmatpush1.msra.mxu0 0.0
    %2663 = vmatprep.subr.mxu0 0.0
    %2664 = vmatpush1.msra.mxu0 0.0
    %2665 = vmatprep.subr.mxu0 0.0
    %2666 = vmatpush1.msra.mxu0 0.0
    %2667 = vmatprep.subr.mxu0 0.0
    %2668 = vmatpush1.msra.mxu0 0.0
    %2669 = vmatprep.subr.mxu0 0.0
    %2670 = vmatpush1.msra.mxu0 0.0
    %2671 = vmatprep.subr.mxu0 0.0
    %2672 = vmatpush1.msra.mxu0 0.0
    %2673 = vmatprep.subr.mxu0 0.0
    %2674 = vmatpush1.msra.mxu0 0.0
    %2675 = vmatprep.subr.mxu0 0.0
    %2676 = vmatpush1.msra.mxu0 0.0
    %2677 = vmatprep.subr.mxu0 0.0
    %2678 = vmatpush1.msra.mxu0 0.0
    %2679 = vmatprep.subr.mxu0 0.0
    %2680 = vmatpush1.msra.mxu0 0.0
    %2681 = vmatprep.subr.mxu0 0.0
    %2682 = vmatpush1.msra.mxu0 0.0
    %2683 = vmatprep.subr.mxu0 0.0
    %2684 = vmatpush1.msra.mxu0 0.0
    %2685 = vmatprep.subr.mxu0 0.0
    %2686 = vmatpush1.msra.mxu0 0.0
    %2687 = vmatprep.subr.mxu0 0.0
    %2688 = vmatpush1.msra.mxu0 0.0
    %2689 = vmatprep.subr.mxu0 0.0
    %2690 = vmatpush1.msra.mxu0 0.0
    %2691 = vmatprep.subr.mxu0 0.0
    %2692 = vmatpush1.msra.mxu0 0.0
    %2693 = vmatprep.subr.mxu0 0.0
    %2694 = vmatpush1.msra.mxu0 0.0
    %2695 = vmatprep.subr.mxu0 0.0
    %2696 = vmatpush1.msra.mxu0 0.0
    %2697 = vmatprep.subr.mxu0 0.0
    %2698 = vmatpush1.msra.mxu0 0.0
    %2699 = vmatprep.subr.mxu0 0.0
    %2700 = vmatpush1.msra.mxu0 0.0
    %2701 = vmatprep.subr.mxu0 0.0
    %2702 = vmatpush1.msra.mxu0 0.0
    %2703 = vmatprep.subr.mxu0 0.0
    %2704 = vmatpush1.msra.mxu0 0.0
    %2705 = vmatprep.subr.mxu0 0.0
    %2706 = vmatpush1.msra.mxu0 0.0
    %2707 = vmatprep.subr.mxu0 0.0
    %2708 = vmatpush1.msra.mxu0 0.0
    %2709 = vmatprep.subr.mxu0 0.0
    %2710 = vmatpush1.msra.mxu0 0.0
    %2711 = vmatprep.subr.mxu0 0.0
    %2712 = vmatpush1.msra.mxu0 0.0
    %2713 = vmatprep.subr.mxu0 0.0
    %2714 = vmatpush1.msra.mxu0 0.0
    %2715 = vmatprep.mubr.f32.mxu0 0.0
    %2716 = vmatmul.mubr.f32.gmra.mrb[0].mxu0 %v2649
    %v2717 = vpop.f32.mrb[0].mxu0
    %v2718 = vadd.f32 0.0, %v2717
    %v2719 = vpop.f32.mrb[0].mxu0
    %2720 = vdwg.mxu0
    %v2722 = vsel %vm1160, %v2718, 0
    %2724 = vmatprep.subr.mxu0 0.0
    %2725 = vmatpush1.msra.mxu0 %v166
    %2726 = vmatprep.subr.mxu0 0.0
    %2727 = vmatpush1.msra.mxu0 0.0
    %2728 = vmatprep.subr.mxu0 0.0
    %2729 = vmatpush1.msra.mxu0 0.0
    %2730 = vmatprep.subr.mxu0 0.0
    %2731 = vmatpush1.msra.mxu0 0.0
    %2732 = vmatprep.subr.mxu0 0.0
    %2733 = vmatpush1.msra.mxu0 0.0
    %2734 = vmatprep.subr.mxu0 0.0
    %2735 = vmatpush1.msra.mxu0 0.0
    %2736 = vmatprep.subr.mxu0 0.0
    %2737 = vmatpush1.msra.mxu0 0.0
    %2738 = vmatprep.subr.mxu0 0.0
    %2739 = vmatpush1.msra.mxu0 0.0
    %2740 = vmatprep.subr.mxu0 0.0
    %2741 = vmatpush1.msra.mxu0 0.0
    %2742 = vmatprep.subr.mxu0 0.0
    %2743 = vmatpush1.msra.mxu0 0.0
    %2744 = vmatprep.subr.mxu0 0.0
    %2745 = vmatpush1.msra.mxu0 0.0
    %2746 = vmatprep.subr.mxu0 0.0
    %2747 = vmatpush1.msra.mxu0 0.0
    %2748 = vmatprep.subr.mxu0 0.0
    %2749 = vmatpush1.msra.mxu0 0.0
    %2750 = vmatprep.subr.mxu0 0.0
    %2751 = vmatpush1.msra.mxu0 0.0
    %2752 = vmatprep.subr.mxu0 0.0
    %2753 = vmatpush1.msra.mxu0 0.0
    %2754 = vmatprep.subr.mxu0 0.0
    %2755 = vmatpush1.msra.mxu0 0.0
    %2756 = vmatprep.subr.mxu0 0.0
    %2757 = vmatpush1.msra.mxu0 0.0
    %2758 = vmatprep.subr.mxu0 0.0
    %2759 = vmatpush1.msra.mxu0 0.0
    %2760 = vmatprep.subr.mxu0 0.0
    %2761 = vmatpush1.msra.mxu0 0.0
    %2762 = vmatprep.subr.mxu0 0.0
    %2763 = vmatpush1.msra.mxu0 0.0
    %2764 = vmatprep.subr.mxu0 0.0
    %2765 = vmatpush1.msra.mxu0 0.0
    %2766 = vmatprep.subr.mxu0 0.0
    %2767 = vmatpush1.msra.mxu0 0.0
    %2768 = vmatprep.subr.mxu0 0.0
    %2769 = vmatpush1.msra.mxu0 0.0
    %2770 = vmatprep.subr.mxu0 0.0
    %2771 = vmatpush1.msra.mxu0 0.0
    %2772 = vmatprep.subr.mxu0 0.0
    %2773 = vmatpush1.msra.mxu0 0.0
    %2774 = vmatprep.subr.mxu0 0.0
    %2775 = vmatpush1.msra.mxu0 0.0
    %2776 = vmatprep.subr.mxu0 0.0
    %2777 = vmatpush1.msra.mxu0 0.0
    %2778 = vmatprep.subr.mxu0 0.0
    %2779 = vmatpush1.msra.mxu0 0.0
    %2780 = vmatprep.subr.mxu0 0.0
    %2781 = vmatpush1.msra.mxu0 0.0
    %2782 = vmatprep.subr.mxu0 0.0
    %2783 = vmatpush1.msra.mxu0 0.0
    %2784 = vmatprep.subr.mxu0 0.0
    %2785 = vmatpush1.msra.mxu0 0.0
    %2786 = vmatprep.subr.mxu0 0.0
    %2787 = vmatpush1.msra.mxu0 0.0
    %2788 = vmatprep.mubr.f32.mxu0 0.0
    %2789 = vmatmul.mubr.f32.gmra.mrb[0].mxu0 %v2722
    %v2790 = vpop.f32.mrb[0].mxu0
    %v2791 = vadd.f32 0.0, %v2790
    %v2792 = vpop.f32.mrb[0].mxu0
    %2793 = vdwg.mxu0
    %v2794 = vadd.f32 %v2558, %v2791
    %v2796 = vsel %vm1160, %v997, 0
    %v2799 = vsel %vm1160, %v1076, 0
    %2801 = vmatprep.subr.mxu0 0.0
    %2802 = vmatpush1.xpose.msra.mxu0 %v2799
    %2803 = vmatprep.subr.mxu0 0.0
    %2804 = vmatpush1.xpose.msra.mxu0 0.0
    %2805 = vmatprep.subr.mxu0 0.0
    %2806 = vmatpush1.xpose.msra.mxu0 0.0
    %2807 = vmatprep.subr.mxu0 0.0
    %2808 = vmatpush1.xpose.msra.mxu0 0.0
    %2809 = vmatprep.subr.mxu0 0.0
    %2810 = vmatpush1.xpose.msra.mxu0 0.0
    %2811 = vmatprep.subr.mxu0 0.0
    %2812 = vmatpush1.xpose.msra.mxu0 0.0
    %2813 = vmatprep.subr.mxu0 0.0
    %2814 = vmatpush1.xpose.msra.mxu0 0.0
    %2815 = vmatprep.subr.mxu0 0.0
    %2816 = vmatpush1.xpose.msra.mxu0 0.0
    %2817 = vmatprep.subr.mxu0 0.0
    %2818 = vmatpush1.xpose.msra.mxu0 0.0
    %2819 = vmatprep.subr.mxu0 0.0
    %2820 = vmatpush1.xpose.msra.mxu0 0.0
    %2821 = vmatprep.subr.mxu0 0.0
    %2822 = vmatpush1.xpose.msra.mxu0 0.0
    %2823 = vmatprep.subr.mxu0 0.0
    %2824 = vmatpush1.xpose.msra.mxu0 0.0
    %2825 = vmatprep.subr.mxu0 0.0
    %2826 = vmatpush1.xpose.msra.mxu0 0.0
    %2827 = vmatprep.subr.mxu0 0.0
    %2828 = vmatpush1.xpose.msra.mxu0 0.0
    %2829 = vmatprep.subr.mxu0 0.0
    %2830 = vmatpush1.xpose.msra.mxu0 0.0
    %2831 = vmatprep.subr.mxu0 0.0
    %2832 = vmatpush1.xpose.msra.mxu0 0.0
    %2833 = vmatprep.subr.mxu0 0.0
    %2834 = vmatpush1.xpose.msra.mxu0 0.0
    %2835 = vmatprep.subr.mxu0 0.0
    %2836 = vmatpush1.xpose.msra.mxu0 0.0
    %2837 = vmatprep.subr.mxu0 0.0
    %2838 = vmatpush1.xpose.msra.mxu0 0.0
    %2839 = vmatprep.subr.mxu0 0.0
    %2840 = vmatpush1.xpose.msra.mxu0 0.0
    %2841 = vmatprep.subr.mxu0 0.0
    %2842 = vmatpush1.xpose.msra.mxu0 0.0
    %2843 = vmatprep.subr.mxu0 0.0
    %2844 = vmatpush1.xpose.msra.mxu0 0.0
    %2845 = vmatprep.subr.mxu0 0.0
    %2846 = vmatpush1.xpose.msra.mxu0 0.0
    %2847 = vmatprep.subr.mxu0 0.0
    %2848 = vmatpush1.xpose.msra.mxu0 0.0
    %2849 = vmatprep.subr.mxu0 0.0
    %2850 = vmatpush1.xpose.msra.mxu0 0.0
    %2851 = vmatprep.subr.mxu0 0.0
    %2852 = vmatpush1.xpose.msra.mxu0 0.0
    %2853 = vmatprep.subr.mxu0 0.0
    %2854 = vmatpush1.xpose.msra.mxu0 0.0
    %2855 = vmatprep.subr.mxu0 0.0
    %2856 = vmatpush1.xpose.msra.mxu0 0.0
    %2857 = vmatprep.subr.mxu0 0.0
    %2858 = vmatpush1.xpose.msra.mxu0 0.0
    %2859 = vmatprep.subr.mxu0 0.0
    %2860 = vmatpush1.xpose.msra.mxu0 0.0
    %2861 = vmatprep.subr.mxu0 0.0
    %2862 = vmatpush1.xpose.msra.mxu0 0.0
    %2863 = vmatprep.subr.mxu0 0.0
    %2864 = vmatpush1.xpose.msra.mxu0 0.0
    %2865 = vmatprep.mubr.f32.mxu0 0.0
    %2866 = vmatmul.mubr.f32.gmra.mrb[0].mxu0 %v2796
    %v2867 = vpop.f32.mrb[0].mxu0
    %v2868 = vadd.f32 0.0, %v2867
    %v2869 = vpop.f32.mrb[0].mxu0
    %2870 = vdwg.mxu0
    %v2871 = vsel %vm1160, %v2868, -inf
    %2872 = vmax.xlane.f32.xlu0 %v2871
    %v2873 = vpop.xlane.xlu0 %2872
    %v2874 = vsub.f32 %v2868, %v2873
    %v2875 = vmul.f32 %v2874, 1.442695
    %v2876 = vpow.pop %v2875
    %v2877 = vsel %vm1160, %v2876, 0.0
    %2878 = vadd.xlane.f32.xlu0 %v2877
    %v2879 = vpop.xlane.xlu0 %2878
    %v2880 = vrcp.pop %v2879
    %v2881 = vmul.f32 %v2876, %v2880
    %v2883 = vsel %vm1160, %v2881, 0
    %2885 = vmatprep.subr.mxu0 0.0
    %2886 = vmatpush1.msra.mxu0 %v1157
    %2887 = vmatprep.subr.mxu0 0.0
    %2888 = vmatpush1.msra.mxu0 0.0
    %2889 = vmatprep.subr.mxu0 0.0
    %2890 = vmatpush1.msra.mxu0 0.0
    %2891 = vmatprep.subr.mxu0 0.0
    %2892 = vmatpush1.msra.mxu0 0.0
    %2893 = vmatprep.subr.mxu0 0.0
    %2894 = vmatpush1.msra.mxu0 0.0
    %2895 = vmatprep.subr.mxu0 0.0
    %2896 = vmatpush1.msra.mxu0 0.0
    %2897 = vmatprep.subr.mxu0 0.0
    %2898 = vmatpush1.msra.mxu0 0.0
    %2899 = vmatprep.subr.mxu0 0.0
    %2900 = vmatpush1.msra.mxu0 0.0
    %2901 = vmatprep.subr.mxu0 0.0
    %2902 = vmatpush1.msra.mxu0 0.0
    %2903 = vmatprep.subr.mxu0 0.0
    %2904 = vmatpush1.msra.mxu0 0.0
    %2905 = vmatprep.subr.mxu0 0.0
    %2906 = vmatpush1.msra.mxu0 0.0
    %2907 = vmatprep.subr.mxu0 0.0
    %2908 = vmatpush1.msra.mxu0 0.0
    %2909 = vmatprep.subr.mxu0 0.0
    %2910 = vmatpush1.msra.mxu0 0.0
    %2911 = vmatprep.subr.mxu0 0.0
    %2912 = vmatpush1.msra.mxu0 0.0
    %2913 = vmatprep.subr.mxu0 0.0
    %2914 = vmatpush1.msra.mxu0 0.0
    %2915 = vmatprep.subr.mxu0 0.0
    %2916 = vmatpush1.msra.mxu0 0.0
    %2917 = vmatprep.subr.mxu0 0.0
    %2918 = vmatpush1.msra.mxu0 0.0
    %2919 = vmatprep.subr.mxu0 0.0
    %2920 = vmatpush1.msra.mxu0 0.0
    %2921 = vmatprep.subr.mxu0 0.0
    %2922 = vmatpush1.msra.mxu0 0.0
    %2923 = vmatprep.subr.mxu0 0.0
    %2924 = vmatpush1.msra.mxu0 0.0
    %2925 = vmatprep.subr.mxu0 0.0
    %2926 = vmatpush1.msra.mxu0 0.0
    %2927 = vmatprep.subr.mxu0 0.0
    %2928 = vmatpush1.msra.mxu0 0.0
    %2929 = vmatprep.subr.mxu0 0.0
    %2930 = vmatpush1.msra.mxu0 0.0
    %2931 = vmatprep.subr.mxu0 0.0
    %2932 = vmatpush1.msra.mxu0 0.0
    %2933 = vmatprep.subr.mxu0 0.0
    %2934 = vmatpush1.msra.mxu0 0.0
    %2935 = vmatprep.subr.mxu0 0.0
    %2936 = vmatpush1.msra.mxu0 0.0
    %2937 = vmatprep.subr.mxu0 0.0
    %2938 = vmatpush1.msra.mxu0 0.0
    %2939 = vmatprep.subr.mxu0 0.0
    %2940 = vmatpush1.msra.mxu0 0.0
    %2941 = vmatprep.subr.mxu0 0.0
    %2942 = vmatpush1.msra.mxu0 0.0
    %2943 = vmatprep.subr.mxu0 0.0
    %2944 = vmatpush1.msra.mxu0 0.0
    %2945 = vmatprep.subr.mxu0 0.0
    %2946 = vmatpush1.msra.mxu0 0.0
    %2947 = vmatprep.subr.mxu0 0.0
    %2948 = vmatpush1.msra.mxu0 0.0
    %2949 = vmatprep.mubr.f32.mxu0 0.0
    %2950 = vmatmul.mubr.f32.gmra.mrb[0].mxu0 %v2883
    %v2951 = vpop.f32.mrb[0].mxu0
    %v2952 = vadd.f32 0.0, %v2951
    %v2953 = vpop.f32.mrb[0].mxu0
    %2954 = vdwg.mxu0
    %v2956 = vsel %vm1160, %v2952, 0
    %2958 = vmatprep.subr.mxu0 0.0
    %2959 = vmatpush1.msra.mxu0 %v167
    %2960 = vmatprep.subr.mxu0 0.0
    %2961 = vmatpush1.msra.mxu0 0.0
    %2962 = vmatprep.subr.mxu0 0.0
    %2963 = vmatpush1.msra.mxu0 0.0
    %2964 = vmatprep.subr.mxu0 0.0
    %2965 = vmatpush1.msra.mxu0 0.0
    %2966 = vmatprep.subr.mxu0 0.0
    %2967 = vmatpush1.msra.mxu0 0.0
    %2968 = vmatprep.subr.mxu0 0.0
    %2969 = vmatpush1.msra.mxu0 0.0
    %2970 = vmatprep.subr.mxu0 0.0
    %2971 = vmatpush1.msra.mxu0 0.0
    %2972 = vmatprep.subr.mxu0 0.0
    %2973 = vmatpush1.msra.mxu0 0.0
    %2974 = vmatprep.subr.mxu0 0.0
    %2975 = vmatpush1.msra.mxu0 0.0
    %2976 = vmatprep.subr.mxu0 0.0
    %2977 = vmatpush1.msra.mxu0 0.0
    %2978 = vmatprep.subr.mxu0 0.0
    %2979 = vmatpush1.msra.mxu0 0.0
    %2980 = vmatprep.subr.mxu0 0.0
    %2981 = vmatpush1.msra.mxu0 0.0
    %2982 = vmatprep.subr.mxu0 0.0
    %2983 = vmatpush1.msra.mxu0 0.0
    %2984 = vmatprep.subr.mxu0 0.0
    %2985 = vmatpush1.msra.mxu0 0.0
    %2986 = vmatprep.subr.mxu0 0.0
    %2987 = vmatpush1.msra.mxu0 0.0
    %2988 = vmatprep.subr.mxu0 0.0
    %2989 = vmatpush1.msra.mxu0 0.0
    %2990 = vmatprep.subr.mxu0 0.0
    %2991 = vmatpush1.msra.mxu0 0.0
    %2992 = vmatprep.subr.mxu0 0.0
    %2993 = vmatpush1.msra.mxu0 0.0
    %2994 = vmatprep.subr.mxu0 0.0
    %2995 = vmatpush1.msra.mxu0 0.0
    %2996 = vmatprep.subr.mxu0 0.0
    %2997 = vmatpush1.msra.mxu0 0.0
    %2998 = vmatprep.subr.mxu0 0.0
    %2999 = vmatpush1.msra.mxu0 0.0
    %3000 = vmatprep.subr.mxu0 0.0
    %3001 = vmatpush1.msra.mxu0 0.0
    %3002 = vmatprep.subr.mxu0 0.0
    %3003 = vmatpush1.msra.mxu0 0.0
    %3004 = vmatprep.subr.mxu0 0.0
    %3005 = vmatpush1.msra.mxu0 0.0
    %3006 = vmatprep.subr.mxu0 0.0
    %3007 = vmatpush1.msra.mxu0 0.0
    %3008 = vmatprep.subr.mxu0 0.0
    %3009 = vmatpush1.msra.mxu0 0.0
    %3010 = vmatprep.subr.mxu0 0.0
    %3011 = vmatpush1.msra.mxu0 0.0
    %3012 = vmatprep.subr.mxu0 0.0
    %3013 = vmatpush1.msra.mxu0 0.0
    %3014 = vmatprep.subr.mxu0 0.0
    %3015 = vmatpush1.msra.mxu0 0.0
    %3016 = vmatprep.subr.mxu0 0.0
    %3017 = vmatpush1.msra.mxu0 0.0
    %3018 = vmatprep.subr.mxu0 0.0
    %3019 = vmatpush1.msra.mxu0 0.0
    %3020 = vmatprep.subr.mxu0 0.0
    %3021 = vmatpush1.msra.mxu0 0.0
    %3022 = vmatprep.mubr.f32.mxu0 0.0
    %3023 = vmatmul.mubr.f32.gmra.mrb[0].mxu0 %v2956
    %v3024 = vpop.f32.mrb[0].mxu0
    %v3025 = vadd.f32 0.0, %v3024
    %v3026 = vpop.f32.mrb[0].mxu0
    %3027 = vdwg.mxu0
    %v3028 = vadd.f32 %v2794, %v3025
    %v3029 = vlaneseq
    %v3030 = vshrl.u32 %v3029, 7
    %v3031 = vsub.s32 0, %v3030
    %v3032 = vrot.slane %v60, %v3031
    %v3033 = vadd.f32 %v2094, %v3032
    %v3034 = vadd.f32 %v3028, %v3032
    %v3035 = vadd.f32 %v48, %v3033
    %v3036 = vadd.f32 %v49, %v3034
    %v3037 = vsel %vm62, %v3035, 0.0
    %3038 = vadd.xlane.f32.xlu0 %v3037
    %v3039 = vpop.xlane.xlu0 %3038
    %v3040 = vsel %vm62, %v3036, 0.0
    %3041 = vadd.xlane.f32.xlu0 %v3040
    %v3042 = vpop.xlane.xlu0 %3041
    %v3043 = vmul.f32 %v3039, %v69
    %v3044 = vmul.f32 %v3042, %v69
    %v3045 = vsub.f32 %v3035, %v3043
    %v3046 = vsub.f32 %v3036, %v3044
    %v3047 = vmul.f32 %v3045, %v3045
    %v3048 = vmul.f32 %v3046, %v3046
    %v3049 = vsel %vm62, %v3047, 0.0
    %3050 = vadd.xlane.f32.xlu0 %v3049
    %v3051 = vpop.xlane.xlu0 %3050
    %v3052 = vsel %vm62, %v3048, 0.0
    %3053 = vadd.xlane.f32.xlu0 %v3052
    %v3054 = vpop.xlane.xlu0 %3053
    %v3055 = vmul.f32 %v3051, %v69
    %v3056 = vmul.f32 %v3054, %v69
    %v3057 = vadd.f32 %v3055, 1e-05
    %v3058 = vadd.f32 %v3056, 1e-05
    %v3059 = vrsqrt.pop %v3057
    %v3060 = vrsqrt.pop %v3058
    %v3061 = vmul.f32 %v3045, %v3059
    %v3062 = vmul.f32 %v3046, %v3060
    %v3063 = vlaneseq
    %v3064 = vshrl.u32 %v3063, 7
    %v3065 = vsub.s32 5, %v3064
    %v3066 = vrot.slane %v60, %v3065
    %v3067 = vmul.f32 %v3061, %v3066
    %v3068 = vmul.f32 %v3062, %v3066
    %v3069 = vlaneseq
    %v3070 = vshrl.u32 %v3069, 7
    %v3071 = vsub.s32 6, %v3070
    %v3072 = vrot.slane %v60, %v3071
    %v3073 = vadd.f32 %v3067, %v3072
    %v3074 = vadd.f32 %v3068, %v3072
    %v3075 = vadd.f32 %v3073, %v54
    %v3076 = vadd.f32 %v3074, %v55
    %v3077 = vadd.f32 %v50, %v56
    %v3078 = vadd.f32 %v51, %v57
    %v3079 = vadd.f32 %v52, %v58
    %v3080 = vadd.f32 %v53, %v59
    %v3081 = vld [vmem:[%s7] sm:$0xff]
    %v3082 = vld [vmem:[%s7 + $0x8] sm:$0xff]
    %v3083 = vld [vmem:[%s7 + $0x10] sm:$0xff]
    %v3084 = vld [vmem:[%s7 + $0x18] sm:$0xff]
    %v3085 = vld [vmem:[%s7 + $0x20] sm:$0xff]
    %v3086 = vld [vmem:[%s7 + $0x28] sm:$0xff]
    %v3087 = vld [vmem:[%s7 + $0x30] sm:$0xff]
    %v3088 = vld [vmem:[%s7 + $0x38] sm:$0xff]
    %v3089 = vld [vmem:[%s7 + $0x40] sm:$0xff]
    %v3090 = vld [vmem:[%s7 + $0x48] sm:$0xff]
    %v3091 = vld [vmem:[%s7 + $0x50] sm:$0xff]
    %v3092 = vld [vmem:[%s7 + $0x58] sm:$0xff]
    %v3093 = vld [vmem:[%s7 + $0x60] sm:$0xff]
    %v3094 = vld [vmem:[%s7 + $0x68] sm:$0xff]
    %v3095 = vld [vmem:[%s7 + $0x70] sm:$0xff]
    %v3096 = vld [vmem:[%s7 + $0x78] sm:$0xff]
    %v3097 = vld [vmem:[%s7 + $0x80] sm:$0xff]
    %v3098 = vld [vmem:[%s7 + $0x88] sm:$0xff]
    %v3099 = vld [vmem:[%s7 + $0x90] sm:$0xff]
    %v3100 = vld [vmem:[%s7 + $0x98] sm:$0xff]
    %v3101 = vld [vmem:[%s7 + $0xa0] sm:$0xff]
    %v3102 = vld [vmem:[%s7 + $0xa8] sm:$0xff]
    %v3103 = vld [vmem:[%s7 + $0xb0] sm:$0xff]
    %v3104 = vld [vmem:[%s7 + $0xb8] sm:$0xff]
    %v3105 = vld [vmem:[%s7 + $0xc0] sm:$0xff]
    %v3106 = vld [vmem:[%s7 + $0xc8] sm:$0xff]
    %v3107 = vld [vmem:[%s7 + $0xd0] sm:$0xff]
    %v3108 = vld [vmem:[%s7 + $0xd8] sm:$0xff]
    %v3109 = vld [vmem:[%s7 + $0xe0] sm:$0xff]
    %v3110 = vld [vmem:[%s7 + $0xe8] sm:$0xff]
    %v3111 = vld [vmem:[%s7 + $0xf0] sm:$0xff]
    %v3112 = vld [vmem:[%s7 + $0xf8] sm:$0xff]
    %v3113 = vld [vmem:[%s7 + $0x100] sm:$0xff]
    %v3114 = vld [vmem:[%s7 + $0x108] sm:$0xff]
    %v3115 = vld [vmem:[%s7 + $0x110] sm:$0xff]
    %v3116 = vld [vmem:[%s7 + $0x118] sm:$0xff]
    %v3117 = vld [vmem:[%s7 + $0x120] sm:$0xff]
    %v3118 = vld [vmem:[%s7 + $0x128] sm:$0xff]
    %v3119 = vld [vmem:[%s7 + $0x130] sm:$0xff]
    %v3120 = vld [vmem:[%s7 + $0x138] sm:$0xff]
    %v3121 = vld [vmem:[%s7 + $0x140] sm:$0xff]
    %v3122 = vld [vmem:[%s7 + $0x148] sm:$0xff]
    %v3123 = vld [vmem:[%s7 + $0x150] sm:$0xff]
    %v3124 = vld [vmem:[%s7 + $0x158] sm:$0xff]
    %v3125 = vld [vmem:[%s7 + $0x160] sm:$0xff]
    %v3126 = vld [vmem:[%s7 + $0x168] sm:$0xff]
    %v3127 = vld [vmem:[%s7 + $0x170] sm:$0xff]
    %v3128 = vld [vmem:[%s7 + $0x178] sm:$0xff]
    %v3129 = vld [vmem:[%s8] sm:$0x1]
    %v3130 = vld [vmem:[%s8 + $0x1] sm:$0x1]
    %v3131 = vld [vmem:[%s8 + $0x2] sm:$0x1]
    %v3132 = vld [vmem:[%s8 + $0x3] sm:$0x1]
    %v3133 = vld [vmem:[%s8 + $0x4] sm:$0x1]
    %v3134 = vld [vmem:[%s8 + $0x5] sm:$0x1]
    %v3135 = vld [vmem:[%s8 + $0x6] sm:$0x1]
    %v3136 = vld [vmem:[%s8 + $0x7] sm:$0x1]
    %v3137 = vld [vmem:[%s8 + $0x8] sm:$0x1]
    %v3138 = vld [vmem:[%s8 + $0x9] sm:$0x1]
    %v3139 = vld [vmem:[%s8 + $0xa] sm:$0x1]
    %v3140 = vld [vmem:[%s8 + $0xb] sm:$0x1]
    %v3141 = vld [vmem:[%s9] sm:$0xff]
    %v3142 = vld [vmem:[%s9 + $0x8] sm:$0xff]
    %v3143 = vld [vmem:[%s9 + $0x10] sm:$0xff]
    %v3144 = vld [vmem:[%s9 + $0x18] sm:$0xff]
    %v3146 = vlaneseq
    %v3147 = vshrl.u32 %v3146, 7
    %v3148 = vsub.s32 0, %v3147
    %v3149 = vrot.slane %v3129, %v3148
    %v3152 = vsel %vm62, %v3075, 0
    %v3155 = vsel %vm62, %v3076, 0
    %3157 = vmatprep.subr.mxu0 0.0
    %3158 = vmatpush1.msra.mxu0 %v3081
    %3159 = vmatprep.subr.mxu0 0.0
    %3160 = vmatpush1.msra.mxu0 %v3082
    %3161 = vmatprep.subr.mxu0 0.0
    %3162 = vmatpush1.msra.mxu0 %v3083
    %3163 = vmatprep.subr.mxu0 0.0
    %3164 = vmatpush1.msra.mxu0 %v3084
    %3165 = vmatprep.subr.mxu0 0.0
    %3166 = vmatpush1.msra.mxu0 0.0
    %3167 = vmatprep.subr.mxu0 0.0
    %3168 = vmatpush1.msra.mxu0 0.0
    %3169 = vmatprep.subr.mxu0 0.0
    %3170 = vmatpush1.msra.mxu0 0.0
    %3171 = vmatprep.subr.mxu0 0.0
    %3172 = vmatpush1.msra.mxu0 0.0
    %3173 = vmatprep.subr.mxu0 0.0
    %3174 = vmatpush1.msra.mxu0 0.0
    %3175 = vmatprep.subr.mxu0 0.0
    %3176 = vmatpush1.msra.mxu0 0.0
    %3177 = vmatprep.subr.mxu0 0.0
    %3178 = vmatpush1.msra.mxu0 0.0
    %3179 = vmatprep.subr.mxu0 0.0
    %3180 = vmatpush1.msra.mxu0 0.0
    %3181 = vmatprep.subr.mxu0 0.0
    %3182 = vmatpush1.msra.mxu0 0.0
    %3183 = vmatprep.subr.mxu0 0.0
    %3184 = vmatpush1.msra.mxu0 0.0
    %3185 = vmatprep.subr.mxu0 0.0
    %3186 = vmatpush1.msra.mxu0 0.0
    %3187 = vmatprep.subr.mxu0 0.0
    %3188 = vmatpush1.msra.mxu0 0.0
    %3189 = vmatprep.subr.mxu0 0.0
    %3190 = vmatpush1.msra.mxu0 0.0
    %3191 = vmatprep.subr.mxu0 0.0
    %3192 = vmatpush1.msra.mxu0 0.0
    %3193 = vmatprep.subr.mxu0 0.0
    %3194 = vmatpush1.msra.mxu0 0.0
    %3195 = vmatprep.subr.mxu0 0.0
    %3196 = vmatpush1.msra.mxu0 0.0
    %3197 = vmatprep.subr.mxu0 0.0
    %3198 = vmatpush1.msra.mxu0 0.0
    %3199 = vmatprep.subr.mxu0 0.0
    %3200 = vmatpush1.msra.mxu0 0.0
    %3201 = vmatprep.subr.mxu0 0.0
    %3202 = vmatpush1.msra.mxu0 0.0
    %3203 = vmatprep.subr.mxu0 0.0
    %3204 = vmatpush1.msra.mxu0 0.0
    %3205 = vmatprep.subr.mxu0 0.0
    %3206 = vmatpush1.msra.mxu0 0.0
    %3207 = vmatprep.subr.mxu0 0.0
    %3208 = vmatpush1.msra.mxu0 0.0
    %3209 = vmatprep.subr.mxu0 0.0
    %3210 = vmatpush1.msra.mxu0 0.0
    %3211 = vmatprep.subr.mxu0 0.0
    %3212 = vmatpush1.msra.mxu0 0.0
    %3213 = vmatprep.subr.mxu0 0.0
    %3214 = vmatpush1.msra.mxu0 0.0
    %3215 = vmatprep.subr.mxu0 0.0
    %3216 = vmatpush1.msra.mxu0 0.0
    %3217 = vmatprep.subr.mxu0 0.0
    %3218 = vmatpush1.msra.mxu0 0.0
    %3219 = vmatprep.subr.mxu0 0.0
    %3220 = vmatpush1.msra.mxu0 0.0
    %3221 = vmatprep.mubr.f32.mxu0 0.0
    %3222 = vmatmul.mubr.f32.gmra.mrb[0].mxu0 %v3152
    %v3223 = vpop.f32.mrb[0].mxu0
    %v3224 = vadd.f32 %v3149, %v3223
    %v3225 = vpop.f32.mrb[0].mxu0
    %3226 = vmatprep.mubr.f32.mxu0 0.0
    %3227 = vmatmul.mubr.f32.gmra.mrb[0].mxu0 %v3155
    %v3228 = vpop.f32.mrb[0].mxu0
    %v3229 = vadd.f32 %v3149, %v3228
    %v3230 = vpop.f32.mrb[0].mxu0
    %3231 = vdwg.mxu0
    %v3232 = vmul.f32 %v3224, 0.35355338
    %v3233 = vmul.f32 %v3229, 0.35355338
    %v3235 = vlaneseq
    %v3236 = vshrl.u32 %v3235, 7
    %v3237 = vsub.s32 0, %v3236
    %v3238 = vrot.slane %v3133, %v3237
    %v3241 = vsel %vm62, %v3077, 0
    %v3244 = vsel %vm62, %v3078, 0
    %v3247 = vsel %vm62, %v3079, 0
    %v3250 = vsel %vm62, %v3080, 0
    %3252 = vmatprep.subr.mxu0 0.0
    %3253 = vmatpush1.msra.mxu0 %v3097
    %3254 = vmatprep.subr.mxu0 0.0
    %3255 = vmatpush1.msra.mxu0 %v3098
    %3256 = vmatprep.subr.mxu0 0.0
    %3257 = vmatpush1.msra.mxu0 %v3099
    %3258 = vmatprep.subr.mxu0 0.0
    %3259 = vmatpush1.msra.mxu0 %v3100
    %3260 = vmatprep.subr.mxu0 0.0
    %3261 = vmatpush1.msra.mxu0 0.0
    %3262 = vmatprep.subr.mxu0 0.0
    %3263 = vmatpush1.msra.mxu0 0.0
    %3264 = vmatprep.subr.mxu0 0.0
    %3265 = vmatpush1.msra.mxu0 0.0
    %3266 = vmatprep.subr.mxu0 0.0
    %3267 = vmatpush1.msra.mxu0 0.0
    %3268 = vmatprep.subr.mxu0 0.0
    %3269 = vmatpush1.msra.mxu0 0.0
    %3270 = vmatprep.subr.mxu0 0.0
    %3271 = vmatpush1.msra.mxu0 0.0
    %3272 = vmatprep.subr.mxu0 0.0
    %3273 = vmatpush1.msra.mxu0 0.0
    %3274 = vmatprep.subr.mxu0 0.0
    %3275 = vmatpush1.msra.mxu0 0.0
    %3276 = vmatprep.subr.mxu0 0.0
    %3277 = vmatpush1.msra.mxu0 0.0
    %3278 = vmatprep.subr.mxu0 0.0
    %3279 = vmatpush1.msra.mxu0 0.0
    %3280 = vmatprep.subr.mxu0 0.0
    %3281 = vmatpush1.msra.mxu0 0.0
    %3282 = vmatprep.subr.mxu0 0.0
    %3283 = vmatpush1.msra.mxu0 0.0
    %3284 = vmatprep.subr.mxu0 0.0
    %3285 = vmatpush1.msra.mxu0 0.0
    %3286 = vmatprep.subr.mxu0 0.0
    %3287 = vmatpush1.msra.mxu0 0.0
    %3288 = vmatprep.subr.mxu0 0.0
    %3289 = vmatpush1.msra.mxu0 0.0
    %3290 = vmatprep.subr.mxu0 0.0
    %3291 = vmatpush1.msra.mxu0 0.0
    %3292 = vmatprep.subr.mxu0 0.0
    %3293 = vmatpush1.msra.mxu0 0.0
    %3294 = vmatprep.subr.mxu0 0.0
    %3295 = vmatpush1.msra.mxu0 0.0
    %3296 = vmatprep.subr.mxu0 0.0
    %3297 = vmatpush1.msra.mxu0 0.0
    %3298 = vmatprep.subr.mxu0 0.0
    %3299 = vmatpush1.msra.mxu0 0.0
    %3300 = vmatprep.subr.mxu0 0.0
    %3301 = vmatpush1.msra.mxu0 0.0
    %3302 = vmatprep.subr.mxu0 0.0
    %3303 = vmatpush1.msra.mxu0 0.0
    %3304 = vmatprep.subr.mxu0 0.0
    %3305 = vmatpush1.msra.mxu0 0.0
    %3306 = vmatprep.subr.mxu0 0.0
    %3307 = vmatpush1.msra.mxu0 0.0
    %3308 = vmatprep.subr.mxu0 0.0
    %3309 = vmatpush1.msra.mxu0 0.0
    %3310 = vmatprep.subr.mxu0 0.0
    %3311 = vmatpush1.msra.mxu0 0.0
    %3312 = vmatprep.subr.mxu0 0.0
    %3313 = vmatpush1.msra.mxu0 0.0
    %3314 = vmatprep.subr.mxu0 0.0
    %3315 = vmatpush1.msra.mxu0 0.0
    %3316 = vmatprep.mubr.f32.mxu0 0.0
    %3317 = vmatmul.mubr.f32.gmra.mrb[0].mxu0 %v3241
    %v3318 = vpop.f32.mrb[0].mxu0
    %v3319 = vadd.f32 %v3238, %v3318
    %v3320 = vpop.f32.mrb[0].mxu0
    %3321 = vmatprep.mubr.f32.mxu0 0.0
    %3322 = vmatmul.mubr.f32.gmra.mrb[0].mxu0 %v3244
    %v3323 = vpop.f32.mrb[0].mxu0
    %v3324 = vadd.f32 %v3238, %v3323
    %v3325 = vpop.f32.mrb[0].mxu0
    %3326 = vmatprep.mubr.f32.mxu0 0.0
    %3327 = vmatmul.mubr.f32.gmra.mrb[0].mxu0 %v3247
    %v3328 = vpop.f32.mrb[0].mxu0
    %v3329 = vadd.f32 %v3238, %v3328
    %v3330 = vpop.f32.mrb[0].mxu0
    %3331 = vmatprep.mubr.f32.mxu0 0.0
    %3332 = vmatmul.mubr.f32.gmra.mrb[0].mxu0 %v3250
    %v3333 = vpop.f32.mrb[0].mxu0
    %v3334 = vadd.f32 %v3238, %v3333
    %v3335 = vpop.f32.mrb[0].mxu0
    %3336 = vdwg.mxu0
    %v3338 = vlaneseq
    %v3339 = vshrl.u32 %v3338, 7
    %v3340 = vsub.s32 0, %v3339
    %v3341 = vrot.slane %v3137, %v3340
    %v3344 = vsel %vm62, %v50, 0
    %v3347 = vsel %vm62, %v51, 0
    %v3350 = vsel %vm62, %v52, 0
    %v3353 = vsel %vm62, %v53, 0
    %3355 = vmatprep.subr.mxu0 0.0
    %3356 = vmatpush1.msra.mxu0 %v3113
    %3357 = vmatprep.subr.mxu0 0.0
    %3358 = vmatpush1.msra.mxu0 %v3114
    %3359 = vmatprep.subr.mxu0 0.0
    %3360 = vmatpush1.msra.mxu0 %v3115
    %3361 = vmatprep.subr.mxu0 0.0
    %3362 = vmatpush1.msra.mxu0 %v3116
    %3363 = vmatprep.subr.mxu0 0.0
    %3364 = vmatpush1.msra.mxu0 0.0
    %3365 = vmatprep.subr.mxu0 0.0
    %3366 = vmatpush1.msra.mxu0 0.0
    %3367 = vmatprep.subr.mxu0 0.0
    %3368 = vmatpush1.msra.mxu0 0.0
    %3369 = vmatprep.subr.mxu0 0.0
    %3370 = vmatpush1.msra.mxu0 0.0
    %3371 = vmatprep.subr.mxu0 0.0
    %3372 = vmatpush1.msra.mxu0 0.0
    %3373 = vmatprep.subr.mxu0 0.0
    %3374 = vmatpush1.msra.mxu0 0.0
    %3375 = vmatprep.subr.mxu0 0.0
    %3376 = vmatpush1.msra.mxu0 0.0
    %3377 = vmatprep.subr.mxu0 0.0
    %3378 = vmatpush1.msra.mxu0 0.0
    %3379 = vmatprep.subr.mxu0 0.0
    %3380 = vmatpush1.msra.mxu0 0.0
    %3381 = vmatprep.subr.mxu0 0.0
    %3382 = vmatpush1.msra.mxu0 0.0
    %3383 = vmatprep.subr.mxu0 0.0
    %3384 = vmatpush1.msra.mxu0 0.0
    %3385 = vmatprep.subr.mxu0 0.0
    %3386 = vmatpush1.msra.mxu0 0.0
    %3387 = vmatprep.subr.mxu0 0.0
    %3388 = vmatpush1.msra.mxu0 0.0
    %3389 = vmatprep.subr.mxu0 0.0
    %3390 = vmatpush1.msra.mxu0 0.0
    %3391 = vmatprep.subr.mxu0 0.0
    %3392 = vmatpush1.msra.mxu0 0.0
    %3393 = vmatprep.subr.mxu0 0.0
    %3394 = vmatpush1.msra.mxu0 0.0
    %3395 = vmatprep.subr.mxu0 0.0
    %3396 = vmatpush1.msra.mxu0 0.0
    %3397 = vmatprep.subr.mxu0 0.0
    %3398 = vmatpush1.msra.mxu0 0.0
    %3399 = vmatprep.subr.mxu0 0.0
    %3400 = vmatpush1.msra.mxu0 0.0
    %3401 = vmatprep.subr.mxu0 0.0
    %3402 = vmatpush1.msra.mxu0 0.0
    %3403 = vmatprep.subr.mxu0 0.0
    %3404 = vmatpush1.msra.mxu0 0.0
    %3405 = vmatprep.subr.mxu0 0.0
    %3406 = vmatpush1.msra.mxu0 0.0
    %3407 = vmatprep.subr.mxu0 0.0
    %3408 = vmatpush1.msra.mxu0 0.0
    %3409 = vmatprep.subr.mxu0 0.0
    %3410 = vmatpush1.msra.mxu0 0.0
    %3411 = vmatprep.subr.mxu0 0.0
    %3412 = vmatpush1.msra.mxu0 0.0
    %3413 = vmatprep.subr.mxu0 0.0
    %3414 = vmatpush1.msra.mxu0 0.0
    %3415 = vmatprep.subr.mxu0 0.0
    %3416 = vmatpush1.msra.mxu0 0.0
    %3417 = vmatprep.subr.mxu0 0.0
    %3418 = vmatpush1.msra.mxu0 0.0
    %3419 = vmatprep.mubr.f32.mxu0 0.0
    %3420 = vmatmul.mubr.f32.gmra.mrb[0].mxu0 %v3344
    %v3421 = vpop.f32.mrb[0].mxu0
    %v3422 = vadd.f32 %v3341, %v3421
    %v3423 = vpop.f32.mrb[0].mxu0
    %3424 = vmatprep.mubr.f32.mxu0 0.0
    %3425 = vmatmul.mubr.f32.gmra.mrb[0].mxu0 %v3347
    %v3426 = vpop.f32.mrb[0].mxu0
    %v3427 = vadd.f32 %v3341, %v3426
    %v3428 = vpop.f32.mrb[0].mxu0
    %3429 = vmatprep.mubr.f32.mxu0 0.0
    %3430 = vmatmul.mubr.f32.gmra.mrb[0].mxu0 %v3350
    %v3431 = vpop.f32.mrb[0].mxu0
    %v3432 = vadd.f32 %v3341, %v3431
    %v3433 = vpop.f32.mrb[0].mxu0
    %3434 = vmatprep.mubr.f32.mxu0 0.0
    %3435 = vmatmul.mubr.f32.gmra.mrb[0].mxu0 %v3353
    %v3436 = vpop.f32.mrb[0].mxu0
    %v3437 = vadd.f32 %v3341, %v3436
    %v3438 = vpop.f32.mrb[0].mxu0
    %3439 = vdwg.mxu0
    %v3441 = vlaneseq
    %v3442 = vshrl.u32 %v3441, 7
    %v3443 = vsub.s32 0, %v3442
    %v3444 = vrot.slane %v3130, %v3443
    %3446 = vmatprep.subr.mxu0 0.0
    %3447 = vmatpush1.msra.mxu0 %v3085
    %3448 = vmatprep.subr.mxu0 0.0
    %3449 = vmatpush1.msra.mxu0 %v3086
    %3450 = vmatprep.subr.mxu0 0.0
    %3451 = vmatpush1.msra.mxu0 %v3087
    %3452 = vmatprep.subr.mxu0 0.0
    %3453 = vmatpush1.msra.mxu0 %v3088
    %3454 = vmatprep.subr.mxu0 0.0
    %3455 = vmatpush1.msra.mxu0 0.0
    %3456 = vmatprep.subr.mxu0 0.0
    %3457 = vmatpush1.msra.mxu0 0.0
    %3458 = vmatprep.subr.mxu0 0.0
    %3459 = vmatpush1.msra.mxu0 0.0
    %3460 = vmatprep.subr.mxu0 0.0
    %3461 = vmatpush1.msra.mxu0 0.0
    %3462 = vmatprep.subr.mxu0 0.0
    %3463 = vmatpush1.msra.mxu0 0.0
    %3464 = vmatprep.subr.mxu0 0.0
    %3465 = vmatpush1.msra.mxu0 0.0
    %3466 = vmatprep.subr.mxu0 0.0
    %3467 = vmatpush1.msra.mxu0 0.0
    %3468 = vmatprep.subr.mxu0 0.0
    %3469 = vmatpush1.msra.mxu0 0.0
    %3470 = vmatprep.subr.mxu0 0.0
    %3471 = vmatpush1.msra.mxu0 0.0
    %3472 = vmatprep.subr.mxu0 0.0
    %3473 = vmatpush1.msra.mxu0 0.0
    %3474 = vmatprep.subr.mxu0 0.0
    %3475 = vmatpush1.msra.mxu0 0.0
    %3476 = vmatprep.subr.mxu0 0.0
    %3477 = vmatpush1.msra.mxu0 0.0
    %3478 = vmatprep.subr.mxu0 0.0
    %3479 = vmatpush1.msra.mxu0 0.0
    %3480 = vmatprep.subr.mxu0 0.0
    %3481 = vmatpush1.msra.mxu0 0.0
    %3482 = vmatprep.subr.mxu0 0.0
    %3483 = vmatpush1.msra.mxu0 0.0
    %3484 = vmatprep.subr.mxu0 0.0
    %3485 = vmatpush1.msra.mxu0 0.0
    %3486 = vmatprep.subr.mxu0 0.0
    %3487 = vmatpush1.msra.mxu0 0.0
    %3488 = vmatprep.subr.mxu0 0.0
    %3489 = vmatpush1.msra.mxu0 0.0
    %3490 = vmatprep.subr.mxu0 0.0
    %3491 = vmatpush1.msra.mxu0 0.0
    %3492 = vmatprep.subr.mxu0 0.0
    %3493 = vmatpush1.msra.mxu0 0.0
    %3494 = vmatprep.subr.mxu0 0.0
    %3495 = vmatpush1.msra.mxu0 0.0
    %3496 = vmatprep.subr.mxu0 0.0
    %3497 = vmatpush1.msra.mxu0 0.0
    %3498 = vmatprep.subr.mxu0 0.0
    %3499 = vmatpush1.msra.mxu0 0.0
    %3500 = vmatprep.subr.mxu0 0.0
    %3501 = vmatpush1.msra.mxu0 0.0
    %3502 = vmatprep.subr.mxu0 0.0
    %3503 = vmatpush1.msra.mxu0 0.0
    %3504 = vmatprep.subr.mxu0 0.0
    %3505 = vmatpush1.msra.mxu0 0.0
    %3506 = vmatprep.subr.mxu0 0.0
    %3507 = vmatpush1.msra.mxu0 0.0
    %3508 = vmatprep.subr.mxu0 0.0
    %3509 = vmatpush1.msra.mxu0 0.0
    %3510 = vmatprep.mubr.f32.mxu0 0.0
    %3511 = vmatmul.mubr.f32.gmra.mrb[0].mxu0 %v3152
    %v3512 = vpop.f32.mrb[0].mxu0
    %v3513 = vadd.f32 %v3444, %v3512
    %v3514 = vpop.f32.mrb[0].mxu0
    %3515 = vmatprep.mubr.f32.mxu0 0.0
    %3516 = vmatmul.mubr.f32.gmra.mrb[0].mxu0 %v3155
    %v3517 = vpop.f32.mrb[0].mxu0
    %v3518 = vadd.f32 %v3444, %v3517
    %v3519 = vpop.f32.mrb[0].mxu0
    %3520 = vdwg.mxu0
    %v3521 = vmul.f32 %v3513, 0.35355338
    %v3522 = vmul.f32 %v3518, 0.35355338
    %v3524 = vlaneseq
    %v3525 = vshrl.u32 %v3524, 7
    %v3526 = vsub.s32 0, %v3525
    %v3527 = vrot.slane %v3134, %v3526
    %3529 = vmatprep.subr.mxu0 0.0
    %3530 = vmatpush1.msra.mxu0 %v3101
    %3531 = vmatprep.subr.mxu0 0.0
    %3532 = vmatpush1.msra.mxu0 %v3102
    %3533 = vmatprep.subr.mxu0 0.0
    %3534 = vmatpush1.msra.mxu0 %v3103
    %3535 = vmatprep.subr.mxu0 0.0
    %3536 = vmatpush1.msra.mxu0 %v3104
    %3537 = vmatprep.subr.mxu0 0.0
    %3538 = vmatpush1.msra.mxu0 0.0
    %3539 = vmatprep.subr.mxu0 0.0
    %3540 = vmatpush1.msra.mxu0 0.0
    %3541 = vmatprep.subr.mxu0 0.0
    %3542 = vmatpush1.msra.mxu0 0.0
    %3543 = vmatprep.subr.mxu0 0.0
    %3544 = vmatpush1.msra.mxu0 0.0
    %3545 = vmatprep.subr.mxu0 0.0
    %3546 = vmatpush1.msra.mxu0 0.0
    %3547 = vmatprep.subr.mxu0 0.0
    %3548 = vmatpush1.msra.mxu0 0.0
    %3549 = vmatprep.subr.mxu0 0.0
    %3550 = vmatpush1.msra.mxu0 0.0
    %3551 = vmatprep.subr.mxu0 0.0
    %3552 = vmatpush1.msra.mxu0 0.0
    %3553 = vmatprep.subr.mxu0 0.0
    %3554 = vmatpush1.msra.mxu0 0.0
    %3555 = vmatprep.subr.mxu0 0.0
    %3556 = vmatpush1.msra.mxu0 0.0
    %3557 = vmatprep.subr.mxu0 0.0
    %3558 = vmatpush1.msra.mxu0 0.0
    %3559 = vmatprep.subr.mxu0 0.0
    %3560 = vmatpush1.msra.mxu0 0.0
    %3561 = vmatprep.subr.mxu0 0.0
    %3562 = vmatpush1.msra.mxu0 0.0
    %3563 = vmatprep.subr.mxu0 0.0
    %3564 = vmatpush1.msra.mxu0 0.0
    %3565 = vmatprep.subr.mxu0 0.0
    %3566 = vmatpush1.msra.mxu0 0.0
    %3567 = vmatprep.subr.mxu0 0.0
    %3568 = vmatpush1.msra.mxu0 0.0
    %3569 = vmatprep.subr.mxu0 0.0
    %3570 = vmatpush1.msra.mxu0 0.0
    %3571 = vmatprep.subr.mxu0 0.0
    %3572 = vmatpush1.msra.mxu0 0.0
    %3573 = vmatprep.subr.mxu0 0.0
    %3574 = vmatpush1.msra.mxu0 0.0
    %3575 = vmatprep.subr.mxu0 0.0
    %3576 = vmatpush1.msra.mxu0 0.0
    %3577 = vmatprep.subr.mxu0 0.0
    %3578 = vmatpush1.msra.mxu0 0.0
    %3579 = vmatprep.subr.mxu0 0.0
    %3580 = vmatpush1.msra.mxu0 0.0
    %3581 = vmatprep.subr.mxu0 0.0
    %3582 = vmatpush1.msra.mxu0 0.0
    %3583 = vmatprep.subr.mxu0 0.0
    %3584 = vmatpush1.msra.mxu0 0.0
    %3585 = vmatprep.subr.mxu0 0.0
    %3586 = vmatpush1.msra.mxu0 0.0
    %3587 = vmatprep.subr.mxu0 0.0
    %3588 = vmatpush1.msra.mxu0 0.0
    %3589 = vmatprep.subr.mxu0 0.0
    %3590 = vmatpush1.msra.mxu0 0.0
    %3591 = vmatprep.subr.mxu0 0.0
    %3592 = vmatpush1.msra.mxu0 0.0
    %3593 = vmatprep.mubr.f32.mxu0 0.0
    %3594 = vmatmul.mubr.f32.gmra.mrb[0].mxu0 %v3241
    %v3595 = vpop.f32.mrb[0].mxu0
    %v3596 = vadd.f32 %v3527, %v3595
    %v3597 = vpop.f32.mrb[0].mxu0
    %3598 = vmatprep.mubr.f32.mxu0 0.0
    %3599 = vmatmul.mubr.f32.gmra.mrb[0].mxu0 %v3244
    %v3600 = vpop.f32.mrb[0].mxu0
    %v3601 = vadd.f32 %v3527, %v3600
    %v3602 = vpop.f32.mrb[0].mxu0
    %3603 = vmatprep.mubr.f32.mxu0 0.0
    %3604 = vmatmul.mubr.f32.gmra.mrb[0].mxu0 %v3247
    %v3605 = vpop.f32.mrb[0].mxu0
    %v3606 = vadd.f32 %v3527, %v3605
    %v3607 = vpop.f32.mrb[0].mxu0
    %3608 = vmatprep.mubr.f32.mxu0 0.0
    %3609 = vmatmul.mubr.f32.gmra.mrb[0].mxu0 %v3250
    %v3610 = vpop.f32.mrb[0].mxu0
    %v3611 = vadd.f32 %v3527, %v3610
    %v3612 = vpop.f32.mrb[0].mxu0
    %3613 = vdwg.mxu0
    %v3615 = vlaneseq
    %v3616 = vshrl.u32 %v3615, 7
    %v3617 = vsub.s32 0, %v3616
    %v3618 = vrot.slane %v3138, %v3617
    %3620 = vmatprep.subr.mxu0 0.0
    %3621 = vmatpush1.msra.mxu0 %v3117
    %3622 = vmatprep.subr.mxu0 0.0
    %3623 = vmatpush1.msra.mxu0 %v3118
    %3624 = vmatprep.subr.mxu0 0.0
    %3625 = vmatpush1.msra.mxu0 %v3119
    %3626 = vmatprep.subr.mxu0 0.0
    %3627 = vmatpush1.msra.mxu0 %v3120
    %3628 = vmatprep.subr.mxu0 0.0
    %3629 = vmatpush1.msra.mxu0 0.0
    %3630 = vmatprep.subr.mxu0 0.0
    %3631 = vmatpush1.msra.mxu0 0.0
    %3632 = vmatprep.subr.mxu0 0.0
    %3633 = vmatpush1.msra.mxu0 0.0
    %3634 = vmatprep.subr.mxu0 0.0
    %3635 = vmatpush1.msra.mxu0 0.0
    %3636 = vmatprep.subr.mxu0 0.0
    %3637 = vmatpush1.msra.mxu0 0.0
    %3638 = vmatprep.subr.mxu0 0.0
    %3639 = vmatpush1.msra.mxu0 0.0
    %3640 = vmatprep.subr.mxu0 0.0
    %3641 = vmatpush1.msra.mxu0 0.0
    %3642 = vmatprep.subr.mxu0 0.0
    %3643 = vmatpush1.msra.mxu0 0.0
    %3644 = vmatprep.subr.mxu0 0.0
    %3645 = vmatpush1.msra.mxu0 0.0
    %3646 = vmatprep.subr.mxu0 0.0
    %3647 = vmatpush1.msra.mxu0 0.0
    %3648 = vmatprep.subr.mxu0 0.0
    %3649 = vmatpush1.msra.mxu0 0.0
    %3650 = vmatprep.subr.mxu0 0.0
    %3651 = vmatpush1.msra.mxu0 0.0
    %3652 = vmatprep.subr.mxu0 0.0
    %3653 = vmatpush1.msra.mxu0 0.0
    %3654 = vmatprep.subr.mxu0 0.0
    %3655 = vmatpush1.msra.mxu0 0.0
    %3656 = vmatprep.subr.mxu0 0.0
    %3657 = vmatpush1.msra.mxu0 0.0
    %3658 = vmatprep.subr.mxu0 0.0
    %3659 = vmatpush1.msra.mxu0 0.0
    %3660 = vmatprep.subr.mxu0 0.0
    %3661 = vmatpush1.msra.mxu0 0.0
    %3662 = vmatprep.subr.mxu0 0.0
    %3663 = vmatpush1.msra.mxu0 0.0
    %3664 = vmatprep.subr.mxu0 0.0
    %3665 = vmatpush1.msra.mxu0 0.0
    %3666 = vmatprep.subr.mxu0 0.0
    %3667 = vmatpush1.msra.mxu0 0.0
    %3668 = vmatprep.subr.mxu0 0.0
    %3669 = vmatpush1.msra.mxu0 0.0
    %3670 = vmatprep.subr.mxu0 0.0
    %3671 = vmatpush1.msra.mxu0 0.0
    %3672 = vmatprep.subr.mxu0 0.0
    %3673 = vmatpush1.msra.mxu0 0.0
    %3674 = vmatprep.subr.mxu0 0.0
    %3675 = vmatpush1.msra.mxu0 0.0
    %3676 = vmatprep.subr.mxu0 0.0
    %3677 = vmatpush1.msra.mxu0 0.0
    %3678 = vmatprep.subr.mxu0 0.0
    %3679 = vmatpush1.msra.mxu0 0.0
    %3680 = vmatprep.subr.mxu0 0.0
    %3681 = vmatpush1.msra.mxu0 0.0
    %3682 = vmatprep.subr.mxu0 0.0
    %3683 = vmatpush1.msra.mxu0 0.0
    %3684 = vmatprep.mubr.f32.mxu0 0.0
    %3685 = vmatmul.mubr.f32.gmra.mrb[0].mxu0 %v3344
    %v3686 = vpop.f32.mrb[0].mxu0
    %v3687 = vadd.f32 %v3618, %v3686
    %v3688 = vpop.f32.mrb[0].mxu0
    %3689 = vmatprep.mubr.f32.mxu0 0.0
    %3690 = vmatmul.mubr.f32.gmra.mrb[0].mxu0 %v3347
    %v3691 = vpop.f32.mrb[0].mxu0
    %v3692 = vadd.f32 %v3618, %v3691
    %v3693 = vpop.f32.mrb[0].mxu0
    %3694 = vmatprep.mubr.f32.mxu0 0.0
    %3695 = vmatmul.mubr.f32.gmra.mrb[0].mxu0 %v3350
    %v3696 = vpop.f32.mrb[0].mxu0
    %v3697 = vadd.f32 %v3618, %v3696
    %v3698 = vpop.f32.mrb[0].mxu0
    %3699 = vmatprep.mubr.f32.mxu0 0.0
    %3700 = vmatmul.mubr.f32.gmra.mrb[0].mxu0 %v3353
    %v3701 = vpop.f32.mrb[0].mxu0
    %v3702 = vadd.f32 %v3618, %v3701
    %v3703 = vpop.f32.mrb[0].mxu0
    %3704 = vdwg.mxu0
    %v3706 = vlaneseq
    %v3707 = vshrl.u32 %v3706, 7
    %v3708 = vsub.s32 0, %v3707
    %v3709 = vrot.slane %v3131, %v3708
    %3711 = vmatprep.subr.mxu0 0.0
    %3712 = vmatpush1.msra.mxu0 %v3089
    %3713 = vmatprep.subr.mxu0 0.0
    %3714 = vmatpush1.msra.mxu0 %v3090
    %3715 = vmatprep.subr.mxu0 0.0
    %3716 = vmatpush1.msra.mxu0 %v3091
    %3717 = vmatprep.subr.mxu0 0.0
    %3718 = vmatpush1.msra.mxu0 %v3092
    %3719 = vmatprep.subr.mxu0 0.0
    %3720 = vmatpush1.msra.mxu0 0.0
    %3721 = vmatprep.subr.mxu0 0.0
    %3722 = vmatpush1.msra.mxu0 0.0
    %3723 = vmatprep.subr.mxu0 0.0
    %3724 = vmatpush1.msra.mxu0 0.0
    %3725 = vmatprep.subr.mxu0 0.0
    %3726 = vmatpush1.msra.mxu0 0.0
    %3727 = vmatprep.subr.mxu0 0.0
    %3728 = vmatpush1.msra.mxu0 0.0
    %3729 = vmatprep.subr.mxu0 0.0
    %3730 = vmatpush1.msra.mxu0 0.0
    %3731 = vmatprep.subr.mxu0 0.0
    %3732 = vmatpush1.msra.mxu0 0.0
    %3733 = vmatprep.subr.mxu0 0.0
    %3734 = vmatpush1.msra.mxu0 0.0
    %3735 = vmatprep.subr.mxu0 0.0
    %3736 = vmatpush1.msra.mxu0 0.0
    %3737 = vmatprep.subr.mxu0 0.0
    %3738 = vmatpush1.msra.mxu0 0.0
    %3739 = vmatprep.subr.mxu0 0.0
    %3740 = vmatpush1.msra.mxu0 0.0
    %3741 = vmatprep.subr.mxu0 0.0
    %3742 = vmatpush1.msra.mxu0 0.0
    %3743 = vmatprep.subr.mxu0 0.0
    %3744 = vmatpush1.msra.mxu0 0.0
    %3745 = vmatprep.subr.mxu0 0.0
    %3746 = vmatpush1.msra.mxu0 0.0
    %3747 = vmatprep.subr.mxu0 0.0
    %3748 = vmatpush1.msra.mxu0 0.0
    %3749 = vmatprep.subr.mxu0 0.0
    %3750 = vmatpush1.msra.mxu0 0.0
    %3751 = vmatprep.subr.mxu0 0.0
    %3752 = vmatpush1.msra.mxu0 0.0
    %3753 = vmatprep.subr.mxu0 0.0
    %3754 = vmatpush1.msra.mxu0 0.0
    %3755 = vmatprep.subr.mxu0 0.0
    %3756 = vmatpush1.msra.mxu0 0.0
    %3757 = vmatprep.subr.mxu0 0.0
    %3758 = vmatpush1.msra.mxu0 0.0
    %3759 = vmatprep.subr.mxu0 0.0
    %3760 = vmatpush1.msra.mxu0 0.0
    %3761 = vmatprep.subr.mxu0 0.0
    %3762 = vmatpush1.msra.mxu0 0.0
    %3763 = vmatprep.subr.mxu0 0.0
    %3764 = vmatpush1.msra.mxu0 0.0
    %3765 = vmatprep.subr.mxu0 0.0
    %3766 = vmatpush1.msra.mxu0 0.0
    %3767 = vmatprep.subr.mxu0 0.0
    %3768 = vmatpush1.msra.mxu0 0.0
    %3769 = vmatprep.subr.mxu0 0.0
    %3770 = vmatpush1.msra.mxu0 0.0
    %3771 = vmatprep.subr.mxu0 0.0
    %3772 = vmatpush1.msra.mxu0 0.0
    %3773 = vmatprep.subr.mxu0 0.0
    %3774 = vmatpush1.msra.mxu0 0.0
    %3775 = vmatprep.mubr.f32.mxu0 0.0
    %3776 = vmatmul.mubr.f32.gmra.mrb[0].mxu0 %v3152
    %v3777 = vpop.f32.mrb[0].mxu0
    %v3778 = vadd.f32 %v3709, %v3777
    %v3779 = vpop.f32.mrb[0].mxu0
    %3780 = vmatprep.mubr.f32.mxu0 0.0
    %3781 = vmatmul.mubr.f32.gmra.mrb[0].mxu0 %v3155
    %v3782 = vpop.f32.mrb[0].mxu0
    %v3783 = vadd.f32 %v3709, %v3782
    %v3784 = vpop.f32.mrb[0].mxu0
    %3785 = vdwg.mxu0
    %v3786 = vmul.f32 %v3778, 0.35355338
    %v3787 = vmul.f32 %v3783, 0.35355338
    %v3789 = vlaneseq
    %v3790 = vshrl.u32 %v3789, 7
    %v3791 = vsub.s32 0, %v3790
    %v3792 = vrot.slane %v3135, %v3791
    %3794 = vmatprep.subr.mxu0 0.0
    %3795 = vmatpush1.msra.mxu0 %v3105
    %3796 = vmatprep.subr.mxu0 0.0
    %3797 = vmatpush1.msra.mxu0 %v3106
    %3798 = vmatprep.subr.mxu0 0.0
    %3799 = vmatpush1.msra.mxu0 %v3107
    %3800 = vmatprep.subr.mxu0 0.0
    %3801 = vmatpush1.msra.mxu0 %v3108
    %3802 = vmatprep.subr.mxu0 0.0
    %3803 = vmatpush1.msra.mxu0 0.0
    %3804 = vmatprep.subr.mxu0 0.0
    %3805 = vmatpush1.msra.mxu0 0.0
    %3806 = vmatprep.subr.mxu0 0.0
    %3807 = vmatpush1.msra.mxu0 0.0
    %3808 = vmatprep.subr.mxu0 0.0
    %3809 = vmatpush1.msra.mxu0 0.0
    %3810 = vmatprep.subr.mxu0 0.0
    %3811 = vmatpush1.msra.mxu0 0.0
    %3812 = vmatprep.subr.mxu0 0.0
    %3813 = vmatpush1.msra.mxu0 0.0
    %3814 = vmatprep.subr.mxu0 0.0
    %3815 = vmatpush1.msra.mxu0 0.0
    %3816 = vmatprep.subr.mxu0 0.0
    %3817 = vmatpush1.msra.mxu0 0.0
    %3818 = vmatprep.subr.mxu0 0.0
    %3819 = vmatpush1.msra.mxu0 0.0
    %3820 = vmatprep.subr.mxu0 0.0
    %3821 = vmatpush1.msra.mxu0 0.0
    %3822 = vmatprep.subr.mxu0 0.0
    %3823 = vmatpush1.msra.mxu0 0.0
    %3824 = vmatprep.subr.mxu0 0.0
    %3825 = vmatpush1.msra.mxu0 0.0
    %3826 = vmatprep.subr.mxu0 0.0
    %3827 = vmatpush1.msra.mxu0 0.0
    %3828 = vmatprep.subr.mxu0 0.0
    %3829 = vmatpush1.msra.mxu0 0.0
    %3830 = vmatprep.subr.mxu0 0.0
    %3831 = vmatpush1.msra.mxu0 0.0
    %3832 = vmatprep.subr.mxu0 0.0
    %3833 = vmatpush1.msra.mxu0 0.0
    %3834 = vmatprep.subr.mxu0 0.0
    %3835 = vmatpush1.msra.mxu0 0.0
    %3836 = vmatprep.subr.mxu0 0.0
    %3837 = vmatpush1.msra.mxu0 0.0
    %3838 = vmatprep.subr.mxu0 0.0
    %3839 = vmatpush1.msra.mxu0 0.0
    %3840 = vmatprep.subr.mxu0 0.0
    %3841 = vmatpush1.msra.mxu0 0.0
    %3842 = vmatprep.subr.mxu0 0.0
    %3843 = vmatpush1.msra.mxu0 0.0
    %3844 = vmatprep.subr.mxu0 0.0
    %3845 = vmatpush1.msra.mxu0 0.0
    %3846 = vmatprep.subr.mxu0 0.0
    %3847 = vmatpush1.msra.mxu0 0.0
    %3848 = vmatprep.subr.mxu0 0.0
    %3849 = vmatpush1.msra.mxu0 0.0
    %3850 = vmatprep.subr.mxu0 0.0
    %3851 = vmatpush1.msra.mxu0 0.0
    %3852 = vmatprep.subr.mxu0 0.0
    %3853 = vmatpush1.msra.mxu0 0.0
    %3854 = vmatprep.subr.mxu0 0.0
    %3855 = vmatpush1.msra.mxu0 0.0
    %3856 = vmatprep.subr.mxu0 0.0
    %3857 = vmatpush1.msra.mxu0 0.0
    %3858 = vmatprep.mubr.f32.mxu0 0.0
    %3859 = vmatmul.mubr.f32.gmra.mrb[0].mxu0 %v3241
    %v3860 = vpop.f32.mrb[0].mxu0
    %v3861 = vadd.f32 %v3792, %v3860
    %v3862 = vpop.f32.mrb[0].mxu0
    %3863 = vmatprep.mubr.f32.mxu0 0.0
    %3864 = vmatmul.mubr.f32.gmra.mrb[0].mxu0 %v3244
    %v3865 = vpop.f32.mrb[0].mxu0
    %v3866 = vadd.f32 %v3792, %v3865
    %v3867 = vpop.f32.mrb[0].mxu0
    %3868 = vmatprep.mubr.f32.mxu0 0.0
    %3869 = vmatmul.mubr.f32.gmra.mrb[0].mxu0 %v3247
    %v3870 = vpop.f32.mrb[0].mxu0
    %v3871 = vadd.f32 %v3792, %v3870
    %v3872 = vpop.f32.mrb[0].mxu0
    %3873 = vmatprep.mubr.f32.mxu0 0.0
    %3874 = vmatmul.mubr.f32.gmra.mrb[0].mxu0 %v3250
    %v3875 = vpop.f32.mrb[0].mxu0
    %v3876 = vadd.f32 %v3792, %v3875
    %v3877 = vpop.f32.mrb[0].mxu0
    %3878 = vdwg.mxu0
    %v3880 = vlaneseq
    %v3881 = vshrl.u32 %v3880, 7
    %v3882 = vsub.s32 0, %v3881
    %v3883 = vrot.slane %v3139, %v3882
    %3885 = vmatprep.subr.mxu0 0.0
    %3886 = vmatpush1.msra.mxu0 %v3121
    %3887 = vmatprep.subr.mxu0 0.0
    %3888 = vmatpush1.msra.mxu0 %v3122
    %3889 = vmatprep.subr.mxu0 0.0
    %3890 = vmatpush1.msra.mxu0 %v3123
    %3891 = vmatprep.subr.mxu0 0.0
    %3892 = vmatpush1.msra.mxu0 %v3124
    %3893 = vmatprep.subr.mxu0 0.0
    %3894 = vmatpush1.msra.mxu0 0.0
    %3895 = vmatprep.subr.mxu0 0.0
    %3896 = vmatpush1.msra.mxu0 0.0
    %3897 = vmatprep.subr.mxu0 0.0
    %3898 = vmatpush1.msra.mxu0 0.0
    %3899 = vmatprep.subr.mxu0 0.0
    %3900 = vmatpush1.msra.mxu0 0.0
    %3901 = vmatprep.subr.mxu0 0.0
    %3902 = vmatpush1.msra.mxu0 0.0
    %3903 = vmatprep.subr.mxu0 0.0
    %3904 = vmatpush1.msra.mxu0 0.0
    %3905 = vmatprep.subr.mxu0 0.0
    %3906 = vmatpush1.msra.mxu0 0.0
    %3907 = vmatprep.subr.mxu0 0.0
    %3908 = vmatpush1.msra.mxu0 0.0
    %3909 = vmatprep.subr.mxu0 0.0
    %3910 = vmatpush1.msra.mxu0 0.0
    %3911 = vmatprep.subr.mxu0 0.0
    %3912 = vmatpush1.msra.mxu0 0.0
    %3913 = vmatprep.subr.mxu0 0.0
    %3914 = vmatpush1.msra.mxu0 0.0
    %3915 = vmatprep.subr.mxu0 0.0
    %3916 = vmatpush1.msra.mxu0 0.0
    %3917 = vmatprep.subr.mxu0 0.0
    %3918 = vmatpush1.msra.mxu0 0.0
    %3919 = vmatprep.subr.mxu0 0.0
    %3920 = vmatpush1.msra.mxu0 0.0
    %3921 = vmatprep.subr.mxu0 0.0
    %3922 = vmatpush1.msra.mxu0 0.0
    %3923 = vmatprep.subr.mxu0 0.0
    %3924 = vmatpush1.msra.mxu0 0.0
    %3925 = vmatprep.subr.mxu0 0.0
    %3926 = vmatpush1.msra.mxu0 0.0
    %3927 = vmatprep.subr.mxu0 0.0
    %3928 = vmatpush1.msra.mxu0 0.0
    %3929 = vmatprep.subr.mxu0 0.0
    %3930 = vmatpush1.msra.mxu0 0.0
    %3931 = vmatprep.subr.mxu0 0.0
    %3932 = vmatpush1.msra.mxu0 0.0
    %3933 = vmatprep.subr.mxu0 0.0
    %3934 = vmatpush1.msra.mxu0 0.0
    %3935 = vmatprep.subr.mxu0 0.0
    %3936 = vmatpush1.msra.mxu0 0.0
    %3937 = vmatprep.subr.mxu0 0.0
    %3938 = vmatpush1.msra.mxu0 0.0
    %3939 = vmatprep.subr.mxu0 0.0
    %3940 = vmatpush1.msra.mxu0 0.0
    %3941 = vmatprep.subr.mxu0 0.0
    %3942 = vmatpush1.msra.mxu0 0.0
    %3943 = vmatprep.subr.mxu0 0.0
    %3944 = vmatpush1.msra.mxu0 0.0
    %3945 = vmatprep.subr.mxu0 0.0
    %3946 = vmatpush1.msra.mxu0 0.0
    %3947 = vmatprep.subr.mxu0 0.0
    %3948 = vmatpush1.msra.mxu0 0.0
    %3949 = vmatprep.mubr.f32.mxu0 0.0
    %3950 = vmatmul.mubr.f32.gmra.mrb[0].mxu0 %v3344
    %v3951 = vpop.f32.mrb[0].mxu0
    %v3952 = vadd.f32 %v3883, %v3951
    %v3953 = vpop.f32.mrb[0].mxu0
    %3954 = vmatprep.mubr.f32.mxu0 0.0
    %3955 = vmatmul.mubr.f32.gmra.mrb[0].mxu0 %v3347
    %v3956 = vpop.f32.mrb[0].mxu0
    %v3957 = vadd.f32 %v3883, %v3956
    %v3958 = vpop.f32.mrb[0].mxu0
    %3959 = vmatprep.mubr.f32.mxu0 0.0
    %3960 = vmatmul.mubr.f32.gmra.mrb[0].mxu0 %v3350
    %v3961 = vpop.f32.mrb[0].mxu0
    %v3962 = vadd.f32 %v3883, %v3961
    %v3963 = vpop.f32.mrb[0].mxu0
    %3964 = vmatprep.mubr.f32.mxu0 0.0
    %3965 = vmatmul.mubr.f32.gmra.mrb[0].mxu0 %v3353
    %v3966 = vpop.f32.mrb[0].mxu0
    %v3967 = vadd.f32 %v3883, %v3966
    %v3968 = vpop.f32.mrb[0].mxu0
    %3969 = vdwg.mxu0
    %v3971 = vlaneseq
    %v3972 = vshrl.u32 %v3971, 7
    %v3973 = vsub.s32 0, %v3972
    %v3974 = vrot.slane %v3132, %v3973
    %3976 = vmatprep.subr.mxu0 0.0
    %3977 = vmatpush1.msra.mxu0 %v3093
    %3978 = vmatprep.subr.mxu0 0.0
    %3979 = vmatpush1.msra.mxu0 %v3094
    %3980 = vmatprep.subr.mxu0 0.0
    %3981 = vmatpush1.msra.mxu0 %v3095
    %3982 = vmatprep.subr.mxu0 0.0
    %3983 = vmatpush1.msra.mxu0 %v3096
    %3984 = vmatprep.subr.mxu0 0.0
    %3985 = vmatpush1.msra.mxu0 0.0
    %3986 = vmatprep.subr.mxu0 0.0
    %3987 = vmatpush1.msra.mxu0 0.0
    %3988 = vmatprep.subr.mxu0 0.0
    %3989 = vmatpush1.msra.mxu0 0.0
    %3990 = vmatprep.subr.mxu0 0.0
    %3991 = vmatpush1.msra.mxu0 0.0
    %3992 = vmatprep.subr.mxu0 0.0
    %3993 = vmatpush1.msra.mxu0 0.0
    %3994 = vmatprep.subr.mxu0 0.0
    %3995 = vmatpush1.msra.mxu0 0.0
    %3996 = vmatprep.subr.mxu0 0.0
    %3997 = vmatpush1.msra.mxu0 0.0
    %3998 = vmatprep.subr.mxu0 0.0
    %3999 = vmatpush1.msra.mxu0 0.0
    %4000 = vmatprep.subr.mxu0 0.0
    %4001 = vmatpush1.msra.mxu0 0.0
    %4002 = vmatprep.subr.mxu0 0.0
    %4003 = vmatpush1.msra.mxu0 0.0
    %4004 = vmatprep.subr.mxu0 0.0
    %4005 = vmatpush1.msra.mxu0 0.0
    %4006 = vmatprep.subr.mxu0 0.0
    %4007 = vmatpush1.msra.mxu0 0.0
    %4008 = vmatprep.subr.mxu0 0.0
    %4009 = vmatpush1.msra.mxu0 0.0
    %4010 = vmatprep.subr.mxu0 0.0
    %4011 = vmatpush1.msra.mxu0 0.0
    %4012 = vmatprep.subr.mxu0 0.0
    %4013 = vmatpush1.msra.mxu0 0.0
    %4014 = vmatprep.subr.mxu0 0.0
    %4015 = vmatpush1.msra.mxu0 0.0
    %4016 = vmatprep.subr.mxu0 0.0
    %4017 = vmatpush1.msra.mxu0 0.0
    %4018 = vmatprep.subr.mxu0 0.0
    %4019 = vmatpush1.msra.mxu0 0.0
    %4020 = vmatprep.subr.mxu0 0.0
    %4021 = vmatpush1.msra.mxu0 0.0
    %4022 = vmatprep.subr.mxu0 0.0
    %4023 = vmatpush1.msra.mxu0 0.0
    %4024 = vmatprep.subr.mxu0 0.0
    %4025 = vmatpush1.msra.mxu0 0.0
    %4026 = vmatprep.subr.mxu0 0.0
    %4027 = vmatpush1.msra.mxu0 0.0
    %4028 = vmatprep.subr.mxu0 0.0
    %4029 = vmatpush1.msra.mxu0 0.0
    %4030 = vmatprep.subr.mxu0 0.0
    %4031 = vmatpush1.msra.mxu0 0.0
    %4032 = vmatprep.subr.mxu0 0.0
    %4033 = vmatpush1.msra.mxu0 0.0
    %4034 = vmatprep.subr.mxu0 0.0
    %4035 = vmatpush1.msra.mxu0 0.0
    %4036 = vmatprep.subr.mxu0 0.0
    %4037 = vmatpush1.msra.mxu0 0.0
    %4038 = vmatprep.subr.mxu0 0.0
    %4039 = vmatpush1.msra.mxu0 0.0
    %4040 = vmatprep.mubr.f32.mxu0 0.0
    %4041 = vmatmul.mubr.f32.gmra.mrb[0].mxu0 %v3152
    %v4042 = vpop.f32.mrb[0].mxu0
    %v4043 = vadd.f32 %v3974, %v4042
    %v4044 = vpop.f32.mrb[0].mxu0
    %4045 = vmatprep.mubr.f32.mxu0 0.0
    %4046 = vmatmul.mubr.f32.gmra.mrb[0].mxu0 %v3155
    %v4047 = vpop.f32.mrb[0].mxu0
    %v4048 = vadd.f32 %v3974, %v4047
    %v4049 = vpop.f32.mrb[0].mxu0
    %4050 = vdwg.mxu0
    %v4051 = vmul.f32 %v4043, 0.35355338
    %v4052 = vmul.f32 %v4048, 0.35355338
    %v4054 = vlaneseq
    %v4055 = vshrl.u32 %v4054, 7
    %v4056 = vsub.s32 0, %v4055
    %v4057 = vrot.slane %v3136, %v4056
    %4059 = vmatprep.subr.mxu0 0.0
    %4060 = vmatpush1.msra.mxu0 %v3109
    %4061 = vmatprep.subr.mxu0 0.0
    %4062 = vmatpush1.msra.mxu0 %v3110
    %4063 = vmatprep.subr.mxu0 0.0
    %4064 = vmatpush1.msra.mxu0 %v3111
    %4065 = vmatprep.subr.mxu0 0.0
    %4066 = vmatpush1.msra.mxu0 %v3112
    %4067 = vmatprep.subr.mxu0 0.0
    %4068 = vmatpush1.msra.mxu0 0.0
    %4069 = vmatprep.subr.mxu0 0.0
    %4070 = vmatpush1.msra.mxu0 0.0
    %4071 = vmatprep.subr.mxu0 0.0
    %4072 = vmatpush1.msra.mxu0 0.0
    %4073 = vmatprep.subr.mxu0 0.0
    %4074 = vmatpush1.msra.mxu0 0.0
    %4075 = vmatprep.subr.mxu0 0.0
    %4076 = vmatpush1.msra.mxu0 0.0
    %4077 = vmatprep.subr.mxu0 0.0
    %4078 = vmatpush1.msra.mxu0 0.0
    %4079 = vmatprep.subr.mxu0 0.0
    %4080 = vmatpush1.msra.mxu0 0.0
    %4081 = vmatprep.subr.mxu0 0.0
    %4082 = vmatpush1.msra.mxu0 0.0
    %4083 = vmatprep.subr.mxu0 0.0
    %4084 = vmatpush1.msra.mxu0 0.0
    %4085 = vmatprep.subr.mxu0 0.0
    %4086 = vmatpush1.msra.mxu0 0.0
    %4087 = vmatprep.subr.mxu0 0.0
    %4088 = vmatpush1.msra.mxu0 0.0
    %4089 = vmatprep.subr.mxu0 0.0
    %4090 = vmatpush1.msra.mxu0 0.0
    %4091 = vmatprep.subr.mxu0 0.0
    %4092 = vmatpush1.msra.mxu0 0.0
    %4093 = vmatprep.subr.mxu0 0.0
    %4094 = vmatpush1.msra.mxu0 0.0
    %4095 = vmatprep.subr.mxu0 0.0
    %4096 = vmatpush1.msra.mxu0 0.0
    %4097 = vmatprep.subr.mxu0 0.0
    %4098 = vmatpush1.msra.mxu0 0.0
    %4099 = vmatprep.subr.mxu0 0.0
    %4100 = vmatpush1.msra.mxu0 0.0
    %4101 = vmatprep.subr.mxu0 0.0
    %4102 = vmatpush1.msra.mxu0 0.0
    %4103 = vmatprep.subr.mxu0 0.0
    %4104 = vmatpush1.msra.mxu0 0.0
    %4105 = vmatprep.subr.mxu0 0.0
    %4106 = vmatpush1.msra.mxu0 0.0
    %4107 = vmatprep.subr.mxu0 0.0
    %4108 = vmatpush1.msra.mxu0 0.0
    %4109 = vmatprep.subr.mxu0 0.0
    %4110 = vmatpush1.msra.mxu0 0.0
    %4111 = vmatprep.subr.mxu0 0.0
    %4112 = vmatpush1.msra.mxu0 0.0
    %4113 = vmatprep.subr.mxu0 0.0
    %4114 = vmatpush1.msra.mxu0 0.0
    %4115 = vmatprep.subr.mxu0 0.0
    %4116 = vmatpush1.msra.mxu0 0.0
    %4117 = vmatprep.subr.mxu0 0.0
    %4118 = vmatpush1.msra.mxu0 0.0
    %4119 = vmatprep.subr.mxu0 0.0
    %4120 = vmatpush1.msra.mxu0 0.0
    %4121 = vmatprep.subr.mxu0 0.0
    %4122 = vmatpush1.msra.mxu0 0.0
    %4123 = vmatprep.mubr.f32.mxu0 0.0
    %4124 = vmatmul.mubr.f32.gmra.mrb[0].mxu0 %v3241
    %v4125 = vpop.f32.mrb[0].mxu0
    %v4126 = vadd.f32 %v4057, %v4125
    %v4127 = vpop.f32.mrb[0].mxu0
    %4128 = vmatprep.mubr.f32.mxu0 0.0
    %4129 = vmatmul.mubr.f32.gmra.mrb[0].mxu0 %v3244
    %v4130 = vpop.f32.mrb[0].mxu0
    %v4131 = vadd.f32 %v4057, %v4130
    %v4132 = vpop.f32.mrb[0].mxu0
    %4133 = vmatprep.mubr.f32.mxu0 0.0
    %4134 = vmatmul.mubr.f32.gmra.mrb[0].mxu0 %v3247
    %v4135 = vpop.f32.mrb[0].mxu0
    %v4136 = vadd.f32 %v4057, %v4135
    %v4137 = vpop.f32.mrb[0].mxu0
    %4138 = vmatprep.mubr.f32.mxu0 0.0
    %4139 = vmatmul.mubr.f32.gmra.mrb[0].mxu0 %v3250
    %v4140 = vpop.f32.mrb[0].mxu0
    %v4141 = vadd.f32 %v4057, %v4140
    %v4142 = vpop.f32.mrb[0].mxu0
    %4143 = vdwg.mxu0
    %v4145 = vlaneseq
    %v4146 = vshrl.u32 %v4145, 7
    %v4147 = vsub.s32 0, %v4146
    %v4148 = vrot.slane %v3140, %v4147
    %4150 = vmatprep.subr.mxu0 0.0
    %4151 = vmatpush1.msra.mxu0 %v3125
    %4152 = vmatprep.subr.mxu0 0.0
    %4153 = vmatpush1.msra.mxu0 %v3126
    %4154 = vmatprep.subr.mxu0 0.0
    %4155 = vmatpush1.msra.mxu0 %v3127
    %4156 = vmatprep.subr.mxu0 0.0
    %4157 = vmatpush1.msra.mxu0 %v3128
    %4158 = vmatprep.subr.mxu0 0.0
    %4159 = vmatpush1.msra.mxu0 0.0
    %4160 = vmatprep.subr.mxu0 0.0
    %4161 = vmatpush1.msra.mxu0 0.0
    %4162 = vmatprep.subr.mxu0 0.0
    %4163 = vmatpush1.msra.mxu0 0.0
    %4164 = vmatprep.subr.mxu0 0.0
    %4165 = vmatpush1.msra.mxu0 0.0
    %4166 = vmatprep.subr.mxu0 0.0
    %4167 = vmatpush1.msra.mxu0 0.0
    %4168 = vmatprep.subr.mxu0 0.0
    %4169 = vmatpush1.msra.mxu0 0.0
    %4170 = vmatprep.subr.mxu0 0.0
    %4171 = vmatpush1.msra.mxu0 0.0
    %4172 = vmatprep.subr.mxu0 0.0
    %4173 = vmatpush1.msra.mxu0 0.0
    %4174 = vmatprep.subr.mxu0 0.0
    %4175 = vmatpush1.msra.mxu0 0.0
    %4176 = vmatprep.subr.mxu0 0.0
    %4177 = vmatpush1.msra.mxu0 0.0
    %4178 = vmatprep.subr.mxu0 0.0
    %4179 = vmatpush1.msra.mxu0 0.0
    %4180 = vmatprep.subr.mxu0 0.0
    %4181 = vmatpush1.msra.mxu0 0.0
    %4182 = vmatprep.subr.mxu0 0.0
    %4183 = vmatpush1.msra.mxu0 0.0
    %4184 = vmatprep.subr.mxu0 0.0
    %4185 = vmatpush1.msra.mxu0 0.0
    %4186 = vmatprep.subr.mxu0 0.0
    %4187 = vmatpush1.msra.mxu0 0.0
    %4188 = vmatprep.subr.mxu0 0.0
    %4189 = vmatpush1.msra.mxu0 0.0
    %4190 = vmatprep.subr.mxu0 0.0
    %4191 = vmatpush1.msra.mxu0 0.0
    %4192 = vmatprep.subr.mxu0 0.0
    %4193 = vmatpush1.msra.mxu0 0.0
    %4194 = vmatprep.subr.mxu0 0.0
    %4195 = vmatpush1.msra.mxu0 0.0
    %4196 = vmatprep.subr.mxu0 0.0
    %4197 = vmatpush1.msra.mxu0 0.0
    %4198 = vmatprep.subr.mxu0 0.0
    %4199 = vmatpush1.msra.mxu0 0.0
    %4200 = vmatprep.subr.mxu0 0.0
    %4201 = vmatpush1.msra.mxu0 0.0
    %4202 = vmatprep.subr.mxu0 0.0
    %4203 = vmatpush1.msra.mxu0 0.0
    %4204 = vmatprep.subr.mxu0 0.0
    %4205 = vmatpush1.msra.mxu0 0.0
    %4206 = vmatprep.subr.mxu0 0.0
    %4207 = vmatpush1.msra.mxu0 0.0
    %4208 = vmatprep.subr.mxu0 0.0
    %4209 = vmatpush1.msra.mxu0 0.0
    %4210 = vmatprep.subr.mxu0 0.0
    %4211 = vmatpush1.msra.mxu0 0.0
    %4212 = vmatprep.subr.mxu0 0.0
    %4213 = vmatpush1.msra.mxu0 0.0
    %4214 = vmatprep.mubr.f32.mxu0 0.0
    %4215 = vmatmul.mubr.f32.gmra.mrb[0].mxu0 %v3344
    %v4216 = vpop.f32.mrb[0].mxu0
    %v4217 = vadd.f32 %v4148, %v4216
    %v4218 = vpop.f32.mrb[0].mxu0
    %4219 = vmatprep.mubr.f32.mxu0 0.0
    %4220 = vmatmul.mubr.f32.gmra.mrb[0].mxu0 %v3347
    %v4221 = vpop.f32.mrb[0].mxu0
    %v4222 = vadd.f32 %v4148, %v4221
    %v4223 = vpop.f32.mrb[0].mxu0
    %4224 = vmatprep.mubr.f32.mxu0 0.0
    %4225 = vmatmul.mubr.f32.gmra.mrb[0].mxu0 %v3350
    %v4226 = vpop.f32.mrb[0].mxu0
    %v4227 = vadd.f32 %v4148, %v4226
    %v4228 = vpop.f32.mrb[0].mxu0
    %4229 = vmatprep.mubr.f32.mxu0 0.0
    %4230 = vmatmul.mubr.f32.gmra.mrb[0].mxu0 %v3353
    %v4231 = vpop.f32.mrb[0].mxu0
    %v4232 = vadd.f32 %v4148, %v4231
    %v4233 = vpop.f32.mrb[0].mxu0
    %4234 = vdwg.mxu0
    %v4236 = vsel %vm1160, %v3232, 0
    %v4239 = vsel %vm1160, %v3319, 0
    %v4242 = vsel %vm1160, %v3324, 0
    %4244 = vmatprep.subr.mxu0 0.0
    %4245 = vmatpush1.xpose.msra.mxu0 %v4239
    %4246 = vmatprep.subr.mxu0 0.0
    %4247 = vmatpush1.xpose.msra.mxu0 %v4242
    %4248 = vmatprep.subr.mxu0 0.0
    %4249 = vmatpush1.xpose.msra.mxu0 0.0
    %4250 = vmatprep.subr.mxu0 0.0
    %4251 = vmatpush1.xpose.msra.mxu0 0.0
    %4252 = vmatprep.subr.mxu0 0.0
    %4253 = vmatpush1.xpose.msra.mxu0 0.0
    %4254 = vmatprep.subr.mxu0 0.0
    %4255 = vmatpush1.xpose.msra.mxu0 0.0
    %4256 = vmatprep.subr.mxu0 0.0
    %4257 = vmatpush1.xpose.msra.mxu0 0.0
    %4258 = vmatprep.subr.mxu0 0.0
    %4259 = vmatpush1.xpose.msra.mxu0 0.0
    %4260 = vmatprep.subr.mxu0 0.0
    %4261 = vmatpush1.xpose.msra.mxu0 0.0
    %4262 = vmatprep.subr.mxu0 0.0
    %4263 = vmatpush1.xpose.msra.mxu0 0.0
    %4264 = vmatprep.subr.mxu0 0.0
    %4265 = vmatpush1.xpose.msra.mxu0 0.0
    %4266 = vmatprep.subr.mxu0 0.0
    %4267 = vmatpush1.xpose.msra.mxu0 0.0
    %4268 = vmatprep.subr.mxu0 0.0
    %4269 = vmatpush1.xpose.msra.mxu0 0.0
    %4270 = vmatprep.subr.mxu0 0.0
    %4271 = vmatpush1.xpose.msra.mxu0 0.0
    %4272 = vmatprep.subr.mxu0 0.0
    %4273 = vmatpush1.xpose.msra.mxu0 0.0
    %4274 = vmatprep.subr.mxu0 0.0
    %4275 = vmatpush1.xpose.msra.mxu0 0.0
    %4276 = vmatprep.subr.mxu0 0.0
    %4277 = vmatpush1.xpose.msra.mxu0 0.0
    %4278 = vmatprep.subr.mxu0 0.0
    %4279 = vmatpush1.xpose.msra.mxu0 0.0
    %4280 = vmatprep.subr.mxu0 0.0
    %4281 = vmatpush1.xpose.msra.mxu0 0.0
    %4282 = vmatprep.subr.mxu0 0.0
    %4283 = vmatpush1.xpose.msra.mxu0 0.0
    %4284 = vmatprep.subr.mxu0 0.0
    %4285 = vmatpush1.xpose.msra.mxu0 0.0
    %4286 = vmatprep.subr.mxu0 0.0
    %4287 = vmatpush1.xpose.msra.mxu0 0.0
    %4288 = vmatprep.subr.mxu0 0.0
    %4289 = vmatpush1.xpose.msra.mxu0 0.0
    %4290 = vmatprep.subr.mxu0 0.0
    %4291 = vmatpush1.xpose.msra.mxu0 0.0
    %4292 = vmatprep.subr.mxu0 0.0
    %4293 = vmatpush1.xpose.msra.mxu0 0.0
    %4294 = vmatprep.subr.mxu0 0.0
    %4295 = vmatpush1.xpose.msra.mxu0 0.0
    %4296 = vmatprep.subr.mxu0 0.0
    %4297 = vmatpush1.xpose.msra.mxu0 0.0
    %4298 = vmatprep.subr.mxu0 0.0
    %4299 = vmatpush1.xpose.msra.mxu0 0.0
    %4300 = vmatprep.subr.mxu0 0.0
    %4301 = vmatpush1.xpose.msra.mxu0 0.0
    %4302 = vmatprep.subr.mxu0 0.0
    %4303 = vmatpush1.xpose.msra.mxu0 0.0
    %4304 = vmatprep.subr.mxu0 0.0
    %4305 = vmatpush1.xpose.msra.mxu0 0.0
    %4306 = vmatprep.subr.mxu0 0.0
    %4307 = vmatpush1.xpose.msra.mxu0 0.0
    %4308 = vmatprep.mubr.f32.mxu0 0.0
    %4309 = vmatmul.mubr.f32.gmra.mrb[0].mxu0 %v4236
    %v4310 = vpop.f32.mrb[0].mxu0
    %v4311 = vadd.f32 0.0, %v4310
    %v4312 = vpop.f32.mrb[0].mxu0
    %4313 = vdwg.mxu0
    %vm4314 = vcmask 130048
    %v4315 = vsel %vm4314, %v4311, -inf
    %4316 = vmax.xlane.f32.xlu0 %v4315
    %v4317 = vpop.xlane.xlu0 %4316
    %v4318 = vsub.f32 %v4311, %v4317
    %v4319 = vmul.f32 %v4318, 1.442695
    %v4320 = vpow.pop %v4319
    %v4321 = vsel %vm4314, %v4320, 0.0
    %4322 = vadd.xlane.f32.xlu0 %v4321
    %v4323 = vpop.xlane.xlu0 %4322
    %v4324 = vrcp.pop %v4323
    %v4325 = vmul.f32 %v4320, %v4324
    %v4327 = vsel %vm4314, %v4325, 0
    %4329 = vmatprep.subr.mxu0 0.0
    %4330 = vmatpush1.msra.mxu0 %v3422
    %4331 = vmatprep.subr.mxu0 0.0
    %4332 = vmatpush1.msra.mxu0 %v3427
    %4333 = vmatprep.subr.mxu0 0.0
    %4334 = vmatpush1.msra.mxu0 0.0
    %4335 = vmatprep.subr.mxu0 0.0
    %4336 = vmatpush1.msra.mxu0 0.0
    %4337 = vmatprep.subr.mxu0 0.0
    %4338 = vmatpush1.msra.mxu0 0.0
    %4339 = vmatprep.subr.mxu0 0.0
    %4340 = vmatpush1.msra.mxu0 0.0
    %4341 = vmatprep.subr.mxu0 0.0
    %4342 = vmatpush1.msra.mxu0 0.0
    %4343 = vmatprep.subr.mxu0 0.0
    %4344 = vmatpush1.msra.mxu0 0.0
    %4345 = vmatprep.subr.mxu0 0.0
    %4346 = vmatpush1.msra.mxu0 0.0
    %4347 = vmatprep.subr.mxu0 0.0
    %4348 = vmatpush1.msra.mxu0 0.0
    %4349 = vmatprep.subr.mxu0 0.0
    %4350 = vmatpush1.msra.mxu0 0.0
    %4351 = vmatprep.subr.mxu0 0.0
    %4352 = vmatpush1.msra.mxu0 0.0
    %4353 = vmatprep.subr.mxu0 0.0
    %4354 = vmatpush1.msra.mxu0 0.0
    %4355 = vmatprep.subr.mxu0 0.0
    %4356 = vmatpush1.msra.mxu0 0.0
    %4357 = vmatprep.subr.mxu0 0.0
    %4358 = vmatpush1.msra.mxu0 0.0
    %4359 = vmatprep.subr.mxu0 0.0
    %4360 = vmatpush1.msra.mxu0 0.0
    %4361 = vmatprep.subr.mxu0 0.0
    %4362 = vmatpush1.msra.mxu0 0.0
    %4363 = vmatprep.subr.mxu0 0.0
    %4364 = vmatpush1.msra.mxu0 0.0
    %4365 = vmatprep.subr.mxu0 0.0
    %4366 = vmatpush1.msra.mxu0 0.0
    %4367 = vmatprep.subr.mxu0 0.0
    %4368 = vmatpush1.msra.mxu0 0.0
    %4369 = vmatprep.subr.mxu0 0.0
    %4370 = vmatpush1.msra.mxu0 0.0
    %4371 = vmatprep.subr.mxu0 0.0
    %4372 = vmatpush1.msra.mxu0 0.0
    %4373 = vmatprep.subr.mxu0 0.0
    %4374 = vmatpush1.msra.mxu0 0.0
    %4375 = vmatprep.subr.mxu0 0.0
    %4376 = vmatpush1.msra.mxu0 0.0
    %4377 = vmatprep.subr.mxu0 0.0
    %4378 = vmatpush1.msra.mxu0 0.0
    %4379 = vmatprep.subr.mxu0 0.0
    %4380 = vmatpush1.msra.mxu0 0.0
    %4381 = vmatprep.subr.mxu0 0.0
    %4382 = vmatpush1.msra.mxu0 0.0
    %4383 = vmatprep.subr.mxu0 0.0
    %4384 = vmatpush1.msra.mxu0 0.0
    %4385 = vmatprep.subr.mxu0 0.0
    %4386 = vmatpush1.msra.mxu0 0.0
    %4387 = vmatprep.subr.mxu0 0.0
    %4388 = vmatpush1.msra.mxu0 0.0
    %4389 = vmatprep.subr.mxu0 0.0
    %4390 = vmatpush1.msra.mxu0 0.0
    %4391 = vmatprep.subr.mxu0 0.0
    %4392 = vmatpush1.msra.mxu0 0.0
    %4393 = vmatprep.mubr.f32.mxu0 0.0
    %4394 = vmatmul.mubr.f32.gmra.mrb[0].mxu0 %v4327
    %v4395 = vpop.f32.mrb[0].mxu0
    %v4396 = vadd.f32 0.0, %v4395
    %v4397 = vpop.f32.mrb[0].mxu0
    %4398 = vdwg.mxu0
    %v4400 = vsel %vm1160, %v3521, 0
    %v4403 = vsel %vm1160, %v3596, 0
    %v4406 = vsel %vm1160, %v3601, 0
    %4408 = vmatprep.subr.mxu0 0.0
    %4409 = vmatpush1.xpose.msra.mxu0 %v4403
    %4410 = vmatprep.subr.mxu0 0.0
    %4411 = vmatpush1.xpose.msra.mxu0 %v4406
    %4412 = vmatprep.subr.mxu0 0.0
    %4413 = vmatpush1.xpose.msra.mxu0 0.0
    %4414 = vmatprep.subr.mxu0 0.0
    %4415 = vmatpush1.xpose.msra.mxu0 0.0
    %4416 = vmatprep.subr.mxu0 0.0
    %4417 = vmatpush1.xpose.msra.mxu0 0.0
    %4418 = vmatprep.subr.mxu0 0.0
    %4419 = vmatpush1.xpose.msra.mxu0 0.0
    %4420 = vmatprep.subr.mxu0 0.0
    %4421 = vmatpush1.xpose.msra.mxu0 0.0
    %4422 = vmatprep.subr.mxu0 0.0
    %4423 = vmatpush1.xpose.msra.mxu0 0.0
    %4424 = vmatprep.subr.mxu0 0.0
    %4425 = vmatpush1.xpose.msra.mxu0 0.0
    %4426 = vmatprep.subr.mxu0 0.0
    %4427 = vmatpush1.xpose.msra.mxu0 0.0
    %4428 = vmatprep.subr.mxu0 0.0
    %4429 = vmatpush1.xpose.msra.mxu0 0.0
    %4430 = vmatprep.subr.mxu0 0.0
    %4431 = vmatpush1.xpose.msra.mxu0 0.0
    %4432 = vmatprep.subr.mxu0 0.0
    %4433 = vmatpush1.xpose.msra.mxu0 0.0
    %4434 = vmatprep.subr.mxu0 0.0
    %4435 = vmatpush1.xpose.msra.mxu0 0.0
    %4436 = vmatprep.subr.mxu0 0.0
    %4437 = vmatpush1.xpose.msra.mxu0 0.0
    %4438 = vmatprep.subr.mxu0 0.0
    %4439 = vmatpush1.xpose.msra.mxu0 0.0
    %4440 = vmatprep.subr.mxu0 0.0
    %4441 = vmatpush1.xpose.msra.mxu0 0.0
    %4442 = vmatprep.subr.mxu0 0.0
    %4443 = vmatpush1.xpose.msra.mxu0 0.0
    %4444 = vmatprep.subr.mxu0 0.0
    %4445 = vmatpush1.xpose.msra.mxu0 0.0
    %4446 = vmatprep.subr.mxu0 0.0
    %4447 = vmatpush1.xpose.msra.mxu0 0.0
    %4448 = vmatprep.subr.mxu0 0.0
    %4449 = vmatpush1.xpose.msra.mxu0 0.0
    %4450 = vmatprep.subr.mxu0 0.0
    %4451 = vmatpush1.xpose.msra.mxu0 0.0
    %4452 = vmatprep.subr.mxu0 0.0
    %4453 = vmatpush1.xpose.msra.mxu0 0.0
    %4454 = vmatprep.subr.mxu0 0.0
    %4455 = vmatpush1.xpose.msra.mxu0 0.0
    %4456 = vmatprep.subr.mxu0 0.0
    %4457 = vmatpush1.xpose.msra.mxu0 0.0
    %4458 = vmatprep.subr.mxu0 0.0
    %4459 = vmatpush1.xpose.msra.mxu0 0.0
    %4460 = vmatprep.subr.mxu0 0.0
    %4461 = vmatpush1.xpose.msra.mxu0 0.0
    %4462 = vmatprep.subr.mxu0 0.0
    %4463 = vmatpush1.xpose.msra.mxu0 0.0
    %4464 = vmatprep.subr.mxu0 0.0
    %4465 = vmatpush1.xpose.msra.mxu0 0.0
    %4466 = vmatprep.subr.mxu0 0.0
    %4467 = vmatpush1.xpose.msra.mxu0 0.0
    %4468 = vmatprep.subr.mxu0 0.0
    %4469 = vmatpush1.xpose.msra.mxu0 0.0
    %4470 = vmatprep.subr.mxu0 0.0
    %4471 = vmatpush1.xpose.msra.mxu0 0.0
    %4472 = vmatprep.mubr.f32.mxu0 0.0
    %4473 = vmatmul.mubr.f32.gmra.mrb[0].mxu0 %v4400
    %v4474 = vpop.f32.mrb[0].mxu0
    %v4475 = vadd.f32 0.0, %v4474
    %v4476 = vpop.f32.mrb[0].mxu0
    %4477 = vdwg.mxu0
    %v4478 = vsel %vm4314, %v4475, -inf
    %4479 = vmax.xlane.f32.xlu0 %v4478
    %v4480 = vpop.xlane.xlu0 %4479
    %v4481 = vsub.f32 %v4475, %v4480
    %v4482 = vmul.f32 %v4481, 1.442695
    %v4483 = vpow.pop %v4482
    %v4484 = vsel %vm4314, %v4483, 0.0
    %4485 = vadd.xlane.f32.xlu0 %v4484
    %v4486 = vpop.xlane.xlu0 %4485
    %v4487 = vrcp.pop %v4486
    %v4488 = vmul.f32 %v4483, %v4487
    %v4490 = vsel %vm4314, %v4488, 0
    %4492 = vmatprep.subr.mxu0 0.0
    %4493 = vmatpush1.msra.mxu0 %v3687
    %4494 = vmatprep.subr.mxu0 0.0
    %4495 = vmatpush1.msra.mxu0 %v3692
    %4496 = vmatprep.subr.mxu0 0.0
    %4497 = vmatpush1.msra.mxu0 0.0
    %4498 = vmatprep.subr.mxu0 0.0
    %4499 = vmatpush1.msra.mxu0 0.0
    %4500 = vmatprep.subr.mxu0 0.0
    %4501 = vmatpush1.msra.mxu0 0.0
    %4502 = vmatprep.subr.mxu0 0.0
    %4503 = vmatpush1.msra.mxu0 0.0
    %4504 = vmatprep.subr.mxu0 0.0
    %4505 = vmatpush1.msra.mxu0 0.0
    %4506 = vmatprep.subr.mxu0 0.0
    %4507 = vmatpush1.msra.mxu0 0.0
    %4508 = vmatprep.subr.mxu0 0.0
    %4509 = vmatpush1.msra.mxu0 0.0
    %4510 = vmatprep.subr.mxu0 0.0
    %4511 = vmatpush1.msra.mxu0 0.0
    %4512 = vmatprep.subr.mxu0 0.0
    %4513 = vmatpush1.msra.mxu0 0.0
    %4514 = vmatprep.subr.mxu0 0.0
    %4515 = vmatpush1.msra.mxu0 0.0
    %4516 = vmatprep.subr.mxu0 0.0
    %4517 = vmatpush1.msra.mxu0 0.0
    %4518 = vmatprep.subr.mxu0 0.0
    %4519 = vmatpush1.msra.mxu0 0.0
    %4520 = vmatprep.subr.mxu0 0.0
    %4521 = vmatpush1.msra.mxu0 0.0
    %4522 = vmatprep.subr.mxu0 0.0
    %4523 = vmatpush1.msra.mxu0 0.0
    %4524 = vmatprep.subr.mxu0 0.0
    %4525 = vmatpush1.msra.mxu0 0.0
    %4526 = vmatprep.subr.mxu0 0.0
    %4527 = vmatpush1.msra.mxu0 0.0
    %4528 = vmatprep.subr.mxu0 0.0
    %4529 = vmatpush1.msra.mxu0 0.0
    %4530 = vmatprep.subr.mxu0 0.0
    %4531 = vmatpush1.msra.mxu0 0.0
    %4532 = vmatprep.subr.mxu0 0.0
    %4533 = vmatpush1.msra.mxu0 0.0
    %4534 = vmatprep.subr.mxu0 0.0
    %4535 = vmatpush1.msra.mxu0 0.0
    %4536 = vmatprep.subr.mxu0 0.0
    %4537 = vmatpush1.msra.mxu0 0.0
    %4538 = vmatprep.subr.mxu0 0.0
    %4539 = vmatpush1.msra.mxu0 0.0
    %4540 = vmatprep.subr.mxu0 0.0
    %4541 = vmatpush1.msra.mxu0 0.0
    %4542 = vmatprep.subr.mxu0 0.0
    %4543 = vmatpush1.msra.mxu0 0.0
    %4544 = vmatprep.subr.mxu0 0.0
    %4545 = vmatpush1.msra.mxu0 0.0
    %4546 = vmatprep.subr.mxu0 0.0
    %4547 = vmatpush1.msra.mxu0 0.0
    %4548 = vmatprep.subr.mxu0 0.0
    %4549 = vmatpush1.msra.mxu0 0.0
    %4550 = vmatprep.subr.mxu0 0.0
    %4551 = vmatpush1.msra.mxu0 0.0
    %4552 = vmatprep.subr.mxu0 0.0
    %4553 = vmatpush1.msra.mxu0 0.0
    %4554 = vmatprep.subr.mxu0 0.0
    %4555 = vmatpush1.msra.mxu0 0.0
    %4556 = vmatprep.mubr.f32.mxu0 0.0
    %4557 = vmatmul.mubr.f32.gmra.mrb[0].mxu0 %v4490
    %v4558 = vpop.f32.mrb[0].mxu0
    %v4559 = vadd.f32 0.0, %v4558
    %v4560 = vpop.f32.mrb[0].mxu0
    %4561 = vdwg.mxu0
    %v4563 = vsel %vm1160, %v4559, 0
    %4565 = vmatprep.subr.mxu0 0.0
    %4566 = vmatpush1.msra.mxu0 %v3142
    %4567 = vmatprep.subr.mxu0 0.0
    %4568 = vmatpush1.msra.mxu0 0.0
    %4569 = vmatprep.subr.mxu0 0.0
    %4570 = vmatpush1.msra.mxu0 0.0
    %4571 = vmatprep.subr.mxu0 0.0
    %4572 = vmatpush1.msra.mxu0 0.0
    %4573 = vmatprep.subr.mxu0 0.0
    %4574 = vmatpush1.msra.mxu0 0.0
    %4575 = vmatprep.subr.mxu0 0.0
    %4576 = vmatpush1.msra.mxu0 0.0
    %4577 = vmatprep.subr.mxu0 0.0
    %4578 = vmatpush1.msra.mxu0 0.0
    %4579 = vmatprep.subr.mxu0 0.0
    %4580 = vmatpush1.msra.mxu0 0.0
    %4581 = vmatprep.subr.mxu0 0.0
    %4582 = vmatpush1.msra.mxu0 0.0
    %4583 = vmatprep.subr.mxu0 0.0
    %4584 = vmatpush1.msra.mxu0 0.0
    %4585 = vmatprep.subr.mxu0 0.0
    %4586 = vmatpush1.msra.mxu0 0.0
    %4587 = vmatprep.subr.mxu0 0.0
    %4588 = vmatpush1.msra.mxu0 0.0
    %4589 = vmatprep.subr.mxu0 0.0
    %4590 = vmatpush1.msra.mxu0 0.0
    %4591 = vmatprep.subr.mxu0 0.0
    %4592 = vmatpush1.msra.mxu0 0.0
    %4593 = vmatprep.subr.mxu0 0.0
    %4594 = vmatpush1.msra.mxu0 0.0
    %4595 = vmatprep.subr.mxu0 0.0
    %4596 = vmatpush1.msra.mxu0 0.0
    %4597 = vmatprep.subr.mxu0 0.0
    %4598 = vmatpush1.msra.mxu0 0.0
    %4599 = vmatprep.subr.mxu0 0.0
    %4600 = vmatpush1.msra.mxu0 0.0
    %4601 = vmatprep.subr.mxu0 0.0
    %4602 = vmatpush1.msra.mxu0 0.0
    %4603 = vmatprep.subr.mxu0 0.0
    %4604 = vmatpush1.msra.mxu0 0.0
    %4605 = vmatprep.subr.mxu0 0.0
    %4606 = vmatpush1.msra.mxu0 0.0
    %4607 = vmatprep.subr.mxu0 0.0
    %4608 = vmatpush1.msra.mxu0 0.0
    %4609 = vmatprep.subr.mxu0 0.0
    %4610 = vmatpush1.msra.mxu0 0.0
    %4611 = vmatprep.subr.mxu0 0.0
    %4612 = vmatpush1.msra.mxu0 0.0
    %4613 = vmatprep.subr.mxu0 0.0
    %4614 = vmatpush1.msra.mxu0 0.0
    %4615 = vmatprep.subr.mxu0 0.0
    %4616 = vmatpush1.msra.mxu0 0.0
    %4617 = vmatprep.subr.mxu0 0.0
    %4618 = vmatpush1.msra.mxu0 0.0
    %4619 = vmatprep.subr.mxu0 0.0
    %4620 = vmatpush1.msra.mxu0 0.0
    %4621 = vmatprep.subr.mxu0 0.0
    %4622 = vmatpush1.msra.mxu0 0.0
    %4623 = vmatprep.subr.mxu0 0.0
    %4624 = vmatpush1.msra.mxu0 0.0
    %4625 = vmatprep.subr.mxu0 0.0
    %4626 = vmatpush1.msra.mxu0 0.0
    %4627 = vmatprep.subr.mxu0 0.0
    %4628 = vmatpush1.msra.mxu0 0.0
    %4629 = vmatprep.mubr.f32.mxu0 0.0
    %4630 = vmatmul.mubr.f32.gmra.mrb[0].mxu0 %v4563
    %v4631 = vpop.f32.mrb[0].mxu0
    %v4632 = vadd.f32 0.0, %v4631
    %v4633 = vpop.f32.mrb[0].mxu0
    %4634 = vdwg.mxu0
    %v4636 = vsel %vm1160, %v4396, 0
    %4638 = vmatprep.subr.mxu0 0.0
    %4639 = vmatpush1.msra.mxu0 %v3141
    %4640 = vmatprep.subr.mxu0 0.0
    %4641 = vmatpush1.msra.mxu0 0.0
    %4642 = vmatprep.subr.mxu0 0.0
    %4643 = vmatpush1.msra.mxu0 0.0
    %4644 = vmatprep.subr.mxu0 0.0
    %4645 = vmatpush1.msra.mxu0 0.0
    %4646 = vmatprep.subr.mxu0 0.0
    %4647 = vmatpush1.msra.mxu0 0.0
    %4648 = vmatprep.subr.mxu0 0.0
    %4649 = vmatpush1.msra.mxu0 0.0
    %4650 = vmatprep.subr.mxu0 0.0
    %4651 = vmatpush1.msra.mxu0 0.0
    %4652 = vmatprep.subr.mxu0 0.0
    %4653 = vmatpush1.msra.mxu0 0.0
    %4654 = vmatprep.subr.mxu0 0.0
    %4655 = vmatpush1.msra.mxu0 0.0
    %4656 = vmatprep.subr.mxu0 0.0
    %4657 = vmatpush1.msra.mxu0 0.0
    %4658 = vmatprep.subr.mxu0 0.0
    %4659 = vmatpush1.msra.mxu0 0.0
    %4660 = vmatprep.subr.mxu0 0.0
    %4661 = vmatpush1.msra.mxu0 0.0
    %4662 = vmatprep.subr.mxu0 0.0
    %4663 = vmatpush1.msra.mxu0 0.0
    %4664 = vmatprep.subr.mxu0 0.0
    %4665 = vmatpush1.msra.mxu0 0.0
    %4666 = vmatprep.subr.mxu0 0.0
    %4667 = vmatpush1.msra.mxu0 0.0
    %4668 = vmatprep.subr.mxu0 0.0
    %4669 = vmatpush1.msra.mxu0 0.0
    %4670 = vmatprep.subr.mxu0 0.0
    %4671 = vmatpush1.msra.mxu0 0.0
    %4672 = vmatprep.subr.mxu0 0.0
    %4673 = vmatpush1.msra.mxu0 0.0
    %4674 = vmatprep.subr.mxu0 0.0
    %4675 = vmatpush1.msra.mxu0 0.0
    %4676 = vmatprep.subr.mxu0 0.0
    %4677 = vmatpush1.msra.mxu0 0.0
    %4678 = vmatprep.subr.mxu0 0.0
    %4679 = vmatpush1.msra.mxu0 0.0
    %4680 = vmatprep.subr.mxu0 0.0
    %4681 = vmatpush1.msra.mxu0 0.0
    %4682 = vmatprep.subr.mxu0 0.0
    %4683 = vmatpush1.msra.mxu0 0.0
    %4684 = vmatprep.subr.mxu0 0.0
    %4685 = vmatpush1.msra.mxu0 0.0
    %4686 = vmatprep.subr.mxu0 0.0
    %4687 = vmatpush1.msra.mxu0 0.0
    %4688 = vmatprep.subr.mxu0 0.0
    %4689 = vmatpush1.msra.mxu0 0.0
    %4690 = vmatprep.subr.mxu0 0.0
    %4691 = vmatpush1.msra.mxu0 0.0
    %4692 = vmatprep.subr.mxu0 0.0
    %4693 = vmatpush1.msra.mxu0 0.0
    %4694 = vmatprep.subr.mxu0 0.0
    %4695 = vmatpush1.msra.mxu0 0.0
    %4696 = vmatprep.subr.mxu0 0.0
    %4697 = vmatpush1.msra.mxu0 0.0
    %4698 = vmatprep.subr.mxu0 0.0
    %4699 = vmatpush1.msra.mxu0 0.0
    %4700 = vmatprep.subr.mxu0 0.0
    %4701 = vmatpush1.msra.mxu0 0.0
    %4702 = vmatprep.mubr.f32.mxu0 0.0
    %4703 = vmatmul.mubr.f32.gmra.mrb[0].mxu0 %v4636
    %v4704 = vpop.f32.mrb[0].mxu0
    %v4705 = vadd.f32 %v4632, %v4704
    %v4706 = vpop.f32.mrb[0].mxu0
    %4707 = vdwg.mxu0
    %v4709 = vsel %vm1160, %v3786, 0
    %v4712 = vsel %vm1160, %v3861, 0
    %v4715 = vsel %vm1160, %v3866, 0
    %4717 = vmatprep.subr.mxu0 0.0
    %4718 = vmatpush1.xpose.msra.mxu0 %v4712
    %4719 = vmatprep.subr.mxu0 0.0
    %4720 = vmatpush1.xpose.msra.mxu0 %v4715
    %4721 = vmatprep.subr.mxu0 0.0
    %4722 = vmatpush1.xpose.msra.mxu0 0.0
    %4723 = vmatprep.subr.mxu0 0.0
    %4724 = vmatpush1.xpose.msra.mxu0 0.0
    %4725 = vmatprep.subr.mxu0 0.0
    %4726 = vmatpush1.xpose.msra.mxu0 0.0
    %4727 = vmatprep.subr.mxu0 0.0
    %4728 = vmatpush1.xpose.msra.mxu0 0.0
    %4729 = vmatprep.subr.mxu0 0.0
    %4730 = vmatpush1.xpose.msra.mxu0 0.0
    %4731 = vmatprep.subr.mxu0 0.0
    %4732 = vmatpush1.xpose.msra.mxu0 0.0
    %4733 = vmatprep.subr.mxu0 0.0
    %4734 = vmatpush1.xpose.msra.mxu0 0.0
    %4735 = vmatprep.subr.mxu0 0.0
    %4736 = vmatpush1.xpose.msra.mxu0 0.0
    %4737 = vmatprep.subr.mxu0 0.0
    %4738 = vmatpush1.xpose.msra.mxu0 0.0
    %4739 = vmatprep.subr.mxu0 0.0
    %4740 = vmatpush1.xpose.msra.mxu0 0.0
    %4741 = vmatprep.subr.mxu0 0.0
    %4742 = vmatpush1.xpose.msra.mxu0 0.0
    %4743 = vmatprep.subr.mxu0 0.0
    %4744 = vmatpush1.xpose.msra.mxu0 0.0
    %4745 = vmatprep.subr.mxu0 0.0
    %4746 = vmatpush1.xpose.msra.mxu0 0.0
    %4747 = vmatprep.subr.mxu0 0.0
    %4748 = vmatpush1.xpose.msra.mxu0 0.0
    %4749 = vmatprep.subr.mxu0 0.0
    %4750 = vmatpush1.xpose.msra.mxu0 0.0
    %4751 = vmatprep.subr.mxu0 0.0
    %4752 = vmatpush1.xpose.msra.mxu0 0.0
    %4753 = vmatprep.subr.mxu0 0.0
    %4754 = vmatpush1.xpose.msra.mxu0 0.0
    %4755 = vmatprep.subr.mxu0 0.0
    %4756 = vmatpush1.xpose.msra.mxu0 0.0
    %4757 = vmatprep.subr.mxu0 0.0
    %4758 = vmatpush1.xpose.msra.mxu0 0.0
    %4759 = vmatprep.subr.mxu0 0.0
    %4760 = vmatpush1.xpose.msra.mxu0 0.0
    %4761 = vmatprep.subr.mxu0 0.0
    %4762 = vmatpush1.xpose.msra.mxu0 0.0
    %4763 = vmatprep.subr.mxu0 0.0
    %4764 = vmatpush1.xpose.msra.mxu0 0.0
    %4765 = vmatprep.subr.mxu0 0.0
    %4766 = vmatpush1.xpose.msra.mxu0 0.0
    %4767 = vmatprep.subr.mxu0 0.0
    %4768 = vmatpush1.xpose.msra.mxu0 0.0
    %4769 = vmatprep.subr.mxu0 0.0
    %4770 = vmatpush1.xpose.msra.mxu0 0.0
    %4771 = vmatprep.subr.mxu0 0.0
    %4772 = vmatpush1.xpose.msra.mxu0 0.0
    %4773 = vmatprep.subr.mxu0 0.0
    %4774 = vmatpush1.xpose.msra.mxu0 0.0
    %4775 = vmatprep.subr.mxu0 0.0
    %4776 = vmatpush1.xpose.msra.mxu0 0.0
    %4777 = vmatprep.subr.mxu0 0.0
    %4778 = vmatpush1.xpose.msra.mxu0 0.0
    %4779 = vmatprep.subr.mxu0 0.0
    %4780 = vmatpush1.xpose.msra.mxu0 0.0
    %4781 = vmatprep.mubr.f32.mxu0 0.0
    %4782 = vmatmul.mubr.f32.gmra.mrb[0].mxu0 %v4709
    %v4783 = vpop.f32.mrb[0].mxu0
    %v4784 = vadd.f32 0.0, %v4783
    %v4785 = vpop.f32.mrb[0].mxu0
    %4786 = vdwg.mxu0
    %v4787 = vsel %vm4314, %v4784, -inf
    %4788 = vmax.xlane.f32.xlu0 %v4787
    %v4789 = vpop.xlane.xlu0 %4788
    %v4790 = vsub.f32 %v4784, %v4789
    %v4791 = vmul.f32 %v4790, 1.442695
    %v4792 = vpow.pop %v4791
    %v4793 = vsel %vm4314, %v4792, 0.0
    %4794 = vadd.xlane.f32.xlu0 %v4793
    %v4795 = vpop.xlane.xlu0 %4794
    %v4796 = vrcp.pop %v4795
    %v4797 = vmul.f32 %v4792, %v4796
    %v4799 = vsel %vm4314, %v4797, 0
    %4801 = vmatprep.subr.mxu0 0.0
    %4802 = vmatpush1.msra.mxu0 %v3952
    %4803 = vmatprep.subr.mxu0 0.0
    %4804 = vmatpush1.msra.mxu0 %v3957
    %4805 = vmatprep.subr.mxu0 0.0
    %4806 = vmatpush1.msra.mxu0 0.0
    %4807 = vmatprep.subr.mxu0 0.0
    %4808 = vmatpush1.msra.mxu0 0.0
    %4809 = vmatprep.subr.mxu0 0.0
    %4810 = vmatpush1.msra.mxu0 0.0
    %4811 = vmatprep.subr.mxu0 0.0
    %4812 = vmatpush1.msra.mxu0 0.0
    %4813 = vmatprep.subr.mxu0 0.0
    %4814 = vmatpush1.msra.mxu0 0.0
    %4815 = vmatprep.subr.mxu0 0.0
    %4816 = vmatpush1.msra.mxu0 0.0
    %4817 = vmatprep.subr.mxu0 0.0
    %4818 = vmatpush1.msra.mxu0 0.0
    %4819 = vmatprep.subr.mxu0 0.0
    %4820 = vmatpush1.msra.mxu0 0.0
    %4821 = vmatprep.subr.mxu0 0.0
    %4822 = vmatpush1.msra.mxu0 0.0
    %4823 = vmatprep.subr.mxu0 0.0
    %4824 = vmatpush1.msra.mxu0 0.0
    %4825 = vmatprep.subr.mxu0 0.0
    %4826 = vmatpush1.msra.mxu0 0.0
    %4827 = vmatprep.subr.mxu0 0.0
    %4828 = vmatpush1.msra.mxu0 0.0
    %4829 = vmatprep.subr.mxu0 0.0
    %4830 = vmatpush1.msra.mxu0 0.0
    %4831 = vmatprep.subr.mxu0 0.0
    %4832 = vmatpush1.msra.mxu0 0.0
    %4833 = vmatprep.subr.mxu0 0.0
    %4834 = vmatpush1.msra.mxu0 0.0
    %4835 = vmatprep.subr.mxu0 0.0
    %4836 = vmatpush1.msra.mxu0 0.0
    %4837 = vmatprep.subr.mxu0 0.0
    %4838 = vmatpush1.msra.mxu0 0.0
    %4839 = vmatprep.subr.mxu0 0.0
    %4840 = vmatpush1.msra.mxu0 0.0
    %4841 = vmatprep.subr.mxu0 0.0
    %4842 = vmatpush1.msra.mxu0 0.0
    %4843 = vmatprep.subr.mxu0 0.0
    %4844 = vmatpush1.msra.mxu0 0.0
    %4845 = vmatprep.subr.mxu0 0.0
    %4846 = vmatpush1.msra.mxu0 0.0
    %4847 = vmatprep.subr.mxu0 0.0
    %4848 = vmatpush1.msra.mxu0 0.0
    %4849 = vmatprep.subr.mxu0 0.0
    %4850 = vmatpush1.msra.mxu0 0.0
    %4851 = vmatprep.subr.mxu0 0.0
    %4852 = vmatpush1.msra.mxu0 0.0
    %4853 = vmatprep.subr.mxu0 0.0
    %4854 = vmatpush1.msra.mxu0 0.0
    %4855 = vmatprep.subr.mxu0 0.0
    %4856 = vmatpush1.msra.mxu0 0.0
    %4857 = vmatprep.subr.mxu0 0.0
    %4858 = vmatpush1.msra.mxu0 0.0
    %4859 = vmatprep.subr.mxu0 0.0
    %4860 = vmatpush1.msra.mxu0 0.0
    %4861 = vmatprep.subr.mxu0 0.0
    %4862 = vmatpush1.msra.mxu0 0.0
    %4863 = vmatprep.subr.mxu0 0.0
    %4864 = vmatpush1.msra.mxu0 0.0
    %4865 = vmatprep.mubr.f32.mxu0 0.0
    %4866 = vmatmul.mubr.f32.gmra.mrb[0].mxu0 %v4799
    %v4867 = vpop.f32.mrb[0].mxu0
    %v4868 = vadd.f32 0.0, %v4867
    %v4869 = vpop.f32.mrb[0].mxu0
    %4870 = vdwg.mxu0
    %v4872 = vsel %vm1160, %v4868, 0
    %4874 = vmatprep.subr.mxu0 0.0
    %4875 = vmatpush1.msra.mxu0 %v3143
    %4876 = vmatprep.subr.mxu0 0.0
    %4877 = vmatpush1.msra.mxu0 0.0
    %4878 = vmatprep.subr.mxu0 0.0
    %4879 = vmatpush1.msra.mxu0 0.0
    %4880 = vmatprep.subr.mxu0 0.0
    %4881 = vmatpush1.msra.mxu0 0.0
    %4882 = vmatprep.subr.mxu0 0.0
    %4883 = vmatpush1.msra.mxu0 0.0
    %4884 = vmatprep.subr.mxu0 0.0
    %4885 = vmatpush1.msra.mxu0 0.0
    %4886 = vmatprep.subr.mxu0 0.0
    %4887 = vmatpush1.msra.mxu0 0.0
    %4888 = vmatprep.subr.mxu0 0.0
    %4889 = vmatpush1.msra.mxu0 0.0
    %4890 = vmatprep.subr.mxu0 0.0
    %4891 = vmatpush1.msra.mxu0 0.0
    %4892 = vmatprep.subr.mxu0 0.0
    %4893 = vmatpush1.msra.mxu0 0.0
    %4894 = vmatprep.subr.mxu0 0.0
    %4895 = vmatpush1.msra.mxu0 0.0
    %4896 = vmatprep.subr.mxu0 0.0
    %4897 = vmatpush1.msra.mxu0 0.0
    %4898 = vmatprep.subr.mxu0 0.0
    %4899 = vmatpush1.msra.mxu0 0.0
    %4900 = vmatprep.subr.mxu0 0.0
    %4901 = vmatpush1.msra.mxu0 0.0
    %4902 = vmatprep.subr.mxu0 0.0
    %4903 = vmatpush1.msra.mxu0 0.0
    %4904 = vmatprep.subr.mxu0 0.0
    %4905 = vmatpush1.msra.mxu0 0.0
    %4906 = vmatprep.subr.mxu0 0.0
    %4907 = vmatpush1.msra.mxu0 0.0
    %4908 = vmatprep.subr.mxu0 0.0
    %4909 = vmatpush1.msra.mxu0 0.0
    %4910 = vmatprep.subr.mxu0 0.0
    %4911 = vmatpush1.msra.mxu0 0.0
    %4912 = vmatprep.subr.mxu0 0.0
    %4913 = vmatpush1.msra.mxu0 0.0
    %4914 = vmatprep.subr.mxu0 0.0
    %4915 = vmatpush1.msra.mxu0 0.0
    %4916 = vmatprep.subr.mxu0 0.0
    %4917 = vmatpush1.msra.mxu0 0.0
    %4918 = vmatprep.subr.mxu0 0.0
    %4919 = vmatpush1.msra.mxu0 0.0
    %4920 = vmatprep.subr.mxu0 0.0
    %4921 = vmatpush1.msra.mxu0 0.0
    %4922 = vmatprep.subr.mxu0 0.0
    %4923 = vmatpush1.msra.mxu0 0.0
    %4924 = vmatprep.subr.mxu0 0.0
    %4925 = vmatpush1.msra.mxu0 0.0
    %4926 = vmatprep.subr.mxu0 0.0
    %4927 = vmatpush1.msra.mxu0 0.0
    %4928 = vmatprep.subr.mxu0 0.0
    %4929 = vmatpush1.msra.mxu0 0.0
    %4930 = vmatprep.subr.mxu0 0.0
    %4931 = vmatpush1.msra.mxu0 0.0
    %4932 = vmatprep.subr.mxu0 0.0
    %4933 = vmatpush1.msra.mxu0 0.0
    %4934 = vmatprep.subr.mxu0 0.0
    %4935 = vmatpush1.msra.mxu0 0.0
    %4936 = vmatprep.subr.mxu0 0.0
    %4937 = vmatpush1.msra.mxu0 0.0
    %4938 = vmatprep.mubr.f32.mxu0 0.0
    %4939 = vmatmul.mubr.f32.gmra.mrb[0].mxu0 %v4872
    %v4940 = vpop.f32.mrb[0].mxu0
    %v4941 = vadd.f32 0.0, %v4940
    %v4942 = vpop.f32.mrb[0].mxu0
    %4943 = vdwg.mxu0
    %v4944 = vadd.f32 %v4705, %v4941
    %v4946 = vsel %vm1160, %v4051, 0
    %v4949 = vsel %vm1160, %v4126, 0
    %v4952 = vsel %vm1160, %v4131, 0
    %4954 = vmatprep.subr.mxu0 0.0
    %4955 = vmatpush1.xpose.msra.mxu0 %v4949
    %4956 = vmatprep.subr.mxu0 0.0
    %4957 = vmatpush1.xpose.msra.mxu0 %v4952
    %4958 = vmatprep.subr.mxu0 0.0
    %4959 = vmatpush1.xpose.msra.mxu0 0.0
    %4960 = vmatprep.subr.mxu0 0.0
    %4961 = vmatpush1.xpose.msra.mxu0 0.0
    %4962 = vmatprep.subr.mxu0 0.0
    %4963 = vmatpush1.xpose.msra.mxu0 0.0
    %4964 = vmatprep.subr.mxu0 0.0
    %4965 = vmatpush1.xpose.msra.mxu0 0.0
    %4966 = vmatprep.subr.mxu0 0.0
    %4967 = vmatpush1.xpose.msra.mxu0 0.0
    %4968 = vmatprep.subr.mxu0 0.0
    %4969 = vmatpush1.xpose.msra.mxu0 0.0
    %4970 = vmatprep.subr.mxu0 0.0
    %4971 = vmatpush1.xpose.msra.mxu0 0.0
    %4972 = vmatprep.subr.mxu0 0.0
    %4973 = vmatpush1.xpose.msra.mxu0 0.0
    %4974 = vmatprep.subr.mxu0 0.0
    %4975 = vmatpush1.xpose.msra.mxu0 0.0
    %4976 = vmatprep.subr.mxu0 0.0
    %4977 = vmatpush1.xpose.msra.mxu0 0.0
    %4978 = vmatprep.subr.mxu0 0.0
    %4979 = vmatpush1.xpose.msra.mxu0 0.0
    %4980 = vmatprep.subr.mxu0 0.0
    %4981 = vmatpush1.xpose.msra.mxu0 0.0
    %4982 = vmatprep.subr.mxu0 0.0
    %4983 = vmatpush1.xpose.msra.mxu0 0.0
    %4984 = vmatprep.subr.mxu0 0.0
    %4985 = vmatpush1.xpose.msra.mxu0 0.0
    %4986 = vmatprep.subr.mxu0 0.0
    %4987 = vmatpush1.xpose.msra.mxu0 0.0
    %4988 = vmatprep.subr.mxu0 0.0
    %4989 = vmatpush1.xpose.msra.mxu0 0.0
    %4990 = vmatprep.subr.mxu0 0.0
    %4991 = vmatpush1.xpose.msra.mxu0 0.0
    %4992 = vmatprep.subr.mxu0 0.0
    %4993 = vmatpush1.xpose.msra.mxu0 0.0
    %4994 = vmatprep.subr.mxu0 0.0
    %4995 = vmatpush1.xpose.msra.mxu0 0.0
    %4996 = vmatprep.subr.mxu0 0.0
    %4997 = vmatpush1.xpose.msra.mxu0 0.0
    %4998 = vmatprep.subr.mxu0 0.0
    %4999 = vmatpush1.xpose.msra.mxu0 0.0
    %5000 = vmatprep.subr.mxu0 0.0
    %5001 = vmatpush1.xpose.msra.mxu0 0.0
    %5002 = vmatprep.subr.mxu0 0.0
    %5003 = vmatpush1.xpose.msra.mxu0 0.0
    %5004 = vmatprep.subr.mxu0 0.0
    %5005 = vmatpush1.xpose.msra.mxu0 0.0
    %5006 = vmatprep.subr.mxu0 0.0
    %5007 = vmatpush1.xpose.msra.mxu0 0.0
    %5008 = vmatprep.subr.mxu0 0.0
    %5009 = vmatpush1.xpose.msra.mxu0 0.0
    %5010 = vmatprep.subr.mxu0 0.0
    %5011 = vmatpush1.xpose.msra.mxu0 0.0
    %5012 = vmatprep.subr.mxu0 0.0
    %5013 = vmatpush1.xpose.msra.mxu0 0.0
    %5014 = vmatprep.subr.mxu0 0.0
    %5015 = vmatpush1.xpose.msra.mxu0 0.0
    %5016 = vmatprep.subr.mxu0 0.0
    %5017 = vmatpush1.xpose.msra.mxu0 0.0
    %5018 = vmatprep.mubr.f32.mxu0 0.0
    %5019 = vmatmul.mubr.f32.gmra.mrb[0].mxu0 %v4946
    %v5020 = vpop.f32.mrb[0].mxu0
    %v5021 = vadd.f32 0.0, %v5020
    %v5022 = vpop.f32.mrb[0].mxu0
    %5023 = vdwg.mxu0
    %v5024 = vsel %vm4314, %v5021, -inf
    %5025 = vmax.xlane.f32.xlu0 %v5024
    %v5026 = vpop.xlane.xlu0 %5025
    %v5027 = vsub.f32 %v5021, %v5026
    %v5028 = vmul.f32 %v5027, 1.442695
    %v5029 = vpow.pop %v5028
    %v5030 = vsel %vm4314, %v5029, 0.0
    %5031 = vadd.xlane.f32.xlu0 %v5030
    %v5032 = vpop.xlane.xlu0 %5031
    %v5033 = vrcp.pop %v5032
    %v5034 = vmul.f32 %v5029, %v5033
    %v5036 = vsel %vm4314, %v5034, 0
    %5038 = vmatprep.subr.mxu0 0.0
    %5039 = vmatpush1.msra.mxu0 %v4217
    %5040 = vmatprep.subr.mxu0 0.0
    %5041 = vmatpush1.msra.mxu0 %v4222
    %5042 = vmatprep.subr.mxu0 0.0
    %5043 = vmatpush1.msra.mxu0 0.0
    %5044 = vmatprep.subr.mxu0 0.0
    %5045 = vmatpush1.msra.mxu0 0.0
    %5046 = vmatprep.subr.mxu0 0.0
    %5047 = vmatpush1.msra.mxu0 0.0
    %5048 = vmatprep.subr.mxu0 0.0
    %5049 = vmatpush1.msra.mxu0 0.0
    %5050 = vmatprep.subr.mxu0 0.0
    %5051 = vmatpush1.msra.mxu0 0.0
    %5052 = vmatprep.subr.mxu0 0.0
    %5053 = vmatpush1.msra.mxu0 0.0
    %5054 = vmatprep.subr.mxu0 0.0
    %5055 = vmatpush1.msra.mxu0 0.0
    %5056 = vmatprep.subr.mxu0 0.0
    %5057 = vmatpush1.msra.mxu0 0.0
    %5058 = vmatprep.subr.mxu0 0.0
    %5059 = vmatpush1.msra.mxu0 0.0
    %5060 = vmatprep.subr.mxu0 0.0
    %5061 = vmatpush1.msra.mxu0 0.0
    %5062 = vmatprep.subr.mxu0 0.0
    %5063 = vmatpush1.msra.mxu0 0.0
    %5064 = vmatprep.subr.mxu0 0.0
    %5065 = vmatpush1.msra.mxu0 0.0
    %5066 = vmatprep.subr.mxu0 0.0
    %5067 = vmatpush1.msra.mxu0 0.0
    %5068 = vmatprep.subr.mxu0 0.0
    %5069 = vmatpush1.msra.mxu0 0.0
    %5070 = vmatprep.subr.mxu0 0.0
    %5071 = vmatpush1.msra.mxu0 0.0
    %5072 = vmatprep.subr.mxu0 0.0
    %5073 = vmatpush1.msra.mxu0 0.0
    %5074 = vmatprep.subr.mxu0 0.0
    %5075 = vmatpush1.msra.mxu0 0.0
    %5076 = vmatprep.subr.mxu0 0.0
    %5077 = vmatpush1.msra.mxu0 0.0
    %5078 = vmatprep.subr.mxu0 0.0
    %5079 = vmatpush1.msra.mxu0 0.0
    %5080 = vmatprep.subr.mxu0 0.0
    %5081 = vmatpush1.msra.mxu0 0.0
    %5082 = vmatprep.subr.mxu0 0.0
    %5083 = vmatpush1.msra.mxu0 0.0
    %5084 = vmatprep.subr.mxu0 0.0
    %5085 = vmatpush1.msra.mxu0 0.0
    %5086 = vmatprep.subr.mxu0 0.0
    %5087 = vmatpush1.msra.mxu0 0.0
    %5088 = vmatprep.subr.mxu0 0.0
    %5089 = vmatpush1.msra.mxu0 0.0
    %5090 = vmatprep.subr.mxu0 0.0
    %5091 = vmatpush1.msra.mxu0 0.0
    %5092 = vmatprep.subr.mxu0 0.0
    %5093 = vmatpush1.msra.mxu0 0.0
    %5094 = vmatprep.subr.mxu0 0.0
    %5095 = vmatpush1.msra.mxu0 0.0
    %5096 = vmatprep.subr.mxu0 0.0
    %5097 = vmatpush1.msra.mxu0 0.0
    %5098 = vmatprep.subr.mxu0 0.0
    %5099 = vmatpush1.msra.mxu0 0.0
    %5100 = vmatprep.subr.mxu0 0.0
    %5101 = vmatpush1.msra.mxu0 0.0
    %5102 = vmatprep.mubr.f32.mxu0 0.0
    %5103 = vmatmul.mubr.f32.gmra.mrb[0].mxu0 %v5036
    %v5104 = vpop.f32.mrb[0].mxu0
    %v5105 = vadd.f32 0.0, %v5104
    %v5106 = vpop.f32.mrb[0].mxu0
    %5107 = vdwg.mxu0
    %v5109 = vsel %vm1160, %v5105, 0
    %5111 = vmatprep.subr.mxu0 0.0
    %5112 = vmatpush1.msra.mxu0 %v3144
    %5113 = vmatprep.subr.mxu0 0.0
    %5114 = vmatpush1.msra.mxu0 0.0
    %5115 = vmatprep.subr.mxu0 0.0
    %5116 = vmatpush1.msra.mxu0 0.0
    %5117 = vmatprep.subr.mxu0 0.0
    %5118 = vmatpush1.msra.mxu0 0.0
    %5119 = vmatprep.subr.mxu0 0.0
    %5120 = vmatpush1.msra.mxu0 0.0
    %5121 = vmatprep.subr.mxu0 0.0
    %5122 = vmatpush1.msra.mxu0 0.0
    %5123 = vmatprep.subr.mxu0 0.0
    %5124 = vmatpush1.msra.mxu0 0.0
    %5125 = vmatprep.subr.mxu0 0.0
    %5126 = vmatpush1.msra.mxu0 0.0
    %5127 = vmatprep.subr.mxu0 0.0
    %5128 = vmatpush1.msra.mxu0 0.0
    %5129 = vmatprep.subr.mxu0 0.0
    %5130 = vmatpush1.msra.mxu0 0.0
    %5131 = vmatprep.subr.mxu0 0.0
    %5132 = vmatpush1.msra.mxu0 0.0
    %5133 = vmatprep.subr.mxu0 0.0
    %5134 = vmatpush1.msra.mxu0 0.0
    %5135 = vmatprep.subr.mxu0 0.0
    %5136 = vmatpush1.msra.mxu0 0.0
    %5137 = vmatprep.subr.mxu0 0.0
    %5138 = vmatpush1.msra.mxu0 0.0
    %5139 = vmatprep.subr.mxu0 0.0
    %5140 = vmatpush1.msra.mxu0 0.0
    %5141 = vmatprep.subr.mxu0 0.0
    %5142 = vmatpush1.msra.mxu0 0.0
    %5143 = vmatprep.subr.mxu0 0.0
    %5144 = vmatpush1.msra.mxu0 0.0
    %5145 = vmatprep.subr.mxu0 0.0
    %5146 = vmatpush1.msra.mxu0 0.0
    %5147 = vmatprep.subr.mxu0 0.0
    %5148 = vmatpush1.msra.mxu0 0.0
    %5149 = vmatprep.subr.mxu0 0.0
    %5150 = vmatpush1.msra.mxu0 0.0
    %5151 = vmatprep.subr.mxu0 0.0
    %5152 = vmatpush1.msra.mxu0 0.0
    %5153 = vmatprep.subr.mxu0 0.0
    %5154 = vmatpush1.msra.mxu0 0.0
    %5155 = vmatprep.subr.mxu0 0.0
    %5156 = vmatpush1.msra.mxu0 0.0
    %5157 = vmatprep.subr.mxu0 0.0
    %5158 = vmatpush1.msra.mxu0 0.0
    %5159 = vmatprep.subr.mxu0 0.0
    %5160 = vmatpush1.msra.mxu0 0.0
    %5161 = vmatprep.subr.mxu0 0.0
    %5162 = vmatpush1.msra.mxu0 0.0
    %5163 = vmatprep.subr.mxu0 0.0
    %5164 = vmatpush1.msra.mxu0 0.0
    %5165 = vmatprep.subr.mxu0 0.0
    %5166 = vmatpush1.msra.mxu0 0.0
    %5167 = vmatprep.subr.mxu0 0.0
    %5168 = vmatpush1.msra.mxu0 0.0
    %5169 = vmatprep.subr.mxu0 0.0
    %5170 = vmatpush1.msra.mxu0 0.0
    %5171 = vmatprep.subr.mxu0 0.0
    %5172 = vmatpush1.msra.mxu0 0.0
    %5173 = vmatprep.subr.mxu0 0.0
    %5174 = vmatpush1.msra.mxu0 0.0
    %5175 = vmatprep.mubr.f32.mxu0 0.0
    %5176 = vmatmul.mubr.f32.gmra.mrb[0].mxu0 %v5109
    %v5177 = vpop.f32.mrb[0].mxu0
    %v5178 = vadd.f32 0.0, %v5177
    %v5179 = vpop.f32.mrb[0].mxu0
    %5180 = vdwg.mxu0
    %v5181 = vadd.f32 %v4944, %v5178
    %v5183 = vsel %vm1160, %v3233, 0
    %v5186 = vsel %vm1160, %v3329, 0
    %v5189 = vsel %vm1160, %v3334, 0
    %5191 = vmatprep.subr.mxu0 0.0
    %5192 = vmatpush1.xpose.msra.mxu0 %v5186
    %5193 = vmatprep.subr.mxu0 0.0
    %5194 = vmatpush1.xpose.msra.mxu0 %v5189
    %5195 = vmatprep.subr.mxu0 0.0
    %5196 = vmatpush1.xpose.msra.mxu0 0.0
    %5197 = vmatprep.subr.mxu0 0.0
    %5198 = vmatpush1.xpose.msra.mxu0 0.0
    %5199 = vmatprep.subr.mxu0 0.0
    %5200 = vmatpush1.xpose.msra.mxu0 0.0
    %5201 = vmatprep.subr.mxu0 0.0
    %5202 = vmatpush1.xpose.msra.mxu0 0.0
    %5203 = vmatprep.subr.mxu0 0.0
    %5204 = vmatpush1.xpose.msra.mxu0 0.0
    %5205 = vmatprep.subr.mxu0 0.0
    %5206 = vmatpush1.xpose.msra.mxu0 0.0
    %5207 = vmatprep.subr.mxu0 0.0
    %5208 = vmatpush1.xpose.msra.mxu0 0.0
    %5209 = vmatprep.subr.mxu0 0.0
    %5210 = vmatpush1.xpose.msra.mxu0 0.0
    %5211 = vmatprep.subr.mxu0 0.0
    %5212 = vmatpush1.xpose.msra.mxu0 0.0
    %5213 = vmatprep.subr.mxu0 0.0
    %5214 = vmatpush1.xpose.msra.mxu0 0.0
    %5215 = vmatprep.subr.mxu0 0.0
    %5216 = vmatpush1.xpose.msra.mxu0 0.0
    %5217 = vmatprep.subr.mxu0 0.0
    %5218 = vmatpush1.xpose.msra.mxu0 0.0
    %5219 = vmatprep.subr.mxu0 0.0
    %5220 = vmatpush1.xpose.msra.mxu0 0.0
    %5221 = vmatprep.subr.mxu0 0.0
    %5222 = vmatpush1.xpose.msra.mxu0 0.0
    %5223 = vmatprep.subr.mxu0 0.0
    %5224 = vmatpush1.xpose.msra.mxu0 0.0
    %5225 = vmatprep.subr.mxu0 0.0
    %5226 = vmatpush1.xpose.msra.mxu0 0.0
    %5227 = vmatprep.subr.mxu0 0.0
    %5228 = vmatpush1.xpose.msra.mxu0 0.0
    %5229 = vmatprep.subr.mxu0 0.0
    %5230 = vmatpush1.xpose.msra.mxu0 0.0
    %5231 = vmatprep.subr.mxu0 0.0
    %5232 = vmatpush1.xpose.msra.mxu0 0.0
    %5233 = vmatprep.subr.mxu0 0.0
    %5234 = vmatpush1.xpose.msra.mxu0 0.0
    %5235 = vmatprep.subr.mxu0 0.0
    %5236 = vmatpush1.xpose.msra.mxu0 0.0
    %5237 = vmatprep.subr.mxu0 0.0
    %5238 = vmatpush1.xpose.msra.mxu0 0.0
    %5239 = vmatprep.subr.mxu0 0.0
    %5240 = vmatpush1.xpose.msra.mxu0 0.0
    %5241 = vmatprep.subr.mxu0 0.0
    %5242 = vmatpush1.xpose.msra.mxu0 0.0
    %5243 = vmatprep.subr.mxu0 0.0
    %5244 = vmatpush1.xpose.msra.mxu0 0.0
    %5245 = vmatprep.subr.mxu0 0.0
    %5246 = vmatpush1.xpose.msra.mxu0 0.0
    %5247 = vmatprep.subr.mxu0 0.0
    %5248 = vmatpush1.xpose.msra.mxu0 0.0
    %5249 = vmatprep.subr.mxu0 0.0
    %5250 = vmatpush1.xpose.msra.mxu0 0.0
    %5251 = vmatprep.subr.mxu0 0.0
    %5252 = vmatpush1.xpose.msra.mxu0 0.0
    %5253 = vmatprep.subr.mxu0 0.0
    %5254 = vmatpush1.xpose.msra.mxu0 0.0
    %5255 = vmatprep.mubr.f32.mxu0 0.0
    %5256 = vmatmul.mubr.f32.gmra.mrb[0].mxu0 %v5183
    %v5257 = vpop.f32.mrb[0].mxu0
    %v5258 = vadd.f32 0.0, %v5257
    %v5259 = vpop.f32.mrb[0].mxu0
    %5260 = vdwg.mxu0
    %v5261 = vsel %vm4314, %v5258, -inf
    %5262 = vmax.xlane.f32.xlu0 %v5261
    %v5263 = vpop.xlane.xlu0 %5262
    %v5264 = vsub.f32 %v5258, %v5263
    %v5265 = vmul.f32 %v5264, 1.442695
    %v5266 = vpow.pop %v5265
    %v5267 = vsel %vm4314, %v5266, 0.0
    %5268 = vadd.xlane.f32.xlu0 %v5267
    %v5269 = vpop.xlane.xlu0 %5268
    %v5270 = vrcp.pop %v5269
    %v5271 = vmul.f32 %v5266, %v5270
    %v5273 = vsel %vm4314, %v5271, 0
    %5275 = vmatprep.subr.mxu0 0.0
    %5276 = vmatpush1.msra.mxu0 %v3432
    %5277 = vmatprep.subr.mxu0 0.0
    %5278 = vmatpush1.msra.mxu0 %v3437
    %5279 = vmatprep.subr.mxu0 0.0
    %5280 = vmatpush1.msra.mxu0 0.0
    %5281 = vmatprep.subr.mxu0 0.0
    %5282 = vmatpush1.msra.mxu0 0.0
    %5283 = vmatprep.subr.mxu0 0.0
    %5284 = vmatpush1.msra.mxu0 0.0
    %5285 = vmatprep.subr.mxu0 0.0
    %5286 = vmatpush1.msra.mxu0 0.0
    %5287 = vmatprep.subr.mxu0 0.0
    %5288 = vmatpush1.msra.mxu0 0.0
    %5289 = vmatprep.subr.mxu0 0.0
    %5290 = vmatpush1.msra.mxu0 0.0
    %5291 = vmatprep.subr.mxu0 0.0
    %5292 = vmatpush1.msra.mxu0 0.0
    %5293 = vmatprep.subr.mxu0 0.0
    %5294 = vmatpush1.msra.mxu0 0.0
    %5295 = vmatprep.subr.mxu0 0.0
    %5296 = vmatpush1.msra.mxu0 0.0
    %5297 = vmatprep.subr.mxu0 0.0
    %5298 = vmatpush1.msra.mxu0 0.0
    %5299 = vmatprep.subr.mxu0 0.0
    %5300 = vmatpush1.msra.mxu0 0.0
    %5301 = vmatprep.subr.mxu0 0.0
    %5302 = vmatpush1.msra.mxu0 0.0
    %5303 = vmatprep.subr.mxu0 0.0
    %5304 = vmatpush1.msra.mxu0 0.0
    %5305 = vmatprep.subr.mxu0 0.0
    %5306 = vmatpush1.msra.mxu0 0.0
    %5307 = vmatprep.subr.mxu0 0.0
    %5308 = vmatpush1.msra.mxu0 0.0
    %5309 = vmatprep.subr.mxu0 0.0
    %5310 = vmatpush1.msra.mxu0 0.0
    %5311 = vmatprep.subr.mxu0 0.0
    %5312 = vmatpush1.msra.mxu0 0.0
    %5313 = vmatprep.subr.mxu0 0.0
    %5314 = vmatpush1.msra.mxu0 0.0
    %5315 = vmatprep.subr.mxu0 0.0
    %5316 = vmatpush1.msra.mxu0 0.0
    %5317 = vmatprep.subr.mxu0 0.0
    %5318 = vmatpush1.msra.mxu0 0.0
    %5319 = vmatprep.subr.mxu0 0.0
    %5320 = vmatpush1.msra.mxu0 0.0
    %5321 = vmatprep.subr.mxu0 0.0
    %5322 = vmatpush1.msra.mxu0 0.0
    %5323 = vmatprep.subr.mxu0 0.0
    %5324 = vmatpush1.msra.mxu0 0.0
    %5325 = vmatprep.subr.mxu0 0.0
    %5326 = vmatpush1.msra.mxu0 0.0
    %5327 = vmatprep.subr.mxu0 0.0
    %5328 = vmatpush1.msra.mxu0 0.0
    %5329 = vmatprep.subr.mxu0 0.0
    %5330 = vmatpush1.msra.mxu0 0.0
    %5331 = vmatprep.subr.mxu0 0.0
    %5332 = vmatpush1.msra.mxu0 0.0
    %5333 = vmatprep.subr.mxu0 0.0
    %5334 = vmatpush1.msra.mxu0 0.0
    %5335 = vmatprep.subr.mxu0 0.0
    %5336 = vmatpush1.msra.mxu0 0.0
    %5337 = vmatprep.subr.mxu0 0.0
    %5338 = vmatpush1.msra.mxu0 0.0
    %5339 = vmatprep.mubr.f32.mxu0 0.0
    %5340 = vmatmul.mubr.f32.gmra.mrb[0].mxu0 %v5273
    %v5341 = vpop.f32.mrb[0].mxu0
    %v5342 = vadd.f32 0.0, %v5341
    %v5343 = vpop.f32.mrb[0].mxu0
    %5344 = vdwg.mxu0
    %v5346 = vsel %vm1160, %v3522, 0
    %v5349 = vsel %vm1160, %v3606, 0
    %v5352 = vsel %vm1160, %v3611, 0
    %5354 = vmatprep.subr.mxu0 0.0
    %5355 = vmatpush1.xpose.msra.mxu0 %v5349
    %5356 = vmatprep.subr.mxu0 0.0
    %5357 = vmatpush1.xpose.msra.mxu0 %v5352
    %5358 = vmatprep.subr.mxu0 0.0
    %5359 = vmatpush1.xpose.msra.mxu0 0.0
    %5360 = vmatprep.subr.mxu0 0.0
    %5361 = vmatpush1.xpose.msra.mxu0 0.0
    %5362 = vmatprep.subr.mxu0 0.0
    %5363 = vmatpush1.xpose.msra.mxu0 0.0
    %5364 = vmatprep.subr.mxu0 0.0
    %5365 = vmatpush1.xpose.msra.mxu0 0.0
    %5366 = vmatprep.subr.mxu0 0.0
    %5367 = vmatpush1.xpose.msra.mxu0 0.0
    %5368 = vmatprep.subr.mxu0 0.0
    %5369 = vmatpush1.xpose.msra.mxu0 0.0
    %5370 = vmatprep.subr.mxu0 0.0
    %5371 = vmatpush1.xpose.msra.mxu0 0.0
    %5372 = vmatprep.subr.mxu0 0.0
    %5373 = vmatpush1.xpose.msra.mxu0 0.0
    %5374 = vmatprep.subr.mxu0 0.0
    %5375 = vmatpush1.xpose.msra.mxu0 0.0
    %5376 = vmatprep.subr.mxu0 0.0
    %5377 = vmatpush1.xpose.msra.mxu0 0.0
    %5378 = vmatprep.subr.mxu0 0.0
    %5379 = vmatpush1.xpose.msra.mxu0 0.0
    %5380 = vmatprep.subr.mxu0 0.0
    %5381 = vmatpush1.xpose.msra.mxu0 0.0
    %5382 = vmatprep.subr.mxu0 0.0
    %5383 = vmatpush1.xpose.msra.mxu0 0.0
    %5384 = vmatprep.subr.mxu0 0.0
    %5385 = vmatpush1.xpose.msra.mxu0 0.0
    %5386 = vmatprep.subr.mxu0 0.0
    %5387 = vmatpush1.xpose.msra.mxu0 0.0
    %5388 = vmatprep.subr.mxu0 0.0
    %5389 = vmatpush1.xpose.msra.mxu0 0.0
    %5390 = vmatprep.subr.mxu0 0.0
    %5391 = vmatpush1.xpose.msra.mxu0 0.0
    %5392 = vmatprep.subr.mxu0 0.0
    %5393 = vmatpush1.xpose.msra.mxu0 0.0
    %5394 = vmatprep.subr.mxu0 0.0
    %5395 = vmatpush1.xpose.msra.mxu0 0.0
    %5396 = vmatprep.subr.mxu0 0.0
    %5397 = vmatpush1.xpose.msra.mxu0 0.0
    %5398 = vmatprep.subr.mxu0 0.0
    %5399 = vmatpush1.xpose.msra.mxu0 0.0
    %5400 = vmatprep.subr.mxu0 0.0
    %5401 = vmatpush1.xpose.msra.mxu0 0.0
    %5402 = vmatprep.subr.mxu0 0.0
    %5403 = vmatpush1.xpose.msra.mxu0 0.0
    %5404 = vmatprep.subr.mxu0 0.0
    %5405 = vmatpush1.xpose.msra.mxu0 0.0
    %5406 = vmatprep.subr.mxu0 0.0
    %5407 = vmatpush1.xpose.msra.mxu0 0.0
    %5408 = vmatprep.subr.mxu0 0.0
    %5409 = vmatpush1.xpose.msra.mxu0 0.0
    %5410 = vmatprep.subr.mxu0 0.0
    %5411 = vmatpush1.xpose.msra.mxu0 0.0
    %5412 = vmatprep.subr.mxu0 0.0
    %5413 = vmatpush1.xpose.msra.mxu0 0.0
    %5414 = vmatprep.subr.mxu0 0.0
    %5415 = vmatpush1.xpose.msra.mxu0 0.0
    %5416 = vmatprep.subr.mxu0 0.0
    %5417 = vmatpush1.xpose.msra.mxu0 0.0
    %5418 = vmatprep.mubr.f32.mxu0 0.0
    %5419 = vmatmul.mubr.f32.gmra.mrb[0].mxu0 %v5346
    %v5420 = vpop.f32.mrb[0].mxu0
    %v5421 = vadd.f32 0.0, %v5420
    %v5422 = vpop.f32.mrb[0].mxu0
    %5423 = vdwg.mxu0
    %v5424 = vsel %vm4314, %v5421, -inf
    %5425 = vmax.xlane.f32.xlu0 %v5424
    %v5426 = vpop.xlane.xlu0 %5425
    %v5427 = vsub.f32 %v5421, %v5426
    %v5428 = vmul.f32 %v5427, 1.442695
    %v5429 = vpow.pop %v5428
    %v5430 = vsel %vm4314, %v5429, 0.0
    %5431 = vadd.xlane.f32.xlu0 %v5430
    %v5432 = vpop.xlane.xlu0 %5431
    %v5433 = vrcp.pop %v5432
    %v5434 = vmul.f32 %v5429, %v5433
    %v5436 = vsel %vm4314, %v5434, 0
    %5438 = vmatprep.subr.mxu0 0.0
    %5439 = vmatpush1.msra.mxu0 %v3697
    %5440 = vmatprep.subr.mxu0 0.0
    %5441 = vmatpush1.msra.mxu0 %v3702
    %5442 = vmatprep.subr.mxu0 0.0
    %5443 = vmatpush1.msra.mxu0 0.0
    %5444 = vmatprep.subr.mxu0 0.0
    %5445 = vmatpush1.msra.mxu0 0.0
    %5446 = vmatprep.subr.mxu0 0.0
    %5447 = vmatpush1.msra.mxu0 0.0
    %5448 = vmatprep.subr.mxu0 0.0
    %5449 = vmatpush1.msra.mxu0 0.0
    %5450 = vmatprep.subr.mxu0 0.0
    %5451 = vmatpush1.msra.mxu0 0.0
    %5452 = vmatprep.subr.mxu0 0.0
    %5453 = vmatpush1.msra.mxu0 0.0
    %5454 = vmatprep.subr.mxu0 0.0
    %5455 = vmatpush1.msra.mxu0 0.0
    %5456 = vmatprep.subr.mxu0 0.0
    %5457 = vmatpush1.msra.mxu0 0.0
    %5458 = vmatprep.subr.mxu0 0.0
    %5459 = vmatpush1.msra.mxu0 0.0
    %5460 = vmatprep.subr.mxu0 0.0
    %5461 = vmatpush1.msra.mxu0 0.0
    %5462 = vmatprep.subr.mxu0 0.0
    %5463 = vmatpush1.msra.mxu0 0.0
    %5464 = vmatprep.subr.mxu0 0.0
    %5465 = vmatpush1.msra.mxu0 0.0
    %5466 = vmatprep.subr.mxu0 0.0
    %5467 = vmatpush1.msra.mxu0 0.0
    %5468 = vmatprep.subr.mxu0 0.0
    %5469 = vmatpush1.msra.mxu0 0.0
    %5470 = vmatprep.subr.mxu0 0.0
    %5471 = vmatpush1.msra.mxu0 0.0
    %5472 = vmatprep.subr.mxu0 0.0
    %5473 = vmatpush1.msra.mxu0 0.0
    %5474 = vmatprep.subr.mxu0 0.0
    %5475 = vmatpush1.msra.mxu0 0.0
    %5476 = vmatprep.subr.mxu0 0.0
    %5477 = vmatpush1.msra.mxu0 0.0
    %5478 = vmatprep.subr.mxu0 0.0
    %5479 = vmatpush1.msra.mxu0 0.0
    %5480 = vmatprep.subr.mxu0 0.0
    %5481 = vmatpush1.msra.mxu0 0.0
    %5482 = vmatprep.subr.mxu0 0.0
    %5483 = vmatpush1.msra.mxu0 0.0
    %5484 = vmatprep.subr.mxu0 0.0
    %5485 = vmatpush1.msra.mxu0 0.0
    %5486 = vmatprep.subr.mxu0 0.0
    %5487 = vmatpush1.msra.mxu0 0.0
    %5488 = vmatprep.subr.mxu0 0.0
    %5489 = vmatpush1.msra.mxu0 0.0
    %5490 = vmatprep.subr.mxu0 0.0
    %5491 = vmatpush1.msra.mxu0 0.0
    %5492 = vmatprep.subr.mxu0 0.0
    %5493 = vmatpush1.msra.mxu0 0.0
    %5494 = vmatprep.subr.mxu0 0.0
    %5495 = vmatpush1.msra.mxu0 0.0
    %5496 = vmatprep.subr.mxu0 0.0
    %5497 = vmatpush1.msra.mxu0 0.0
    %5498 = vmatprep.subr.mxu0 0.0
    %5499 = vmatpush1.msra.mxu0 0.0
    %5500 = vmatprep.subr.mxu0 0.0
    %5501 = vmatpush1.msra.mxu0 0.0
    %5502 = vmatprep.mubr.f32.mxu0 0.0
    %5503 = vmatmul.mubr.f32.gmra.mrb[0].mxu0 %v5436
    %v5504 = vpop.f32.mrb[0].mxu0
    %v5505 = vadd.f32 0.0, %v5504
    %v5506 = vpop.f32.mrb[0].mxu0
    %5507 = vdwg.mxu0
    %v5509 = vsel %vm1160, %v5505, 0
    %5511 = vmatprep.subr.mxu0 0.0
    %5512 = vmatpush1.msra.mxu0 %v3142
    %5513 = vmatprep.subr.mxu0 0.0
    %5514 = vmatpush1.msra.mxu0 0.0
    %5515 = vmatprep.subr.mxu0 0.0
    %5516 = vmatpush1.msra.mxu0 0.0
    %5517 = vmatprep.subr.mxu0 0.0
    %5518 = vmatpush1.msra.mxu0 0.0
    %5519 = vmatprep.subr.mxu0 0.0
    %5520 = vmatpush1.msra.mxu0 0.0
    %5521 = vmatprep.subr.mxu0 0.0
    %5522 = vmatpush1.msra.mxu0 0.0
    %5523 = vmatprep.subr.mxu0 0.0
    %5524 = vmatpush1.msra.mxu0 0.0
    %5525 = vmatprep.subr.mxu0 0.0
    %5526 = vmatpush1.msra.mxu0 0.0
    %5527 = vmatprep.subr.mxu0 0.0
    %5528 = vmatpush1.msra.mxu0 0.0
    %5529 = vmatprep.subr.mxu0 0.0
    %5530 = vmatpush1.msra.mxu0 0.0
    %5531 = vmatprep.subr.mxu0 0.0
    %5532 = vmatpush1.msra.mxu0 0.0
    %5533 = vmatprep.subr.mxu0 0.0
    %5534 = vmatpush1.msra.mxu0 0.0
    %5535 = vmatprep.subr.mxu0 0.0
    %5536 = vmatpush1.msra.mxu0 0.0
    %5537 = vmatprep.subr.mxu0 0.0
    %5538 = vmatpush1.msra.mxu0 0.0
    %5539 = vmatprep.subr.mxu0 0.0
    %5540 = vmatpush1.msra.mxu0 0.0
    %5541 = vmatprep.subr.mxu0 0.0
    %5542 = vmatpush1.msra.mxu0 0.0
    %5543 = vmatprep.subr.mxu0 0.0
    %5544 = vmatpush1.msra.mxu0 0.0
    %5545 = vmatprep.subr.mxu0 0.0
    %5546 = vmatpush1.msra.mxu0 0.0
    %5547 = vmatprep.subr.mxu0 0.0
    %5548 = vmatpush1.msra.mxu0 0.0
    %5549 = vmatprep.subr.mxu0 0.0
    %5550 = vmatpush1.msra.mxu0 0.0
    %5551 = vmatprep.subr.mxu0 0.0
    %5552 = vmatpush1.msra.mxu0 0.0
    %5553 = vmatprep.subr.mxu0 0.0
    %5554 = vmatpush1.msra.mxu0 0.0
    %5555 = vmatprep.subr.mxu0 0.0
    %5556 = vmatpush1.msra.mxu0 0.0
    %5557 = vmatprep.subr.mxu0 0.0
    %5558 = vmatpush1.msra.mxu0 0.0
    %5559 = vmatprep.subr.mxu0 0.0
    %5560 = vmatpush1.msra.mxu0 0.0
    %5561 = vmatprep.subr.mxu0 0.0
    %5562 = vmatpush1.msra.mxu0 0.0
    %5563 = vmatprep.subr.mxu0 0.0
    %5564 = vmatpush1.msra.mxu0 0.0
    %5565 = vmatprep.subr.mxu0 0.0
    %5566 = vmatpush1.msra.mxu0 0.0
    %5567 = vmatprep.subr.mxu0 0.0
    %5568 = vmatpush1.msra.mxu0 0.0
    %5569 = vmatprep.subr.mxu0 0.0
    %5570 = vmatpush1.msra.mxu0 0.0
    %5571 = vmatprep.subr.mxu0 0.0
    %5572 = vmatpush1.msra.mxu0 0.0
    %5573 = vmatprep.subr.mxu0 0.0
    %5574 = vmatpush1.msra.mxu0 0.0
    %5575 = vmatprep.mubr.f32.mxu0 0.0
    %5576 = vmatmul.mubr.f32.gmra.mrb[0].mxu0 %v5509
    %v5577 = vpop.f32.mrb[0].mxu0
    %v5578 = vadd.f32 0.0, %v5577
    %v5579 = vpop.f32.mrb[0].mxu0
    %5580 = vdwg.mxu0
    %v5582 = vsel %vm1160, %v5342, 0
    %5584 = vmatprep.subr.mxu0 0.0
    %5585 = vmatpush1.msra.mxu0 %v3141
    %5586 = vmatprep.subr.mxu0 0.0
    %5587 = vmatpush1.msra.mxu0 0.0
    %5588 = vmatprep.subr.mxu0 0.0
    %5589 = vmatpush1.msra.mxu0 0.0
    %5590 = vmatprep.subr.mxu0 0.0
    %5591 = vmatpush1.msra.mxu0 0.0
    %5592 = vmatprep.subr.mxu0 0.0
    %5593 = vmatpush1.msra.mxu0 0.0
    %5594 = vmatprep.subr.mxu0 0.0
    %5595 = vmatpush1.msra.mxu0 0.0
    %5596 = vmatprep.subr.mxu0 0.0
    %5597 = vmatpush1.msra.mxu0 0.0
    %5598 = vmatprep.subr.mxu0 0.0
    %5599 = vmatpush1.msra.mxu0 0.0
    %5600 = vmatprep.subr.mxu0 0.0
    %5601 = vmatpush1.msra.mxu0 0.0
    %5602 = vmatprep.subr.mxu0 0.0
    %5603 = vmatpush1.msra.mxu0 0.0
    %5604 = vmatprep.subr.mxu0 0.0
    %5605 = vmatpush1.msra.mxu0 0.0
    %5606 = vmatprep.subr.mxu0 0.0
    %5607 = vmatpush1.msra.mxu0 0.0
    %5608 = vmatprep.subr.mxu0 0.0
    %5609 = vmatpush1.msra.mxu0 0.0
    %5610 = vmatprep.subr.mxu0 0.0
    %5611 = vmatpush1.msra.mxu0 0.0
    %5612 = vmatprep.subr.mxu0 0.0
    %5613 = vmatpush1.msra.mxu0 0.0
    %5614 = vmatprep.subr.mxu0 0.0
    %5615 = vmatpush1.msra.mxu0 0.0
    %5616 = vmatprep.subr.mxu0 0.0
    %5617 = vmatpush1.msra.mxu0 0.0
    %5618 = vmatprep.subr.mxu0 0.0
    %5619 = vmatpush1.msra.mxu0 0.0
    %5620 = vmatprep.subr.mxu0 0.0
    %5621 = vmatpush1.msra.mxu0 0.0
    %5622 = vmatprep.subr.mxu0 0.0
    %5623 = vmatpush1.msra.mxu0 0.0
    %5624 = vmatprep.subr.mxu0 0.0
    %5625 = vmatpush1.msra.mxu0 0.0
    %5626 = vmatprep.subr.mxu0 0.0
    %5627 = vmatpush1.msra.mxu0 0.0
    %5628 = vmatprep.subr.mxu0 0.0
    %5629 = vmatpush1.msra.mxu0 0.0
    %5630 = vmatprep.subr.mxu0 0.0
    %5631 = vmatpush1.msra.mxu0 0.0
    %5632 = vmatprep.subr.mxu0 0.0
    %5633 = vmatpush1.msra.mxu0 0.0
    %5634 = vmatprep.subr.mxu0 0.0
    %5635 = vmatpush1.msra.mxu0 0.0
    %5636 = vmatprep.subr.mxu0 0.0
    %5637 = vmatpush1.msra.mxu0 0.0
    %5638 = vmatprep.subr.mxu0 0.0
    %5639 = vmatpush1.msra.mxu0 0.0
    %5640 = vmatprep.subr.mxu0 0.0
    %5641 = vmatpush1.msra.mxu0 0.0
    %5642 = vmatprep.subr.mxu0 0.0
    %5643 = vmatpush1.msra.mxu0 0.0
    %5644 = vmatprep.subr.mxu0 0.0
    %5645 = vmatpush1.msra.mxu0 0.0
    %5646 = vmatprep.subr.mxu0 0.0
    %5647 = vmatpush1.msra.mxu0 0.0
    %5648 = vmatprep.mubr.f32.mxu0 0.0
    %5649 = vmatmul.mubr.f32.gmra.mrb[0].mxu0 %v5582
    %v5650 = vpop.f32.mrb[0].mxu0
    %v5651 = vadd.f32 %v5578, %v5650
    %v5652 = vpop.f32.mrb[0].mxu0
    %5653 = vdwg.mxu0
    %v5655 = vsel %vm1160, %v3787, 0
    %v5658 = vsel %vm1160, %v3871, 0
    %v5661 = vsel %vm1160, %v3876, 0
    %5663 = vmatprep.subr.mxu0 0.0
    %5664 = vmatpush1.xpose.msra.mxu0 %v5658
    %5665 = vmatprep.subr.mxu0 0.0
    %5666 = vmatpush1.xpose.msra.mxu0 %v5661
    %5667 = vmatprep.subr.mxu0 0.0
    %5668 = vmatpush1.xpose.msra.mxu0 0.0
    %5669 = vmatprep.subr.mxu0 0.0
    %5670 = vmatpush1.xpose.msra.mxu0 0.0
    %5671 = vmatprep.subr.mxu0 0.0
    %5672 = vmatpush1.xpose.msra.mxu0 0.0
    %5673 = vmatprep.subr.mxu0 0.0
    %5674 = vmatpush1.xpose.msra.mxu0 0.0
    %5675 = vmatprep.subr.mxu0 0.0
    %5676 = vmatpush1.xpose.msra.mxu0 0.0
    %5677 = vmatprep.subr.mxu0 0.0
    %5678 = vmatpush1.xpose.msra.mxu0 0.0
    %5679 = vmatprep.subr.mxu0 0.0
    %5680 = vmatpush1.xpose.msra.mxu0 0.0
    %5681 = vmatprep.subr.mxu0 0.0
    %5682 = vmatpush1.xpose.msra.mxu0 0.0
    %5683 = vmatprep.subr.mxu0 0.0
    %5684 = vmatpush1.xpose.msra.mxu0 0.0
    %5685 = vmatprep.subr.mxu0 0.0
    %5686 = vmatpush1.xpose.msra.mxu0 0.0
    %5687 = vmatprep.subr.mxu0 0.0
    %5688 = vmatpush1.xpose.msra.mxu0 0.0
    %5689 = vmatprep.subr.mxu0 0.0
    %5690 = vmatpush1.xpose.msra.mxu0 0.0
    %5691 = vmatprep.subr.mxu0 0.0
    %5692 = vmatpush1.xpose.msra.mxu0 0.0
    %5693 = vmatprep.subr.mxu0 0.0
    %5694 = vmatpush1.xpose.msra.mxu0 0.0
    %5695 = vmatprep.subr.mxu0 0.0
    %5696 = vmatpush1.xpose.msra.mxu0 0.0
    %5697 = vmatprep.subr.mxu0 0.0
    %5698 = vmatpush1.xpose.msra.mxu0 0.0
    %5699 = vmatprep.subr.mxu0 0.0
    %5700 = vmatpush1.xpose.msra.mxu0 0.0
    %5701 = vmatprep.subr.mxu0 0.0
    %5702 = vmatpush1.xpose.msra.mxu0 0.0
    %5703 = vmatprep.subr.mxu0 0.0
    %5704 = vmatpush1.xpose.msra.mxu0 0.0
    %5705 = vmatprep.subr.mxu0 0.0
    %5706 = vmatpush1.xpose.msra.mxu0 0.0
    %5707 = vmatprep.subr.mxu0 0.0
    %5708 = vmatpush1.xpose.msra.mxu0 0.0
    %5709 = vmatprep.subr.mxu0 0.0
    %5710 = vmatpush1.xpose.msra.mxu0 0.0
    %5711 = vmatprep.subr.mxu0 0.0
    %5712 = vmatpush1.xpose.msra.mxu0 0.0
    %5713 = vmatprep.subr.mxu0 0.0
    %5714 = vmatpush1.xpose.msra.mxu0 0.0
    %5715 = vmatprep.subr.mxu0 0.0
    %5716 = vmatpush1.xpose.msra.mxu0 0.0
    %5717 = vmatprep.subr.mxu0 0.0
    %5718 = vmatpush1.xpose.msra.mxu0 0.0
    %5719 = vmatprep.subr.mxu0 0.0
    %5720 = vmatpush1.xpose.msra.mxu0 0.0
    %5721 = vmatprep.subr.mxu0 0.0
    %5722 = vmatpush1.xpose.msra.mxu0 0.0
    %5723 = vmatprep.subr.mxu0 0.0
    %5724 = vmatpush1.xpose.msra.mxu0 0.0
    %5725 = vmatprep.subr.mxu0 0.0
    %5726 = vmatpush1.xpose.msra.mxu0 0.0
    %5727 = vmatprep.mubr.f32.mxu0 0.0
    %5728 = vmatmul.mubr.f32.gmra.mrb[0].mxu0 %v5655
    %v5729 = vpop.f32.mrb[0].mxu0
    %v5730 = vadd.f32 0.0, %v5729
    %v5731 = vpop.f32.mrb[0].mxu0
    %5732 = vdwg.mxu0
    %v5733 = vsel %vm4314, %v5730, -inf
    %5734 = vmax.xlane.f32.xlu0 %v5733
    %v5735 = vpop.xlane.xlu0 %5734
    %v5736 = vsub.f32 %v5730, %v5735
    %v5737 = vmul.f32 %v5736, 1.442695
    %v5738 = vpow.pop %v5737
    %v5739 = vsel %vm4314, %v5738, 0.0
    %5740 = vadd.xlane.f32.xlu0 %v5739
    %v5741 = vpop.xlane.xlu0 %5740
    %v5742 = vrcp.pop %v5741
    %v5743 = vmul.f32 %v5738, %v5742
    %v5745 = vsel %vm4314, %v5743, 0
    %5747 = vmatprep.subr.mxu0 0.0
    %5748 = vmatpush1.msra.mxu0 %v3962
    %5749 = vmatprep.subr.mxu0 0.0
    %5750 = vmatpush1.msra.mxu0 %v3967
    %5751 = vmatprep.subr.mxu0 0.0
    %5752 = vmatpush1.msra.mxu0 0.0
    %5753 = vmatprep.subr.mxu0 0.0
    %5754 = vmatpush1.msra.mxu0 0.0
    %5755 = vmatprep.subr.mxu0 0.0
    %5756 = vmatpush1.msra.mxu0 0.0
    %5757 = vmatprep.subr.mxu0 0.0
    %5758 = vmatpush1.msra.mxu0 0.0
    %5759 = vmatprep.subr.mxu0 0.0
    %5760 = vmatpush1.msra.mxu0 0.0
    %5761 = vmatprep.subr.mxu0 0.0
    %5762 = vmatpush1.msra.mxu0 0.0
    %5763 = vmatprep.subr.mxu0 0.0
    %5764 = vmatpush1.msra.mxu0 0.0
    %5765 = vmatprep.subr.mxu0 0.0
    %5766 = vmatpush1.msra.mxu0 0.0
    %5767 = vmatprep.subr.mxu0 0.0
    %5768 = vmatpush1.msra.mxu0 0.0
    %5769 = vmatprep.subr.mxu0 0.0
    %5770 = vmatpush1.msra.mxu0 0.0
    %5771 = vmatprep.subr.mxu0 0.0
    %5772 = vmatpush1.msra.mxu0 0.0
    %5773 = vmatprep.subr.mxu0 0.0
    %5774 = vmatpush1.msra.mxu0 0.0
    %5775 = vmatprep.subr.mxu0 0.0
    %5776 = vmatpush1.msra.mxu0 0.0
    %5777 = vmatprep.subr.mxu0 0.0
    %5778 = vmatpush1.msra.mxu0 0.0
    %5779 = vmatprep.subr.mxu0 0.0
    %5780 = vmatpush1.msra.mxu0 0.0
    %5781 = vmatprep.subr.mxu0 0.0
    %5782 = vmatpush1.msra.mxu0 0.0
    %5783 = vmatprep.subr.mxu0 0.0
    %5784 = vmatpush1.msra.mxu0 0.0
    %5785 = vmatprep.subr.mxu0 0.0
    %5786 = vmatpush1.msra.mxu0 0.0
    %5787 = vmatprep.subr.mxu0 0.0
    %5788 = vmatpush1.msra.mxu0 0.0
    %5789 = vmatprep.subr.mxu0 0.0
    %5790 = vmatpush1.msra.mxu0 0.0
    %5791 = vmatprep.subr.mxu0 0.0
    %5792 = vmatpush1.msra.mxu0 0.0
    %5793 = vmatprep.subr.mxu0 0.0
    %5794 = vmatpush1.msra.mxu0 0.0
    %5795 = vmatprep.subr.mxu0 0.0
    %5796 = vmatpush1.msra.mxu0 0.0
    %5797 = vmatprep.subr.mxu0 0.0
    %5798 = vmatpush1.msra.mxu0 0.0
    %5799 = vmatprep.subr.mxu0 0.0
    %5800 = vmatpush1.msra.mxu0 0.0
    %5801 = vmatprep.subr.mxu0 0.0
    %5802 = vmatpush1.msra.mxu0 0.0
    %5803 = vmatprep.subr.mxu0 0.0
    %5804 = vmatpush1.msra.mxu0 0.0
    %5805 = vmatprep.subr.mxu0 0.0
    %5806 = vmatpush1.msra.mxu0 0.0
    %5807 = vmatprep.subr.mxu0 0.0
    %5808 = vmatpush1.msra.mxu0 0.0
    %5809 = vmatprep.subr.mxu0 0.0
    %5810 = vmatpush1.msra.mxu0 0.0
    %5811 = vmatprep.mubr.f32.mxu0 0.0
    %5812 = vmatmul.mubr.f32.gmra.mrb[0].mxu0 %v5745
    %v5813 = vpop.f32.mrb[0].mxu0
    %v5814 = vadd.f32 0.0, %v5813
    %v5815 = vpop.f32.mrb[0].mxu0
    %5816 = vdwg.mxu0
    %v5818 = vsel %vm1160, %v5814, 0
    %5820 = vmatprep.subr.mxu0 0.0
    %5821 = vmatpush1.msra.mxu0 %v3143
    %5822 = vmatprep.subr.mxu0 0.0
    %5823 = vmatpush1.msra.mxu0 0.0
    %5824 = vmatprep.subr.mxu0 0.0
    %5825 = vmatpush1.msra.mxu0 0.0
    %5826 = vmatprep.subr.mxu0 0.0
    %5827 = vmatpush1.msra.mxu0 0.0
    %5828 = vmatprep.subr.mxu0 0.0
    %5829 = vmatpush1.msra.mxu0 0.0
    %5830 = vmatprep.subr.mxu0 0.0
    %5831 = vmatpush1.msra.mxu0 0.0
    %5832 = vmatprep.subr.mxu0 0.0
    %5833 = vmatpush1.msra.mxu0 0.0
    %5834 = vmatprep.subr.mxu0 0.0
    %5835 = vmatpush1.msra.mxu0 0.0
    %5836 = vmatprep.subr.mxu0 0.0
    %5837 = vmatpush1.msra.mxu0 0.0
    %5838 = vmatprep.subr.mxu0 0.0
    %5839 = vmatpush1.msra.mxu0 0.0
    %5840 = vmatprep.subr.mxu0 0.0
    %5841 = vmatpush1.msra.mxu0 0.0
    %5842 = vmatprep.subr.mxu0 0.0
    %5843 = vmatpush1.msra.mxu0 0.0
    %5844 = vmatprep.subr.mxu0 0.0
    %5845 = vmatpush1.msra.mxu0 0.0
    %5846 = vmatprep.subr.mxu0 0.0
    %5847 = vmatpush1.msra.mxu0 0.0
    %5848 = vmatprep.subr.mxu0 0.0
    %5849 = vmatpush1.msra.mxu0 0.0
    %5850 = vmatprep.subr.mxu0 0.0
    %5851 = vmatpush1.msra.mxu0 0.0
    %5852 = vmatprep.subr.mxu0 0.0
    %5853 = vmatpush1.msra.mxu0 0.0
    %5854 = vmatprep.subr.mxu0 0.0
    %5855 = vmatpush1.msra.mxu0 0.0
    %5856 = vmatprep.subr.mxu0 0.0
    %5857 = vmatpush1.msra.mxu0 0.0
    %5858 = vmatprep.subr.mxu0 0.0
    %5859 = vmatpush1.msra.mxu0 0.0
    %5860 = vmatprep.subr.mxu0 0.0
    %5861 = vmatpush1.msra.mxu0 0.0
    %5862 = vmatprep.subr.mxu0 0.0
    %5863 = vmatpush1.msra.mxu0 0.0
    %5864 = vmatprep.subr.mxu0 0.0
    %5865 = vmatpush1.msra.mxu0 0.0
    %5866 = vmatprep.subr.mxu0 0.0
    %5867 = vmatpush1.msra.mxu0 0.0
    %5868 = vmatprep.subr.mxu0 0.0
    %5869 = vmatpush1.msra.mxu0 0.0
    %5870 = vmatprep.subr.mxu0 0.0
    %5871 = vmatpush1.msra.mxu0 0.0
    %5872 = vmatprep.subr.mxu0 0.0
    %5873 = vmatpush1.msra.mxu0 0.0
    %5874 = vmatprep.subr.mxu0 0.0
    %5875 = vmatpush1.msra.mxu0 0.0
    %5876 = vmatprep.subr.mxu0 0.0
    %5877 = vmatpush1.msra.mxu0 0.0
    %5878 = vmatprep.subr.mxu0 0.0
    %5879 = vmatpush1.msra.mxu0 0.0
    %5880 = vmatprep.subr.mxu0 0.0
    %5881 = vmatpush1.msra.mxu0 0.0
    %5882 = vmatprep.subr.mxu0 0.0
    %5883 = vmatpush1.msra.mxu0 0.0
    %5884 = vmatprep.mubr.f32.mxu0 0.0
    %5885 = vmatmul.mubr.f32.gmra.mrb[0].mxu0 %v5818
    %v5886 = vpop.f32.mrb[0].mxu0
    %v5887 = vadd.f32 0.0, %v5886
    %v5888 = vpop.f32.mrb[0].mxu0
    %5889 = vdwg.mxu0
    %v5890 = vadd.f32 %v5651, %v5887
    %v5892 = vsel %vm1160, %v4052, 0
    %v5895 = vsel %vm1160, %v4136, 0
    %v5898 = vsel %vm1160, %v4141, 0
    %5900 = vmatprep.subr.mxu0 0.0
    %5901 = vmatpush1.xpose.msra.mxu0 %v5895
    %5902 = vmatprep.subr.mxu0 0.0
    %5903 = vmatpush1.xpose.msra.mxu0 %v5898
    %5904 = vmatprep.subr.mxu0 0.0
    %5905 = vmatpush1.xpose.msra.mxu0 0.0
    %5906 = vmatprep.subr.mxu0 0.0
    %5907 = vmatpush1.xpose.msra.mxu0 0.0
    %5908 = vmatprep.subr.mxu0 0.0
    %5909 = vmatpush1.xpose.msra.mxu0 0.0
    %5910 = vmatprep.subr.mxu0 0.0
    %5911 = vmatpush1.xpose.msra.mxu0 0.0
    %5912 = vmatprep.subr.mxu0 0.0
    %5913 = vmatpush1.xpose.msra.mxu0 0.0
    %5914 = vmatprep.subr.mxu0 0.0
    %5915 = vmatpush1.xpose.msra.mxu0 0.0
    %5916 = vmatprep.subr.mxu0 0.0
    %5917 = vmatpush1.xpose.msra.mxu0 0.0
    %5918 = vmatprep.subr.mxu0 0.0
    %5919 = vmatpush1.xpose.msra.mxu0 0.0
    %5920 = vmatprep.subr.mxu0 0.0
    %5921 = vmatpush1.xpose.msra.mxu0 0.0
    %5922 = vmatprep.subr.mxu0 0.0
    %5923 = vmatpush1.xpose.msra.mxu0 0.0
    %5924 = vmatprep.subr.mxu0 0.0
    %5925 = vmatpush1.xpose.msra.mxu0 0.0
    %5926 = vmatprep.subr.mxu0 0.0
    %5927 = vmatpush1.xpose.msra.mxu0 0.0
    %5928 = vmatprep.subr.mxu0 0.0
    %5929 = vmatpush1.xpose.msra.mxu0 0.0
    %5930 = vmatprep.subr.mxu0 0.0
    %5931 = vmatpush1.xpose.msra.mxu0 0.0
    %5932 = vmatprep.subr.mxu0 0.0
    %5933 = vmatpush1.xpose.msra.mxu0 0.0
    %5934 = vmatprep.subr.mxu0 0.0
    %5935 = vmatpush1.xpose.msra.mxu0 0.0
    %5936 = vmatprep.subr.mxu0 0.0
    %5937 = vmatpush1.xpose.msra.mxu0 0.0
    %5938 = vmatprep.subr.mxu0 0.0
    %5939 = vmatpush1.xpose.msra.mxu0 0.0
    %5940 = vmatprep.subr.mxu0 0.0
    %5941 = vmatpush1.xpose.msra.mxu0 0.0
    %5942 = vmatprep.subr.mxu0 0.0
    %5943 = vmatpush1.xpose.msra.mxu0 0.0
    %5944 = vmatprep.subr.mxu0 0.0
    %5945 = vmatpush1.xpose.msra.mxu0 0.0
    %5946 = vmatprep.subr.mxu0 0.0
    %5947 = vmatpush1.xpose.msra.mxu0 0.0
    %5948 = vmatprep.subr.mxu0 0.0
    %5949 = vmatpush1.xpose.msra.mxu0 0.0
    %5950 = vmatprep.subr.mxu0 0.0
    %5951 = vmatpush1.xpose.msra.mxu0 0.0
    %5952 = vmatprep.subr.mxu0 0.0
    %5953 = vmatpush1.xpose.msra.mxu0 0.0
    %5954 = vmatprep.subr.mxu0 0.0
    %5955 = vmatpush1.xpose.msra.mxu0 0.0
    %5956 = vmatprep.subr.mxu0 0.0
    %5957 = vmatpush1.xpose.msra.mxu0 0.0
    %5958 = vmatprep.subr.mxu0 0.0
    %5959 = vmatpush1.xpose.msra.mxu0 0.0
    %5960 = vmatprep.subr.mxu0 0.0
    %5961 = vmatpush1.xpose.msra.mxu0 0.0
    %5962 = vmatprep.subr.mxu0 0.0
    %5963 = vmatpush1.xpose.msra.mxu0 0.0
    %5964 = vmatprep.mubr.f32.mxu0 0.0
    %5965 = vmatmul.mubr.f32.gmra.mrb[0].mxu0 %v5892
    %v5966 = vpop.f32.mrb[0].mxu0
    %v5967 = vadd.f32 0.0, %v5966
    %v5968 = vpop.f32.mrb[0].mxu0
    %5969 = vdwg.mxu0
    %v5970 = vsel %vm4314, %v5967, -inf
    %5971 = vmax.xlane.f32.xlu0 %v5970
    %v5972 = vpop.xlane.xlu0 %5971
    %v5973 = vsub.f32 %v5967, %v5972
    %v5974 = vmul.f32 %v5973, 1.442695
    %v5975 = vpow.pop %v5974
    %v5976 = vsel %vm4314, %v5975, 0.0
    %5977 = vadd.xlane.f32.xlu0 %v5976
    %v5978 = vpop.xlane.xlu0 %5977
    %v5979 = vrcp.pop %v5978
    %v5980 = vmul.f32 %v5975, %v5979
    %v5982 = vsel %vm4314, %v5980, 0
    %5984 = vmatprep.subr.mxu0 0.0
    %5985 = vmatpush1.msra.mxu0 %v4227
    %5986 = vmatprep.subr.mxu0 0.0
    %5987 = vmatpush1.msra.mxu0 %v4232
    %5988 = vmatprep.subr.mxu0 0.0
    %5989 = vmatpush1.msra.mxu0 0.0
    %5990 = vmatprep.subr.mxu0 0.0
    %5991 = vmatpush1.msra.mxu0 0.0
    %5992 = vmatprep.subr.mxu0 0.0
    %5993 = vmatpush1.msra.mxu0 0.0
    %5994 = vmatprep.subr.mxu0 0.0
    %5995 = vmatpush1.msra.mxu0 0.0
    %5996 = vmatprep.subr.mxu0 0.0
    %5997 = vmatpush1.msra.mxu0 0.0
    %5998 = vmatprep.subr.mxu0 0.0
    %5999 = vmatpush1.msra.mxu0 0.0
    %6000 = vmatprep.subr.mxu0 0.0
    %6001 = vmatpush1.msra.mxu0 0.0
    %6002 = vmatprep.subr.mxu0 0.0
    %6003 = vmatpush1.msra.mxu0 0.0
    %6004 = vmatprep.subr.mxu0 0.0
    %6005 = vmatpush1.msra.mxu0 0.0
    %6006 = vmatprep.subr.mxu0 0.0
    %6007 = vmatpush1.msra.mxu0 0.0
    %6008 = vmatprep.subr.mxu0 0.0
    %6009 = vmatpush1.msra.mxu0 0.0
    %6010 = vmatprep.subr.mxu0 0.0
    %6011 = vmatpush1.msra.mxu0 0.0
    %6012 = vmatprep.subr.mxu0 0.0
    %6013 = vmatpush1.msra.mxu0 0.0
    %6014 = vmatprep.subr.mxu0 0.0
    %6015 = vmatpush1.msra.mxu0 0.0
    %6016 = vmatprep.subr.mxu0 0.0
    %6017 = vmatpush1.msra.mxu0 0.0
    %6018 = vmatprep.subr.mxu0 0.0
    %6019 = vmatpush1.msra.mxu0 0.0
    %6020 = vmatprep.subr.mxu0 0.0
    %6021 = vmatpush1.msra.mxu0 0.0
    %6022 = vmatprep.subr.mxu0 0.0
    %6023 = vmatpush1.msra.mxu0 0.0
    %6024 = vmatprep.subr.mxu0 0.0
    %6025 = vmatpush1.msra.mxu0 0.0
    %6026 = vmatprep.subr.mxu0 0.0
    %6027 = vmatpush1.msra.mxu0 0.0
    %6028 = vmatprep.subr.mxu0 0.0
    %6029 = vmatpush1.msra.mxu0 0.0
    %6030 = vmatprep.subr.mxu0 0.0
    %6031 = vmatpush1.msra.mxu0 0.0
    %6032 = vmatprep.subr.mxu0 0.0
    %6033 = vmatpush1.msra.mxu0 0.0
    %6034 = vmatprep.subr.mxu0 0.0
    %6035 = vmatpush1.msra.mxu0 0.0
    %6036 = vmatprep.subr.mxu0 0.0
    %6037 = vmatpush1.msra.mxu0 0.0
    %6038 = vmatprep.subr.mxu0 0.0
    %6039 = vmatpush1.msra.mxu0 0.0
    %6040 = vmatprep.subr.mxu0 0.0
    %6041 = vmatpush1.msra.mxu0 0.0
    %6042 = vmatprep.subr.mxu0 0.0
    %6043 = vmatpush1.msra.mxu0 0.0
    %6044 = vmatprep.subr.mxu0 0.0
    %6045 = vmatpush1.msra.mxu0 0.0
    %6046 = vmatprep.subr.mxu0 0.0
    %6047 = vmatpush1.msra.mxu0 0.0
    %6048 = vmatprep.mubr.f32.mxu0 0.0
    %6049 = vmatmul.mubr.f32.gmra.mrb[0].mxu0 %v5982
    %v6050 = vpop.f32.mrb[0].mxu0
    %v6051 = vadd.f32 0.0, %v6050
    %v6052 = vpop.f32.mrb[0].mxu0
    %6053 = vdwg.mxu0
    %v6055 = vsel %vm1160, %v6051, 0
    %6057 = vmatprep.subr.mxu0 0.0
    %6058 = vmatpush1.msra.mxu0 %v3144
    %6059 = vmatprep.subr.mxu0 0.0
    %6060 = vmatpush1.msra.mxu0 0.0
    %6061 = vmatprep.subr.mxu0 0.0
    %6062 = vmatpush1.msra.mxu0 0.0
    %6063 = vmatprep.subr.mxu0 0.0
    %6064 = vmatpush1.msra.mxu0 0.0
    %6065 = vmatprep.subr.mxu0 0.0
    %6066 = vmatpush1.msra.mxu0 0.0
    %6067 = vmatprep.subr.mxu0 0.0
    %6068 = vmatpush1.msra.mxu0 0.0
    %6069 = vmatprep.subr.mxu0 0.0
    %6070 = vmatpush1.msra.mxu0 0.0
    %6071 = vmatprep.subr.mxu0 0.0
    %6072 = vmatpush1.msra.mxu0 0.0
    %6073 = vmatprep.subr.mxu0 0.0
    %6074 = vmatpush1.msra.mxu0 0.0
    %6075 = vmatprep.subr.mxu0 0.0
    %6076 = vmatpush1.msra.mxu0 0.0
    %6077 = vmatprep.subr.mxu0 0.0
    %6078 = vmatpush1.msra.mxu0 0.0
    %6079 = vmatprep.subr.mxu0 0.0
    %6080 = vmatpush1.msra.mxu0 0.0
    %6081 = vmatprep.subr.mxu0 0.0
    %6082 = vmatpush1.msra.mxu0 0.0
    %6083 = vmatprep.subr.mxu0 0.0
    %6084 = vmatpush1.msra.mxu0 0.0
    %6085 = vmatprep.subr.mxu0 0.0
    %6086 = vmatpush1.msra.mxu0 0.0
    %6087 = vmatprep.subr.mxu0 0.0
    %6088 = vmatpush1.msra.mxu0 0.0
    %6089 = vmatprep.subr.mxu0 0.0
    %6090 = vmatpush1.msra.mxu0 0.0
    %6091 = vmatprep.subr.mxu0 0.0
    %6092 = vmatpush1.msra.mxu0 0.0
    %6093 = vmatprep.subr.mxu0 0.0
    %6094 = vmatpush1.msra.mxu0 0.0
    %6095 = vmatprep.subr.mxu0 0.0
    %6096 = vmatpush1.msra.mxu0 0.0
    %6097 = vmatprep.subr.mxu0 0.0
    %6098 = vmatpush1.msra.mxu0 0.0
    %6099 = vmatprep.subr.mxu0 0.0
    %6100 = vmatpush1.msra.mxu0 0.0
    %6101 = vmatprep.subr.mxu0 0.0
    %6102 = vmatpush1.msra.mxu0 0.0
    %6103 = vmatprep.subr.mxu0 0.0
    %6104 = vmatpush1.msra.mxu0 0.0
    %6105 = vmatprep.subr.mxu0 0.0
    %6106 = vmatpush1.msra.mxu0 0.0
    %6107 = vmatprep.subr.mxu0 0.0
    %6108 = vmatpush1.msra.mxu0 0.0
    %6109 = vmatprep.subr.mxu0 0.0
    %6110 = vmatpush1.msra.mxu0 0.0
    %6111 = vmatprep.subr.mxu0 0.0
    %6112 = vmatpush1.msra.mxu0 0.0
    %6113 = vmatprep.subr.mxu0 0.0
    %6114 = vmatpush1.msra.mxu0 0.0
    %6115 = vmatprep.subr.mxu0 0.0
    %6116 = vmatpush1.msra.mxu0 0.0
    %6117 = vmatprep.subr.mxu0 0.0
    %6118 = vmatpush1.msra.mxu0 0.0
    %6119 = vmatprep.subr.mxu0 0.0
    %6120 = vmatpush1.msra.mxu0 0.0
    %6121 = vmatprep.mubr.f32.mxu0 0.0
    %6122 = vmatmul.mubr.f32.gmra.mrb[0].mxu0 %v6055
    %v6123 = vpop.f32.mrb[0].mxu0
    %v6124 = vadd.f32 0.0, %v6123
    %v6125 = vpop.f32.mrb[0].mxu0
    %6126 = vdwg.mxu0
    %v6127 = vadd.f32 %v5890, %v6124
    %v6128 = vlaneseq
    %v6129 = vshrl.u32 %v6128, 7
    %v6130 = vsub.s32 1, %v6129
    %v6131 = vrot.slane %v60, %v6130
    %v6132 = vadd.f32 %v5181, %v6131
    %v6133 = vadd.f32 %v6127, %v6131
    %v6134 = vadd.f32 %v3035, %v6132
    %v6135 = vadd.f32 %v3036, %v6133
    %v6136 = vsel %vm62, %v6134, 0.0
    %6137 = vadd.xlane.f32.xlu0 %v6136
    %v6138 = vpop.xlane.xlu0 %6137
    %v6139 = vsel %vm62, %v6135, 0.0
    %6140 = vadd.xlane.f32.xlu0 %v6139
    %v6141 = vpop.xlane.xlu0 %6140
    %v6142 = vmul.f32 %v6138, %v69
    %v6143 = vmul.f32 %v6141, %v69
    %v6144 = vsub.f32 %v6134, %v6142
    %v6145 = vsub.f32 %v6135, %v6143
    %v6146 = vmul.f32 %v6144, %v6144
    %v6147 = vmul.f32 %v6145, %v6145
    %v6148 = vsel %vm62, %v6146, 0.0
    %6149 = vadd.xlane.f32.xlu0 %v6148
    %v6150 = vpop.xlane.xlu0 %6149
    %v6151 = vsel %vm62, %v6147, 0.0
    %6152 = vadd.xlane.f32.xlu0 %v6151
    %v6153 = vpop.xlane.xlu0 %6152
    %v6154 = vmul.f32 %v6150, %v69
    %v6155 = vmul.f32 %v6153, %v69
    %v6156 = vadd.f32 %v6154, 1e-05
    %v6157 = vadd.f32 %v6155, 1e-05
    %v6158 = vrsqrt.pop %v6156
    %v6159 = vrsqrt.pop %v6157
    %v6160 = vmul.f32 %v6144, %v6158
    %v6161 = vmul.f32 %v6145, %v6159
    %v6162 = vlaneseq
    %v6163 = vshrl.u32 %v6162, 7
    %v6164 = vsub.s32 7, %v6163
    %v6165 = vrot.slane %v60, %v6164
    %v6166 = vmul.f32 %v6160, %v6165
    %v6167 = vmul.f32 %v6161, %v6165
    %v6168 = vlaneseq
    %v6169 = vshrl.u32 %v6168, 7
    %v6170 = vsub.s32 0, %v6169
    %v6171 = vrot.slane %v61, %v6170
    %v6172 = vadd.f32 %v6166, %v6171
    %v6173 = vadd.f32 %v6167, %v6171
    %v6174 = vld [vmem:[%s10] sm:$0xff]
    %v6175 = vld [vmem:[%s10 + $0x8] sm:$0xff]
    %v6176 = vld [vmem:[%s10 + $0x10] sm:$0xff]
    %v6177 = vld [vmem:[%s10 + $0x18] sm:$0xff]
    %v6178 = vld [vmem:[%s11] sm:$0x1]
    %v6180 = vlaneseq
    %v6181 = vshrl.u32 %v6180, 7
    %v6182 = vsub.s32 0, %v6181
    %v6183 = vrot.slane %v6178, %v6182
    %v6186 = vsel %vm62, %v6172, 0
    %v6189 = vsel %vm62, %v6173, 0
    %6191 = vmatprep.subr.mxu0 0.0
    %6192 = vmatpush1.msra.mxu0 %v6174
    %6193 = vmatprep.subr.mxu0 0.0
    %6194 = vmatpush1.msra.mxu0 %v6175
    %6195 = vmatprep.subr.mxu0 0.0
    %6196 = vmatpush1.msra.mxu0 %v6176
    %6197 = vmatprep.subr.mxu0 0.0
    %6198 = vmatpush1.msra.mxu0 %v6177
    %6199 = vmatprep.subr.mxu0 0.0
    %6200 = vmatpush1.msra.mxu0 0.0
    %6201 = vmatprep.subr.mxu0 0.0
    %6202 = vmatpush1.msra.mxu0 0.0
    %6203 = vmatprep.subr.mxu0 0.0
    %6204 = vmatpush1.msra.mxu0 0.0
    %6205 = vmatprep.subr.mxu0 0.0
    %6206 = vmatpush1.msra.mxu0 0.0
    %6207 = vmatprep.subr.mxu0 0.0
    %6208 = vmatpush1.msra.mxu0 0.0
    %6209 = vmatprep.subr.mxu0 0.0
    %6210 = vmatpush1.msra.mxu0 0.0
    %6211 = vmatprep.subr.mxu0 0.0
    %6212 = vmatpush1.msra.mxu0 0.0
    %6213 = vmatprep.subr.mxu0 0.0
    %6214 = vmatpush1.msra.mxu0 0.0
    %6215 = vmatprep.subr.mxu0 0.0
    %6216 = vmatpush1.msra.mxu0 0.0
    %6217 = vmatprep.subr.mxu0 0.0
    %6218 = vmatpush1.msra.mxu0 0.0
    %6219 = vmatprep.subr.mxu0 0.0
    %6220 = vmatpush1.msra.mxu0 0.0
    %6221 = vmatprep.subr.mxu0 0.0
    %6222 = vmatpush1.msra.mxu0 0.0
    %6223 = vmatprep.subr.mxu0 0.0
    %6224 = vmatpush1.msra.mxu0 0.0
    %6225 = vmatprep.subr.mxu0 0.0
    %6226 = vmatpush1.msra.mxu0 0.0
    %6227 = vmatprep.subr.mxu0 0.0
    %6228 = vmatpush1.msra.mxu0 0.0
    %6229 = vmatprep.subr.mxu0 0.0
    %6230 = vmatpush1.msra.mxu0 0.0
    %6231 = vmatprep.subr.mxu0 0.0
    %6232 = vmatpush1.msra.mxu0 0.0
    %6233 = vmatprep.subr.mxu0 0.0
    %6234 = vmatpush1.msra.mxu0 0.0
    %6235 = vmatprep.subr.mxu0 0.0
    %6236 = vmatpush1.msra.mxu0 0.0
    %6237 = vmatprep.subr.mxu0 0.0
    %6238 = vmatpush1.msra.mxu0 0.0
    %6239 = vmatprep.subr.mxu0 0.0
    %6240 = vmatpush1.msra.mxu0 0.0
    %6241 = vmatprep.subr.mxu0 0.0
    %6242 = vmatpush1.msra.mxu0 0.0
    %6243 = vmatprep.subr.mxu0 0.0
    %6244 = vmatpush1.msra.mxu0 0.0
    %6245 = vmatprep.subr.mxu0 0.0
    %6246 = vmatpush1.msra.mxu0 0.0
    %6247 = vmatprep.subr.mxu0 0.0
    %6248 = vmatpush1.msra.mxu0 0.0
    %6249 = vmatprep.subr.mxu0 0.0
    %6250 = vmatpush1.msra.mxu0 0.0
    %6251 = vmatprep.subr.mxu0 0.0
    %6252 = vmatpush1.msra.mxu0 0.0
    %6253 = vmatprep.subr.mxu0 0.0
    %6254 = vmatpush1.msra.mxu0 0.0
    %6255 = vmatprep.mubr.f32.mxu0 0.0
    %6256 = vmatmul.mubr.f32.gmra.mrb[0].mxu0 %v6186
    %v6257 = vpop.f32.mrb[0].mxu0
    %v6258 = vadd.f32 %v6183, %v6257
    %v6259 = vpop.f32.mrb[0].mxu0
    %6260 = vmatprep.mubr.f32.mxu0 0.0
    %6261 = vmatmul.mubr.f32.gmra.mrb[0].mxu0 %v6189
    %v6262 = vpop.f32.mrb[0].mxu0
    %v6263 = vadd.f32 %v6183, %v6262
    %v6264 = vpop.f32.mrb[0].mxu0
    %6265 = vdwg.mxu0
    %v6266 = vmax.f32 %v6258, 0.0
    %v6267 = vmax.f32 %v6263, 0.0
    %v6268 = vld [vmem:[%s12] sm:$0xff]
    %v6269 = vld [vmem:[%s12 + $0x8] sm:$0xff]
    %v6270 = vld [vmem:[%s12 + $0x10] sm:$0xff]
    %v6271 = vld [vmem:[%s12 + $0x18] sm:$0xff]
    %v6272 = vld [vmem:[%s12 + $0x20] sm:$0xff]
    %v6273 = vld [vmem:[%s12 + $0x28] sm:$0xff]
    %v6274 = vld [vmem:[%s12 + $0x30] sm:$0xff]
    %v6275 = vld [vmem:[%s12 + $0x38] sm:$0xff]
    %v6276 = vlaneseq
    %v6277 = vshrl.u32 %v6276, 7
    %v6278 = vsub.s32 2, %v6277
    %v6279 = vrot.slane %v60, %v6278
    %vm6280 = vcmask 523264
    %v6282 = vsel %vm6280, %v6266, 0
    %v6285 = vsel %vm6280, %v6267, 0
    %6287 = vmatprep.subr.mxu0 0.0
    %6288 = vmatpush1.msra.mxu0 %v6268
    %6289 = vmatprep.subr.mxu0 0.0
    %6290 = vmatpush1.msra.mxu0 %v6269
    %6291 = vmatprep.subr.mxu0 0.0
    %6292 = vmatpush1.msra.mxu0 %v6270
    %6293 = vmatprep.subr.mxu0 0.0
    %6294 = vmatpush1.msra.mxu0 %v6271
    %6295 = vmatprep.subr.mxu0 0.0
    %6296 = vmatpush1.msra.mxu0 %v6272
    %6297 = vmatprep.subr.mxu0 0.0
    %6298 = vmatpush1.msra.mxu0 %v6273
    %6299 = vmatprep.subr.mxu0 0.0
    %6300 = vmatpush1.msra.mxu0 %v6274
    %6301 = vmatprep.subr.mxu0 0.0
    %6302 = vmatpush1.msra.mxu0 %v6275
    %6303 = vmatprep.subr.mxu0 0.0
    %6304 = vmatpush1.msra.mxu0 0.0
    %6305 = vmatprep.subr.mxu0 0.0
    %6306 = vmatpush1.msra.mxu0 0.0
    %6307 = vmatprep.subr.mxu0 0.0
    %6308 = vmatpush1.msra.mxu0 0.0
    %6309 = vmatprep.subr.mxu0 0.0
    %6310 = vmatpush1.msra.mxu0 0.0
    %6311 = vmatprep.subr.mxu0 0.0
    %6312 = vmatpush1.msra.mxu0 0.0
    %6313 = vmatprep.subr.mxu0 0.0
    %6314 = vmatpush1.msra.mxu0 0.0
    %6315 = vmatprep.subr.mxu0 0.0
    %6316 = vmatpush1.msra.mxu0 0.0
    %6317 = vmatprep.subr.mxu0 0.0
    %6318 = vmatpush1.msra.mxu0 0.0
    %6319 = vmatprep.subr.mxu0 0.0
    %6320 = vmatpush1.msra.mxu0 0.0
    %6321 = vmatprep.subr.mxu0 0.0
    %6322 = vmatpush1.msra.mxu0 0.0
    %6323 = vmatprep.subr.mxu0 0.0
    %6324 = vmatpush1.msra.mxu0 0.0
    %6325 = vmatprep.subr.mxu0 0.0
    %6326 = vmatpush1.msra.mxu0 0.0
    %6327 = vmatprep.subr.mxu0 0.0
    %6328 = vmatpush1.msra.mxu0 0.0
    %6329 = vmatprep.subr.mxu0 0.0
    %6330 = vmatpush1.msra.mxu0 0.0
    %6331 = vmatprep.subr.mxu0 0.0
    %6332 = vmatpush1.msra.mxu0 0.0
    %6333 = vmatprep.subr.mxu0 0.0
    %6334 = vmatpush1.msra.mxu0 0.0
    %6335 = vmatprep.subr.mxu0 0.0
    %6336 = vmatpush1.msra.mxu0 0.0
    %6337 = vmatprep.subr.mxu0 0.0
    %6338 = vmatpush1.msra.mxu0 0.0
    %6339 = vmatprep.subr.mxu0 0.0
    %6340 = vmatpush1.msra.mxu0 0.0
    %6341 = vmatprep.subr.mxu0 0.0
    %6342 = vmatpush1.msra.mxu0 0.0
    %6343 = vmatprep.subr.mxu0 0.0
    %6344 = vmatpush1.msra.mxu0 0.0
    %6345 = vmatprep.subr.mxu0 0.0
    %6346 = vmatpush1.msra.mxu0 0.0
    %6347 = vmatprep.subr.mxu0 0.0
    %6348 = vmatpush1.msra.mxu0 0.0
    %6349 = vmatprep.subr.mxu0 0.0
    %6350 = vmatpush1.msra.mxu0 0.0
    %6351 = vmatprep.mubr.f32.mxu0 0.0
    %6352 = vmatmul.mubr.f32.gmra.mrb[0].mxu0 %v6282
    %v6353 = vpop.f32.mrb[0].mxu0
    %v6354 = vadd.f32 %v6279, %v6353
    %v6355 = vpop.f32.mrb[0].mxu0
    %6356 = vmatprep.mubr.f32.mxu0 0.0
    %6357 = vmatmul.mubr.f32.gmra.mrb[0].mxu0 %v6285
    %v6358 = vpop.f32.mrb[0].mxu0
    %v6359 = vadd.f32 %v6279, %v6358
    %v6360 = vpop.f32.mrb[0].mxu0
    %6361 = vdwg.mxu0
    %v6362 = vadd.f32 %v6134, %v6354
    %v6363 = vadd.f32 %v6135, %v6359
    %6364 = vst.msk [vmem:[#allocation2] sm:$0xff] %vm62, %v6362
    %6365 = vst.msk [vmem:[#allocation2 + $0x8] sm:$0xff] %vm62, %v6363
    // Predicated region
    $region58: #{tpu_custom_call.1} parent=1 // pred_check
      _
    $region59: #{tpu_custom_call.1} parent=1 // pred_check_branch
      %6367 = sbr.rel (0) target = $region61
    $region60: #{tpu_custom_call.1} parent=1 // pred_region
      %s6369 = ssub.s32 256, 256
      %6370 = vsyncadd [#allocation3], %s6369
      %s6371 = sshll.u32 [#allocation2], 4
      %s6372 = int_to_ptr.vmem [resolvable:$true] %s6371
      %6377 = dma.vmem_to_hbm [thread:$0]  %s6372, 256, %s14, [#allocation3], 128, 128, 8
    $region61: #{tpu_custom_call.1} parent=1 // pred_fallthru
      _
    // Predicated region
    $region62: #{tpu_custom_call.1} parent=1 // pred_check
      _
    $region63: #{tpu_custom_call.1} parent=1 // pred_check_branch
      %6379 = sbr.rel (0) target = $region65
    $region64: #{tpu_custom_call.1} parent=1 // pred_region
      %6380 = dma.done [#allocation3], 256
    $region65: #{tpu_custom_call.1} parent=1 // pred_fallthru
      _
    %6381 = vsyncpa [#allocation3], 1

</llo_original>
